<compile_context>
chip_gen: v7x
topology: tpu7x:2x2x1
jax: 0.10.0
libtpu: 0.0.40
codegen_flags: <defaults>
</compile_context>

<pallas_src>
import jax
import jax.numpy as jnp
from jax import lax
from jax.experimental import pallas as pl
from jax.experimental.pallas import tpu as pltpu

EPS = 1e-5             # nn.BatchNorm2d default eps
NEG_SLOPE = 0.01       # nn.LeakyReLU default negative_slope
LANE = 128             # TPU lane width


# ------------------------------- small helpers ------------------------------

def _round_up(n, m):
    return ((n + m - 1) // m) * m


def _vmem_limit():
    """~75% of the physical per-core VMEM, clamped to a sane range."""
    try:
        cap = getattr(pltpu.get_tpu_info(), "vmem_capacity_bytes", None)
        if cap:
            return int(min(max(cap * 3 // 4, 32 * 1024 * 1024), 128 * 1024 * 1024))
    except Exception:
        pass
    return 48 * 1024 * 1024


_VMEM_LIMIT = _vmem_limit()


def _compiler_params(semantics):
    return pltpu.CompilerParams(dimension_semantics=tuple(semantics),
                                vmem_limit_bytes=_VMEM_LIMIT)


def _row_tile(m):
    for t in (1024, 512, 256, 128, 64, 32, 16, 8):
        if m % t == 0:
            return t
    return m


def _col_tile(c):
    # Prefer 256-wide RHS tiles (fills v6e/v7x's 2x256 MXU); fall back to 128.
    for t in (256, 128):
        if c % t == 0:
            return t
    return c


def _bn_affine(gamma, beta, mean, var, cp):
    """Fold BatchNorm (inference) into a per-channel scale/bias, lane-padded."""
    inv = gamma / jnp.sqrt(var + EPS)
    scale = inv
    bias = beta - mean * inv
    c = scale.shape[0]
    scale = jnp.pad(scale, (0, cp - c)).reshape(1, cp).astype(jnp.float32)
    bias = jnp.pad(bias, (0, cp - c)).reshape(1, cp).astype(jnp.float32)
    return scale, bias


def _pack_w3x3(w_oihw, cp_in, cp_out):
    """OIHW 3x3 weights -> (9, Cp_in, Cp_out) bf16, tap-major (dh*3+dw)."""
    cout, cin = w_oihw.shape[0], w_oihw.shape[1]
    w9 = jnp.transpose(w_oihw, (2, 3, 1, 0)).reshape(9, cin, cout)
    w9 = jnp.pad(w9, ((0, 0), (0, cp_in - cin), (0, cp_out - cout)))
    return w9.astype(jnp.bfloat16)


def _pack_w1x1(w_oihw, cp_in, cp_out):
    cout, cin = w_oihw.shape[0], w_oihw.shape[1]
    w = w_oihw[:, :, 0, 0].T                      # (Cin, Cout)
    w = jnp.pad(w, ((0, cp_in - cin), (0, cp_out - cout)))
    return w.astype(jnp.bfloat16)


# --------------------- fused BN + LeakyReLU + 3x3 conv ----------------------
# Stride-1 main path: grid = (image, Cout tile).  The BN'd activation is staged
# once per image into a zero-padded, row-major-flattened bf16 slab in VMEM
# (row stride Wp is a multiple of 16 for sublane alignment); the conv is 9
# shifted (rows x Cin)@(Cin x TN) MXU matmuls accumulated in f32, with an
# optional fused residual-add epilogue.

def _make_conv3x3_kernel(H, W, Wp, M, fuse_res):
    def kernel(x_ref, scale_ref, bias_ref, w_ref, *rest):
        if fuse_res:
            res_ref, o_ref, a_scr, acc_scr = rest
        else:
            o_ref, a_scr, acc_scr = rest

        # Prologue: BN affine + LeakyReLU -> padded bf16 slab.  Only staged on
        # the first Cout tile of each image; the scratch persists across the
        # "arbitrary" Cout-tile grid axis and is reused by the other tiles.
        @pl.when(pl.program_id(1) == 0)
        def _stage():
            a_scr[...] = jnp.zeros_like(a_scr)
            act = x_ref[0].astype(jnp.float32) * scale_ref[...] + bias_ref[...]
            act = jnp.where(act >= 0.0, act, NEG_SLOPE * act).astype(a_scr.dtype)
            for h in range(H):
                a_scr[pl.ds((h + 1) * Wp + 1, W), :] = act[h]

        # 3x3 conv: 9 shifted bf16 MXU matmuls with f32 accumulation.  Taps are
        # grouped per kernel row so the big f32 scratch is written only 3 times
        # (v5e/v6e have a single vector-store slot per bundle).
        for dh in range(3):
            base = dh * Wp
            part = jnp.dot(a_scr[pl.ds(base, M), :], w_ref[3 * dh],
                           preferred_element_type=jnp.float32)
            part = part + jnp.dot(a_scr[pl.ds(base + 1, M), :], w_ref[3 * dh + 1],
                                  preferred_element_type=jnp.float32)
            part = part + jnp.dot(a_scr[pl.ds(base + 2, M), :], w_ref[3 * dh + 2],
                                  preferred_element_type=jnp.float32)
            if dh == 0:
                acc_scr[...] = part
            else:
                acc_scr[...] += part

        # Epilogue: extract valid output rows (+ fused residual add), cast.
        for h in range(H):
            row = acc_scr[pl.ds(h * Wp, W), :]     # (W, TN) f32, aligned start
            if fuse_res:
                row = row + res_ref[0, h].astype(jnp.float32)
            o_ref[0, h] = row.astype(o_ref.dtype)
    return kernel


def conv3x3_bn_fused(x, scale, bias, w9, residual=None, out_dtype=jnp.float32):
    """Fused BN+LeakyReLU prologue + 3x3 conv (stride 1, pad 1) [+ residual].

    x:          (N, H, W, Cp_in) f32 or bf16 (channel padded)
    scale/bias: (1, Cp_in) f32
    w9:         (9, Cp_in, Cp_out) bf16 (tap-major)
    residual:   optional (N, H, W, Cp_out)
    """
    N, H, W, cp_in = x.shape
    cp_out = w9.shape[2]
    TN = _col_tile(cp_out)
    Wp = _round_up(W + 2, 16)           # sublane-aligned bf16 slab row stride
    Hp = H + 2
    M = (H - 1) * Wp + W                # flattened rows covering every output

    fuse_res = residual is not None
    kernel = _make_conv3x3_kernel(H, W, Wp, M, fuse_res)

    in_specs = [
        pl.BlockSpec((1, H, W, cp_in), lambda n, j: (n, 0, 0, 0)),
        pl.BlockSpec((1, cp_in), lambda n, j: (0, 0)),
        pl.BlockSpec((1, cp_in), lambda n, j: (0, 0)),
        pl.BlockSpec((9, cp_in, TN), lambda n, j: (0, 0, j)),
    ]
    args = [x, scale, bias, w9]
    if fuse_res:
        in_specs.append(pl.BlockSpec((1, H, W, TN), lambda n, j: (n, 0, 0, j)))
        args.append(residual)

    flops = 2 * 9 * N * H * W * cp_in * cp_out
    bytes_accessed = (x.size * x.dtype.itemsize + w9.size * 2
                      + N * H * W * cp_out * jnp.dtype(out_dtype).itemsize
                      + (residual.size * residual.dtype.itemsize if fuse_res else 0))

    # TODO(synk): add a spatial row-band grid axis (with a 1-row halo) for very
    # large feature maps so the slab / accumulator stay bounded on v7x's 64 MiB.
    return pl.pallas_call(
        kernel,
        out_shape=jax.ShapeDtypeStruct((N, H, W, cp_out), out_dtype),
        grid=(N, cp_out // TN),
        in_specs=in_specs,
        out_specs=pl.BlockSpec((1, H, W, TN), lambda n, j: (n, 0, 0, j)),
        scratch_shapes=[
            pltpu.VMEM((Hp * Wp, cp_in), jnp.bfloat16),   # padded activation slab
            pltpu.VMEM((M, TN), jnp.float32),             # conv accumulator
        ],
        compiler_params=_compiler_params(("parallel", "arbitrary")),
        cost_estimate=pl.CostEstimate(flops=flops, transcendentals=0,
                                      bytes_accessed=int(bytes_accessed)),
    )(*args)


# ------------------- fused BN + LeakyReLU + 1x1 conv (shortcut) --------------

def _conv1x1_kernel(x_ref, s_ref, b_ref, w_ref, o_ref):
    a = x_ref[...].astype(jnp.float32) * s_ref[...] + b_ref[...]
    a = jnp.where(a >= 0.0, a, NEG_SLOPE * a)
    o_ref[...] = jnp.dot(a.astype(jnp.bfloat16), w_ref[...],
                         preferred_element_type=jnp.float32).astype(o_ref.dtype)


def conv1x1_bn_fused(x, scale, bias, w_mat, stride, out_dtype=jnp.bfloat16):
    N, H, W, cp_in = x.shape
    cp_out = w_mat.shape[1]
    if stride != 1:
        # TODO(synk): fold the stride-s subsample into the BlockSpec index_map
        # (needs strided gathers); the JAX-level slice is one small extra pass
        # over the already-subsampled input.
        x = x[:, ::stride, ::stride, :]
    Ho, Wo = x.shape[1], x.shape[2]
    M = N * Ho * Wo
    Mp = _round_up(M, 8)
    x2 = x.reshape(M, cp_in)
    if Mp != M:
        x2 = jnp.pad(x2, ((0, Mp - M), (0, 0)))
    TM = _row_tile(Mp)
    TN = _col_tile(cp_out)
    y = pl.pallas_call(
        _conv1x1_kernel,
        out_shape=jax.ShapeDtypeStruct((Mp, cp_out), out_dtype),
        grid=(Mp // TM, cp_out // TN),
        in_specs=[pl.BlockSpec((TM, cp_in), lambda i, j: (i, 0)),
                  pl.BlockSpec((1, cp_in), lambda i, j: (0, 0)),
                  pl.BlockSpec((1, cp_in), lambda i, j: (0, 0)),
                  pl.BlockSpec((cp_in, TN), lambda i, j: (0, j))],
        out_specs=pl.BlockSpec((TM, TN), lambda i, j: (i, j)),
        compiler_params=_compiler_params(("parallel", "parallel")),
    )(x2, scale, bias, w_mat)
    return y[:M].reshape(N, Ho, Wo, cp_out)


# ---------------- stride>1 fallback: BN pass + tap gather + matmul -----------

def _bn_lrelu_kernel(x_ref, s_ref, b_ref, o_ref):
    a = x_ref[...].astype(jnp.float32) * s_ref[...] + b_ref[...]
    o_ref[...] = jnp.where(a >= 0.0, a, NEG_SLOPE * a).astype(o_ref.dtype)


def bn_lrelu(x2, scale, bias, out_dtype=jnp.bfloat16):
    M, cp = x2.shape
    Mp = _round_up(M, 8)
    if Mp != M:
        x2 = jnp.pad(x2, ((0, Mp - M), (0, 0)))
    TM = _row_tile(Mp)
    y = pl.pallas_call(
        _bn_lrelu_kernel,
        out_shape=jax.ShapeDtypeStruct((Mp, cp), out_dtype),
        grid=(Mp // TM,),
        in_specs=[pl.BlockSpec((TM, cp), lambda i: (i, 0)),
                  pl.BlockSpec((1, cp), lambda i: (0, 0)),
                  pl.BlockSpec((1, cp), lambda i: (0, 0))],
        out_specs=pl.BlockSpec((TM, cp), lambda i: (i, 0)),
        compiler_params=_compiler_params(("parallel",)),
    )(x2, scale, bias)
    return y[:M]


def _matmul_kernel(a_ref, b_ref, o_ref):
    o_ref[...] = jnp.dot(a_ref[...], b_ref[...],
                         preferred_element_type=jnp.float32).astype(o_ref.dtype)


def matmul_tiled(a, b, out_dtype=jnp.float32):
    M, K = a.shape
    Nc = b.shape[1]
    Mp = _round_up(M, 8)
    if Mp != M:
        a = jnp.pad(a, ((0, Mp - M), (0, 0)))
    TM = _row_tile(Mp)
    TN = _col_tile(Nc)
    y = pl.pallas_call(
        _matmul_kernel,
        out_shape=jax.ShapeDtypeStruct((Mp, Nc), out_dtype),
        grid=(Mp // TM, Nc // TN),
        in_specs=[pl.BlockSpec((TM, K), lambda i, j: (i, 0)),
                  pl.BlockSpec((K, TN), lambda i, j: (0, j))],
        out_specs=pl.BlockSpec((TM, TN), lambda i, j: (i, j)),
        compiler_params=_compiler_params(("parallel", "parallel")),
    )(a, b)
    return y[:M]


def conv3x3_im2col(x, scale, bias, w9, stride):
    """stride>1 fallback (only the two downsampling blocks of a WideResNet).

    TODO(synk): move the strided 9-tap gather into VMEM (strided pl.ds reads of
    the staged slab) to avoid the HBM-materialized im2col."""
    N, H, W, cp_in = x.shape
    cp_out = w9.shape[2]
    a = bn_lrelu(x.reshape(N * H * W, cp_in), scale, bias, jnp.bfloat16)
    a = a.reshape(N, H, W, cp_in)
    ap = jnp.pad(a, ((0, 0), (1, 1), (1, 1), (0, 0)))
    Ho = (H - 1) // stride + 1
    Wo = (W - 1) // stride + 1
    taps = []
    for dh in range(3):
        for dw in range(3):
            taps.append(lax.slice(
                ap, (0, dh, dw, 0),
                (N, dh + (Ho - 1) * stride + 1, dw + (Wo - 1) * stride + 1, cp_in),
                (1, stride, stride, 1)))
    acol = jnp.stack(taps, axis=3).reshape(N * Ho * Wo, 9 * cp_in)
    y = matmul_tiled(acol, w9.reshape(9 * cp_in, cp_out), out_dtype=jnp.bfloat16)
    return y.reshape(N, Ho, Wo, cp_out)


# ------------------------------ module forward -------------------------------

def wide_res_unit_forward(x_nchw, params, stride=1):
    x = jnp.transpose(x_nchw, (0, 2, 3, 1)).astype(jnp.float32)   # NCHW -> NHWC
    N, H, W, Cin = x.shape
    Cout = params["conv1_w"].shape[0]
    cp_in = _round_up(Cin, LANE)
    cp_out = _round_up(Cout, LANE)
    has_i_block = (Cin != Cout) or (stride != 1)

    xp = jnp.pad(x, ((0, 0), (0, 0), (0, 0), (0, cp_in - Cin)))   # lane padding

    s1, b1 = _bn_affine(*params["bn1"], cp_in)
    s2, b2 = _bn_affine(*params["bn2"], cp_out)
    w1 = _pack_w3x3(params["conv1_w"], cp_in, cp_out)
    w2 = _pack_w3x3(params["conv2_w"], cp_out, cp_out)

    # f_block: norm1 -> relu1 -> conv1(stride) -> dropout -> norm2 -> relu2 -> conv2
    # TODO(synk): for tiny Cin (WRN stem, Cin=16) a packed-K in-VMEM im2col
    # (K=round_up(9*Cin,128)) would cut MXU passes ~4.5x; not done here.
    if stride == 1:
        y1 = conv3x3_bn_fused(xp, s1, b1, w1, out_dtype=jnp.bfloat16)
    else:
        y1 = conv3x3_im2col(xp, s1, b1, w1, stride)               # bf16 output
    # TODO(synk): nn.Dropout(p=0.3) is training-only; eval-mode identity here.

    # i_block shortcut projection when channels/stride change (own BN + relu)
    if has_i_block:
        si, bi = _bn_affine(*params["bni"], cp_in)
        wi = _pack_w1x1(params["convi_w"], cp_in, cp_out)
        res = conv1x1_bn_fused(xp, si, bi, wi, stride, out_dtype=jnp.bfloat16)
    else:
        res = xp                                                  # cp_in == cp_out

    # conv2 (stride 1) with the residual add fused into its epilogue
    out = conv3x3_bn_fused(y1, s2, b2, w2, residual=res, out_dtype=jnp.float32)
    out = out[..., :Cout]
    return jnp.transpose(out, (0, 3, 1, 2))                       # back to NCHW


# ---------------------------- reference (pure JAX) ----------------------------

def _ref_forward(x, p, stride):
    def bn_lr(v, g, b, m, s2):
        y = (v - m.reshape(1, -1, 1, 1)) / jnp.sqrt(s2.reshape(1, -1, 1, 1) + EPS)
        y = y * g.reshape(1, -1, 1, 1) + b.reshape(1, -1, 1, 1)
        return jnp.where(y >= 0.0, y, NEG_SLOPE * y)

    dn = ("NCHW", "OIHW", "NCHW")
    cin = x.shape[1]
    cout = p["conv1_w"].shape[0]
    a1 = bn_lr(x, *p["bn1"])
    y1 = lax.conv_general_dilated(a1, p["conv1_w"], (stride, stride),
                                  ((1, 1), (1, 1)), dimension_numbers=dn)
    a2 = bn_lr(y1, *p["bn2"])
    y2 = lax.conv_general_dilated(a2, p["conv2_w"], (1, 1),
                                  ((1, 1), (1, 1)), dimension_numbers=dn)
    if cin != cout or stride != 1:
        ai = bn_lr(x, *p["bni"])
        res = lax.conv_general_dilated(ai, p["convi_w"], (stride, stride),
                                       ((0, 0), (0, 0)), dimension_numbers=dn)
    else:
        res = x
    return y2 + res


# ----------------------------------- main -------------------------------------

def _make_params(key, cin, cout):
    ks = jax.random.split(key, 16)

    def bn(k0, k1, k2, k3, c):
        return (jax.random.uniform(k0, (c,), jnp.float32, 0.5, 1.5),   # gamma
                0.1 * jax.random.normal(k1, (c,), jnp.float32),        # beta
                0.1 * jax.random.normal(k2, (c,), jnp.float32),        # running_mean
                jax.random.uniform(k3, (c,), jnp.float32, 0.5, 1.5))   # running_var

    return {
        "bn1": bn(ks[0], ks[1], ks[2], ks[3], cin),
        "conv1_w": 0.1 * jax.random.normal(ks[4], (cout, cin, 3, 3), jnp.float32),
        "bn2": bn(ks[5], ks[6], ks[7], ks[8], cout),
        "conv2_w": 0.1 * jax.random.normal(ks[9], (cout, cout, 3, 3), jnp.float32),
        # i_block has its OWN BatchNorm in the PyTorch module -> distinct params
        "bni": bn(ks[10], ks[11], ks[12], ks[13], cin),
        "convi_w": 0.1 * jax.random.normal(ks[14], (cout, cin, 1, 1), jnp.float32),
    }


if __name__ == "__main__":
    key = jax.random.PRNGKey(0)
    k_x, k_p = jax.random.split(key)

    N, Cin, Cout, H, W = 2, 4, 8, 16, 16
    x = jax.random.normal(k_x, (N, Cin, H, W), jnp.float32)
    params = _make_params(k_p, Cin, Cout)

    # stride=1 exercises the fused-prologue conv path; stride=2 the fallback.
    for stride in (1, 2):
        out = wide_res_unit_forward(x, params, stride=stride)
        out = jax.block_until_ready(out)
        ref = _ref_forward(x, params, stride)
        assert out.shape == ref.shape, (stride, out.shape, ref.shape)
        max_err = float(jnp.max(jnp.abs(out - ref)))
        # bf16 MXU operands / bf16 intermediates with f32 accumulation
        assert jnp.allclose(out, ref, atol=5e-2, rtol=5e-2), (stride, max_err)

    print("KERNEL_OK")
</pallas_src>

<mosaic_0001>
module attributes {stable_mosaic.version = 11 : i64} {
  func.func @kernel(%arg0: i32, %arg1: i32, %arg2: memref<1x16x16x128xf32, #tpu.memory_space<vmem>>, %arg3: memref<1x128xf32, #tpu.memory_space<vmem>>, %arg4: memref<1x128xf32, #tpu.memory_space<vmem>>, %arg5: memref<9x128x128xbf16, #tpu.memory_space<vmem>>, %arg6: memref<1x16x16x128xbf16, #tpu.memory_space<vmem>>, %arg7: memref<576x128xbf16, #tpu.memory_space<vmem>>, %arg8: memref<496x128xf32, #tpu.memory_space<vmem>>) attributes {dimension_semantics = [#tpu.dimension_semantics<parallel>, #tpu.dimension_semantics<arbitrary>], iteration_bounds = array<i64: 2, 1>, scalar_prefetch = 0 : i64, scratch_operands = 2 : i64, tpu.core_type = #tpu.core_type<tc>, window_params = [{transform_indices = @transform_0, window_bounds = array<i64: 1, 16, 16, 128>}, {pipeline_mode = #tpu.pipeline_mode<synchronous>, transform_indices = @transform_1, window_bounds = array<i64: 1, 128>}, {pipeline_mode = #tpu.pipeline_mode<synchronous>, transform_indices = @transform_2, window_bounds = array<i64: 1, 128>}, {transform_indices = @transform_3, window_bounds = array<i64: 9, 128, 128>}, {transform_indices = @transform_4, window_bounds = array<i64: 1, 16, 16, 128>}]} {
    %c0_i32 = arith.constant 0 : i32
    %0 = arith.cmpi eq, %arg1, %c0_i32 : i32
    %1 = arith.extui %0 : i1 to i32
    %c0_i32_0 = arith.constant 0 : i32
    %2 = arith.cmpi ne, %1, %c0_i32_0 : i32
    scf.if %2 {
      %cst_125 = arith.constant 0.000000e+00 : bf16
      %132 = vector.broadcast %cst_125 : bf16 to vector<576x128xbf16>
      %c0_126 = arith.constant 0 : index
      %c0_127 = arith.constant 0 : index
      %133 = vector.load %arg7[%c0_126, %c0_127] : memref<576x128xbf16, #tpu.memory_space<vmem>>, vector<576x128xbf16>
      tpu.vector_store %arg7[%c0_126, %c0_127], %132 {strides = array<i32>} : memref<576x128xbf16, #tpu.memory_space<vmem>>, vector<576x128xbf16>,
      %c0_128 = arith.constant 0 : index
      %c0_129 = arith.constant 0 : index
      %c0_130 = arith.constant 0 : index
      %c0_131 = arith.constant 0 : index
      %134 = vector.load %arg2[%c0_128, %c0_129, %c0_130, %c0_131] : memref<1x16x16x128xf32, #tpu.memory_space<vmem>>, vector<1x16x16x128xf32>
      %135 = vector.shape_cast %134 : vector<1x16x16x128xf32> to vector<16x16x128xf32>
      %c0_132 = arith.constant 0 : index
      %c0_133 = arith.constant 0 : index
      %136 = vector.load %arg3[%c0_132, %c0_133] : memref<1x128xf32, #tpu.memory_space<vmem>>, vector<1x128xf32>
      %137 = vector.shape_cast %136 : vector<1x128xf32> to vector<1x1x128xf32>
      %138 = vector.broadcast %137 : vector<1x1x128xf32> to vector<16x16x128xf32>
      %139 = arith.mulf %135, %138 : vector<16x16x128xf32>
      %c0_134 = arith.constant 0 : index
      %c0_135 = arith.constant 0 : index
      %140 = vector.load %arg4[%c0_134, %c0_135] : memref<1x128xf32, #tpu.memory_space<vmem>>, vector<1x128xf32>
      %141 = vector.shape_cast %140 : vector<1x128xf32> to vector<1x1x128xf32>
      %142 = vector.broadcast %141 : vector<1x1x128xf32> to vector<16x16x128xf32>
      %143 = arith.addf %139, %142 : vector<16x16x128xf32>
      %cst_136 = arith.constant 0.000000e+00 : f32
      %144 = vector.broadcast %cst_136 : f32 to vector<16x16x128xf32>
      %145 = arith.cmpf oge, %143, %144 : vector<16x16x128xf32>
      %cst_137 = arith.constant 0.00999999977 : f32
      %146 = vector.broadcast %cst_137 : f32 to vector<16x16x128xf32>
      %147 = arith.mulf %146, %143 : vector<16x16x128xf32>
      %148 = arith.select %145, %143, %147 : vector<16x16x128xi1>, vector<16x16x128xf32>
      %149 = arith.truncf %148 : vector<16x16x128xf32> to vector<16x16x128xbf16>
      %150 = vector.extract_strided_slice %149 {offsets = [0, 0, 0], sizes = [1, 16, 128], strides = [1, 1, 1]} : vector<16x16x128xbf16> to vector<1x16x128xbf16>
      %151 = vector.shape_cast %150 : vector<1x16x128xbf16> to vector<16x128xbf16>
      %c33_138 = arith.constant 33 : index
      %c0_139 = arith.constant 0 : index
      %152 = vector.load %arg7[%c33_138, %c0_139] : memref<576x128xbf16, #tpu.memory_space<vmem>>, vector<16x128xbf16>
      tpu.vector_store %arg7[%c33_138, %c0_139], %151 {strides = array<i32>} : memref<576x128xbf16, #tpu.memory_space<vmem>>, vector<16x128xbf16>,
      %153 = vector.extract_strided_slice %149 {offsets = [1, 0, 0], sizes = [1, 16, 128], strides = [1, 1, 1]} : vector<16x16x128xbf16> to vector<1x16x128xbf16>
      %154 = vector.shape_cast %153 : vector<1x16x128xbf16> to vector<16x128xbf16>
      %c65_140 = arith.constant 65 : index
      %c0_141 = arith.constant 0 : index
      %155 = vector.load %arg7[%c65_140, %c0_141] : memref<576x128xbf16, #tpu.memory_space<vmem>>, vector<16x128xbf16>
      tpu.vector_store %arg7[%c65_140, %c0_141], %154 {strides = array<i32>} : memref<576x128xbf16, #tpu.memory_space<vmem>>, vector<16x128xbf16>,
      %156 = vector.extract_strided_slice %149 {offsets = [2, 0, 0], sizes = [1, 16, 128], strides = [1, 1, 1]} : vector<16x16x128xbf16> to vector<1x16x128xbf16>
      %157 = vector.shape_cast %156 : vector<1x16x128xbf16> to vector<16x128xbf16>
      %c97 = arith.constant 97 : index
      %c0_142 = arith.constant 0 : index
      %158 = vector.load %arg7[%c97, %c0_142] : memref<576x128xbf16, #tpu.memory_space<vmem>>, vector<16x128xbf16>
      tpu.vector_store %arg7[%c97, %c0_142], %157 {strides = array<i32>} : memref<576x128xbf16, #tpu.memory_space<vmem>>, vector<16x128xbf16>,
      %159 = vector.extract_strided_slice %149 {offsets = [3, 0, 0], sizes = [1, 16, 128], strides = [1, 1, 1]} : vector<16x16x128xbf16> to vector<1x16x128xbf16>
      %160 = vector.shape_cast %159 : vector<1x16x128xbf16> to vector<16x128xbf16>
      %c129 = arith.constant 129 : index
      %c0_143 = arith.constant 0 : index
      %161 = vector.load %arg7[%c129, %c0_143] : memref<576x128xbf16, #tpu.memory_space<vmem>>, vector<16x128xbf16>
      tpu.vector_store %arg7[%c129, %c0_143], %160 {strides = array<i32>} : memref<576x128xbf16, #tpu.memory_space<vmem>>, vector<16x128xbf16>,
      %162 = vector.extract_strided_slice %149 {offsets = [4, 0, 0], sizes = [1, 16, 128], strides = [1, 1, 1]} : vector<16x16x128xbf16> to vector<1x16x128xbf16>
      %163 = vector.shape_cast %162 : vector<1x16x128xbf16> to vector<16x128xbf16>
      %c161 = arith.constant 161 : index
      %c0_144 = arith.constant 0 : index
      %164 = vector.load %arg7[%c161, %c0_144] : memref<576x128xbf16, #tpu.memory_space<vmem>>, vector<16x128xbf16>
      tpu.vector_store %arg7[%c161, %c0_144], %163 {strides = array<i32>} : memref<576x128xbf16, #tpu.memory_space<vmem>>, vector<16x128xbf16>,
      %165 = vector.extract_strided_slice %149 {offsets = [5, 0, 0], sizes = [1, 16, 128], strides = [1, 1, 1]} : vector<16x16x128xbf16> to vector<1x16x128xbf16>
      %166 = vector.shape_cast %165 : vector<1x16x128xbf16> to vector<16x128xbf16>
      %c193 = arith.constant 193 : index
      %c0_145 = arith.constant 0 : index
      %167 = vector.load %arg7[%c193, %c0_145] : memref<576x128xbf16, #tpu.memory_space<vmem>>, vector<16x128xbf16>
      tpu.vector_store %arg7[%c193, %c0_145], %166 {strides = array<i32>} : memref<576x128xbf16, #tpu.memory_space<vmem>>, vector<16x128xbf16>,
      %168 = vector.extract_strided_slice %149 {offsets = [6, 0, 0], sizes = [1, 16, 128], strides = [1, 1, 1]} : vector<16x16x128xbf16> to vector<1x16x128xbf16>
      %169 = vector.shape_cast %168 : vector<1x16x128xbf16> to vector<16x128xbf16>
      %c225 = arith.constant 225 : index
      %c0_146 = arith.constant 0 : index
      %170 = vector.load %arg7[%c225, %c0_146] : memref<576x128xbf16, #tpu.memory_space<vmem>>, vector<16x128xbf16>
      tpu.vector_store %arg7[%c225, %c0_146], %169 {strides = array<i32>} : memref<576x128xbf16, #tpu.memory_space<vmem>>, vector<16x128xbf16>,
      %171 = vector.extract_strided_slice %149 {offsets = [7, 0, 0], sizes = [1, 16, 128], strides = [1, 1, 1]} : vector<16x16x128xbf16> to vector<1x16x128xbf16>
      %172 = vector.shape_cast %171 : vector<1x16x128xbf16> to vector<16x128xbf16>
      %c257 = arith.constant 257 : index
      %c0_147 = arith.constant 0 : index
      %173 = vector.load %arg7[%c257, %c0_147] : memref<576x128xbf16, #tpu.memory_space<vmem>>, vector<16x128xbf16>
      tpu.vector_store %arg7[%c257, %c0_147], %172 {strides = array<i32>} : memref<576x128xbf16, #tpu.memory_space<vmem>>, vector<16x128xbf16>,
      %174 = vector.extract_strided_slice %149 {offsets = [8, 0, 0], sizes = [1, 16, 128], strides = [1, 1, 1]} : vector<16x16x128xbf16> to vector<1x16x128xbf16>
      %175 = vector.shape_cast %174 : vector<1x16x128xbf16> to vector<16x128xbf16>
      %c289 = arith.constant 289 : index
      %c0_148 = arith.constant 0 : index
      %176 = vector.load %arg7[%c289, %c0_148] : memref<576x128xbf16, #tpu.memory_space<vmem>>, vector<16x128xbf16>
      tpu.vector_store %arg7[%c289, %c0_148], %175 {strides = array<i32>} : memref<576x128xbf16, #tpu.memory_space<vmem>>, vector<16x128xbf16>,
      %177 = vector.extract_strided_slice %149 {offsets = [9, 0, 0], sizes = [1, 16, 128], strides = [1, 1, 1]} : vector<16x16x128xbf16> to vector<1x16x128xbf16>
      %178 = vector.shape_cast %177 : vector<1x16x128xbf16> to vector<16x128xbf16>
      %c321 = arith.constant 321 : index
      %c0_149 = arith.constant 0 : index
      %179 = vector.load %arg7[%c321, %c0_149] : memref<576x128xbf16, #tpu.memory_space<vmem>>, vector<16x128xbf16>
      tpu.vector_store %arg7[%c321, %c0_149], %178 {strides = array<i32>} : memref<576x128xbf16, #tpu.memory_space<vmem>>, vector<16x128xbf16>,
      %180 = vector.extract_strided_slice %149 {offsets = [10, 0, 0], sizes = [1, 16, 128], strides = [1, 1, 1]} : vector<16x16x128xbf16> to vector<1x16x128xbf16>
      %181 = vector.shape_cast %180 : vector<1x16x128xbf16> to vector<16x128xbf16>
      %c353 = arith.constant 353 : index
      %c0_150 = arith.constant 0 : index
      %182 = vector.load %arg7[%c353, %c0_150] : memref<576x128xbf16, #tpu.memory_space<vmem>>, vector<16x128xbf16>
      tpu.vector_store %arg7[%c353, %c0_150], %181 {strides = array<i32>} : memref<576x128xbf16, #tpu.memory_space<vmem>>, vector<16x128xbf16>,
      %183 = vector.extract_strided_slice %149 {offsets = [11, 0, 0], sizes = [1, 16, 128], strides = [1, 1, 1]} : vector<16x16x128xbf16> to vector<1x16x128xbf16>
      %184 = vector.shape_cast %183 : vector<1x16x128xbf16> to vector<16x128xbf16>
      %c385 = arith.constant 385 : index
      %c0_151 = arith.constant 0 : index
      %185 = vector.load %arg7[%c385, %c0_151] : memref<576x128xbf16, #tpu.memory_space<vmem>>, vector<16x128xbf16>
      tpu.vector_store %arg7[%c385, %c0_151], %184 {strides = array<i32>} : memref<576x128xbf16, #tpu.memory_space<vmem>>, vector<16x128xbf16>,
      %186 = vector.extract_strided_slice %149 {offsets = [12, 0, 0], sizes = [1, 16, 128], strides = [1, 1, 1]} : vector<16x16x128xbf16> to vector<1x16x128xbf16>
      %187 = vector.shape_cast %186 : vector<1x16x128xbf16> to vector<16x128xbf16>
      %c417 = arith.constant 417 : index
      %c0_152 = arith.constant 0 : index
      %188 = vector.load %arg7[%c417, %c0_152] : memref<576x128xbf16, #tpu.memory_space<vmem>>, vector<16x128xbf16>
      tpu.vector_store %arg7[%c417, %c0_152], %187 {strides = array<i32>} : memref<576x128xbf16, #tpu.memory_space<vmem>>, vector<16x128xbf16>,
      %189 = vector.extract_strided_slice %149 {offsets = [13, 0, 0], sizes = [1, 16, 128], strides = [1, 1, 1]} : vector<16x16x128xbf16> to vector<1x16x128xbf16>
      %190 = vector.shape_cast %189 : vector<1x16x128xbf16> to vector<16x128xbf16>
      %c449 = arith.constant 449 : index
      %c0_153 = arith.constant 0 : index
      %191 = vector.load %arg7[%c449, %c0_153] : memref<576x128xbf16, #tpu.memory_space<vmem>>, vector<16x128xbf16>
      tpu.vector_store %arg7[%c449, %c0_153], %190 {strides = array<i32>} : memref<576x128xbf16, #tpu.memory_space<vmem>>, vector<16x128xbf16>,
      %192 = vector.extract_strided_slice %149 {offsets = [14, 0, 0], sizes = [1, 16, 128], strides = [1, 1, 1]} : vector<16x16x128xbf16> to vector<1x16x128xbf16>
      %193 = vector.shape_cast %192 : vector<1x16x128xbf16> to vector<16x128xbf16>
      %c481 = arith.constant 481 : index
      %c0_154 = arith.constant 0 : index
      %194 = vector.load %arg7[%c481, %c0_154] : memref<576x128xbf16, #tpu.memory_space<vmem>>, vector<16x128xbf16>
      tpu.vector_store %arg7[%c481, %c0_154], %193 {strides = array<i32>} : memref<576x128xbf16, #tpu.memory_space<vmem>>, vector<16x128xbf16>,
      %195 = vector.extract_strided_slice %149 {offsets = [15, 0, 0], sizes = [1, 16, 128], strides = [1, 1, 1]} : vector<16x16x128xbf16> to vector<1x16x128xbf16>
      %196 = vector.shape_cast %195 : vector<1x16x128xbf16> to vector<16x128xbf16>
      %c513 = arith.constant 513 : index
      %c0_155 = arith.constant 0 : index
      %197 = vector.load %arg7[%c513, %c0_155] : memref<576x128xbf16, #tpu.memory_space<vmem>>, vector<16x128xbf16>
      tpu.vector_store %arg7[%c513, %c0_155], %196 {strides = array<i32>} : memref<576x128xbf16, #tpu.memory_space<vmem>>, vector<16x128xbf16>,
    } else {
    }
    %c0 = arith.constant 0 : index
    %c0_1 = arith.constant 0 : index
    %3 = vector.load %arg7[%c0, %c0_1] : memref<576x128xbf16, #tpu.memory_space<vmem>>, vector<496x128xbf16>
    %c0_2 = arith.constant 0 : index
    %c0_3 = arith.constant 0 : index
    %c0_4 = arith.constant 0 : index
    %4 = vector.load %arg5[%c0_2, %c0_3, %c0_4] : memref<9x128x128xbf16, #tpu.memory_space<vmem>>, vector<1x128x128xbf16>
    %5 = vector.shape_cast %4 : vector<1x128x128xbf16> to vector<128x128xbf16>
    %cst = arith.constant dense<0.000000e+00> : vector<496x128xf32>
    %6 = tpu.matmul %3, %5, %cst {dimension_numbers = #tpu.dot_dimension_numbers<[1], [0], [0], [1], [0, 0, 1, 1], [], []>} : vector<496x128xbf16>, vector<128x128xbf16>, vector<496x128xf32> -> vector<496x128xf32>
    %c1 = arith.constant 1 : index
    %c0_5 = arith.constant 0 : index
    %7 = vector.load %arg7[%c1, %c0_5] : memref<576x128xbf16, #tpu.memory_space<vmem>>, vector<496x128xbf16>
    %c1_6 = arith.constant 1 : index
    %c0_7 = arith.constant 0 : index
    %c0_8 = arith.constant 0 : index
    %8 = vector.load %arg5[%c1_6, %c0_7, %c0_8] : memref<9x128x128xbf16, #tpu.memory_space<vmem>>, vector<1x128x128xbf16>
    %9 = vector.shape_cast %8 : vector<1x128x128xbf16> to vector<128x128xbf16>
    %cst_9 = arith.constant dense<0.000000e+00> : vector<496x128xf32>
    %10 = tpu.matmul %7, %9, %cst_9 {dimension_numbers = #tpu.dot_dimension_numbers<[1], [0], [0], [1], [0, 0, 1, 1], [], []>} : vector<496x128xbf16>, vector<128x128xbf16>, vector<496x128xf32> -> vector<496x128xf32>
    %11 = arith.addf %6, %10 : vector<496x128xf32>
    %c2 = arith.constant 2 : index
    %c0_10 = arith.constant 0 : index
    %12 = vector.load %arg7[%c2, %c0_10] : memref<576x128xbf16, #tpu.memory_space<vmem>>, vector<496x128xbf16>
    %c2_11 = arith.constant 2 : index
    %c0_12 = arith.constant 0 : index
    %c0_13 = arith.constant 0 : index
    %13 = vector.load %arg5[%c2_11, %c0_12, %c0_13] : memref<9x128x128xbf16, #tpu.memory_space<vmem>>, vector<1x128x128xbf16>
    %14 = vector.shape_cast %13 : vector<1x128x128xbf16> to vector<128x128xbf16>
    %cst_14 = arith.constant dense<0.000000e+00> : vector<496x128xf32>
    %15 = tpu.matmul %12, %14, %cst_14 {dimension_numbers = #tpu.dot_dimension_numbers<[1], [0], [0], [1], [0, 0, 1, 1], [], []>} : vector<496x128xbf16>, vector<128x128xbf16>, vector<496x128xf32> -> vector<496x128xf32>
    %16 = arith.addf %11, %15 : vector<496x128xf32>
    %c0_15 = arith.constant 0 : index
    %c0_16 = arith.constant 0 : index
    %17 = vector.load %arg8[%c0_15, %c0_16] : memref<496x128xf32, #tpu.memory_space<vmem>>, vector<496x128xf32>
    tpu.vector_store %arg8[%c0_15, %c0_16], %16 {strides = array<i32>} : memref<496x128xf32, #tpu.memory_space<vmem>>, vector<496x128xf32>,
    %c32 = arith.constant 32 : index
    %c0_17 = arith.constant 0 : index
    %18 = vector.load %arg7[%c32, %c0_17] : memref<576x128xbf16, #tpu.memory_space<vmem>>, vector<496x128xbf16>
    %c3 = arith.constant 3 : index
    %c0_18 = arith.constant 0 : index
    %c0_19 = arith.constant 0 : index
    %19 = vector.load %arg5[%c3, %c0_18, %c0_19] : memref<9x128x128xbf16, #tpu.memory_space<vmem>>, vector<1x128x128xbf16>
    %20 = vector.shape_cast %19 : vector<1x128x128xbf16> to vector<128x128xbf16>
    %cst_20 = arith.constant dense<0.000000e+00> : vector<496x128xf32>
    %21 = tpu.matmul %18, %20, %cst_20 {dimension_numbers = #tpu.dot_dimension_numbers<[1], [0], [0], [1], [0, 0, 1, 1], [], []>} : vector<496x128xbf16>, vector<128x128xbf16>, vector<496x128xf32> -> vector<496x128xf32>
    %c33 = arith.constant 33 : index
    %c0_21 = arith.constant 0 : index
    %22 = vector.load %arg7[%c33, %c0_21] : memref<576x128xbf16, #tpu.memory_space<vmem>>, vector<496x128xbf16>
    %c4 = arith.constant 4 : index
    %c0_22 = arith.constant 0 : index
    %c0_23 = arith.constant 0 : index
    %23 = vector.load %arg5[%c4, %c0_22, %c0_23] : memref<9x128x128xbf16, #tpu.memory_space<vmem>>, vector<1x128x128xbf16>
    %24 = vector.shape_cast %23 : vector<1x128x128xbf16> to vector<128x128xbf16>
    %cst_24 = arith.constant dense<0.000000e+00> : vector<496x128xf32>
    %25 = tpu.matmul %22, %24, %cst_24 {dimension_numbers = #tpu.dot_dimension_numbers<[1], [0], [0], [1], [0, 0, 1, 1], [], []>} : vector<496x128xbf16>, vector<128x128xbf16>, vector<496x128xf32> -> vector<496x128xf32>
    %26 = arith.addf %21, %25 : vector<496x128xf32>
    %c34 = arith.constant 34 : index
    %c0_25 = arith.constant 0 : index
    %27 = vector.load %arg7[%c34, %c0_25] : memref<576x128xbf16, #tpu.memory_space<vmem>>, vector<496x128xbf16>
    %c5 = arith.constant 5 : index
    %c0_26 = arith.constant 0 : index
    %c0_27 = arith.constant 0 : index
    %28 = vector.load %arg5[%c5, %c0_26, %c0_27] : memref<9x128x128xbf16, #tpu.memory_space<vmem>>, vector<1x128x128xbf16>
    %29 = vector.shape_cast %28 : vector<1x128x128xbf16> to vector<128x128xbf16>
    %cst_28 = arith.constant dense<0.000000e+00> : vector<496x128xf32>
    %30 = tpu.matmul %27, %29, %cst_28 {dimension_numbers = #tpu.dot_dimension_numbers<[1], [0], [0], [1], [0, 0, 1, 1], [], []>} : vector<496x128xbf16>, vector<128x128xbf16>, vector<496x128xf32> -> vector<496x128xf32>
    %31 = arith.addf %26, %30 : vector<496x128xf32>
    %c0_29 = arith.constant 0 : index
    %c0_30 = arith.constant 0 : index
    %32 = vector.load %arg8[%c0_29, %c0_30] : memref<496x128xf32, #tpu.memory_space<vmem>>, vector<496x128xf32>
    %33 = arith.addf %32, %31 : vector<496x128xf32>
    %c0_31 = arith.constant 0 : index
    %c0_32 = arith.constant 0 : index
    %34 = vector.load %arg8[%c0_31, %c0_32] : memref<496x128xf32, #tpu.memory_space<vmem>>, vector<496x128xf32>
    tpu.vector_store %arg8[%c0_31, %c0_32], %33 {strides = array<i32>} : memref<496x128xf32, #tpu.memory_space<vmem>>, vector<496x128xf32>,
    %c64 = arith.constant 64 : index
    %c0_33 = arith.constant 0 : index
    %35 = vector.load %arg7[%c64, %c0_33] : memref<576x128xbf16, #tpu.memory_space<vmem>>, vector<496x128xbf16>
    %c6 = arith.constant 6 : index
    %c0_34 = arith.constant 0 : index
    %c0_35 = arith.constant 0 : index
    %36 = vector.load %arg5[%c6, %c0_34, %c0_35] : memref<9x128x128xbf16, #tpu.memory_space<vmem>>, vector<1x128x128xbf16>
    %37 = vector.shape_cast %36 : vector<1x128x128xbf16> to vector<128x128xbf16>
    %cst_36 = arith.constant dense<0.000000e+00> : vector<496x128xf32>
    %38 = tpu.matmul %35, %37, %cst_36 {dimension_numbers = #tpu.dot_dimension_numbers<[1], [0], [0], [1], [0, 0, 1, 1], [], []>} : vector<496x128xbf16>, vector<128x128xbf16>, vector<496x128xf32> -> vector<496x128xf32>
    %c65 = arith.constant 65 : index
    %c0_37 = arith.constant 0 : index
    %39 = vector.load %arg7[%c65, %c0_37] : memref<576x128xbf16, #tpu.memory_space<vmem>>, vector<496x128xbf16>
    %c7 = arith.constant 7 : index
    %c0_38 = arith.constant 0 : index
    %c0_39 = arith.constant 0 : index
    %40 = vector.load %arg5[%c7, %c0_38, %c0_39] : memref<9x128x128xbf16, #tpu.memory_space<vmem>>, vector<1x128x128xbf16>
    %41 = vector.shape_cast %40 : vector<1x128x128xbf16> to vector<128x128xbf16>
    %cst_40 = arith.constant dense<0.000000e+00> : vector<496x128xf32>
    %42 = tpu.matmul %39, %41, %cst_40 {dimension_numbers = #tpu.dot_dimension_numbers<[1], [0], [0], [1], [0, 0, 1, 1], [], []>} : vector<496x128xbf16>, vector<128x128xbf16>, vector<496x128xf32> -> vector<496x128xf32>
    %43 = arith.addf %38, %42 : vector<496x128xf32>
    %c66 = arith.constant 66 : index
    %c0_41 = arith.constant 0 : index
    %44 = vector.load %arg7[%c66, %c0_41] : memref<576x128xbf16, #tpu.memory_space<vmem>>, vector<496x128xbf16>
    %c8 = arith.constant 8 : index
    %c0_42 = arith.constant 0 : index
    %c0_43 = arith.constant 0 : index
    %45 = vector.load %arg5[%c8, %c0_42, %c0_43] : memref<9x128x128xbf16, #tpu.memory_space<vmem>>, vector<1x128x128xbf16>
    %46 = vector.shape_cast %45 : vector<1x128x128xbf16> to vector<128x128xbf16>
    %cst_44 = arith.constant dense<0.000000e+00> : vector<496x128xf32>
    %47 = tpu.matmul %44, %46, %cst_44 {dimension_numbers = #tpu.dot_dimension_numbers<[1], [0], [0], [1], [0, 0, 1, 1], [], []>} : vector<496x128xbf16>, vector<128x128xbf16>, vector<496x128xf32> -> vector<496x128xf32>
    %48 = arith.addf %43, %47 : vector<496x128xf32>
    %c0_45 = arith.constant 0 : index
    %c0_46 = arith.constant 0 : index
    %49 = vector.load %arg8[%c0_45, %c0_46] : memref<496x128xf32, #tpu.memory_space<vmem>>, vector<496x128xf32>
    %50 = arith.addf %49, %48 : vector<496x128xf32>
    %c0_47 = arith.constant 0 : index
    %c0_48 = arith.constant 0 : index
    %51 = vector.load %arg8[%c0_47, %c0_48] : memref<496x128xf32, #tpu.memory_space<vmem>>, vector<496x128xf32>
    tpu.vector_store %arg8[%c0_47, %c0_48], %50 {strides = array<i32>} : memref<496x128xf32, #tpu.memory_space<vmem>>, vector<496x128xf32>,
    %c0_49 = arith.constant 0 : index
    %c0_50 = arith.constant 0 : index
    %52 = vector.load %arg8[%c0_49, %c0_50] : memref<496x128xf32, #tpu.memory_space<vmem>>, vector<16x128xf32>
    %53 = arith.truncf %52 : vector<16x128xf32> to vector<16x128xbf16>
    %c0_51 = arith.constant 0 : index
    %c0_52 = arith.constant 0 : index
    %c0_53 = arith.constant 0 : index
    %c0_54 = arith.constant 0 : index
    %54 = vector.load %arg6[%c0_51, %c0_52, %c0_53, %c0_54] : memref<1x16x16x128xbf16, #tpu.memory_space<vmem>>, vector<1x1x16x128xbf16>
    %55 = vector.shape_cast %54 : vector<1x1x16x128xbf16> to vector<16x128xbf16>
    %56 = vector.shape_cast %53 : vector<16x128xbf16> to vector<1x1x16x128xbf16>
    tpu.vector_store %arg6[%c0_51, %c0_52, %c0_53, %c0_54], %56 {strides = array<i32>} : memref<1x16x16x128xbf16, #tpu.memory_space<vmem>>, vector<1x1x16x128xbf16>,
    %c32_55 = arith.constant 32 : index
    %c0_56 = arith.constant 0 : index
    %57 = vector.load %arg8[%c32_55, %c0_56] : memref<496x128xf32, #tpu.memory_space<vmem>>, vector<16x128xf32>
    %58 = arith.truncf %57 : vector<16x128xf32> to vector<16x128xbf16>
    %c0_57 = arith.constant 0 : index
    %c1_58 = arith.constant 1 : index
    %c0_59 = arith.constant 0 : index
    %c0_60 = arith.constant 0 : index
    %59 = vector.load %arg6[%c0_57, %c1_58, %c0_59, %c0_60] : memref<1x16x16x128xbf16, #tpu.memory_space<vmem>>, vector<1x1x16x128xbf16>
    %60 = vector.shape_cast %59 : vector<1x1x16x128xbf16> to vector<16x128xbf16>
    %61 = vector.shape_cast %58 : vector<16x128xbf16> to vector<1x1x16x128xbf16>
    tpu.vector_store %arg6[%c0_57, %c1_58, %c0_59, %c0_60], %61 {strides = array<i32>} : memref<1x16x16x128xbf16, #tpu.memory_space<vmem>>, vector<1x1x16x128xbf16>,
    %c64_61 = arith.constant 64 : index
    %c0_62 = arith.constant 0 : index
    %62 = vector.load %arg8[%c64_61, %c0_62] : memref<496x128xf32, #tpu.memory_space<vmem>>, vector<16x128xf32>
    %63 = arith.truncf %62 : vector<16x128xf32> to vector<16x128xbf16>
    %c0_63 = arith.constant 0 : index
    %c2_64 = arith.constant 2 : index
    %c0_65 = arith.constant 0 : index
    %c0_66 = arith.constant 0 : index
    %64 = vector.load %arg6[%c0_63, %c2_64, %c0_65, %c0_66] : memref<1x16x16x128xbf16, #tpu.memory_space<vmem>>, vector<1x1x16x128xbf16>
    %65 = vector.shape_cast %64 : vector<1x1x16x128xbf16> to vector<16x128xbf16>
    %66 = vector.shape_cast %63 : vector<16x128xbf16> to vector<1x1x16x128xbf16>
    tpu.vector_store %arg6[%c0_63, %c2_64, %c0_65, %c0_66], %66 {strides = array<i32>} : memref<1x16x16x128xbf16, #tpu.memory_space<vmem>>, vector<1x1x16x128xbf16>,
    %c96 = arith.constant 96 : index
    %c0_67 = arith.constant 0 : index
    %67 = vector.load %arg8[%c96, %c0_67] : memref<496x128xf32, #tpu.memory_space<vmem>>, vector<16x128xf32>
    %68 = arith.truncf %67 : vector<16x128xf32> to vector<16x128xbf16>
    %c0_68 = arith.constant 0 : index
    %c3_69 = arith.constant 3 : index
    %c0_70 = arith.constant 0 : index
    %c0_71 = arith.constant 0 : index
    %69 = vector.load %arg6[%c0_68, %c3_69, %c0_70, %c0_71] : memref<1x16x16x128xbf16, #tpu.memory_space<vmem>>, vector<1x1x16x128xbf16>
    %70 = vector.shape_cast %69 : vector<1x1x16x128xbf16> to vector<16x128xbf16>
    %71 = vector.shape_cast %68 : vector<16x128xbf16> to vector<1x1x16x128xbf16>
    tpu.vector_store %arg6[%c0_68, %c3_69, %c0_70, %c0_71], %71 {strides = array<i32>} : memref<1x16x16x128xbf16, #tpu.memory_space<vmem>>, vector<1x1x16x128xbf16>,
    %c128 = arith.constant 128 : index
    %c0_72 = arith.constant 0 : index
    %72 = vector.load %arg8[%c128, %c0_72] : memref<496x128xf32, #tpu.memory_space<vmem>>, vector<16x128xf32>
    %73 = arith.truncf %72 : vector<16x128xf32> to vector<16x128xbf16>
    %c0_73 = arith.constant 0 : index
    %c4_74 = arith.constant 4 : index
    %c0_75 = arith.constant 0 : index
    %c0_76 = arith.constant 0 : index
    %74 = vector.load %arg6[%c0_73, %c4_74, %c0_75, %c0_76] : memref<1x16x16x128xbf16, #tpu.memory_space<vmem>>, vector<1x1x16x128xbf16>
    %75 = vector.shape_cast %74 : vector<1x1x16x128xbf16> to vector<16x128xbf16>
    %76 = vector.shape_cast %73 : vector<16x128xbf16> to vector<1x1x16x128xbf16>
    tpu.vector_store %arg6[%c0_73, %c4_74, %c0_75, %c0_76], %76 {strides = array<i32>} : memref<1x16x16x128xbf16, #tpu.memory_space<vmem>>, vector<1x1x16x128xbf16>,
    %c160 = arith.constant 160 : index
    %c0_77 = arith.constant 0 : index
    %77 = vector.load %arg8[%c160, %c0_77] : memref<496x128xf32, #tpu.memory_space<vmem>>, vector<16x128xf32>
    %78 = arith.truncf %77 : vector<16x128xf32> to vector<16x128xbf16>
    %c0_78 = arith.constant 0 : index
    %c5_79 = arith.constant 5 : index
    %c0_80 = arith.constant 0 : index
    %c0_81 = arith.constant 0 : index
    %79 = vector.load %arg6[%c0_78, %c5_79, %c0_80, %c0_81] : memref<1x16x16x128xbf16, #tpu.memory_space<vmem>>, vector<1x1x16x128xbf16>
    %80 = vector.shape_cast %79 : vector<1x1x16x128xbf16> to vector<16x128xbf16>
    %81 = vector.shape_cast %78 : vector<16x128xbf16> to vector<1x1x16x128xbf16>
    tpu.vector_store %arg6[%c0_78, %c5_79, %c0_80, %c0_81], %81 {strides = array<i32>} : memref<1x16x16x128xbf16, #tpu.memory_space<vmem>>, vector<1x1x16x128xbf16>,
    %c192 = arith.constant 192 : index
    %c0_82 = arith.constant 0 : index
    %82 = vector.load %arg8[%c192, %c0_82] : memref<496x128xf32, #tpu.memory_space<vmem>>, vector<16x128xf32>
    %83 = arith.truncf %82 : vector<16x128xf32> to vector<16x128xbf16>
    %c0_83 = arith.constant 0 : index
    %c6_84 = arith.constant 6 : index
    %c0_85 = arith.constant 0 : index
    %c0_86 = arith.constant 0 : index
    %84 = vector.load %arg6[%c0_83, %c6_84, %c0_85, %c0_86] : memref<1x16x16x128xbf16, #tpu.memory_space<vmem>>, vector<1x1x16x128xbf16>
    %85 = vector.shape_cast %84 : vector<1x1x16x128xbf16> to vector<16x128xbf16>
    %86 = vector.shape_cast %83 : vector<16x128xbf16> to vector<1x1x16x128xbf16>
    tpu.vector_store %arg6[%c0_83, %c6_84, %c0_85, %c0_86], %86 {strides = array<i32>} : memref<1x16x16x128xbf16, #tpu.memory_space<vmem>>, vector<1x1x16x128xbf16>,
    %c224 = arith.constant 224 : index
    %c0_87 = arith.constant 0 : index
    %87 = vector.load %arg8[%c224, %c0_87] : memref<496x128xf32, #tpu.memory_space<vmem>>, vector<16x128xf32>
    %88 = arith.truncf %87 : vector<16x128xf32> to vector<16x128xbf16>
    %c0_88 = arith.constant 0 : index
    %c7_89 = arith.constant 7 : index
    %c0_90 = arith.constant 0 : index
    %c0_91 = arith.constant 0 : index
    %89 = vector.load %arg6[%c0_88, %c7_89, %c0_90, %c0_91] : memref<1x16x16x128xbf16, #tpu.memory_space<vmem>>, vector<1x1x16x128xbf16>
    %90 = vector.shape_cast %89 : vector<1x1x16x128xbf16> to vector<16x128xbf16>
    %91 = vector.shape_cast %88 : vector<16x128xbf16> to vector<1x1x16x128xbf16>
    tpu.vector_store %arg6[%c0_88, %c7_89, %c0_90, %c0_91], %91 {strides = array<i32>} : memref<1x16x16x128xbf16, #tpu.memory_space<vmem>>, vector<1x1x16x128xbf16>,
    %c256 = arith.constant 256 : index
    %c0_92 = arith.constant 0 : index
    %92 = vector.load %arg8[%c256, %c0_92] : memref<496x128xf32, #tpu.memory_space<vmem>>, vector<16x128xf32>
    %93 = arith.truncf %92 : vector<16x128xf32> to vector<16x128xbf16>
    %c0_93 = arith.constant 0 : index
    %c8_94 = arith.constant 8 : index
    %c0_95 = arith.constant 0 : index
    %c0_96 = arith.constant 0 : index
    %94 = vector.load %arg6[%c0_93, %c8_94, %c0_95, %c0_96] : memref<1x16x16x128xbf16, #tpu.memory_space<vmem>>, vector<1x1x16x128xbf16>
    %95 = vector.shape_cast %94 : vector<1x1x16x128xbf16> to vector<16x128xbf16>
    %96 = vector.shape_cast %93 : vector<16x128xbf16> to vector<1x1x16x128xbf16>
    tpu.vector_store %arg6[%c0_93, %c8_94, %c0_95, %c0_96], %96 {strides = array<i32>} : memref<1x16x16x128xbf16, #tpu.memory_space<vmem>>, vector<1x1x16x128xbf16>,
    %c288 = arith.constant 288 : index
    %c0_97 = arith.constant 0 : index
    %97 = vector.load %arg8[%c288, %c0_97] : memref<496x128xf32, #tpu.memory_space<vmem>>, vector<16x128xf32>
    %98 = arith.truncf %97 : vector<16x128xf32> to vector<16x128xbf16>
    %c0_98 = arith.constant 0 : index
    %c9 = arith.constant 9 : index
    %c0_99 = arith.constant 0 : index
    %c0_100 = arith.constant 0 : index
    %99 = vector.load %arg6[%c0_98, %c9, %c0_99, %c0_100] : memref<1x16x16x128xbf16, #tpu.memory_space<vmem>>, vector<1x1x16x128xbf16>
    %100 = vector.shape_cast %99 : vector<1x1x16x128xbf16> to vector<16x128xbf16>
    %101 = vector.shape_cast %98 : vector<16x128xbf16> to vector<1x1x16x128xbf16>
    tpu.vector_store %arg6[%c0_98, %c9, %c0_99, %c0_100], %101 {strides = array<i32>} : memref<1x16x16x128xbf16, #tpu.memory_space<vmem>>, vector<1x1x16x128xbf16>,
    %c320 = arith.constant 320 : index
    %c0_101 = arith.constant 0 : index
    %102 = vector.load %arg8[%c320, %c0_101] : memref<496x128xf32, #tpu.memory_space<vmem>>, vector<16x128xf32>
    %103 = arith.truncf %102 : vector<16x128xf32> to vector<16x128xbf16>
    %c0_102 = arith.constant 0 : index
    %c10 = arith.constant 10 : index
    %c0_103 = arith.constant 0 : index
    %c0_104 = arith.constant 0 : index
    %104 = vector.load %arg6[%c0_102, %c10, %c0_103, %c0_104] : memref<1x16x16x128xbf16, #tpu.memory_space<vmem>>, vector<1x1x16x128xbf16>
    %105 = vector.shape_cast %104 : vector<1x1x16x128xbf16> to vector<16x128xbf16>
    %106 = vector.shape_cast %103 : vector<16x128xbf16> to vector<1x1x16x128xbf16>
    tpu.vector_store %arg6[%c0_102, %c10, %c0_103, %c0_104], %106 {strides = array<i32>} : memref<1x16x16x128xbf16, #tpu.memory_space<vmem>>, vector<1x1x16x128xbf16>,
    %c352 = arith.constant 352 : index
    %c0_105 = arith.constant 0 : index
    %107 = vector.load %arg8[%c352, %c0_105] : memref<496x128xf32, #tpu.memory_space<vmem>>, vector<16x128xf32>
    %108 = arith.truncf %107 : vector<16x128xf32> to vector<16x128xbf16>
    %c0_106 = arith.constant 0 : index
    %c11 = arith.constant 11 : index
    %c0_107 = arith.constant 0 : index
    %c0_108 = arith.constant 0 : index
    %109 = vector.load %arg6[%c0_106, %c11, %c0_107, %c0_108] : memref<1x16x16x128xbf16, #tpu.memory_space<vmem>>, vector<1x1x16x128xbf16>
    %110 = vector.shape_cast %109 : vector<1x1x16x128xbf16> to vector<16x128xbf16>
    %111 = vector.shape_cast %108 : vector<16x128xbf16> to vector<1x1x16x128xbf16>
    tpu.vector_store %arg6[%c0_106, %c11, %c0_107, %c0_108], %111 {strides = array<i32>} : memref<1x16x16x128xbf16, #tpu.memory_space<vmem>>, vector<1x1x16x128xbf16>,
    %c384 = arith.constant 384 : index
    %c0_109 = arith.constant 0 : index
    %112 = vector.load %arg8[%c384, %c0_109] : memref<496x128xf32, #tpu.memory_space<vmem>>, vector<16x128xf32>
    %113 = arith.truncf %112 : vector<16x128xf32> to vector<16x128xbf16>
    %c0_110 = arith.constant 0 : index
    %c12 = arith.constant 12 : index
    %c0_111 = arith.constant 0 : index
    %c0_112 = arith.constant 0 : index
    %114 = vector.load %arg6[%c0_110, %c12, %c0_111, %c0_112] : memref<1x16x16x128xbf16, #tpu.memory_space<vmem>>, vector<1x1x16x128xbf16>
    %115 = vector.shape_cast %114 : vector<1x1x16x128xbf16> to vector<16x128xbf16>
    %116 = vector.shape_cast %113 : vector<16x128xbf16> to vector<1x1x16x128xbf16>
    tpu.vector_store %arg6[%c0_110, %c12, %c0_111, %c0_112], %116 {strides = array<i32>} : memref<1x16x16x128xbf16, #tpu.memory_space<vmem>>, vector<1x1x16x128xbf16>,
    %c416 = arith.constant 416 : index
    %c0_113 = arith.constant 0 : index
    %117 = vector.load %arg8[%c416, %c0_113] : memref<496x128xf32, #tpu.memory_space<vmem>>, vector<16x128xf32>
    %118 = arith.truncf %117 : vector<16x128xf32> to vector<16x128xbf16>
    %c0_114 = arith.constant 0 : index
    %c13 = arith.constant 13 : index
    %c0_115 = arith.constant 0 : index
    %c0_116 = arith.constant 0 : index
    %119 = vector.load %arg6[%c0_114, %c13, %c0_115, %c0_116] : memref<1x16x16x128xbf16, #tpu.memory_space<vmem>>, vector<1x1x16x128xbf16>
    %120 = vector.shape_cast %119 : vector<1x1x16x128xbf16> to vector<16x128xbf16>
    %121 = vector.shape_cast %118 : vector<16x128xbf16> to vector<1x1x16x128xbf16>
    tpu.vector_store %arg6[%c0_114, %c13, %c0_115, %c0_116], %121 {strides = array<i32>} : memref<1x16x16x128xbf16, #tpu.memory_space<vmem>>, vector<1x1x16x128xbf16>,
    %c448 = arith.constant 448 : index
    %c0_117 = arith.constant 0 : index
    %122 = vector.load %arg8[%c448, %c0_117] : memref<496x128xf32, #tpu.memory_space<vmem>>, vector<16x128xf32>
    %123 = arith.truncf %122 : vector<16x128xf32> to vector<16x128xbf16>
    %c0_118 = arith.constant 0 : index
    %c14 = arith.constant 14 : index
    %c0_119 = arith.constant 0 : index
    %c0_120 = arith.constant 0 : index
    %124 = vector.load %arg6[%c0_118, %c14, %c0_119, %c0_120] : memref<1x16x16x128xbf16, #tpu.memory_space<vmem>>, vector<1x1x16x128xbf16>
    %125 = vector.shape_cast %124 : vector<1x1x16x128xbf16> to vector<16x128xbf16>
    %126 = vector.shape_cast %123 : vector<16x128xbf16> to vector<1x1x16x128xbf16>
    tpu.vector_store %arg6[%c0_118, %c14, %c0_119, %c0_120], %126 {strides = array<i32>} : memref<1x16x16x128xbf16, #tpu.memory_space<vmem>>, vector<1x1x16x128xbf16>,
    %c480 = arith.constant 480 : index
    %c0_121 = arith.constant 0 : index
    %127 = vector.load %arg8[%c480, %c0_121] : memref<496x128xf32, #tpu.memory_space<vmem>>, vector<16x128xf32>
    %128 = arith.truncf %127 : vector<16x128xf32> to vector<16x128xbf16>
    %c0_122 = arith.constant 0 : index
    %c15 = arith.constant 15 : index
    %c0_123 = arith.constant 0 : index
    %c0_124 = arith.constant 0 : index
    %129 = vector.load %arg6[%c0_122, %c15, %c0_123, %c0_124] : memref<1x16x16x128xbf16, #tpu.memory_space<vmem>>, vector<1x1x16x128xbf16>
    %130 = vector.shape_cast %129 : vector<1x1x16x128xbf16> to vector<16x128xbf16>
    %131 = vector.shape_cast %128 : vector<16x128xbf16> to vector<1x1x16x128xbf16>
    tpu.vector_store %arg6[%c0_122, %c15, %c0_123, %c0_124], %131 {strides = array<i32>} : memref<1x16x16x128xbf16, #tpu.memory_space<vmem>>, vector<1x1x16x128xbf16>,
    return
  }
  func.func @transform_0(%arg0: i32, %arg1: i32) -> (i32, i32, i32, i32) {
    %c0_i32 = arith.constant 0 : i32
    %c0_i32_0 = arith.constant 0 : i32
    %c0_i32_1 = arith.constant 0 : i32
    %c0_i32_2 = arith.constant 0 : i32
    return %arg0, %c0_i32, %c0_i32_0, %c0_i32_1 : i32, i32, i32, i32
  }
  func.func @transform_1(%arg0: i32, %arg1: i32) -> (i32, i32) {
    %c0_i32 = arith.constant 0 : i32
    %c0_i32_0 = arith.constant 0 : i32
    %c0_i32_1 = arith.constant 0 : i32
    return %c0_i32, %c0_i32_0 : i32, i32
  }
  func.func @transform_2(%arg0: i32, %arg1: i32) -> (i32, i32) {
    %c0_i32 = arith.constant 0 : i32
    %c0_i32_0 = arith.constant 0 : i32
    %c0_i32_1 = arith.constant 0 : i32
    return %c0_i32, %c0_i32_0 : i32, i32
  }
  func.func @transform_3(%arg0: i32, %arg1: i32) -> (i32, i32, i32) {
    %c0_i32 = arith.constant 0 : i32
    %c0_i32_0 = arith.constant 0 : i32
    %c0_i32_1 = arith.constant 0 : i32
    return %c0_i32, %c0_i32_0, %arg1 : i32, i32, i32
  }
  func.func @transform_4(%arg0: i32, %arg1: i32) -> (i32, i32, i32, i32) {
    %c0_i32 = arith.constant 0 : i32
    %c0_i32_0 = arith.constant 0 : i32
    %c0_i32_1 = arith.constant 0 : i32
    return %arg0, %c0_i32, %c0_i32_0, %arg1 : i32, i32, i32, i32
  }
}

</mosaic_0001>

<llo_original>
// kernel: tpu_custom_call.1
$region0: #{tpu_custom_call.1}
  #allocation0 [shape = 'u32[]', space=smem, size = 0x4, offset = 0x4, fixed_abs, tag = 'smem constant byte address 0x4 - core index']
  #allocation1 [shape = 'u32[144,128]{1,0:T(1,128)}', space=vmem, size = 0x12000, scoped, tag = 'internal scratch']
  #allocation2 [shape = 'bf16[576,128]{1,0:T(16,128)(2,1)}', space=vmem, size = 0x24000, scoped, tag = 'scratch operand']
  #allocation3 [shape = 'f32[496,128]{1,0:T(8,128)}', space=vmem, size = 0x3e000, scoped, tag = 'scratch operand']
  %s0 = inlined_call_operand.hbm [shape: f32[2,16,16,128], index: 0, kind: input, shape index: {}]
  %s1 = inlined_call_operand.vmem [shape: f32[1,128], index: 1, kind: input, shape index: {}]
  %s2 = inlined_call_operand.vmem [shape: f32[1,128], index: 2, kind: input, shape index: {}]
  %s3 = inlined_call_operand.hbm [shape: bf16[9,128,128], index: 3, kind: input, shape index: {}]
  %s4 = inlined_call_operand.hbm [shape: bf16[2,16,16,128], index: 4, kind: output, shape index: {}]
  %s5 = sld [smem:[#allocation0]]
  $region61: #{tpu_custom_call.1} parent=0
    _
  %s7 = ssub.s32 1, %s5
  %s8 = scalar_select 0, %s7, %s5
  $region1: #{tpu_custom_call.1} parent=0
    #allocation4 [shape = 'u8[262144]{0}', space=vmem, size = 0x40000, scoped, tag = 'input window, operand 0']
    #allocation5 [shape = 's32[2]{0}', space=sflag, size = 0x8, scoped, tag = 'scoped memory for tpu_custom_call.1']
    #allocation6 [shape = 's32[2]{0}', space=sflag, size = 0x8, scoped, tag = 'scoped memory for tpu_custom_call.1']
    #allocation7 [shape = 'u8[294912]{0}', space=vmem, size = 0x48000, scoped, tag = 'input window, operand 3, single buffered']
    #allocation8 [shape = 's32[1]{0}', space=sflag, size = 0x4, scoped, tag = 'scoped memory for tpu_custom_call.1']
    #allocation9 [shape = 'u8[131072]{0}', space=vmem, size = 0x20000, scoped, tag = 'output window, operand 0']
    %9 = vsyncpa [#allocation5], 0
    %s10 = scalar_lea.sflag [#allocation5], 1
    %11 = vsyncpa %s10, 0
    %12 = vsyncpa [#allocation8], 0
    %13 = vsyncpa [#allocation6], 0
    %s14 = scalar_lea.sflag [#allocation6], 1
    %15 = vsyncpa %s14, 0
    loop: start=0, step=1, limit=4
    $region2: #{tpu_custom_call.1} parent=1 // loop_pre_header
      _
    $region3: #{tpu_custom_call.1} parent=1 // loop_header
      %s17 = sphi 0, %s21
      %p18 = scmp.ge.s32.totalorder %s17, 4
      %s24 = sphi 0, %s36
      %s25 = sphi 0, %s32
      %s26 = sphi 0, %s24
      %s27 = sphi 0, %s25
      %s28 = sphi 0, %s26
      %s29 = sphi 0, %s27
      %s39 = sphi 0, %s41
      %s42 = sphi 0, %s39
      %s43 = sphi 0, %s42
      %s59 = sphi 0, %s43
      %s63 = sphi 0, %s63
      %s65 = sphi 0, %s63
      %s66 = sphi 0, %s65
      %s80 = sphi 0, %s66
      %s84 = sphi 0, %s84
      %s86 = sphi 0, %s84
      %s87 = sphi 0, %s86
      %s101 = sphi 0, %s87
      %s107 = sphi 0, %s109
      %s110 = sphi 0, %s107
      %s111 = sphi 0, %s110
      %s127 = sphi 0, %s111
      %s135 = sphi 0, %s137
      %s138 = sphi 0, %s135
      %s139 = sphi 0, %s138
      %s155 = sphi 0, %s139
    $region4: #{tpu_custom_call.1} parent=1 // loop_header_branch
      %20 = sbr.rel (%p18) target = $region8
    $region5: #{tpu_custom_call.1} parent=1 // loop_body
      %s22 = ssub.s32 %s17, 1
      %s23 = ssub.s32 %s17, 2
      %s30 = sadd.s32 1, %s25
      %p31 = scmp.ge.s32.totalorder %s30, 1
      %s32 = scalar_select %p31, 0, %s30
      %s33 = sadd.s32 1, %s24
      %s34 = scalar_select %p31, %s33, %s24
      %p35 = scmp.ge.s32.totalorder %s34, 2
      %s36 = scalar_select %p35, 0, %s34
      %s37 = ssub.s32 %s24, %s36
      %p38 = scmp.eq.s32.totalorder %s37, 0
      %s40 = sadd.s32 %s39, 1
      %s41 = scalar_select %p38, %s39, %s40
      %p44 = pneg %p38
      %p45 = scmp.eq.s32.totalorder %s17, 1
      %p46 = por %p44, %p45
      %p47 = scmp.ne.s32.totalorder %s39, %s42
      %p48 = scmp.eq.s32.totalorder %s17, 0
      %p49 = por %p47, %p48
      %p50 = scmp.ne.s32.totalorder %s39, %s42
      %p51 = scmp.eq.s32.totalorder %s22, 1
      %p52 = por %p50, %p51
      %p53 = scmp.ne.s32.totalorder %s42, %s43
      %p54 = scmp.eq.s32.totalorder %s22, 0
      %p55 = por %p53, %p54
      %p56 = scmp.ne.s32.totalorder %s42, %s43
      %p57 = scmp.eq.s32.totalorder %s23, 1
      %p58 = por %p56, %p57
      %p60 = scmp.ne.s32.totalorder %s43, %s59
      %p61 = scmp.eq.s32.totalorder %s23, 0
      %p62 = por %p60, %p61
      %s64 = sadd.s32 %s63, 1
      %p67 = scmp.eq.s32.totalorder %s17, 1
      %p68 = scmp.ne.s32.totalorder %s63, %s65
      %p69 = scmp.eq.s32.totalorder %s17, 0
      %p70 = por %p68, %p69
      %p71 = scmp.ne.s32.totalorder %s63, %s65
      %p72 = scmp.eq.s32.totalorder %s22, 1
      %p73 = por %p71, %p72
      %p74 = scmp.ne.s32.totalorder %s65, %s66
      %p75 = scmp.eq.s32.totalorder %s22, 0
      %p76 = por %p74, %p75
      %p77 = scmp.ne.s32.totalorder %s65, %s66
      %p78 = scmp.eq.s32.totalorder %s23, 1
      %p79 = por %p77, %p78
      %p81 = scmp.ne.s32.totalorder %s66, %s80
      %p82 = scmp.eq.s32.totalorder %s23, 0
      %p83 = por %p81, %p82
      %s85 = sadd.s32 %s84, 1
      %p88 = scmp.eq.s32.totalorder %s17, 1
      %p89 = scmp.ne.s32.totalorder %s84, %s86
      %p90 = scmp.eq.s32.totalorder %s17, 0
      %p91 = por %p89, %p90
      %p92 = scmp.ne.s32.totalorder %s84, %s86
      %p93 = scmp.eq.s32.totalorder %s22, 1
      %p94 = por %p92, %p93
      %p95 = scmp.ne.s32.totalorder %s86, %s87
      %p96 = scmp.eq.s32.totalorder %s22, 0
      %p97 = por %p95, %p96
      %p98 = scmp.ne.s32.totalorder %s86, %s87
      %p99 = scmp.eq.s32.totalorder %s23, 1
      %p100 = por %p98, %p99
      %p102 = scmp.ne.s32.totalorder %s87, %s101
      %p103 = scmp.eq.s32.totalorder %s23, 0
      %p104 = por %p102, %p103
      %s105 = ssub.s32 %s25, %s32
      %p106 = scmp.eq.s32.totalorder %s105, 0
      %s108 = sadd.s32 %s107, 1
      %s109 = scalar_select %p106, %s107, %s108
      %p112 = pneg %p106
      %p113 = scmp.eq.s32.totalorder %s17, 1
      %p114 = por %p112, %p113
      %p115 = scmp.ne.s32.totalorder %s107, %s110
      %p116 = scmp.eq.s32.totalorder %s17, 0
      %p117 = por %p115, %p116
      %p118 = scmp.ne.s32.totalorder %s107, %s110
      %p119 = scmp.eq.s32.totalorder %s22, 1
      %p120 = por %p118, %p119
      %p121 = scmp.ne.s32.totalorder %s110, %s111
      %p122 = scmp.eq.s32.totalorder %s22, 0
      %p123 = por %p121, %p122
      %p124 = scmp.ne.s32.totalorder %s110, %s111
      %p125 = scmp.eq.s32.totalorder %s23, 1
      %p126 = por %p124, %p125
      %p128 = scmp.ne.s32.totalorder %s111, %s127
      %p129 = scmp.eq.s32.totalorder %s23, 0
      %p130 = por %p128, %p129
      %s131 = ssub.s32 %s24, %s36
      %s132 = ssub.s32 %s25, %s32
      %s133 = sor.u32 %s131, %s132
      %p134 = scmp.eq.s32.totalorder %s133, 0
      %s136 = sadd.s32 %s135, 1
      %s137 = scalar_select %p134, %s135, %s136
      %p140 = pneg %p134
      %p141 = scmp.eq.s32.totalorder %s17, 1
      %p142 = por %p140, %p141
      %p143 = scmp.ne.s32.totalorder %s135, %s138
      %p144 = scmp.eq.s32.totalorder %s17, 0
      %p145 = por %p143, %p144
      %p146 = scmp.ne.s32.totalorder %s135, %s138
      %p147 = scmp.eq.s32.totalorder %s22, 1
      %p148 = por %p146, %p147
      %p149 = scmp.ne.s32.totalorder %s138, %s139
      %p150 = scmp.eq.s32.totalorder %s22, 0
      %p151 = por %p149, %p150
      %p152 = scmp.ne.s32.totalorder %s138, %s139
      %p153 = scmp.eq.s32.totalorder %s23, 1
      %p154 = por %p152, %p153
      %p156 = scmp.ne.s32.totalorder %s139, %s155
      %p157 = scmp.eq.s32.totalorder %s23, 0
      %p158 = por %p156, %p157
      %p159 = scmp.le.s32.totalorder 1, %s17
      %p160 = scmp.lt.s32.totalorder %s17, 3
      %p161 = pnand %p159, %p160
      %p162 = pneg %p161
      // Predicated region
      $region9: #{tpu_custom_call.1} parent=5 // pred_check
        _
      $region10: #{tpu_custom_call.1} parent=5 // pred_check_branch
        %164 = sbr.rel (%p161) target = $region12
      $region11: #{tpu_custom_call.1} parent=5 // pred_region
        %s165 = ssub.s32 %s17, 1
        // Predicated region
        $region13: #{tpu_custom_call.1} parent=11 // pred_check
          %p166 = pneg %p76
        $region14: #{tpu_custom_call.1} parent=11 // pred_check_branch
          %168 = sbr.rel (%p166) target = $region16
        $region15: #{tpu_custom_call.1} parent=11 // pred_region
          _
        $region16: #{tpu_custom_call.1} parent=11 // pred_fallthru
          _
        // Predicated region
        $region17: #{tpu_custom_call.1} parent=11 // pred_check
          %p169 = pneg %p97
        $region18: #{tpu_custom_call.1} parent=11 // pred_check_branch
          %171 = sbr.rel (%p169) target = $region20
        $region19: #{tpu_custom_call.1} parent=11 // pred_region
          _
        $region20: #{tpu_custom_call.1} parent=11 // pred_fallthru
          _
        // Predicated region
        $region21: #{tpu_custom_call.1} parent=11 // pred_check
          %p172 = pneg %p123
        $region22: #{tpu_custom_call.1} parent=11 // pred_check_branch
          %174 = sbr.rel (%p172) target = $region24
        $region23: #{tpu_custom_call.1} parent=11 // pred_region
          %s176 = ssub.s32 9216, 9216
          %177 = vsyncadd [#allocation8], %s176
          %s178 = smul.addr %s27, 64
          %s179 = scalar_lea.hbm %s3, %s178
          %s180 = sshll.u32 [#allocation7], 4
          %s181 = int_to_ptr.vmem [resolvable:$true] %s180
          %186 = dma.hbm_to_vmem [thread:$0]  %s179, 9216, %s181, [#allocation8], 64, 64, 4
        $region24: #{tpu_custom_call.1} parent=11 // pred_fallthru
          _
      $region12: #{tpu_custom_call.1} parent=5 // pred_fallthru
        _
      %p187 = scmp.lt.s32.totalorder %s17, 2
      // Predicated region
      $region25: #{tpu_custom_call.1} parent=5 // pred_check
        %p188 = pneg %p187
      $region26: #{tpu_custom_call.1} parent=5 // pred_check_branch
        %190 = sbr.rel (%p188) target = $region28
      $region27: #{tpu_custom_call.1} parent=5 // pred_region
        // Predicated region
        $region29: #{tpu_custom_call.1} parent=27 // pred_check
          %p191 = pneg %p49
        $region30: #{tpu_custom_call.1} parent=27 // pred_check_branch
          %193 = sbr.rel (%p191) target = $region32
        $region31: #{tpu_custom_call.1} parent=27 // pred_region
          %s194 = sand.u32 %s39, 1
          %s195 = scalar_lea.sflag [#allocation5], %s194
          %s196 = sand.u32 %s39, 1
          %s197 = smul.addr %s196, 256
          %s198 = scalar_lea.vmem [#allocation4], %s197
          %s200 = ssub.s32 4096, 4096
          %201 = vsyncadd %s195, %s200
          %s202 = smul.addr %s24, 32
          %s203 = smul.addr %s202, 128
          %s204 = scalar_lea.hbm %s0, %s203
          %s205 = sshll.u32 %s198, 4
          %s206 = int_to_ptr.vmem [resolvable:$true] %s205
          %211 = dma.hbm_to_vmem [thread:$0]  %s204, 4096, %s206, %s195, 128, 128, 8
        $region32: #{tpu_custom_call.1} parent=27 // pred_fallthru
          _
      $region28: #{tpu_custom_call.1} parent=5 // pred_fallthru
        _
      %p212 = scmp.le.s32.totalorder 1, %s17
      %p213 = scmp.lt.s32.totalorder %s17, 3
      %p214 = pnand %p212, %p213
      %p215 = pneg %p214
      // Predicated region
      $region33: #{tpu_custom_call.1} parent=5 // pred_check
        _
      $region34: #{tpu_custom_call.1} parent=5 // pred_check_branch
        %217 = sbr.rel (%p214) target = $region36
      $region35: #{tpu_custom_call.1} parent=5 // pred_region
        %s218 = ssub.s32 %s17, 1
        %s219 = sand.u32 %s42, 1
        %s220 = scalar_lea.sflag [#allocation5], %s219
        %s221 = sand.u32 %s42, 1
        %s222 = smul.addr %s221, 256
        %s223 = scalar_lea.vmem [#allocation4], %s222
        // Predicated region
        $region37: #{tpu_custom_call.1} parent=35 // pred_check
          %p224 = pneg %p55
        $region38: #{tpu_custom_call.1} parent=35 // pred_check_branch
          %226 = sbr.rel (%p224) target = $region40
        $region39: #{tpu_custom_call.1} parent=35 // pred_region
          %227 = dma.done %s220, 4096
        $region40: #{tpu_custom_call.1} parent=35 // pred_fallthru
          _
        // Predicated region
        $region41: #{tpu_custom_call.1} parent=35 // pred_check
          %p228 = pneg %p123
        $region42: #{tpu_custom_call.1} parent=35 // pred_check_branch
          %230 = sbr.rel (%p228) target = $region44
        $region43: #{tpu_custom_call.1} parent=35 // pred_region
          %231 = dma.done [#allocation8], 9216
        $region44: #{tpu_custom_call.1} parent=35 // pred_fallthru
          _
        %s232 = sand.u32 %s42, 1
        %s233 = scalar_lea.sflag [#allocation5], %s232
        %s234 = sand.u32 %s42, 1
        %s235 = smul.addr %s234, 256
        %s236 = scalar_lea.vmem [#allocation4], %s235
        %p237 = pneg %p55
        %p238 = pneg %p52
        %p239 = pneg %p76
        %p240 = pneg %p73
        %p241 = pneg %p97
        %p242 = pneg %p94
        %p243 = pneg %p123
        %p244 = pneg %p120
        %p245 = pneg %p151
        %p246 = pneg %p148
        %s247 = sand.u32 %s138, 1
        %s248 = scalar_lea.sflag [#allocation6], %s247
        %s249 = sand.u32 %s138, 1
        %s250 = smul.addr %s249, 128
        %s251 = scalar_lea.vmem [#allocation9], %s250
        %p253 = scmp.eq.s32.totalorder %s27, 0
        // Predicated region
        $region45: #{tpu_custom_call.1} parent=35 // pred_check
          %p254 = pneg %p253
        $region46: #{tpu_custom_call.1} parent=35 // pred_check_branch
          %256 = sbr.rel (%p254) target = $region48
        $region47: #{tpu_custom_call.1} parent=35 // pred_region
          %257 = vst [vmem:[#allocation2] sm:$0xff] 0
          %258 = vst [vmem:[#allocation2 + $0x8] sm:$0xff] 0
          %259 = vst [vmem:[#allocation2 + $0x10] sm:$0xff] 0
          %260 = vst [vmem:[#allocation2 + $0x18] sm:$0xff] 0
          %261 = vst [vmem:[#allocation2 + $0x20] sm:$0xff] 0
          %262 = vst [vmem:[#allocation2 + $0x28] sm:$0xff] 0
          %263 = vst [vmem:[#allocation2 + $0x30] sm:$0xff] 0
          %264 = vst [vmem:[#allocation2 + $0x38] sm:$0xff] 0
          %265 = vst [vmem:[#allocation2 + $0x40] sm:$0xff] 0
          %266 = vst [vmem:[#allocation2 + $0x48] sm:$0xff] 0
          %267 = vst [vmem:[#allocation2 + $0x50] sm:$0xff] 0
          %268 = vst [vmem:[#allocation2 + $0x58] sm:$0xff] 0
          %269 = vst [vmem:[#allocation2 + $0x60] sm:$0xff] 0
          %270 = vst [vmem:[#allocation2 + $0x68] sm:$0xff] 0
          %271 = vst [vmem:[#allocation2 + $0x70] sm:$0xff] 0
          %272 = vst [vmem:[#allocation2 + $0x78] sm:$0xff] 0
          %273 = vst [vmem:[#allocation2 + $0x80] sm:$0xff] 0
          %274 = vst [vmem:[#allocation2 + $0x88] sm:$0xff] 0
          %275 = vst [vmem:[#allocation2 + $0x90] sm:$0xff] 0
          %276 = vst [vmem:[#allocation2 + $0x98] sm:$0xff] 0
          %277 = vst [vmem:[#allocation2 + $0xa0] sm:$0xff] 0
          %278 = vst [vmem:[#allocation2 + $0xa8] sm:$0xff] 0
          %279 = vst [vmem:[#allocation2 + $0xb0] sm:$0xff] 0
          %280 = vst [vmem:[#allocation2 + $0xb8] sm:$0xff] 0
          %281 = vst [vmem:[#allocation2 + $0xc0] sm:$0xff] 0
          %282 = vst [vmem:[#allocation2 + $0xc8] sm:$0xff] 0
          %283 = vst [vmem:[#allocation2 + $0xd0] sm:$0xff] 0
          %284 = vst [vmem:[#allocation2 + $0xd8] sm:$0xff] 0
          %285 = vst [vmem:[#allocation2 + $0xe0] sm:$0xff] 0
          %286 = vst [vmem:[#allocation2 + $0xe8] sm:$0xff] 0
          %287 = vst [vmem:[#allocation2 + $0xf0] sm:$0xff] 0
          %288 = vst [vmem:[#allocation2 + $0xf8] sm:$0xff] 0
          %289 = vst [vmem:[#allocation2 + $0x100] sm:$0xff] 0
          %290 = vst [vmem:[#allocation2 + $0x108] sm:$0xff] 0
          %291 = vst [vmem:[#allocation2 + $0x110] sm:$0xff] 0
          %292 = vst [vmem:[#allocation2 + $0x118] sm:$0xff] 0
          %v293 = vld [vmem:[%s223] sm:$0xff]
          %v294 = vld [vmem:[%s223 + $0x8] sm:$0xff]
          %v295 = vld [vmem:[%s223 + $0x10] sm:$0xff]
          %v296 = vld [vmem:[%s223 + $0x18] sm:$0xff]
          %v297 = vld [vmem:[%s223 + $0x20] sm:$0xff]
          %v298 = vld [vmem:[%s223 + $0x28] sm:$0xff]
          %v299 = vld [vmem:[%s223 + $0x30] sm:$0xff]
          %v300 = vld [vmem:[%s223 + $0x38] sm:$0xff]
          %v301 = vld [vmem:[%s223 + $0x40] sm:$0xff]
          %v302 = vld [vmem:[%s223 + $0x48] sm:$0xff]
          %v303 = vld [vmem:[%s223 + $0x50] sm:$0xff]
          %v304 = vld [vmem:[%s223 + $0x58] sm:$0xff]
          %v305 = vld [vmem:[%s223 + $0x60] sm:$0xff]
          %v306 = vld [vmem:[%s223 + $0x68] sm:$0xff]
          %v307 = vld [vmem:[%s223 + $0x70] sm:$0xff]
          %v308 = vld [vmem:[%s223 + $0x78] sm:$0xff]
          %v309 = vld [vmem:[%s223 + $0x80] sm:$0xff]
          %v310 = vld [vmem:[%s223 + $0x88] sm:$0xff]
          %v311 = vld [vmem:[%s223 + $0x90] sm:$0xff]
          %v312 = vld [vmem:[%s223 + $0x98] sm:$0xff]
          %v313 = vld [vmem:[%s223 + $0xa0] sm:$0xff]
          %v314 = vld [vmem:[%s223 + $0xa8] sm:$0xff]
          %v315 = vld [vmem:[%s223 + $0xb0] sm:$0xff]
          %v316 = vld [vmem:[%s223 + $0xb8] sm:$0xff]
          %v317 = vld [vmem:[%s223 + $0xc0] sm:$0xff]
          %v318 = vld [vmem:[%s223 + $0xc8] sm:$0xff]
          %v319 = vld [vmem:[%s223 + $0xd0] sm:$0xff]
          %v320 = vld [vmem:[%s223 + $0xd8] sm:$0xff]
          %v321 = vld [vmem:[%s223 + $0xe0] sm:$0xff]
          %v322 = vld [vmem:[%s223 + $0xe8] sm:$0xff]
          %v323 = vld [vmem:[%s223 + $0xf0] sm:$0xff]
          %v324 = vld [vmem:[%s223 + $0xf8] sm:$0xff]
          %v325 = vld [vmem:[%s1] sm:$0x1]
          %v327 = vlaneseq
          %v328 = vshrl.u32 %v327, 7
          %v329 = vsub.s32 0, %v328
          %v330 = vrot.slane %v325, %v329
          %v332 = vmul.f32 %v293, %v330
          %v333 = vmul.f32 %v294, %v330
          %v334 = vmul.f32 %v295, %v330
          %v335 = vmul.f32 %v296, %v330
          %v336 = vmul.f32 %v297, %v330
          %v337 = vmul.f32 %v298, %v330
          %v338 = vmul.f32 %v299, %v330
          %v339 = vmul.f32 %v300, %v330
          %v340 = vmul.f32 %v301, %v330
          %v341 = vmul.f32 %v302, %v330
          %v342 = vmul.f32 %v303, %v330
          %v343 = vmul.f32 %v304, %v330
          %v344 = vmul.f32 %v305, %v330
          %v345 = vmul.f32 %v306, %v330
          %v346 = vmul.f32 %v307, %v330
          %v347 = vmul.f32 %v308, %v330
          %v348 = vmul.f32 %v309, %v330
          %v349 = vmul.f32 %v310, %v330
          %v350 = vmul.f32 %v311, %v330
          %v351 = vmul.f32 %v312, %v330
          %v352 = vmul.f32 %v313, %v330
          %v353 = vmul.f32 %v314, %v330
          %v354 = vmul.f32 %v315, %v330
          %v355 = vmul.f32 %v316, %v330
          %v356 = vmul.f32 %v317, %v330
          %v357 = vmul.f32 %v318, %v330
          %v358 = vmul.f32 %v319, %v330
          %v359 = vmul.f32 %v320, %v330
          %v360 = vmul.f32 %v321, %v330
          %v361 = vmul.f32 %v322, %v330
          %v362 = vmul.f32 %v323, %v330
          %v363 = vmul.f32 %v324, %v330
          %v364 = vld [vmem:[%s2] sm:$0x1]
          %v366 = vlaneseq
          %v367 = vshrl.u32 %v366, 7
          %v368 = vsub.s32 0, %v367
          %v369 = vrot.slane %v364, %v368
          %v371 = vadd.f32 %v332, %v369
          %v372 = vadd.f32 %v333, %v369
          %v373 = vadd.f32 %v334, %v369
          %v374 = vadd.f32 %v335, %v369
          %v375 = vadd.f32 %v336, %v369
          %v376 = vadd.f32 %v337, %v369
          %v377 = vadd.f32 %v338, %v369
          %v378 = vadd.f32 %v339, %v369
          %v379 = vadd.f32 %v340, %v369
          %v380 = vadd.f32 %v341, %v369
          %v381 = vadd.f32 %v342, %v369
          %v382 = vadd.f32 %v343, %v369
          %v383 = vadd.f32 %v344, %v369
          %v384 = vadd.f32 %v345, %v369
          %v385 = vadd.f32 %v346, %v369
          %v386 = vadd.f32 %v347, %v369
          %v387 = vadd.f32 %v348, %v369
          %v388 = vadd.f32 %v349, %v369
          %v389 = vadd.f32 %v350, %v369
          %v390 = vadd.f32 %v351, %v369
          %v391 = vadd.f32 %v352, %v369
          %v392 = vadd.f32 %v353, %v369
          %v393 = vadd.f32 %v354, %v369
          %v394 = vadd.f32 %v355, %v369
          %v395 = vadd.f32 %v356, %v369
          %v396 = vadd.f32 %v357, %v369
          %v397 = vadd.f32 %v358, %v369
          %v398 = vadd.f32 %v359, %v369
          %v399 = vadd.f32 %v360, %v369
          %v400 = vadd.f32 %v361, %v369
          %v401 = vadd.f32 %v362, %v369
          %v402 = vadd.f32 %v363, %v369
          %vm403 = vcmp.ge.f32.partialorder %v371, 0.0
          %vm404 = vcmp.ge.f32.partialorder %v372, 0.0
          %vm405 = vcmp.ge.f32.partialorder %v373, 0.0
          %vm406 = vcmp.ge.f32.partialorder %v374, 0.0
          %vm407 = vcmp.ge.f32.partialorder %v375, 0.0
          %vm408 = vcmp.ge.f32.partialorder %v376, 0.0
          %vm409 = vcmp.ge.f32.partialorder %v377, 0.0
          %vm410 = vcmp.ge.f32.partialorder %v378, 0.0
          %vm411 = vcmp.ge.f32.partialorder %v379, 0.0
          %vm412 = vcmp.ge.f32.partialorder %v380, 0.0
          %vm413 = vcmp.ge.f32.partialorder %v381, 0.0
          %vm414 = vcmp.ge.f32.partialorder %v382, 0.0
          %vm415 = vcmp.ge.f32.partialorder %v383, 0.0
          %vm416 = vcmp.ge.f32.partialorder %v384, 0.0
          %vm417 = vcmp.ge.f32.partialorder %v385, 0.0
          %vm418 = vcmp.ge.f32.partialorder %v386, 0.0
          %vm419 = vcmp.ge.f32.partialorder %v387, 0.0
          %vm420 = vcmp.ge.f32.partialorder %v388, 0.0
          %vm421 = vcmp.ge.f32.partialorder %v389, 0.0
          %vm422 = vcmp.ge.f32.partialorder %v390, 0.0
          %vm423 = vcmp.ge.f32.partialorder %v391, 0.0
          %vm424 = vcmp.ge.f32.partialorder %v392, 0.0
          %vm425 = vcmp.ge.f32.partialorder %v393, 0.0
          %vm426 = vcmp.ge.f32.partialorder %v394, 0.0
          %vm427 = vcmp.ge.f32.partialorder %v395, 0.0
          %vm428 = vcmp.ge.f32.partialorder %v396, 0.0
          %vm429 = vcmp.ge.f32.partialorder %v397, 0.0
          %vm430 = vcmp.ge.f32.partialorder %v398, 0.0
          %vm431 = vcmp.ge.f32.partialorder %v399, 0.0
          %vm432 = vcmp.ge.f32.partialorder %v400, 0.0
          %vm433 = vcmp.ge.f32.partialorder %v401, 0.0
          %vm434 = vcmp.ge.f32.partialorder %v402, 0.0
          %v435 = vmul.f32 %v371, 0.01
          %v436 = vmul.f32 %v372, 0.01
          %v437 = vmul.f32 %v373, 0.01
          %v438 = vmul.f32 %v374, 0.01
          %v439 = vmul.f32 %v375, 0.01
          %v440 = vmul.f32 %v376, 0.01
          %v441 = vmul.f32 %v377, 0.01
          %v442 = vmul.f32 %v378, 0.01
          %v443 = vmul.f32 %v379, 0.01
          %v444 = vmul.f32 %v380, 0.01
          %v445 = vmul.f32 %v381, 0.01
          %v446 = vmul.f32 %v382, 0.01
          %v447 = vmul.f32 %v383, 0.01
          %v448 = vmul.f32 %v384, 0.01
          %v449 = vmul.f32 %v385, 0.01
          %v450 = vmul.f32 %v386, 0.01
          %v451 = vmul.f32 %v387, 0.01
          %v452 = vmul.f32 %v388, 0.01
          %v453 = vmul.f32 %v389, 0.01
          %v454 = vmul.f32 %v390, 0.01
          %v455 = vmul.f32 %v391, 0.01
          %v456 = vmul.f32 %v392, 0.01
          %v457 = vmul.f32 %v393, 0.01
          %v458 = vmul.f32 %v394, 0.01
          %v459 = vmul.f32 %v395, 0.01
          %v460 = vmul.f32 %v396, 0.01
          %v461 = vmul.f32 %v397, 0.01
          %v462 = vmul.f32 %v398, 0.01
          %v463 = vmul.f32 %v399, 0.01
          %v464 = vmul.f32 %v400, 0.01
          %v465 = vmul.f32 %v401, 0.01
          %v466 = vmul.f32 %v402, 0.01
          %v467 = vsel %vm403, %v371, %v435
          %v468 = vsel %vm404, %v372, %v436
          %v469 = vsel %vm405, %v373, %v437
          %v470 = vsel %vm406, %v374, %v438
          %v471 = vsel %vm407, %v375, %v439
          %v472 = vsel %vm408, %v376, %v440
          %v473 = vsel %vm409, %v377, %v441
          %v474 = vsel %vm410, %v378, %v442
          %v475 = vsel %vm411, %v379, %v443
          %v476 = vsel %vm412, %v380, %v444
          %v477 = vsel %vm413, %v381, %v445
          %v478 = vsel %vm414, %v382, %v446
          %v479 = vsel %vm415, %v383, %v447
          %v480 = vsel %vm416, %v384, %v448
          %v481 = vsel %vm417, %v385, %v449
          %v482 = vsel %vm418, %v386, %v450
          %v483 = vsel %vm419, %v387, %v451
          %v484 = vsel %vm420, %v388, %v452
          %v485 = vsel %vm421, %v389, %v453
          %v486 = vsel %vm422, %v390, %v454
          %v487 = vsel %vm423, %v391, %v455
          %v488 = vsel %vm424, %v392, %v456
          %v489 = vsel %vm425, %v393, %v457
          %v490 = vsel %vm426, %v394, %v458
          %v491 = vsel %vm427, %v395, %v459
          %v492 = vsel %vm428, %v396, %v460
          %v493 = vsel %vm429, %v397, %v461
          %v494 = vsel %vm430, %v398, %v462
          %v495 = vsel %vm431, %v399, %v463
          %v496 = vsel %vm432, %v400, %v464
          %v497 = vsel %vm433, %v401, %v465
          %v498 = vsel %vm434, %v402, %v466
          %v499 = vpack.c.bf16 %v468, %v467
          %v500 = vpack.c.bf16 %v470, %v469
          %v501 = vpack.c.bf16 %v472, %v471
          %v502 = vpack.c.bf16 %v474, %v473
          %v503 = vpack.c.bf16 %v476, %v475
          %v504 = vpack.c.bf16 %v478, %v477
          %v505 = vpack.c.bf16 %v480, %v479
          %v506 = vpack.c.bf16 %v482, %v481
          %v507 = vpack.c.bf16 %v484, %v483
          %v508 = vpack.c.bf16 %v486, %v485
          %v509 = vpack.c.bf16 %v488, %v487
          %v510 = vpack.c.bf16 %v490, %v489
          %v511 = vpack.c.bf16 %v492, %v491
          %v512 = vpack.c.bf16 %v494, %v493
          %v513 = vpack.c.bf16 %v496, %v495
          %v514 = vpack.c.bf16 %v498, %v497
          %v516 = vshrl.u32 %v499, 16
          %v518 = vrot.slane %v516, 7
          %v519 = vshll.u32 %v499, 16
          %v521 = vor.u32 %v518, %v519
          %vm524 = vcmask 1047552
          %vm525 = vsmask.f32 7938
          %vm526 = vmand %vm524, %vm525
          %v527 = vld [vmem:[#allocation2 + $0x10] sm:$0xff]
          %v528 = vsel %vm526, %v521, %v527
          %529 = vst [vmem:[#allocation2 + $0x10] sm:$0xff] %v528
          %vm530 = vcmask 1040384
          %vm531 = vsmask.f32 256
          %vm532 = vmand %vm530, %vm531
          %v533 = vld [vmem:[#allocation2 + $0x18] sm:$0x1]
          %v534 = vsel %vm532, %v518, %v533
          %535 = vst [vmem:[#allocation2 + $0x18] sm:$0x1] %v534
          %v537 = vshrl.u32 %v500, 16
          %v539 = vrot.slane %v537, 7
          %v540 = vshll.u32 %v500, 16
          %v542 = vor.u32 %v539, %v540
          %v545 = vld [vmem:[#allocation2 + $0x20] sm:$0xff]
          %v546 = vsel %vm526, %v542, %v545
          %547 = vst [vmem:[#allocation2 + $0x20] sm:$0xff] %v546
          %v548 = vld [vmem:[#allocation2 + $0x28] sm:$0x1]
          %v549 = vsel %vm532, %v539, %v548
          %550 = vst [vmem:[#allocation2 + $0x28] sm:$0x1] %v549
          %v552 = vshrl.u32 %v501, 16
          %v554 = vrot.slane %v552, 7
          %v555 = vshll.u32 %v501, 16
          %v557 = vor.u32 %v554, %v555
          %v560 = vld [vmem:[#allocation2 + $0x30] sm:$0xff]
          %v561 = vsel %vm526, %v557, %v560
          %562 = vst [vmem:[#allocation2 + $0x30] sm:$0xff] %v561
          %v563 = vld [vmem:[#allocation2 + $0x38] sm:$0x1]
          %v564 = vsel %vm532, %v554, %v563
          %565 = vst [vmem:[#allocation2 + $0x38] sm:$0x1] %v564
          %v567 = vshrl.u32 %v502, 16
          %v569 = vrot.slane %v567, 7
          %v570 = vshll.u32 %v502, 16
          %v572 = vor.u32 %v569, %v570
          %v575 = vld [vmem:[#allocation2 + $0x40] sm:$0xff]
          %v576 = vsel %vm526, %v572, %v575
          %577 = vst [vmem:[#allocation2 + $0x40] sm:$0xff] %v576
          %v578 = vld [vmem:[#allocation2 + $0x48] sm:$0x1]
          %v579 = vsel %vm532, %v569, %v578
          %580 = vst [vmem:[#allocation2 + $0x48] sm:$0x1] %v579
          %v582 = vshrl.u32 %v503, 16
          %v584 = vrot.slane %v582, 7
          %v585 = vshll.u32 %v503, 16
          %v587 = vor.u32 %v584, %v585
          %v590 = vld [vmem:[#allocation2 + $0x50] sm:$0xff]
          %v591 = vsel %vm526, %v587, %v590
          %592 = vst [vmem:[#allocation2 + $0x50] sm:$0xff] %v591
          %v593 = vld [vmem:[#allocation2 + $0x58] sm:$0x1]
          %v594 = vsel %vm532, %v584, %v593
          %595 = vst [vmem:[#allocation2 + $0x58] sm:$0x1] %v594
          %v597 = vshrl.u32 %v504, 16
          %v599 = vrot.slane %v597, 7
          %v600 = vshll.u32 %v504, 16
          %v602 = vor.u32 %v599, %v600
          %v605 = vld [vmem:[#allocation2 + $0x60] sm:$0xff]
          %v606 = vsel %vm526, %v602, %v605
          %607 = vst [vmem:[#allocation2 + $0x60] sm:$0xff] %v606
          %v608 = vld [vmem:[#allocation2 + $0x68] sm:$0x1]
          %v609 = vsel %vm532, %v599, %v608
          %610 = vst [vmem:[#allocation2 + $0x68] sm:$0x1] %v609
          %v612 = vshrl.u32 %v505, 16
          %v614 = vrot.slane %v612, 7
          %v615 = vshll.u32 %v505, 16
          %v617 = vor.u32 %v614, %v615
          %v620 = vld [vmem:[#allocation2 + $0x70] sm:$0xff]
          %v621 = vsel %vm526, %v617, %v620
          %622 = vst [vmem:[#allocation2 + $0x70] sm:$0xff] %v621
          %v623 = vld [vmem:[#allocation2 + $0x78] sm:$0x1]
          %v624 = vsel %vm532, %v614, %v623
          %625 = vst [vmem:[#allocation2 + $0x78] sm:$0x1] %v624
          %v627 = vshrl.u32 %v506, 16
          %v629 = vrot.slane %v627, 7
          %v630 = vshll.u32 %v506, 16
          %v632 = vor.u32 %v629, %v630
          %v635 = vld [vmem:[#allocation2 + $0x80] sm:$0xff]
          %v636 = vsel %vm526, %v632, %v635
          %637 = vst [vmem:[#allocation2 + $0x80] sm:$0xff] %v636
          %v638 = vld [vmem:[#allocation2 + $0x88] sm:$0x1]
          %v639 = vsel %vm532, %v629, %v638
          %640 = vst [vmem:[#allocation2 + $0x88] sm:$0x1] %v639
          %v642 = vshrl.u32 %v507, 16
          %v644 = vrot.slane %v642, 7
          %v645 = vshll.u32 %v507, 16
          %v647 = vor.u32 %v644, %v645
          %v650 = vld [vmem:[#allocation2 + $0x90] sm:$0xff]
          %v651 = vsel %vm526, %v647, %v650
          %652 = vst [vmem:[#allocation2 + $0x90] sm:$0xff] %v651
          %v653 = vld [vmem:[#allocation2 + $0x98] sm:$0x1]
          %v654 = vsel %vm532, %v644, %v653
          %655 = vst [vmem:[#allocation2 + $0x98] sm:$0x1] %v654
          %v657 = vshrl.u32 %v508, 16
          %v659 = vrot.slane %v657, 7
          %v660 = vshll.u32 %v508, 16
          %v662 = vor.u32 %v659, %v660
          %v665 = vld [vmem:[#allocation2 + $0xa0] sm:$0xff]
          %v666 = vsel %vm526, %v662, %v665
          %667 = vst [vmem:[#allocation2 + $0xa0] sm:$0xff] %v666
          %v668 = vld [vmem:[#allocation2 + $0xa8] sm:$0x1]
          %v669 = vsel %vm532, %v659, %v668
          %670 = vst [vmem:[#allocation2 + $0xa8] sm:$0x1] %v669
          %v672 = vshrl.u32 %v509, 16
          %v674 = vrot.slane %v672, 7
          %v675 = vshll.u32 %v509, 16
          %v677 = vor.u32 %v674, %v675
          %v680 = vld [vmem:[#allocation2 + $0xb0] sm:$0xff]
          %v681 = vsel %vm526, %v677, %v680
          %682 = vst [vmem:[#allocation2 + $0xb0] sm:$0xff] %v681
          %v683 = vld [vmem:[#allocation2 + $0xb8] sm:$0x1]
          %v684 = vsel %vm532, %v674, %v683
          %685 = vst [vmem:[#allocation2 + $0xb8] sm:$0x1] %v684
          %v687 = vshrl.u32 %v510, 16
          %v689 = vrot.slane %v687, 7
          %v690 = vshll.u32 %v510, 16
          %v692 = vor.u32 %v689, %v690
          %v695 = vld [vmem:[#allocation2 + $0xc0] sm:$0xff]
          %v696 = vsel %vm526, %v692, %v695
          %697 = vst [vmem:[#allocation2 + $0xc0] sm:$0xff] %v696
          %v698 = vld [vmem:[#allocation2 + $0xc8] sm:$0x1]
          %v699 = vsel %vm532, %v689, %v698
          %700 = vst [vmem:[#allocation2 + $0xc8] sm:$0x1] %v699
          %v702 = vshrl.u32 %v511, 16
          %v704 = vrot.slane %v702, 7
          %v705 = vshll.u32 %v511, 16
          %v707 = vor.u32 %v704, %v705
          %v710 = vld [vmem:[#allocation2 + $0xd0] sm:$0xff]
          %v711 = vsel %vm526, %v707, %v710
          %712 = vst [vmem:[#allocation2 + $0xd0] sm:$0xff] %v711
          %v713 = vld [vmem:[#allocation2 + $0xd8] sm:$0x1]
          %v714 = vsel %vm532, %v704, %v713
          %715 = vst [vmem:[#allocation2 + $0xd8] sm:$0x1] %v714
          %v717 = vshrl.u32 %v512, 16
          %v719 = vrot.slane %v717, 7
          %v720 = vshll.u32 %v512, 16
          %v722 = vor.u32 %v719, %v720
          %v725 = vld [vmem:[#allocation2 + $0xe0] sm:$0xff]
          %v726 = vsel %vm526, %v722, %v725
          %727 = vst [vmem:[#allocation2 + $0xe0] sm:$0xff] %v726
          %v728 = vld [vmem:[#allocation2 + $0xe8] sm:$0x1]
          %v729 = vsel %vm532, %v719, %v728
          %730 = vst [vmem:[#allocation2 + $0xe8] sm:$0x1] %v729
          %v732 = vshrl.u32 %v513, 16
          %v734 = vrot.slane %v732, 7
          %v735 = vshll.u32 %v513, 16
          %v737 = vor.u32 %v734, %v735
          %v740 = vld [vmem:[#allocation2 + $0xf0] sm:$0xff]
          %v741 = vsel %vm526, %v737, %v740
          %742 = vst [vmem:[#allocation2 + $0xf0] sm:$0xff] %v741
          %v743 = vld [vmem:[#allocation2 + $0xf8] sm:$0x1]
          %v744 = vsel %vm532, %v734, %v743
          %745 = vst [vmem:[#allocation2 + $0xf8] sm:$0x1] %v744
          %v747 = vshrl.u32 %v514, 16
          %v749 = vrot.slane %v747, 7
          %v750 = vshll.u32 %v514, 16
          %v752 = vor.u32 %v749, %v750
          %v755 = vld [vmem:[#allocation2 + $0x100] sm:$0xff]
          %v756 = vsel %vm526, %v752, %v755
          %757 = vst [vmem:[#allocation2 + $0x100] sm:$0xff] %v756
          %v758 = vld [vmem:[#allocation2 + $0x108] sm:$0x1]
          %v759 = vsel %vm532, %v749, %v758
          %760 = vst [vmem:[#allocation2 + $0x108] sm:$0x1] %v759
        $region48: #{tpu_custom_call.1} parent=35 // pred_fallthru
          _
        %v761 = vld [vmem:[#allocation2] sm:$0xff]
        %v762 = vld [vmem:[#allocation2 + $0x8] sm:$0xff]
        %v763 = vld [vmem:[#allocation2 + $0x10] sm:$0xff]
        %v764 = vld [vmem:[#allocation2 + $0x18] sm:$0xff]
        %v765 = vld [vmem:[#allocation2 + $0x20] sm:$0xff]
        %v766 = vld [vmem:[#allocation2 + $0x28] sm:$0xff]
        %v767 = vld [vmem:[#allocation2 + $0x30] sm:$0xff]
        %v768 = vld [vmem:[#allocation2 + $0x38] sm:$0xff]
        %v769 = vld [vmem:[#allocation2 + $0x40] sm:$0xff]
        %v770 = vld [vmem:[#allocation2 + $0x48] sm:$0xff]
        %v771 = vld [vmem:[#allocation2 + $0x50] sm:$0xff]
        %v772 = vld [vmem:[#allocation2 + $0x58] sm:$0xff]
        %v773 = vld [vmem:[#allocation2 + $0x60] sm:$0xff]
        %v774 = vld [vmem:[#allocation2 + $0x68] sm:$0xff]
        %v775 = vld [vmem:[#allocation2 + $0x70] sm:$0xff]
        %v776 = vld [vmem:[#allocation2 + $0x78] sm:$0xff]
        %v777 = vld [vmem:[#allocation2 + $0x80] sm:$0xff]
        %v778 = vld [vmem:[#allocation2 + $0x88] sm:$0xff]
        %v779 = vld [vmem:[#allocation2 + $0x90] sm:$0xff]
        %v780 = vld [vmem:[#allocation2 + $0x98] sm:$0xff]
        %v781 = vld [vmem:[#allocation2 + $0xa0] sm:$0xff]
        %v782 = vld [vmem:[#allocation2 + $0xa8] sm:$0xff]
        %v783 = vld [vmem:[#allocation2 + $0xb0] sm:$0xff]
        %v784 = vld [vmem:[#allocation2 + $0xb8] sm:$0xff]
        %v785 = vld [vmem:[#allocation2 + $0xc0] sm:$0xff]
        %v786 = vld [vmem:[#allocation2 + $0xc8] sm:$0xff]
        %v787 = vld [vmem:[#allocation2 + $0xd0] sm:$0xff]
        %v788 = vld [vmem:[#allocation2 + $0xd8] sm:$0xff]
        %v789 = vld [vmem:[#allocation2 + $0xe0] sm:$0xff]
        %v790 = vld [vmem:[#allocation2 + $0xe8] sm:$0xff]
        %v791 = vld [vmem:[#allocation2 + $0xf0] sm:$0xff]
        %v792 = vld [vmem:[#allocation7] sm:$0xf]
        %v793 = vld [vmem:[#allocation7 + $0x4] sm:$0xf]
        %v794 = vld [vmem:[#allocation7 + $0x8] sm:$0xf]
        %v795 = vld [vmem:[#allocation7 + $0xc] sm:$0xf]
        %v796 = vld [vmem:[#allocation7 + $0x10] sm:$0xf]
        %v797 = vld [vmem:[#allocation7 + $0x14] sm:$0xf]
        %v798 = vld [vmem:[#allocation7 + $0x18] sm:$0xf]
        %v799 = vld [vmem:[#allocation7 + $0x1c] sm:$0xf]
        %v800 = vld [vmem:[#allocation7 + $0x20] sm:$0xf]
        %v801 = vld [vmem:[#allocation7 + $0x24] sm:$0xf]
        %v802 = vld [vmem:[#allocation7 + $0x28] sm:$0xf]
        %v803 = vld [vmem:[#allocation7 + $0x2c] sm:$0xf]
        %v804 = vld [vmem:[#allocation7 + $0x30] sm:$0xf]
        %v805 = vld [vmem:[#allocation7 + $0x34] sm:$0xf]
        %v806 = vld [vmem:[#allocation7 + $0x38] sm:$0xf]
        %v807 = vld [vmem:[#allocation7 + $0x3c] sm:$0xf]
        %v808 = vld [vmem:[#allocation2 + $0xf8] sm:$0x1]
        %s809 = scalar_lea.vmem [#allocation7], 64
        %v810 = vld [vmem:[%s809] sm:$0xf]
        %v811 = vld [vmem:[%s809 + $0x4] sm:$0xf]
        %v812 = vld [vmem:[%s809 + $0x8] sm:$0xf]
        %v813 = vld [vmem:[%s809 + $0xc] sm:$0xf]
        %v814 = vld [vmem:[%s809 + $0x10] sm:$0xf]
        %v815 = vld [vmem:[%s809 + $0x14] sm:$0xf]
        %v816 = vld [vmem:[%s809 + $0x18] sm:$0xf]
        %v817 = vld [vmem:[%s809 + $0x1c] sm:$0xf]
        %v818 = vld [vmem:[%s809 + $0x20] sm:$0xf]
        %v819 = vld [vmem:[%s809 + $0x24] sm:$0xf]
        %v820 = vld [vmem:[%s809 + $0x28] sm:$0xf]
        %v821 = vld [vmem:[%s809 + $0x2c] sm:$0xf]
        %v822 = vld [vmem:[%s809 + $0x30] sm:$0xf]
        %v823 = vld [vmem:[%s809 + $0x34] sm:$0xf]
        %v824 = vld [vmem:[%s809 + $0x38] sm:$0xf]
        %v825 = vld [vmem:[%s809 + $0x3c] sm:$0xf]
        %vm826 = vsmask.f32 7424
        %v828 = vshrl.u32 %v761, 16
        %v830 = vshll.u32 %v761, 16
        %v832 = vrot.slane %v830, 1
        %v833 = vor.u32 %v828, %v832
        %v835 = vshll.u32 %v762, 16
        %v837 = vrot.slane %v835, 1
        %v838 = vsel %vm826, %v833, %v837
        %v839 = vshrl.u32 %v762, 16
        %v841 = vor.u32 %v839, %v837
        %v843 = vshll.u32 %v763, 16
        %v845 = vrot.slane %v843, 1
        %v846 = vsel %vm826, %v841, %v845
        %v847 = vshrl.u32 %v763, 16
        %v849 = vor.u32 %v847, %v845
        %v851 = vshll.u32 %v764, 16
        %v853 = vrot.slane %v851, 1
        %v854 = vsel %vm826, %v849, %v853
        %v855 = vshrl.u32 %v764, 16
        %v857 = vor.u32 %v855, %v853
        %v859 = vshll.u32 %v765, 16
        %v861 = vrot.slane %v859, 1
        %v862 = vsel %vm826, %v857, %v861
        %v863 = vshrl.u32 %v765, 16
        %v865 = vor.u32 %v863, %v861
        %v867 = vshll.u32 %v766, 16
        %v869 = vrot.slane %v867, 1
        %v870 = vsel %vm826, %v865, %v869
        %v871 = vshrl.u32 %v766, 16
        %v873 = vor.u32 %v871, %v869
        %v875 = vshll.u32 %v767, 16
        %v877 = vrot.slane %v875, 1
        %v878 = vsel %vm826, %v873, %v877
        %v879 = vshrl.u32 %v767, 16
        %v881 = vor.u32 %v879, %v877
        %v883 = vshll.u32 %v768, 16
        %v885 = vrot.slane %v883, 1
        %v886 = vsel %vm826, %v881, %v885
        %v887 = vshrl.u32 %v768, 16
        %v889 = vor.u32 %v887, %v885
        %v891 = vshll.u32 %v769, 16
        %v893 = vrot.slane %v891, 1
        %v894 = vsel %vm826, %v889, %v893
        %v895 = vshrl.u32 %v769, 16
        %v897 = vor.u32 %v895, %v893
        %v899 = vshll.u32 %v770, 16
        %v901 = vrot.slane %v899, 1
        %v902 = vsel %vm826, %v897, %v901
        %v903 = vshrl.u32 %v770, 16
        %v905 = vor.u32 %v903, %v901
        %v907 = vshll.u32 %v771, 16
        %v909 = vrot.slane %v907, 1
        %v910 = vsel %vm826, %v905, %v909
        %v911 = vshrl.u32 %v771, 16
        %v913 = vor.u32 %v911, %v909
        %v915 = vshll.u32 %v772, 16
        %v917 = vrot.slane %v915, 1
        %v918 = vsel %vm826, %v913, %v917
        %v919 = vshrl.u32 %v772, 16
        %v921 = vor.u32 %v919, %v917
        %v923 = vshll.u32 %v773, 16
        %v925 = vrot.slane %v923, 1
        %v926 = vsel %vm826, %v921, %v925
        %v927 = vshrl.u32 %v773, 16
        %v929 = vor.u32 %v927, %v925
        %v931 = vshll.u32 %v774, 16
        %v933 = vrot.slane %v931, 1
        %v934 = vsel %vm826, %v929, %v933
        %v935 = vshrl.u32 %v774, 16
        %v937 = vor.u32 %v935, %v933
        %v939 = vshll.u32 %v775, 16
        %v941 = vrot.slane %v939, 1
        %v942 = vsel %vm826, %v937, %v941
        %v943 = vshrl.u32 %v775, 16
        %v945 = vor.u32 %v943, %v941
        %v947 = vshll.u32 %v776, 16
        %v949 = vrot.slane %v947, 1
        %v950 = vsel %vm826, %v945, %v949
        %v951 = vshrl.u32 %v776, 16
        %v953 = vor.u32 %v951, %v949
        %v955 = vshll.u32 %v777, 16
        %v957 = vrot.slane %v955, 1
        %v958 = vsel %vm826, %v953, %v957
        %v959 = vshrl.u32 %v777, 16
        %v961 = vor.u32 %v959, %v957
        %v963 = vshll.u32 %v778, 16
        %v965 = vrot.slane %v963, 1
        %v966 = vsel %vm826, %v961, %v965
        %v967 = vshrl.u32 %v778, 16
        %v969 = vor.u32 %v967, %v965
        %v971 = vshll.u32 %v779, 16
        %v973 = vrot.slane %v971, 1
        %v974 = vsel %vm826, %v969, %v973
        %v975 = vshrl.u32 %v779, 16
        %v977 = vor.u32 %v975, %v973
        %v979 = vshll.u32 %v780, 16
        %v981 = vrot.slane %v979, 1
        %v982 = vsel %vm826, %v977, %v981
        %v983 = vshrl.u32 %v780, 16
        %v985 = vor.u32 %v983, %v981
        %v987 = vshll.u32 %v781, 16
        %v989 = vrot.slane %v987, 1
        %v990 = vsel %vm826, %v985, %v989
        %v991 = vshrl.u32 %v781, 16
        %v993 = vor.u32 %v991, %v989
        %v995 = vshll.u32 %v782, 16
        %v997 = vrot.slane %v995, 1
        %v998 = vsel %vm826, %v993, %v997
        %v999 = vshrl.u32 %v782, 16
        %v1001 = vor.u32 %v999, %v997
        %v1003 = vshll.u32 %v783, 16
        %v1005 = vrot.slane %v1003, 1
        %v1006 = vsel %vm826, %v1001, %v1005
        %v1007 = vshrl.u32 %v783, 16
        %v1009 = vor.u32 %v1007, %v1005
        %v1011 = vshll.u32 %v784, 16
        %v1013 = vrot.slane %v1011, 1
        %v1014 = vsel %vm826, %v1009, %v1013
        %v1015 = vshrl.u32 %v784, 16
        %v1017 = vor.u32 %v1015, %v1013
        %v1019 = vshll.u32 %v785, 16
        %v1021 = vrot.slane %v1019, 1
        %v1022 = vsel %vm826, %v1017, %v1021
        %v1023 = vshrl.u32 %v785, 16
        %v1025 = vor.u32 %v1023, %v1021
        %v1027 = vshll.u32 %v786, 16
        %v1029 = vrot.slane %v1027, 1
        %v1030 = vsel %vm826, %v1025, %v1029
        %v1031 = vshrl.u32 %v786, 16
        %v1033 = vor.u32 %v1031, %v1029
        %v1035 = vshll.u32 %v787, 16
        %v1037 = vrot.slane %v1035, 1
        %v1038 = vsel %vm826, %v1033, %v1037
        %v1039 = vshrl.u32 %v787, 16
        %v1041 = vor.u32 %v1039, %v1037
        %v1043 = vshll.u32 %v788, 16
        %v1045 = vrot.slane %v1043, 1
        %v1046 = vsel %vm826, %v1041, %v1045
        %v1047 = vshrl.u32 %v788, 16
        %v1049 = vor.u32 %v1047, %v1045
        %v1051 = vshll.u32 %v789, 16
        %v1053 = vrot.slane %v1051, 1
        %v1054 = vsel %vm826, %v1049, %v1053
        %v1055 = vshrl.u32 %v789, 16
        %v1057 = vor.u32 %v1055, %v1053
        %v1059 = vshll.u32 %v790, 16
        %v1061 = vrot.slane %v1059, 1
        %v1062 = vsel %vm826, %v1057, %v1061
        %v1063 = vshrl.u32 %v790, 16
        %v1065 = vor.u32 %v1063, %v1061
        %v1067 = vshll.u32 %v791, 16
        %v1069 = vrot.slane %v1067, 1
        %v1070 = vsel %vm826, %v1065, %v1069
        %v1071 = vshrl.u32 %v791, 16
        %v1073 = vor.u32 %v1071, %v1069
        %v1075 = vshll.u32 %v808, 16
        %v1077 = vrot.slane %v1075, 1
        %v1078 = vsel %vm826, %v1073, %v1077
        %v1126 = vunpack.c.l.b16 %v810
        %v1127 = vunpack.c.l.b16 %v811
        %v1128 = vunpack.c.l.b16 %v812
        %v1129 = vunpack.c.l.b16 %v813
        %v1130 = vunpack.c.l.b16 %v814
        %v1131 = vunpack.c.l.b16 %v815
        %v1132 = vunpack.c.l.b16 %v816
        %v1133 = vunpack.c.l.b16 %v817
        %v1134 = vunpack.c.l.b16 %v818
        %v1135 = vunpack.c.l.b16 %v819
        %v1136 = vunpack.c.l.b16 %v820
        %v1137 = vunpack.c.l.b16 %v821
        %v1138 = vunpack.c.l.b16 %v822
        %v1139 = vunpack.c.l.b16 %v823
        %v1140 = vunpack.c.l.b16 %v824
        %v1141 = vunpack.c.l.b16 %v825
        %v1142 = vpack.c.b16 %v1127, %v1126
        %v1143 = vpack.c.b16 %v1129, %v1128
        %v1144 = vpack.c.b16 %v1131, %v1130
        %v1145 = vpack.c.b16 %v1133, %v1132
        %v1146 = vpack.c.b16 %v1135, %v1134
        %v1147 = vpack.c.b16 %v1137, %v1136
        %v1148 = vpack.c.b16 %v1139, %v1138
        %v1149 = vpack.c.b16 %v1141, %v1140
        %1158 = vmatprep.subr.bf16.mxu0 0
        %1159 = vmatpush1.bf16.msra.mxu0 %v1142
        %1160 = vmatprep.subr.bf16.mxu0 0
        %1161 = vmatpush1.bf16.msra.mxu0 %v1143
        %1162 = vmatprep.subr.bf16.mxu0 0
        %1163 = vmatpush1.bf16.msra.mxu0 %v1144
        %1164 = vmatprep.subr.bf16.mxu0 0
        %1165 = vmatpush1.bf16.msra.mxu0 %v1145
        %1166 = vmatprep.subr.bf16.mxu0 0
        %1167 = vmatpush1.bf16.msra.mxu0 %v1146
        %1168 = vmatprep.subr.bf16.mxu0 0
        %1169 = vmatpush1.bf16.msra.mxu0 %v1147
        %1170 = vmatprep.subr.bf16.mxu0 0
        %1171 = vmatpush1.bf16.msra.mxu0 %v1148
        %1172 = vmatprep.subr.bf16.mxu0 0
        %1173 = vmatpush1.bf16.msra.mxu0 %v1149
        %1174 = vmatprep.subr.bf16.mxu0 0
        %1175 = vmatpush1.bf16.msra.mxu0 0
        %1176 = vmatprep.subr.bf16.mxu0 0
        %1177 = vmatpush1.bf16.msra.mxu0 0
        %1178 = vmatprep.subr.bf16.mxu0 0
        %1179 = vmatpush1.bf16.msra.mxu0 0
        %1180 = vmatprep.subr.bf16.mxu0 0
        %1181 = vmatpush1.bf16.msra.mxu0 0
        %1182 = vmatprep.subr.bf16.mxu0 0
        %1183 = vmatpush1.bf16.msra.mxu0 0
        %1184 = vmatprep.subr.bf16.mxu0 0
        %1185 = vmatpush1.bf16.msra.mxu0 0
        %1186 = vmatprep.subr.bf16.mxu0 0
        %1187 = vmatpush1.bf16.msra.mxu0 0
        %1188 = vmatprep.subr.bf16.mxu0 0
        %1189 = vmatpush1.bf16.msra.mxu0 0
        %1190 = vmatprep.mubr.bf16.mxu0 0
        %1191 = vmatmul.mubr.bf16.gmra.mrb[0].mxu0 %v838
        %v1192 = vpop.f32.mrb[0].mxu0
        %v1193 = vadd.f32 0.0, %v1192
        %v1194 = vpop.f32.mrb[0].mxu0
        %v1195 = vpop.f32.mrb[0].mxu0
        %v1196 = vadd.f32 0.0, %v1195
        %v1197 = vpop.f32.mrb[0].mxu0
        %1198 = vmatprep.mubr.bf16.mxu0 0
        %1199 = vmatmul.mubr.bf16.gmra.mrb[0].mxu0 %v846
        %v1200 = vpop.f32.mrb[0].mxu0
        %v1201 = vadd.f32 0.0, %v1200
        %v1202 = vpop.f32.mrb[0].mxu0
        %v1203 = vpop.f32.mrb[0].mxu0
        %v1204 = vadd.f32 0.0, %v1203
        %v1205 = vpop.f32.mrb[0].mxu0
        %1206 = vmatprep.mubr.bf16.mxu0 0
        %1207 = vmatmul.mubr.bf16.gmra.mrb[0].mxu0 %v854
        %v1208 = vpop.f32.mrb[0].mxu0
        %v1209 = vadd.f32 0.0, %v1208
        %v1210 = vpop.f32.mrb[0].mxu0
        %v1211 = vpop.f32.mrb[0].mxu0
        %v1212 = vadd.f32 0.0, %v1211
        %v1213 = vpop.f32.mrb[0].mxu0
        %1214 = vmatprep.mubr.bf16.mxu0 0
        %1215 = vmatmul.mubr.bf16.gmra.mrb[0].mxu0 %v862
        %v1216 = vpop.f32.mrb[0].mxu0
        %v1217 = vadd.f32 0.0, %v1216
        %v1218 = vpop.f32.mrb[0].mxu0
        %v1219 = vpop.f32.mrb[0].mxu0
        %v1220 = vadd.f32 0.0, %v1219
        %v1221 = vpop.f32.mrb[0].mxu0
        %1222 = vmatprep.mubr.bf16.mxu0 0
        %1223 = vmatmul.mubr.bf16.gmra.mrb[0].mxu0 %v870
        %v1224 = vpop.f32.mrb[0].mxu0
        %v1225 = vadd.f32 0.0, %v1224
        %v1226 = vpop.f32.mrb[0].mxu0
        %v1227 = vpop.f32.mrb[0].mxu0
        %v1228 = vadd.f32 0.0, %v1227
        %v1229 = vpop.f32.mrb[0].mxu0
        %1230 = vmatprep.mubr.bf16.mxu0 0
        %1231 = vmatmul.mubr.bf16.gmra.mrb[0].mxu0 %v878
        %v1232 = vpop.f32.mrb[0].mxu0
        %v1233 = vadd.f32 0.0, %v1232
        %v1234 = vpop.f32.mrb[0].mxu0
        %v1235 = vpop.f32.mrb[0].mxu0
        %v1236 = vadd.f32 0.0, %v1235
        %v1237 = vpop.f32.mrb[0].mxu0
        %1238 = vmatprep.mubr.bf16.mxu0 0
        %1239 = vmatmul.mubr.bf16.gmra.mrb[0].mxu0 %v886
        %v1240 = vpop.f32.mrb[0].mxu0
        %v1241 = vadd.f32 0.0, %v1240
        %v1242 = vpop.f32.mrb[0].mxu0
        %v1243 = vpop.f32.mrb[0].mxu0
        %v1244 = vadd.f32 0.0, %v1243
        %v1245 = vpop.f32.mrb[0].mxu0
        %1246 = vmatprep.mubr.bf16.mxu0 0
        %1247 = vmatmul.mubr.bf16.gmra.mrb[0].mxu0 %v894
        %v1248 = vpop.f32.mrb[0].mxu0
        %v1249 = vadd.f32 0.0, %v1248
        %v1250 = vpop.f32.mrb[0].mxu0
        %v1251 = vpop.f32.mrb[0].mxu0
        %v1252 = vadd.f32 0.0, %v1251
        %v1253 = vpop.f32.mrb[0].mxu0
        %1254 = vmatprep.mubr.bf16.mxu0 0
        %1255 = vmatmul.mubr.bf16.gmra.mrb[0].mxu0 %v902
        %v1256 = vpop.f32.mrb[0].mxu0
        %v1257 = vadd.f32 0.0, %v1256
        %v1258 = vpop.f32.mrb[0].mxu0
        %v1259 = vpop.f32.mrb[0].mxu0
        %v1260 = vadd.f32 0.0, %v1259
        %v1261 = vpop.f32.mrb[0].mxu0
        %1262 = vmatprep.mubr.bf16.mxu0 0
        %1263 = vmatmul.mubr.bf16.gmra.mrb[0].mxu0 %v910
        %v1264 = vpop.f32.mrb[0].mxu0
        %v1265 = vadd.f32 0.0, %v1264
        %v1266 = vpop.f32.mrb[0].mxu0
        %v1267 = vpop.f32.mrb[0].mxu0
        %v1268 = vadd.f32 0.0, %v1267
        %v1269 = vpop.f32.mrb[0].mxu0
        %1270 = vmatprep.mubr.bf16.mxu0 0
        %1271 = vmatmul.mubr.bf16.gmra.mrb[0].mxu0 %v918
        %v1272 = vpop.f32.mrb[0].mxu0
        %v1273 = vadd.f32 0.0, %v1272
        %v1274 = vpop.f32.mrb[0].mxu0
        %v1275 = vpop.f32.mrb[0].mxu0
        %v1276 = vadd.f32 0.0, %v1275
        %v1277 = vpop.f32.mrb[0].mxu0
        %1278 = vmatprep.mubr.bf16.mxu0 0
        %1279 = vmatmul.mubr.bf16.gmra.mrb[0].mxu0 %v926
        %v1280 = vpop.f32.mrb[0].mxu0
        %v1281 = vadd.f32 0.0, %v1280
        %v1282 = vpop.f32.mrb[0].mxu0
        %v1283 = vpop.f32.mrb[0].mxu0
        %v1284 = vadd.f32 0.0, %v1283
        %v1285 = vpop.f32.mrb[0].mxu0
        %1286 = vmatprep.mubr.bf16.mxu0 0
        %1287 = vmatmul.mubr.bf16.gmra.mrb[0].mxu0 %v934
        %v1288 = vpop.f32.mrb[0].mxu0
        %v1289 = vadd.f32 0.0, %v1288
        %v1290 = vpop.f32.mrb[0].mxu0
        %v1291 = vpop.f32.mrb[0].mxu0
        %v1292 = vadd.f32 0.0, %v1291
        %v1293 = vpop.f32.mrb[0].mxu0
        %1294 = vmatprep.mubr.bf16.mxu0 0
        %1295 = vmatmul.mubr.bf16.gmra.mrb[0].mxu0 %v942
        %v1296 = vpop.f32.mrb[0].mxu0
        %v1297 = vadd.f32 0.0, %v1296
        %v1298 = vpop.f32.mrb[0].mxu0
        %v1299 = vpop.f32.mrb[0].mxu0
        %v1300 = vadd.f32 0.0, %v1299
        %v1301 = vpop.f32.mrb[0].mxu0
        %1302 = vmatprep.mubr.bf16.mxu0 0
        %1303 = vmatmul.mubr.bf16.gmra.mrb[0].mxu0 %v950
        %v1304 = vpop.f32.mrb[0].mxu0
        %v1305 = vadd.f32 0.0, %v1304
        %v1306 = vpop.f32.mrb[0].mxu0
        %v1307 = vpop.f32.mrb[0].mxu0
        %v1308 = vadd.f32 0.0, %v1307
        %v1309 = vpop.f32.mrb[0].mxu0
        %1310 = vmatprep.mubr.bf16.mxu0 0
        %1311 = vmatmul.mubr.bf16.gmra.mrb[0].mxu0 %v958
        %v1312 = vpop.f32.mrb[0].mxu0
        %v1313 = vadd.f32 0.0, %v1312
        %v1314 = vpop.f32.mrb[0].mxu0
        %v1315 = vpop.f32.mrb[0].mxu0
        %v1316 = vadd.f32 0.0, %v1315
        %v1317 = vpop.f32.mrb[0].mxu0
        %1318 = vmatprep.mubr.bf16.mxu0 0
        %1319 = vmatmul.mubr.bf16.gmra.mrb[0].mxu0 %v966
        %v1320 = vpop.f32.mrb[0].mxu0
        %v1321 = vadd.f32 0.0, %v1320
        %v1322 = vpop.f32.mrb[0].mxu0
        %v1323 = vpop.f32.mrb[0].mxu0
        %v1324 = vadd.f32 0.0, %v1323
        %v1325 = vpop.f32.mrb[0].mxu0
        %1326 = vmatprep.mubr.bf16.mxu0 0
        %1327 = vmatmul.mubr.bf16.gmra.mrb[0].mxu0 %v974
        %v1328 = vpop.f32.mrb[0].mxu0
        %v1329 = vadd.f32 0.0, %v1328
        %v1330 = vpop.f32.mrb[0].mxu0
        %v1331 = vpop.f32.mrb[0].mxu0
        %v1332 = vadd.f32 0.0, %v1331
        %v1333 = vpop.f32.mrb[0].mxu0
        %1334 = vmatprep.mubr.bf16.mxu0 0
        %1335 = vmatmul.mubr.bf16.gmra.mrb[0].mxu0 %v982
        %v1336 = vpop.f32.mrb[0].mxu0
        %v1337 = vadd.f32 0.0, %v1336
        %v1338 = vpop.f32.mrb[0].mxu0
        %v1339 = vpop.f32.mrb[0].mxu0
        %v1340 = vadd.f32 0.0, %v1339
        %v1341 = vpop.f32.mrb[0].mxu0
        %1342 = vmatprep.mubr.bf16.mxu0 0
        %1343 = vmatmul.mubr.bf16.gmra.mrb[0].mxu0 %v990
        %v1344 = vpop.f32.mrb[0].mxu0
        %v1345 = vadd.f32 0.0, %v1344
        %v1346 = vpop.f32.mrb[0].mxu0
        %v1347 = vpop.f32.mrb[0].mxu0
        %v1348 = vadd.f32 0.0, %v1347
        %v1349 = vpop.f32.mrb[0].mxu0
        %1350 = vmatprep.mubr.bf16.mxu0 0
        %1351 = vmatmul.mubr.bf16.gmra.mrb[0].mxu0 %v998
        %v1352 = vpop.f32.mrb[0].mxu0
        %v1353 = vadd.f32 0.0, %v1352
        %v1354 = vpop.f32.mrb[0].mxu0
        %v1355 = vpop.f32.mrb[0].mxu0
        %v1356 = vadd.f32 0.0, %v1355
        %v1357 = vpop.f32.mrb[0].mxu0
        %1358 = vmatprep.mubr.bf16.mxu0 0
        %1359 = vmatmul.mubr.bf16.gmra.mrb[0].mxu0 %v1006
        %v1360 = vpop.f32.mrb[0].mxu0
        %v1361 = vadd.f32 0.0, %v1360
        %v1362 = vpop.f32.mrb[0].mxu0
        %v1363 = vpop.f32.mrb[0].mxu0
        %v1364 = vadd.f32 0.0, %v1363
        %v1365 = vpop.f32.mrb[0].mxu0
        %1366 = vmatprep.mubr.bf16.mxu0 0
        %1367 = vmatmul.mubr.bf16.gmra.mrb[0].mxu0 %v1014
        %v1368 = vpop.f32.mrb[0].mxu0
        %v1369 = vadd.f32 0.0, %v1368
        %v1370 = vpop.f32.mrb[0].mxu0
        %v1371 = vpop.f32.mrb[0].mxu0
        %v1372 = vadd.f32 0.0, %v1371
        %v1373 = vpop.f32.mrb[0].mxu0
        %1374 = vmatprep.mubr.bf16.mxu0 0
        %1375 = vmatmul.mubr.bf16.gmra.mrb[0].mxu0 %v1022
        %v1376 = vpop.f32.mrb[0].mxu0
        %v1377 = vadd.f32 0.0, %v1376
        %v1378 = vpop.f32.mrb[0].mxu0
        %v1379 = vpop.f32.mrb[0].mxu0
        %v1380 = vadd.f32 0.0, %v1379
        %v1381 = vpop.f32.mrb[0].mxu0
        %1382 = vmatprep.mubr.bf16.mxu0 0
        %1383 = vmatmul.mubr.bf16.gmra.mrb[0].mxu0 %v1030
        %v1384 = vpop.f32.mrb[0].mxu0
        %v1385 = vadd.f32 0.0, %v1384
        %v1386 = vpop.f32.mrb[0].mxu0
        %v1387 = vpop.f32.mrb[0].mxu0
        %v1388 = vadd.f32 0.0, %v1387
        %v1389 = vpop.f32.mrb[0].mxu0
        %1390 = vmatprep.mubr.bf16.mxu0 0
        %1391 = vmatmul.mubr.bf16.gmra.mrb[0].mxu0 %v1038
        %v1392 = vpop.f32.mrb[0].mxu0
        %v1393 = vadd.f32 0.0, %v1392
        %v1394 = vpop.f32.mrb[0].mxu0
        %v1395 = vpop.f32.mrb[0].mxu0
        %v1396 = vadd.f32 0.0, %v1395
        %v1397 = vpop.f32.mrb[0].mxu0
        %1398 = vmatprep.mubr.bf16.mxu0 0
        %1399 = vmatmul.mubr.bf16.gmra.mrb[0].mxu0 %v1046
        %v1400 = vpop.f32.mrb[0].mxu0
        %v1401 = vadd.f32 0.0, %v1400
        %v1402 = vpop.f32.mrb[0].mxu0
        %v1403 = vpop.f32.mrb[0].mxu0
        %v1404 = vadd.f32 0.0, %v1403
        %v1405 = vpop.f32.mrb[0].mxu0
        %1406 = vmatprep.mubr.bf16.mxu0 0
        %1407 = vmatmul.mubr.bf16.gmra.mrb[0].mxu0 %v1054
        %v1408 = vpop.f32.mrb[0].mxu0
        %v1409 = vadd.f32 0.0, %v1408
        %v1410 = vpop.f32.mrb[0].mxu0
        %v1411 = vpop.f32.mrb[0].mxu0
        %v1412 = vadd.f32 0.0, %v1411
        %v1413 = vpop.f32.mrb[0].mxu0
        %1414 = vmatprep.mubr.bf16.mxu0 0
        %1415 = vmatmul.mubr.bf16.gmra.mrb[0].mxu0 %v1062
        %v1416 = vpop.f32.mrb[0].mxu0
        %v1417 = vadd.f32 0.0, %v1416
        %v1418 = vpop.f32.mrb[0].mxu0
        %v1419 = vpop.f32.mrb[0].mxu0
        %v1420 = vadd.f32 0.0, %v1419
        %v1421 = vpop.f32.mrb[0].mxu0
        %1422 = vmatprep.mubr.bf16.mxu0 0
        %1423 = vmatmul.mubr.bf16.gmra.mrb[0].mxu0 %v1070
        %v1424 = vpop.f32.mrb[0].mxu0
        %v1425 = vadd.f32 0.0, %v1424
        %v1426 = vpop.f32.mrb[0].mxu0
        %v1427 = vpop.f32.mrb[0].mxu0
        %v1428 = vadd.f32 0.0, %v1427
        %v1429 = vpop.f32.mrb[0].mxu0
        %1430 = vmatprep.mubr.bf16.mxu0 0
        %1431 = vmatmul.mubr.bf16.gmra.mrb[0].mxu0 %v1078
        %v1432 = vpop.f32.mrb[0].mxu0
        %v1433 = vadd.f32 0.0, %v1432
        %v1434 = vpop.f32.mrb[0].mxu0
        %v1435 = vpop.f32.mrb[0].mxu0
        %v1436 = vadd.f32 0.0, %v1435
        %v1437 = vpop.f32.mrb[0].mxu0
        %1438 = vdwg.mxu0
        %v1455 = vunpack.c.l.b16 %v792
        %v1456 = vunpack.c.l.b16 %v793
        %v1457 = vunpack.c.l.b16 %v794
        %v1458 = vunpack.c.l.b16 %v795
        %v1459 = vunpack.c.l.b16 %v796
        %v1460 = vunpack.c.l.b16 %v797
        %v1461 = vunpack.c.l.b16 %v798
        %v1462 = vunpack.c.l.b16 %v799
        %v1463 = vunpack.c.l.b16 %v800
        %v1464 = vunpack.c.l.b16 %v801
        %v1465 = vunpack.c.l.b16 %v802
        %v1466 = vunpack.c.l.b16 %v803
        %v1467 = vunpack.c.l.b16 %v804
        %v1468 = vunpack.c.l.b16 %v805
        %v1469 = vunpack.c.l.b16 %v806
        %v1470 = vunpack.c.l.b16 %v807
        %v1471 = vpack.c.b16 %v1456, %v1455
        %v1472 = vpack.c.b16 %v1458, %v1457
        %v1473 = vpack.c.b16 %v1460, %v1459
        %v1474 = vpack.c.b16 %v1462, %v1461
        %v1475 = vpack.c.b16 %v1464, %v1463
        %v1476 = vpack.c.b16 %v1466, %v1465
        %v1477 = vpack.c.b16 %v1468, %v1467
        %v1478 = vpack.c.b16 %v1470, %v1469
        %1487 = vmatprep.subr.bf16.mxu0 0
        %1488 = vmatpush1.bf16.msra.mxu0 %v1471
        %1489 = vmatprep.subr.bf16.mxu0 0
        %1490 = vmatpush1.bf16.msra.mxu0 %v1472
        %1491 = vmatprep.subr.bf16.mxu0 0
        %1492 = vmatpush1.bf16.msra.mxu0 %v1473
        %1493 = vmatprep.subr.bf16.mxu0 0
        %1494 = vmatpush1.bf16.msra.mxu0 %v1474
        %1495 = vmatprep.subr.bf16.mxu0 0
        %1496 = vmatpush1.bf16.msra.mxu0 %v1475
        %1497 = vmatprep.subr.bf16.mxu0 0
        %1498 = vmatpush1.bf16.msra.mxu0 %v1476
        %1499 = vmatprep.subr.bf16.mxu0 0
        %1500 = vmatpush1.bf16.msra.mxu0 %v1477
        %1501 = vmatprep.subr.bf16.mxu0 0
        %1502 = vmatpush1.bf16.msra.mxu0 %v1478
        %1503 = vmatprep.subr.bf16.mxu0 0
        %1504 = vmatpush1.bf16.msra.mxu0 0
        %1505 = vmatprep.subr.bf16.mxu0 0
        %1506 = vmatpush1.bf16.msra.mxu0 0
        %1507 = vmatprep.subr.bf16.mxu0 0
        %1508 = vmatpush1.bf16.msra.mxu0 0
        %1509 = vmatprep.subr.bf16.mxu0 0
        %1510 = vmatpush1.bf16.msra.mxu0 0
        %1511 = vmatprep.subr.bf16.mxu0 0
        %1512 = vmatpush1.bf16.msra.mxu0 0
        %1513 = vmatprep.subr.bf16.mxu0 0
        %1514 = vmatpush1.bf16.msra.mxu0 0
        %1515 = vmatprep.subr.bf16.mxu0 0
        %1516 = vmatpush1.bf16.msra.mxu0 0
        %1517 = vmatprep.subr.bf16.mxu0 0
        %1518 = vmatpush1.bf16.msra.mxu0 0
        %1519 = vmatprep.mubr.bf16.mxu0 0
        %1520 = vmatmul.mubr.bf16.gmra.mrb[0].mxu0 %v761
        %v1521 = vpop.f32.mrb[0].mxu0
        %v1522 = vadd.f32 %v1193, %v1521
        %v1523 = vpop.f32.mrb[0].mxu0
        %v1524 = vpop.f32.mrb[0].mxu0
        %v1525 = vadd.f32 %v1196, %v1524
        %v1526 = vpop.f32.mrb[0].mxu0
        %1527 = vmatprep.mubr.bf16.mxu0 0
        %1528 = vmatmul.mubr.bf16.gmra.mrb[0].mxu0 %v762
        %v1529 = vpop.f32.mrb[0].mxu0
        %v1530 = vadd.f32 %v1201, %v1529
        %v1531 = vpop.f32.mrb[0].mxu0
        %v1532 = vpop.f32.mrb[0].mxu0
        %v1533 = vadd.f32 %v1204, %v1532
        %v1534 = vpop.f32.mrb[0].mxu0
        %1535 = vmatprep.mubr.bf16.mxu0 0
        %1536 = vmatmul.mubr.bf16.gmra.mrb[0].mxu0 %v763
        %v1537 = vpop.f32.mrb[0].mxu0
        %v1538 = vadd.f32 %v1209, %v1537
        %v1539 = vpop.f32.mrb[0].mxu0
        %v1540 = vpop.f32.mrb[0].mxu0
        %v1541 = vadd.f32 %v1212, %v1540
        %v1542 = vpop.f32.mrb[0].mxu0
        %1543 = vmatprep.mubr.bf16.mxu0 0
        %1544 = vmatmul.mubr.bf16.gmra.mrb[0].mxu0 %v764
        %v1545 = vpop.f32.mrb[0].mxu0
        %v1546 = vadd.f32 %v1217, %v1545
        %v1547 = vpop.f32.mrb[0].mxu0
        %v1548 = vpop.f32.mrb[0].mxu0
        %v1549 = vadd.f32 %v1220, %v1548
        %v1550 = vpop.f32.mrb[0].mxu0
        %1551 = vmatprep.mubr.bf16.mxu0 0
        %1552 = vmatmul.mubr.bf16.gmra.mrb[0].mxu0 %v765
        %v1553 = vpop.f32.mrb[0].mxu0
        %v1554 = vadd.f32 %v1225, %v1553
        %v1555 = vpop.f32.mrb[0].mxu0
        %v1556 = vpop.f32.mrb[0].mxu0
        %v1557 = vadd.f32 %v1228, %v1556
        %v1558 = vpop.f32.mrb[0].mxu0
        %1559 = vmatprep.mubr.bf16.mxu0 0
        %1560 = vmatmul.mubr.bf16.gmra.mrb[0].mxu0 %v766
        %v1561 = vpop.f32.mrb[0].mxu0
        %v1562 = vadd.f32 %v1233, %v1561
        %v1563 = vpop.f32.mrb[0].mxu0
        %v1564 = vpop.f32.mrb[0].mxu0
        %v1565 = vadd.f32 %v1236, %v1564
        %v1566 = vpop.f32.mrb[0].mxu0
        %1567 = vmatprep.mubr.bf16.mxu0 0
        %1568 = vmatmul.mubr.bf16.gmra.mrb[0].mxu0 %v767
        %v1569 = vpop.f32.mrb[0].mxu0
        %v1570 = vadd.f32 %v1241, %v1569
        %v1571 = vpop.f32.mrb[0].mxu0
        %v1572 = vpop.f32.mrb[0].mxu0
        %v1573 = vadd.f32 %v1244, %v1572
        %v1574 = vpop.f32.mrb[0].mxu0
        %1575 = vmatprep.mubr.bf16.mxu0 0
        %1576 = vmatmul.mubr.bf16.gmra.mrb[0].mxu0 %v768
        %v1577 = vpop.f32.mrb[0].mxu0
        %v1578 = vadd.f32 %v1249, %v1577
        %v1579 = vpop.f32.mrb[0].mxu0
        %v1580 = vpop.f32.mrb[0].mxu0
        %v1581 = vadd.f32 %v1252, %v1580
        %v1582 = vpop.f32.mrb[0].mxu0
        %1583 = vmatprep.mubr.bf16.mxu0 0
        %1584 = vmatmul.mubr.bf16.gmra.mrb[0].mxu0 %v769
        %v1585 = vpop.f32.mrb[0].mxu0
        %v1586 = vadd.f32 %v1257, %v1585
        %v1587 = vpop.f32.mrb[0].mxu0
        %v1588 = vpop.f32.mrb[0].mxu0
        %v1589 = vadd.f32 %v1260, %v1588
        %v1590 = vpop.f32.mrb[0].mxu0
        %1591 = vmatprep.mubr.bf16.mxu0 0
        %1592 = vmatmul.mubr.bf16.gmra.mrb[0].mxu0 %v770
        %v1593 = vpop.f32.mrb[0].mxu0
        %v1594 = vadd.f32 %v1265, %v1593
        %v1595 = vpop.f32.mrb[0].mxu0
        %v1596 = vpop.f32.mrb[0].mxu0
        %v1597 = vadd.f32 %v1268, %v1596
        %v1598 = vpop.f32.mrb[0].mxu0
        %1599 = vmatprep.mubr.bf16.mxu0 0
        %1600 = vmatmul.mubr.bf16.gmra.mrb[0].mxu0 %v771
        %v1601 = vpop.f32.mrb[0].mxu0
        %v1602 = vadd.f32 %v1273, %v1601
        %v1603 = vpop.f32.mrb[0].mxu0
        %v1604 = vpop.f32.mrb[0].mxu0
        %v1605 = vadd.f32 %v1276, %v1604
        %v1606 = vpop.f32.mrb[0].mxu0
        %1607 = vmatprep.mubr.bf16.mxu0 0
        %1608 = vmatmul.mubr.bf16.gmra.mrb[0].mxu0 %v772
        %v1609 = vpop.f32.mrb[0].mxu0
        %v1610 = vadd.f32 %v1281, %v1609
        %v1611 = vpop.f32.mrb[0].mxu0
        %v1612 = vpop.f32.mrb[0].mxu0
        %v1613 = vadd.f32 %v1284, %v1612
        %v1614 = vpop.f32.mrb[0].mxu0
        %1615 = vmatprep.mubr.bf16.mxu0 0
        %1616 = vmatmul.mubr.bf16.gmra.mrb[0].mxu0 %v773
        %v1617 = vpop.f32.mrb[0].mxu0
        %v1618 = vadd.f32 %v1289, %v1617
        %v1619 = vpop.f32.mrb[0].mxu0
        %v1620 = vpop.f32.mrb[0].mxu0
        %v1621 = vadd.f32 %v1292, %v1620
        %v1622 = vpop.f32.mrb[0].mxu0
        %1623 = vmatprep.mubr.bf16.mxu0 0
        %1624 = vmatmul.mubr.bf16.gmra.mrb[0].mxu0 %v774
        %v1625 = vpop.f32.mrb[0].mxu0
        %v1626 = vadd.f32 %v1297, %v1625
        %v1627 = vpop.f32.mrb[0].mxu0
        %v1628 = vpop.f32.mrb[0].mxu0
        %v1629 = vadd.f32 %v1300, %v1628
        %v1630 = vpop.f32.mrb[0].mxu0
        %1631 = vmatprep.mubr.bf16.mxu0 0
        %1632 = vmatmul.mubr.bf16.gmra.mrb[0].mxu0 %v775
        %v1633 = vpop.f32.mrb[0].mxu0
        %v1634 = vadd.f32 %v1305, %v1633
        %v1635 = vpop.f32.mrb[0].mxu0
        %v1636 = vpop.f32.mrb[0].mxu0
        %v1637 = vadd.f32 %v1308, %v1636
        %v1638 = vpop.f32.mrb[0].mxu0
        %1639 = vmatprep.mubr.bf16.mxu0 0
        %1640 = vmatmul.mubr.bf16.gmra.mrb[0].mxu0 %v776
        %v1641 = vpop.f32.mrb[0].mxu0
        %v1642 = vadd.f32 %v1313, %v1641
        %v1643 = vpop.f32.mrb[0].mxu0
        %v1644 = vpop.f32.mrb[0].mxu0
        %v1645 = vadd.f32 %v1316, %v1644
        %v1646 = vpop.f32.mrb[0].mxu0
        %1647 = vmatprep.mubr.bf16.mxu0 0
        %1648 = vmatmul.mubr.bf16.gmra.mrb[0].mxu0 %v777
        %v1649 = vpop.f32.mrb[0].mxu0
        %v1650 = vadd.f32 %v1321, %v1649
        %v1651 = vpop.f32.mrb[0].mxu0
        %v1652 = vpop.f32.mrb[0].mxu0
        %v1653 = vadd.f32 %v1324, %v1652
        %v1654 = vpop.f32.mrb[0].mxu0
        %1655 = vmatprep.mubr.bf16.mxu0 0
        %1656 = vmatmul.mubr.bf16.gmra.mrb[0].mxu0 %v778
        %v1657 = vpop.f32.mrb[0].mxu0
        %v1658 = vadd.f32 %v1329, %v1657
        %v1659 = vpop.f32.mrb[0].mxu0
        %v1660 = vpop.f32.mrb[0].mxu0
        %v1661 = vadd.f32 %v1332, %v1660
        %v1662 = vpop.f32.mrb[0].mxu0
        %1663 = vmatprep.mubr.bf16.mxu0 0
        %1664 = vmatmul.mubr.bf16.gmra.mrb[0].mxu0 %v779
        %v1665 = vpop.f32.mrb[0].mxu0
        %v1666 = vadd.f32 %v1337, %v1665
        %v1667 = vpop.f32.mrb[0].mxu0
        %v1668 = vpop.f32.mrb[0].mxu0
        %v1669 = vadd.f32 %v1340, %v1668
        %v1670 = vpop.f32.mrb[0].mxu0
        %1671 = vmatprep.mubr.bf16.mxu0 0
        %1672 = vmatmul.mubr.bf16.gmra.mrb[0].mxu0 %v780
        %v1673 = vpop.f32.mrb[0].mxu0
        %v1674 = vadd.f32 %v1345, %v1673
        %v1675 = vpop.f32.mrb[0].mxu0
        %v1676 = vpop.f32.mrb[0].mxu0
        %v1677 = vadd.f32 %v1348, %v1676
        %v1678 = vpop.f32.mrb[0].mxu0
        %1679 = vmatprep.mubr.bf16.mxu0 0
        %1680 = vmatmul.mubr.bf16.gmra.mrb[0].mxu0 %v781
        %v1681 = vpop.f32.mrb[0].mxu0
        %v1682 = vadd.f32 %v1353, %v1681
        %v1683 = vpop.f32.mrb[0].mxu0
        %v1684 = vpop.f32.mrb[0].mxu0
        %v1685 = vadd.f32 %v1356, %v1684
        %v1686 = vpop.f32.mrb[0].mxu0
        %1687 = vmatprep.mubr.bf16.mxu0 0
        %1688 = vmatmul.mubr.bf16.gmra.mrb[0].mxu0 %v782
        %v1689 = vpop.f32.mrb[0].mxu0
        %v1690 = vadd.f32 %v1361, %v1689
        %v1691 = vpop.f32.mrb[0].mxu0
        %v1692 = vpop.f32.mrb[0].mxu0
        %v1693 = vadd.f32 %v1364, %v1692
        %v1694 = vpop.f32.mrb[0].mxu0
        %1695 = vmatprep.mubr.bf16.mxu0 0
        %1696 = vmatmul.mubr.bf16.gmra.mrb[0].mxu0 %v783
        %v1697 = vpop.f32.mrb[0].mxu0
        %v1698 = vadd.f32 %v1369, %v1697
        %v1699 = vpop.f32.mrb[0].mxu0
        %v1700 = vpop.f32.mrb[0].mxu0
        %v1701 = vadd.f32 %v1372, %v1700
        %v1702 = vpop.f32.mrb[0].mxu0
        %1703 = vmatprep.mubr.bf16.mxu0 0
        %1704 = vmatmul.mubr.bf16.gmra.mrb[0].mxu0 %v784
        %v1705 = vpop.f32.mrb[0].mxu0
        %v1706 = vadd.f32 %v1377, %v1705
        %v1707 = vpop.f32.mrb[0].mxu0
        %v1708 = vpop.f32.mrb[0].mxu0
        %v1709 = vadd.f32 %v1380, %v1708
        %v1710 = vpop.f32.mrb[0].mxu0
        %1711 = vmatprep.mubr.bf16.mxu0 0
        %1712 = vmatmul.mubr.bf16.gmra.mrb[0].mxu0 %v785
        %v1713 = vpop.f32.mrb[0].mxu0
        %v1714 = vadd.f32 %v1385, %v1713
        %v1715 = vpop.f32.mrb[0].mxu0
        %v1716 = vpop.f32.mrb[0].mxu0
        %v1717 = vadd.f32 %v1388, %v1716
        %v1718 = vpop.f32.mrb[0].mxu0
        %1719 = vmatprep.mubr.bf16.mxu0 0
        %1720 = vmatmul.mubr.bf16.gmra.mrb[0].mxu0 %v786
        %v1721 = vpop.f32.mrb[0].mxu0
        %v1722 = vadd.f32 %v1393, %v1721
        %v1723 = vpop.f32.mrb[0].mxu0
        %v1724 = vpop.f32.mrb[0].mxu0
        %v1725 = vadd.f32 %v1396, %v1724
        %v1726 = vpop.f32.mrb[0].mxu0
        %1727 = vmatprep.mubr.bf16.mxu0 0
        %1728 = vmatmul.mubr.bf16.gmra.mrb[0].mxu0 %v787
        %v1729 = vpop.f32.mrb[0].mxu0
        %v1730 = vadd.f32 %v1401, %v1729
        %v1731 = vpop.f32.mrb[0].mxu0
        %v1732 = vpop.f32.mrb[0].mxu0
        %v1733 = vadd.f32 %v1404, %v1732
        %v1734 = vpop.f32.mrb[0].mxu0
        %1735 = vmatprep.mubr.bf16.mxu0 0
        %1736 = vmatmul.mubr.bf16.gmra.mrb[0].mxu0 %v788
        %v1737 = vpop.f32.mrb[0].mxu0
        %v1738 = vadd.f32 %v1409, %v1737
        %v1739 = vpop.f32.mrb[0].mxu0
        %v1740 = vpop.f32.mrb[0].mxu0
        %v1741 = vadd.f32 %v1412, %v1740
        %v1742 = vpop.f32.mrb[0].mxu0
        %1743 = vmatprep.mubr.bf16.mxu0 0
        %1744 = vmatmul.mubr.bf16.gmra.mrb[0].mxu0 %v789
        %v1745 = vpop.f32.mrb[0].mxu0
        %v1746 = vadd.f32 %v1417, %v1745
        %v1747 = vpop.f32.mrb[0].mxu0
        %v1748 = vpop.f32.mrb[0].mxu0
        %v1749 = vadd.f32 %v1420, %v1748
        %v1750 = vpop.f32.mrb[0].mxu0
        %1751 = vmatprep.mubr.bf16.mxu0 0
        %1752 = vmatmul.mubr.bf16.gmra.mrb[0].mxu0 %v790
        %v1753 = vpop.f32.mrb[0].mxu0
        %v1754 = vadd.f32 %v1425, %v1753
        %v1755 = vpop.f32.mrb[0].mxu0
        %v1756 = vpop.f32.mrb[0].mxu0
        %v1757 = vadd.f32 %v1428, %v1756
        %v1758 = vpop.f32.mrb[0].mxu0
        %1759 = vmatprep.mubr.bf16.mxu0 0
        %1760 = vmatmul.mubr.bf16.gmra.mrb[0].mxu0 %v791
        %v1761 = vpop.f32.mrb[0].mxu0
        %v1762 = vadd.f32 %v1433, %v1761
        %v1763 = vpop.f32.mrb[0].mxu0
        %v1764 = vpop.f32.mrb[0].mxu0
        %v1765 = vadd.f32 %v1436, %v1764
        %v1766 = vpop.f32.mrb[0].mxu0
        %1767 = vdwg.mxu0
        %v1768 = vld [vmem:[#allocation2] sm:$0xfe]
        %s1769 = scalar_lea.vmem [#allocation7], 128
        %v1770 = vld [vmem:[%s1769] sm:$0xf]
        %v1771 = vld [vmem:[%s1769 + $0x4] sm:$0xf]
        %v1772 = vld [vmem:[%s1769 + $0x8] sm:$0xf]
        %v1773 = vld [vmem:[%s1769 + $0xc] sm:$0xf]
        %v1774 = vld [vmem:[%s1769 + $0x10] sm:$0xf]
        %v1775 = vld [vmem:[%s1769 + $0x14] sm:$0xf]
        %v1776 = vld [vmem:[%s1769 + $0x18] sm:$0xf]
        %v1777 = vld [vmem:[%s1769 + $0x1c] sm:$0xf]
        %v1778 = vld [vmem:[%s1769 + $0x20] sm:$0xf]
        %v1779 = vld [vmem:[%s1769 + $0x24] sm:$0xf]
        %v1780 = vld [vmem:[%s1769 + $0x28] sm:$0xf]
        %v1781 = vld [vmem:[%s1769 + $0x2c] sm:$0xf]
        %v1782 = vld [vmem:[%s1769 + $0x30] sm:$0xf]
        %v1783 = vld [vmem:[%s1769 + $0x34] sm:$0xf]
        %v1784 = vld [vmem:[%s1769 + $0x38] sm:$0xf]
        %v1785 = vld [vmem:[%s1769 + $0x3c] sm:$0xf]
        %vm1818 = vcmask 1046528
        %v1819 = vrot.slane %v1768, 1
        %v1820 = vrot.slane %v762, 1
        %v1821 = vsel %vm1818, %v1819, %v1820
        %v1822 = vrot.slane %v763, 1
        %v1823 = vsel %vm1818, %v1820, %v1822
        %v1824 = vrot.slane %v764, 1
        %v1825 = vsel %vm1818, %v1822, %v1824
        %v1826 = vrot.slane %v765, 1
        %v1827 = vsel %vm1818, %v1824, %v1826
        %v1828 = vrot.slane %v766, 1
        %v1829 = vsel %vm1818, %v1826, %v1828
        %v1830 = vrot.slane %v767, 1
        %v1831 = vsel %vm1818, %v1828, %v1830
        %v1832 = vrot.slane %v768, 1
        %v1833 = vsel %vm1818, %v1830, %v1832
        %v1834 = vrot.slane %v769, 1
        %v1835 = vsel %vm1818, %v1832, %v1834
        %v1836 = vrot.slane %v770, 1
        %v1837 = vsel %vm1818, %v1834, %v1836
        %v1838 = vrot.slane %v771, 1
        %v1839 = vsel %vm1818, %v1836, %v1838
        %v1840 = vrot.slane %v772, 1
        %v1841 = vsel %vm1818, %v1838, %v1840
        %v1842 = vrot.slane %v773, 1
        %v1843 = vsel %vm1818, %v1840, %v1842
        %v1844 = vrot.slane %v774, 1
        %v1845 = vsel %vm1818, %v1842, %v1844
        %v1846 = vrot.slane %v775, 1
        %v1847 = vsel %vm1818, %v1844, %v1846
        %v1848 = vrot.slane %v776, 1
        %v1849 = vsel %vm1818, %v1846, %v1848
        %v1850 = vrot.slane %v777, 1
        %v1851 = vsel %vm1818, %v1848, %v1850
        %v1852 = vrot.slane %v778, 1
        %v1853 = vsel %vm1818, %v1850, %v1852
        %v1854 = vrot.slane %v779, 1
        %v1855 = vsel %vm1818, %v1852, %v1854
        %v1856 = vrot.slane %v780, 1
        %v1857 = vsel %vm1818, %v1854, %v1856
        %v1858 = vrot.slane %v781, 1
        %v1859 = vsel %vm1818, %v1856, %v1858
        %v1860 = vrot.slane %v782, 1
        %v1861 = vsel %vm1818, %v1858, %v1860
        %v1862 = vrot.slane %v783, 1
        %v1863 = vsel %vm1818, %v1860, %v1862
        %v1864 = vrot.slane %v784, 1
        %v1865 = vsel %vm1818, %v1862, %v1864
        %v1866 = vrot.slane %v785, 1
        %v1867 = vsel %vm1818, %v1864, %v1866
        %v1868 = vrot.slane %v786, 1
        %v1869 = vsel %vm1818, %v1866, %v1868
        %v1870 = vrot.slane %v787, 1
        %v1871 = vsel %vm1818, %v1868, %v1870
        %v1872 = vrot.slane %v788, 1
        %v1873 = vsel %vm1818, %v1870, %v1872
        %v1874 = vrot.slane %v789, 1
        %v1875 = vsel %vm1818, %v1872, %v1874
        %v1876 = vrot.slane %v790, 1
        %v1877 = vsel %vm1818, %v1874, %v1876
        %v1878 = vrot.slane %v791, 1
        %v1879 = vsel %vm1818, %v1876, %v1878
        %v1880 = vrot.slane %v808, 1
        %v1881 = vsel %vm1818, %v1878, %v1880
        %v1929 = vunpack.c.l.b16 %v1770
        %v1930 = vunpack.c.l.b16 %v1771
        %v1931 = vunpack.c.l.b16 %v1772
        %v1932 = vunpack.c.l.b16 %v1773
        %v1933 = vunpack.c.l.b16 %v1774
        %v1934 = vunpack.c.l.b16 %v1775
        %v1935 = vunpack.c.l.b16 %v1776
        %v1936 = vunpack.c.l.b16 %v1777
        %v1937 = vunpack.c.l.b16 %v1778
        %v1938 = vunpack.c.l.b16 %v1779
        %v1939 = vunpack.c.l.b16 %v1780
        %v1940 = vunpack.c.l.b16 %v1781
        %v1941 = vunpack.c.l.b16 %v1782
        %v1942 = vunpack.c.l.b16 %v1783
        %v1943 = vunpack.c.l.b16 %v1784
        %v1944 = vunpack.c.l.b16 %v1785
        %v1945 = vpack.c.b16 %v1930, %v1929
        %v1946 = vpack.c.b16 %v1932, %v1931
        %v1947 = vpack.c.b16 %v1934, %v1933
        %v1948 = vpack.c.b16 %v1936, %v1935
        %v1949 = vpack.c.b16 %v1938, %v1937
        %v1950 = vpack.c.b16 %v1940, %v1939
        %v1951 = vpack.c.b16 %v1942, %v1941
        %v1952 = vpack.c.b16 %v1944, %v1943
        %1961 = vmatprep.subr.bf16.mxu0 0
        %1962 = vmatpush1.bf16.msra.mxu0 %v1945
        %1963 = vmatprep.subr.bf16.mxu0 0
        %1964 = vmatpush1.bf16.msra.mxu0 %v1946
        %1965 = vmatprep.subr.bf16.mxu0 0
        %1966 = vmatpush1.bf16.msra.mxu0 %v1947
        %1967 = vmatprep.subr.bf16.mxu0 0
        %1968 = vmatpush1.bf16.msra.mxu0 %v1948
        %1969 = vmatprep.subr.bf16.mxu0 0
        %1970 = vmatpush1.bf16.msra.mxu0 %v1949
        %1971 = vmatprep.subr.bf16.mxu0 0
        %1972 = vmatpush1.bf16.msra.mxu0 %v1950
        %1973 = vmatprep.subr.bf16.mxu0 0
        %1974 = vmatpush1.bf16.msra.mxu0 %v1951
        %1975 = vmatprep.subr.bf16.mxu0 0
        %1976 = vmatpush1.bf16.msra.mxu0 %v1952
        %1977 = vmatprep.subr.bf16.mxu0 0
        %1978 = vmatpush1.bf16.msra.mxu0 0
        %1979 = vmatprep.subr.bf16.mxu0 0
        %1980 = vmatpush1.bf16.msra.mxu0 0
        %1981 = vmatprep.subr.bf16.mxu0 0
        %1982 = vmatpush1.bf16.msra.mxu0 0
        %1983 = vmatprep.subr.bf16.mxu0 0
        %1984 = vmatpush1.bf16.msra.mxu0 0
        %1985 = vmatprep.subr.bf16.mxu0 0
        %1986 = vmatpush1.bf16.msra.mxu0 0
        %1987 = vmatprep.subr.bf16.mxu0 0
        %1988 = vmatpush1.bf16.msra.mxu0 0
        %1989 = vmatprep.subr.bf16.mxu0 0
        %1990 = vmatpush1.bf16.msra.mxu0 0
        %1991 = vmatprep.subr.bf16.mxu0 0
        %1992 = vmatpush1.bf16.msra.mxu0 0
        %1993 = vmatprep.mubr.bf16.mxu0 0
        %1994 = vmatmul.mubr.bf16.gmra.mrb[0].mxu0 %v1821
        %v1995 = vpop.f32.mrb[0].mxu0
        %v1996 = vadd.f32 0.0, %v1995
        %v1997 = vpop.f32.mrb[0].mxu0
        %v1998 = vpop.f32.mrb[0].mxu0
        %v1999 = vadd.f32 0.0, %v1998
        %v2000 = vpop.f32.mrb[0].mxu0
        %2001 = vmatprep.mubr.bf16.mxu0 0
        %2002 = vmatmul.mubr.bf16.gmra.mrb[0].mxu0 %v1823
        %v2003 = vpop.f32.mrb[0].mxu0
        %v2004 = vadd.f32 0.0, %v2003
        %v2005 = vpop.f32.mrb[0].mxu0
        %v2006 = vpop.f32.mrb[0].mxu0
        %v2007 = vadd.f32 0.0, %v2006
        %v2008 = vpop.f32.mrb[0].mxu0
        %2009 = vmatprep.mubr.bf16.mxu0 0
        %2010 = vmatmul.mubr.bf16.gmra.mrb[0].mxu0 %v1825
        %v2011 = vpop.f32.mrb[0].mxu0
        %v2012 = vadd.f32 0.0, %v2011
        %v2013 = vpop.f32.mrb[0].mxu0
        %v2014 = vpop.f32.mrb[0].mxu0
        %v2015 = vadd.f32 0.0, %v2014
        %v2016 = vpop.f32.mrb[0].mxu0
        %2017 = vmatprep.mubr.bf16.mxu0 0
        %2018 = vmatmul.mubr.bf16.gmra.mrb[0].mxu0 %v1827
        %v2019 = vpop.f32.mrb[0].mxu0
        %v2020 = vadd.f32 0.0, %v2019
        %v2021 = vpop.f32.mrb[0].mxu0
        %v2022 = vpop.f32.mrb[0].mxu0
        %v2023 = vadd.f32 0.0, %v2022
        %v2024 = vpop.f32.mrb[0].mxu0
        %2025 = vmatprep.mubr.bf16.mxu0 0
        %2026 = vmatmul.mubr.bf16.gmra.mrb[0].mxu0 %v1829
        %v2027 = vpop.f32.mrb[0].mxu0
        %v2028 = vadd.f32 0.0, %v2027
        %v2029 = vpop.f32.mrb[0].mxu0
        %v2030 = vpop.f32.mrb[0].mxu0
        %v2031 = vadd.f32 0.0, %v2030
        %v2032 = vpop.f32.mrb[0].mxu0
        %2033 = vmatprep.mubr.bf16.mxu0 0
        %2034 = vmatmul.mubr.bf16.gmra.mrb[0].mxu0 %v1831
        %v2035 = vpop.f32.mrb[0].mxu0
        %v2036 = vadd.f32 0.0, %v2035
        %v2037 = vpop.f32.mrb[0].mxu0
        %v2038 = vpop.f32.mrb[0].mxu0
        %v2039 = vadd.f32 0.0, %v2038
        %v2040 = vpop.f32.mrb[0].mxu0
        %2041 = vmatprep.mubr.bf16.mxu0 0
        %2042 = vmatmul.mubr.bf16.gmra.mrb[0].mxu0 %v1833
        %v2043 = vpop.f32.mrb[0].mxu0
        %v2044 = vadd.f32 0.0, %v2043
        %v2045 = vpop.f32.mrb[0].mxu0
        %v2046 = vpop.f32.mrb[0].mxu0
        %v2047 = vadd.f32 0.0, %v2046
        %v2048 = vpop.f32.mrb[0].mxu0
        %2049 = vmatprep.mubr.bf16.mxu0 0
        %2050 = vmatmul.mubr.bf16.gmra.mrb[0].mxu0 %v1835
        %v2051 = vpop.f32.mrb[0].mxu0
        %v2052 = vadd.f32 0.0, %v2051
        %v2053 = vpop.f32.mrb[0].mxu0
        %v2054 = vpop.f32.mrb[0].mxu0
        %v2055 = vadd.f32 0.0, %v2054
        %v2056 = vpop.f32.mrb[0].mxu0
        %2057 = vmatprep.mubr.bf16.mxu0 0
        %2058 = vmatmul.mubr.bf16.gmra.mrb[0].mxu0 %v1837
        %v2059 = vpop.f32.mrb[0].mxu0
        %v2060 = vadd.f32 0.0, %v2059
        %v2061 = vpop.f32.mrb[0].mxu0
        %v2062 = vpop.f32.mrb[0].mxu0
        %v2063 = vadd.f32 0.0, %v2062
        %v2064 = vpop.f32.mrb[0].mxu0
        %2065 = vmatprep.mubr.bf16.mxu0 0
        %2066 = vmatmul.mubr.bf16.gmra.mrb[0].mxu0 %v1839
        %v2067 = vpop.f32.mrb[0].mxu0
        %v2068 = vadd.f32 0.0, %v2067
        %v2069 = vpop.f32.mrb[0].mxu0
        %v2070 = vpop.f32.mrb[0].mxu0
        %v2071 = vadd.f32 0.0, %v2070
        %v2072 = vpop.f32.mrb[0].mxu0
        %2073 = vmatprep.mubr.bf16.mxu0 0
        %2074 = vmatmul.mubr.bf16.gmra.mrb[0].mxu0 %v1841
        %v2075 = vpop.f32.mrb[0].mxu0
        %v2076 = vadd.f32 0.0, %v2075
        %v2077 = vpop.f32.mrb[0].mxu0
        %v2078 = vpop.f32.mrb[0].mxu0
        %v2079 = vadd.f32 0.0, %v2078
        %v2080 = vpop.f32.mrb[0].mxu0
        %2081 = vmatprep.mubr.bf16.mxu0 0
        %2082 = vmatmul.mubr.bf16.gmra.mrb[0].mxu0 %v1843
        %v2083 = vpop.f32.mrb[0].mxu0
        %v2084 = vadd.f32 0.0, %v2083
        %v2085 = vpop.f32.mrb[0].mxu0
        %v2086 = vpop.f32.mrb[0].mxu0
        %v2087 = vadd.f32 0.0, %v2086
        %v2088 = vpop.f32.mrb[0].mxu0
        %2089 = vmatprep.mubr.bf16.mxu0 0
        %2090 = vmatmul.mubr.bf16.gmra.mrb[0].mxu0 %v1845
        %v2091 = vpop.f32.mrb[0].mxu0
        %v2092 = vadd.f32 0.0, %v2091
        %v2093 = vpop.f32.mrb[0].mxu0
        %v2094 = vpop.f32.mrb[0].mxu0
        %v2095 = vadd.f32 0.0, %v2094
        %v2096 = vpop.f32.mrb[0].mxu0
        %2097 = vmatprep.mubr.bf16.mxu0 0
        %2098 = vmatmul.mubr.bf16.gmra.mrb[0].mxu0 %v1847
        %v2099 = vpop.f32.mrb[0].mxu0
        %v2100 = vadd.f32 0.0, %v2099
        %v2101 = vpop.f32.mrb[0].mxu0
        %v2102 = vpop.f32.mrb[0].mxu0
        %v2103 = vadd.f32 0.0, %v2102
        %v2104 = vpop.f32.mrb[0].mxu0
        %2105 = vmatprep.mubr.bf16.mxu0 0
        %2106 = vmatmul.mubr.bf16.gmra.mrb[0].mxu0 %v1849
        %v2107 = vpop.f32.mrb[0].mxu0
        %v2108 = vadd.f32 0.0, %v2107
        %v2109 = vpop.f32.mrb[0].mxu0
        %v2110 = vpop.f32.mrb[0].mxu0
        %v2111 = vadd.f32 0.0, %v2110
        %v2112 = vpop.f32.mrb[0].mxu0
        %2113 = vmatprep.mubr.bf16.mxu0 0
        %2114 = vmatmul.mubr.bf16.gmra.mrb[0].mxu0 %v1851
        %v2115 = vpop.f32.mrb[0].mxu0
        %v2116 = vadd.f32 0.0, %v2115
        %v2117 = vpop.f32.mrb[0].mxu0
        %v2118 = vpop.f32.mrb[0].mxu0
        %v2119 = vadd.f32 0.0, %v2118
        %v2120 = vpop.f32.mrb[0].mxu0
        %2121 = vmatprep.mubr.bf16.mxu0 0
        %2122 = vmatmul.mubr.bf16.gmra.mrb[0].mxu0 %v1853
        %v2123 = vpop.f32.mrb[0].mxu0
        %v2124 = vadd.f32 0.0, %v2123
        %v2125 = vpop.f32.mrb[0].mxu0
        %v2126 = vpop.f32.mrb[0].mxu0
        %v2127 = vadd.f32 0.0, %v2126
        %v2128 = vpop.f32.mrb[0].mxu0
        %2129 = vmatprep.mubr.bf16.mxu0 0
        %2130 = vmatmul.mubr.bf16.gmra.mrb[0].mxu0 %v1855
        %v2131 = vpop.f32.mrb[0].mxu0
        %v2132 = vadd.f32 0.0, %v2131
        %v2133 = vpop.f32.mrb[0].mxu0
        %v2134 = vpop.f32.mrb[0].mxu0
        %v2135 = vadd.f32 0.0, %v2134
        %v2136 = vpop.f32.mrb[0].mxu0
        %2137 = vmatprep.mubr.bf16.mxu0 0
        %2138 = vmatmul.mubr.bf16.gmra.mrb[0].mxu0 %v1857
        %v2139 = vpop.f32.mrb[0].mxu0
        %v2140 = vadd.f32 0.0, %v2139
        %v2141 = vpop.f32.mrb[0].mxu0
        %v2142 = vpop.f32.mrb[0].mxu0
        %v2143 = vadd.f32 0.0, %v2142
        %v2144 = vpop.f32.mrb[0].mxu0
        %2145 = vmatprep.mubr.bf16.mxu0 0
        %2146 = vmatmul.mubr.bf16.gmra.mrb[0].mxu0 %v1859
        %v2147 = vpop.f32.mrb[0].mxu0
        %v2148 = vadd.f32 0.0, %v2147
        %v2149 = vpop.f32.mrb[0].mxu0
        %v2150 = vpop.f32.mrb[0].mxu0
        %v2151 = vadd.f32 0.0, %v2150
        %v2152 = vpop.f32.mrb[0].mxu0
        %2153 = vmatprep.mubr.bf16.mxu0 0
        %2154 = vmatmul.mubr.bf16.gmra.mrb[0].mxu0 %v1861
        %v2155 = vpop.f32.mrb[0].mxu0
        %v2156 = vadd.f32 0.0, %v2155
        %v2157 = vpop.f32.mrb[0].mxu0
        %v2158 = vpop.f32.mrb[0].mxu0
        %v2159 = vadd.f32 0.0, %v2158
        %v2160 = vpop.f32.mrb[0].mxu0
        %2161 = vmatprep.mubr.bf16.mxu0 0
        %2162 = vmatmul.mubr.bf16.gmra.mrb[0].mxu0 %v1863
        %v2163 = vpop.f32.mrb[0].mxu0
        %v2164 = vadd.f32 0.0, %v2163
        %v2165 = vpop.f32.mrb[0].mxu0
        %v2166 = vpop.f32.mrb[0].mxu0
        %v2167 = vadd.f32 0.0, %v2166
        %v2168 = vpop.f32.mrb[0].mxu0
        %2169 = vmatprep.mubr.bf16.mxu0 0
        %2170 = vmatmul.mubr.bf16.gmra.mrb[0].mxu0 %v1865
        %v2171 = vpop.f32.mrb[0].mxu0
        %v2172 = vadd.f32 0.0, %v2171
        %v2173 = vpop.f32.mrb[0].mxu0
        %v2174 = vpop.f32.mrb[0].mxu0
        %v2175 = vadd.f32 0.0, %v2174
        %v2176 = vpop.f32.mrb[0].mxu0
        %2177 = vmatprep.mubr.bf16.mxu0 0
        %2178 = vmatmul.mubr.bf16.gmra.mrb[0].mxu0 %v1867
        %v2179 = vpop.f32.mrb[0].mxu0
        %v2180 = vadd.f32 0.0, %v2179
        %v2181 = vpop.f32.mrb[0].mxu0
        %v2182 = vpop.f32.mrb[0].mxu0
        %v2183 = vadd.f32 0.0, %v2182
        %v2184 = vpop.f32.mrb[0].mxu0
        %2185 = vmatprep.mubr.bf16.mxu0 0
        %2186 = vmatmul.mubr.bf16.gmra.mrb[0].mxu0 %v1869
        %v2187 = vpop.f32.mrb[0].mxu0
        %v2188 = vadd.f32 0.0, %v2187
        %v2189 = vpop.f32.mrb[0].mxu0
        %v2190 = vpop.f32.mrb[0].mxu0
        %v2191 = vadd.f32 0.0, %v2190
        %v2192 = vpop.f32.mrb[0].mxu0
        %2193 = vmatprep.mubr.bf16.mxu0 0
        %2194 = vmatmul.mubr.bf16.gmra.mrb[0].mxu0 %v1871
        %v2195 = vpop.f32.mrb[0].mxu0
        %v2196 = vadd.f32 0.0, %v2195
        %v2197 = vpop.f32.mrb[0].mxu0
        %v2198 = vpop.f32.mrb[0].mxu0
        %v2199 = vadd.f32 0.0, %v2198
        %v2200 = vpop.f32.mrb[0].mxu0
        %2201 = vmatprep.mubr.bf16.mxu0 0
        %2202 = vmatmul.mubr.bf16.gmra.mrb[0].mxu0 %v1873
        %v2203 = vpop.f32.mrb[0].mxu0
        %v2204 = vadd.f32 0.0, %v2203
        %v2205 = vpop.f32.mrb[0].mxu0
        %v2206 = vpop.f32.mrb[0].mxu0
        %v2207 = vadd.f32 0.0, %v2206
        %v2208 = vpop.f32.mrb[0].mxu0
        %2209 = vmatprep.mubr.bf16.mxu0 0
        %2210 = vmatmul.mubr.bf16.gmra.mrb[0].mxu0 %v1875
        %v2211 = vpop.f32.mrb[0].mxu0
        %v2212 = vadd.f32 0.0, %v2211
        %v2213 = vpop.f32.mrb[0].mxu0
        %v2214 = vpop.f32.mrb[0].mxu0
        %v2215 = vadd.f32 0.0, %v2214
        %v2216 = vpop.f32.mrb[0].mxu0
        %2217 = vmatprep.mubr.bf16.mxu0 0
        %2218 = vmatmul.mubr.bf16.gmra.mrb[0].mxu0 %v1877
        %v2219 = vpop.f32.mrb[0].mxu0
        %v2220 = vadd.f32 0.0, %v2219
        %v2221 = vpop.f32.mrb[0].mxu0
        %v2222 = vpop.f32.mrb[0].mxu0
        %v2223 = vadd.f32 0.0, %v2222
        %v2224 = vpop.f32.mrb[0].mxu0
        %2225 = vmatprep.mubr.bf16.mxu0 0
        %2226 = vmatmul.mubr.bf16.gmra.mrb[0].mxu0 %v1879
        %v2227 = vpop.f32.mrb[0].mxu0
        %v2228 = vadd.f32 0.0, %v2227
        %v2229 = vpop.f32.mrb[0].mxu0
        %v2230 = vpop.f32.mrb[0].mxu0
        %v2231 = vadd.f32 0.0, %v2230
        %v2232 = vpop.f32.mrb[0].mxu0
        %2233 = vmatprep.mubr.bf16.mxu0 0
        %2234 = vmatmul.mubr.bf16.gmra.mrb[0].mxu0 %v1881
        %v2235 = vpop.f32.mrb[0].mxu0
        %v2236 = vadd.f32 0.0, %v2235
        %v2237 = vpop.f32.mrb[0].mxu0
        %v2238 = vpop.f32.mrb[0].mxu0
        %v2239 = vadd.f32 0.0, %v2238
        %v2240 = vpop.f32.mrb[0].mxu0
        %2241 = vdwg.mxu0
        %v2242 = vadd.f32 %v1522, %v1996
        %v2243 = vadd.f32 %v1525, %v1999
        %v2244 = vadd.f32 %v1530, %v2004
        %v2245 = vadd.f32 %v1533, %v2007
        %v2246 = vadd.f32 %v1538, %v2012
        %v2247 = vadd.f32 %v1541, %v2015
        %v2248 = vadd.f32 %v1546, %v2020
        %v2249 = vadd.f32 %v1549, %v2023
        %v2250 = vadd.f32 %v1554, %v2028
        %v2251 = vadd.f32 %v1557, %v2031
        %v2252 = vadd.f32 %v1562, %v2036
        %v2253 = vadd.f32 %v1565, %v2039
        %v2254 = vadd.f32 %v1570, %v2044
        %v2255 = vadd.f32 %v1573, %v2047
        %v2256 = vadd.f32 %v1578, %v2052
        %v2257 = vadd.f32 %v1581, %v2055
        %v2258 = vadd.f32 %v1586, %v2060
        %v2259 = vadd.f32 %v1589, %v2063
        %v2260 = vadd.f32 %v1594, %v2068
        %v2261 = vadd.f32 %v1597, %v2071
        %v2262 = vadd.f32 %v1602, %v2076
        %v2263 = vadd.f32 %v1605, %v2079
        %v2264 = vadd.f32 %v1610, %v2084
        %v2265 = vadd.f32 %v1613, %v2087
        %v2266 = vadd.f32 %v1618, %v2092
        %v2267 = vadd.f32 %v1621, %v2095
        %v2268 = vadd.f32 %v1626, %v2100
        %v2269 = vadd.f32 %v1629, %v2103
        %v2270 = vadd.f32 %v1634, %v2108
        %v2271 = vadd.f32 %v1637, %v2111
        %v2272 = vadd.f32 %v1642, %v2116
        %v2273 = vadd.f32 %v1645, %v2119
        %v2274 = vadd.f32 %v1650, %v2124
        %v2275 = vadd.f32 %v1653, %v2127
        %v2276 = vadd.f32 %v1658, %v2132
        %v2277 = vadd.f32 %v1661, %v2135
        %v2278 = vadd.f32 %v1666, %v2140
        %v2279 = vadd.f32 %v1669, %v2143
        %v2280 = vadd.f32 %v1674, %v2148
        %v2281 = vadd.f32 %v1677, %v2151
        %v2282 = vadd.f32 %v1682, %v2156
        %v2283 = vadd.f32 %v1685, %v2159
        %v2284 = vadd.f32 %v1690, %v2164
        %v2285 = vadd.f32 %v1693, %v2167
        %v2286 = vadd.f32 %v1698, %v2172
        %v2287 = vadd.f32 %v1701, %v2175
        %v2288 = vadd.f32 %v1706, %v2180
        %v2289 = vadd.f32 %v1709, %v2183
        %v2290 = vadd.f32 %v1714, %v2188
        %v2291 = vadd.f32 %v1717, %v2191
        %v2292 = vadd.f32 %v1722, %v2196
        %v2293 = vadd.f32 %v1725, %v2199
        %v2294 = vadd.f32 %v1730, %v2204
        %v2295 = vadd.f32 %v1733, %v2207
        %v2296 = vadd.f32 %v1738, %v2212
        %v2297 = vadd.f32 %v1741, %v2215
        %v2298 = vadd.f32 %v1746, %v2220
        %v2299 = vadd.f32 %v1749, %v2223
        %v2300 = vadd.f32 %v1754, %v2228
        %v2301 = vadd.f32 %v1757, %v2231
        %v2302 = vadd.f32 %v1762, %v2236
        %v2303 = vadd.f32 %v1765, %v2239
        %2304 = vst [vmem:[#allocation3] sm:$0xff] %v2242
        %2305 = vst [vmem:[#allocation3 + $0x8] sm:$0xff] %v2243
        %2306 = vst [vmem:[#allocation3 + $0x10] sm:$0xff] %v2244
        %2307 = vst [vmem:[#allocation3 + $0x18] sm:$0xff] %v2245
        %2308 = vst [vmem:[#allocation3 + $0x20] sm:$0xff] %v2246
        %2309 = vst [vmem:[#allocation3 + $0x28] sm:$0xff] %v2247
        %2310 = vst [vmem:[#allocation3 + $0x30] sm:$0xff] %v2248
        %2311 = vst [vmem:[#allocation3 + $0x38] sm:$0xff] %v2249
        %2312 = vst [vmem:[#allocation3 + $0x40] sm:$0xff] %v2250
        %2313 = vst [vmem:[#allocation3 + $0x48] sm:$0xff] %v2251
        %2314 = vst [vmem:[#allocation3 + $0x50] sm:$0xff] %v2252
        %2315 = vst [vmem:[#allocation3 + $0x58] sm:$0xff] %v2253
        %2316 = vst [vmem:[#allocation3 + $0x60] sm:$0xff] %v2254
        %2317 = vst [vmem:[#allocation3 + $0x68] sm:$0xff] %v2255
        %2318 = vst [vmem:[#allocation3 + $0x70] sm:$0xff] %v2256
        %2319 = vst [vmem:[#allocation3 + $0x78] sm:$0xff] %v2257
        %2320 = vst [vmem:[#allocation3 + $0x80] sm:$0xff] %v2258
        %2321 = vst [vmem:[#allocation3 + $0x88] sm:$0xff] %v2259
        %2322 = vst [vmem:[#allocation3 + $0x90] sm:$0xff] %v2260
        %2323 = vst [vmem:[#allocation3 + $0x98] sm:$0xff] %v2261
        %2324 = vst [vmem:[#allocation3 + $0xa0] sm:$0xff] %v2262
        %2325 = vst [vmem:[#allocation3 + $0xa8] sm:$0xff] %v2263
        %2326 = vst [vmem:[#allocation3 + $0xb0] sm:$0xff] %v2264
        %2327 = vst [vmem:[#allocation3 + $0xb8] sm:$0xff] %v2265
        %2328 = vst [vmem:[#allocation3 + $0xc0] sm:$0xff] %v2266
        %2329 = vst [vmem:[#allocation3 + $0xc8] sm:$0xff] %v2267
        %2330 = vst [vmem:[#allocation3 + $0xd0] sm:$0xff] %v2268
        %2331 = vst [vmem:[#allocation3 + $0xd8] sm:$0xff] %v2269
        %2332 = vst [vmem:[#allocation3 + $0xe0] sm:$0xff] %v2270
        %2333 = vst [vmem:[#allocation3 + $0xe8] sm:$0xff] %v2271
        %2334 = vst [vmem:[#allocation3 + $0xf0] sm:$0xff] %v2272
        %2335 = vst [vmem:[#allocation3 + $0xf8] sm:$0xff] %v2273
        %2336 = vst [vmem:[#allocation3 + $0x100] sm:$0xff] %v2274
        %2337 = vst [vmem:[#allocation3 + $0x108] sm:$0xff] %v2275
        %2338 = vst [vmem:[#allocation3 + $0x110] sm:$0xff] %v2276
        %2339 = vst [vmem:[#allocation3 + $0x118] sm:$0xff] %v2277
        %2340 = vst [vmem:[#allocation3 + $0x120] sm:$0xff] %v2278
        %2341 = vst [vmem:[#allocation3 + $0x128] sm:$0xff] %v2279
        %2342 = vst [vmem:[#allocation3 + $0x130] sm:$0xff] %v2280
        %2343 = vst [vmem:[#allocation3 + $0x138] sm:$0xff] %v2281
        %2344 = vst [vmem:[#allocation3 + $0x140] sm:$0xff] %v2282
        %2345 = vst [vmem:[#allocation3 + $0x148] sm:$0xff] %v2283
        %2346 = vst [vmem:[#allocation3 + $0x150] sm:$0xff] %v2284
        %2347 = vst [vmem:[#allocation3 + $0x158] sm:$0xff] %v2285
        %2348 = vst [vmem:[#allocation3 + $0x160] sm:$0xff] %v2286
        %2349 = vst [vmem:[#allocation3 + $0x168] sm:$0xff] %v2287
        %2350 = vst [vmem:[#allocation3 + $0x170] sm:$0xff] %v2288
        %2351 = vst [vmem:[#allocation3 + $0x178] sm:$0xff] %v2289
        %2352 = vst [vmem:[#allocation3 + $0x180] sm:$0xff] %v2290
        %2353 = vst [vmem:[#allocation3 + $0x188] sm:$0xff] %v2291
        %2354 = vst [vmem:[#allocation3 + $0x190] sm:$0xff] %v2292
        %2355 = vst [vmem:[#allocation3 + $0x198] sm:$0xff] %v2293
        %2356 = vst [vmem:[#allocation3 + $0x1a0] sm:$0xff] %v2294
        %2357 = vst [vmem:[#allocation3 + $0x1a8] sm:$0xff] %v2295
        %2358 = vst [vmem:[#allocation3 + $0x1b0] sm:$0xff] %v2296
        %2359 = vst [vmem:[#allocation3 + $0x1b8] sm:$0xff] %v2297
        %2360 = vst [vmem:[#allocation3 + $0x1c0] sm:$0xff] %v2298
        %2361 = vst [vmem:[#allocation3 + $0x1c8] sm:$0xff] %v2299
        %2362 = vst [vmem:[#allocation3 + $0x1d0] sm:$0xff] %v2300
        %2363 = vst [vmem:[#allocation3 + $0x1d8] sm:$0xff] %v2301
        %2364 = vst [vmem:[#allocation3 + $0x1e0] sm:$0xff] %v2302
        %2365 = vst [vmem:[#allocation3 + $0x1e8] sm:$0xff] %v2303
        %v2366 = vld [vmem:[#allocation2 + $0x10] sm:$0xff]
        %v2367 = vld [vmem:[#allocation2 + $0x18] sm:$0xff]
        %v2368 = vld [vmem:[#allocation2 + $0x20] sm:$0xff]
        %v2369 = vld [vmem:[#allocation2 + $0x28] sm:$0xff]
        %v2370 = vld [vmem:[#allocation2 + $0x30] sm:$0xff]
        %v2371 = vld [vmem:[#allocation2 + $0x38] sm:$0xff]
        %v2372 = vld [vmem:[#allocation2 + $0x40] sm:$0xff]
        %v2373 = vld [vmem:[#allocation2 + $0x48] sm:$0xff]
        %v2374 = vld [vmem:[#allocation2 + $0x50] sm:$0xff]
        %v2375 = vld [vmem:[#allocation2 + $0x58] sm:$0xff]
        %v2376 = vld [vmem:[#allocation2 + $0x60] sm:$0xff]
        %v2377 = vld [vmem:[#allocation2 + $0x68] sm:$0xff]
        %v2378 = vld [vmem:[#allocation2 + $0x70] sm:$0xff]
        %v2379 = vld [vmem:[#allocation2 + $0x78] sm:$0xff]
        %v2380 = vld [vmem:[#allocation2 + $0x80] sm:$0xff]
        %v2381 = vld [vmem:[#allocation2 + $0x88] sm:$0xff]
        %v2382 = vld [vmem:[#allocation2 + $0x90] sm:$0xff]
        %v2383 = vld [vmem:[#allocation2 + $0x98] sm:$0xff]
        %v2384 = vld [vmem:[#allocation2 + $0xa0] sm:$0xff]
        %v2385 = vld [vmem:[#allocation2 + $0xa8] sm:$0xff]
        %v2386 = vld [vmem:[#allocation2 + $0xb0] sm:$0xff]
        %v2387 = vld [vmem:[#allocation2 + $0xb8] sm:$0xff]
        %v2388 = vld [vmem:[#allocation2 + $0xc0] sm:$0xff]
        %v2389 = vld [vmem:[#allocation2 + $0xc8] sm:$0xff]
        %v2390 = vld [vmem:[#allocation2 + $0xd0] sm:$0xff]
        %v2391 = vld [vmem:[#allocation2 + $0xd8] sm:$0xff]
        %v2392 = vld [vmem:[#allocation2 + $0xe0] sm:$0xff]
        %v2393 = vld [vmem:[#allocation2 + $0xe8] sm:$0xff]
        %v2394 = vld [vmem:[#allocation2 + $0xf0] sm:$0xff]
        %v2395 = vld [vmem:[#allocation2 + $0xf8] sm:$0xff]
        %v2396 = vld [vmem:[#allocation2 + $0x100] sm:$0xff]
        %s2397 = scalar_lea.vmem [#allocation7], 192
        %v2398 = vld [vmem:[%s2397] sm:$0xf]
        %v2399 = vld [vmem:[%s2397 + $0x4] sm:$0xf]
        %v2400 = vld [vmem:[%s2397 + $0x8] sm:$0xf]
        %v2401 = vld [vmem:[%s2397 + $0xc] sm:$0xf]
        %v2402 = vld [vmem:[%s2397 + $0x10] sm:$0xf]
        %v2403 = vld [vmem:[%s2397 + $0x14] sm:$0xf]
        %v2404 = vld [vmem:[%s2397 + $0x18] sm:$0xf]
        %v2405 = vld [vmem:[%s2397 + $0x1c] sm:$0xf]
        %v2406 = vld [vmem:[%s2397 + $0x20] sm:$0xf]
        %v2407 = vld [vmem:[%s2397 + $0x24] sm:$0xf]
        %v2408 = vld [vmem:[%s2397 + $0x28] sm:$0xf]
        %v2409 = vld [vmem:[%s2397 + $0x2c] sm:$0xf]
        %v2410 = vld [vmem:[%s2397 + $0x30] sm:$0xf]
        %v2411 = vld [vmem:[%s2397 + $0x34] sm:$0xf]
        %v2412 = vld [vmem:[%s2397 + $0x38] sm:$0xf]
        %v2413 = vld [vmem:[%s2397 + $0x3c] sm:$0xf]
        %v2414 = vld [vmem:[#allocation2 + $0x108] sm:$0x1]
        %s2415 = scalar_lea.vmem [#allocation7], 256
        %v2416 = vld [vmem:[%s2415] sm:$0xf]
        %v2417 = vld [vmem:[%s2415 + $0x4] sm:$0xf]
        %v2418 = vld [vmem:[%s2415 + $0x8] sm:$0xf]
        %v2419 = vld [vmem:[%s2415 + $0xc] sm:$0xf]
        %v2420 = vld [vmem:[%s2415 + $0x10] sm:$0xf]
        %v2421 = vld [vmem:[%s2415 + $0x14] sm:$0xf]
        %v2422 = vld [vmem:[%s2415 + $0x18] sm:$0xf]
        %v2423 = vld [vmem:[%s2415 + $0x1c] sm:$0xf]
        %v2424 = vld [vmem:[%s2415 + $0x20] sm:$0xf]
        %v2425 = vld [vmem:[%s2415 + $0x24] sm:$0xf]
        %v2426 = vld [vmem:[%s2415 + $0x28] sm:$0xf]
        %v2427 = vld [vmem:[%s2415 + $0x2c] sm:$0xf]
        %v2428 = vld [vmem:[%s2415 + $0x30] sm:$0xf]
        %v2429 = vld [vmem:[%s2415 + $0x34] sm:$0xf]
        %v2430 = vld [vmem:[%s2415 + $0x38] sm:$0xf]
        %v2431 = vld [vmem:[%s2415 + $0x3c] sm:$0xf]
        %v2433 = vshrl.u32 %v2366, 16
        %v2435 = vshll.u32 %v2366, 16
        %v2437 = vrot.slane %v2435, 1
        %v2438 = vor.u32 %v2433, %v2437
        %v2440 = vshll.u32 %v2367, 16
        %v2442 = vrot.slane %v2440, 1
        %v2443 = vsel %vm826, %v2438, %v2442
        %v2444 = vshrl.u32 %v2367, 16
        %v2446 = vor.u32 %v2444, %v2442
        %v2448 = vshll.u32 %v2368, 16
        %v2450 = vrot.slane %v2448, 1
        %v2451 = vsel %vm826, %v2446, %v2450
        %v2452 = vshrl.u32 %v2368, 16
        %v2454 = vor.u32 %v2452, %v2450
        %v2456 = vshll.u32 %v2369, 16
        %v2458 = vrot.slane %v2456, 1
        %v2459 = vsel %vm826, %v2454, %v2458
        %v2460 = vshrl.u32 %v2369, 16
        %v2462 = vor.u32 %v2460, %v2458
        %v2464 = vshll.u32 %v2370, 16
        %v2466 = vrot.slane %v2464, 1
        %v2467 = vsel %vm826, %v2462, %v2466
        %v2468 = vshrl.u32 %v2370, 16
        %v2470 = vor.u32 %v2468, %v2466
        %v2472 = vshll.u32 %v2371, 16
        %v2474 = vrot.slane %v2472, 1
        %v2475 = vsel %vm826, %v2470, %v2474
        %v2476 = vshrl.u32 %v2371, 16
        %v2478 = vor.u32 %v2476, %v2474
        %v2480 = vshll.u32 %v2372, 16
        %v2482 = vrot.slane %v2480, 1
        %v2483 = vsel %vm826, %v2478, %v2482
        %v2484 = vshrl.u32 %v2372, 16
        %v2486 = vor.u32 %v2484, %v2482
        %v2488 = vshll.u32 %v2373, 16
        %v2490 = vrot.slane %v2488, 1
        %v2491 = vsel %vm826, %v2486, %v2490
        %v2492 = vshrl.u32 %v2373, 16
        %v2494 = vor.u32 %v2492, %v2490
        %v2496 = vshll.u32 %v2374, 16
        %v2498 = vrot.slane %v2496, 1
        %v2499 = vsel %vm826, %v2494, %v2498
        %v2500 = vshrl.u32 %v2374, 16
        %v2502 = vor.u32 %v2500, %v2498
        %v2504 = vshll.u32 %v2375, 16
        %v2506 = vrot.slane %v2504, 1
        %v2507 = vsel %vm826, %v2502, %v2506
        %v2508 = vshrl.u32 %v2375, 16
        %v2510 = vor.u32 %v2508, %v2506
        %v2512 = vshll.u32 %v2376, 16
        %v2514 = vrot.slane %v2512, 1
        %v2515 = vsel %vm826, %v2510, %v2514
        %v2516 = vshrl.u32 %v2376, 16
        %v2518 = vor.u32 %v2516, %v2514
        %v2520 = vshll.u32 %v2377, 16
        %v2522 = vrot.slane %v2520, 1
        %v2523 = vsel %vm826, %v2518, %v2522
        %v2524 = vshrl.u32 %v2377, 16
        %v2526 = vor.u32 %v2524, %v2522
        %v2528 = vshll.u32 %v2378, 16
        %v2530 = vrot.slane %v2528, 1
        %v2531 = vsel %vm826, %v2526, %v2530
        %v2532 = vshrl.u32 %v2378, 16
        %v2534 = vor.u32 %v2532, %v2530
        %v2536 = vshll.u32 %v2379, 16
        %v2538 = vrot.slane %v2536, 1
        %v2539 = vsel %vm826, %v2534, %v2538
        %v2540 = vshrl.u32 %v2379, 16
        %v2542 = vor.u32 %v2540, %v2538
        %v2544 = vshll.u32 %v2380, 16
        %v2546 = vrot.slane %v2544, 1
        %v2547 = vsel %vm826, %v2542, %v2546
        %v2548 = vshrl.u32 %v2380, 16
        %v2550 = vor.u32 %v2548, %v2546
        %v2552 = vshll.u32 %v2381, 16
        %v2554 = vrot.slane %v2552, 1
        %v2555 = vsel %vm826, %v2550, %v2554
        %v2556 = vshrl.u32 %v2381, 16
        %v2558 = vor.u32 %v2556, %v2554
        %v2560 = vshll.u32 %v2382, 16
        %v2562 = vrot.slane %v2560, 1
        %v2563 = vsel %vm826, %v2558, %v2562
        %v2564 = vshrl.u32 %v2382, 16
        %v2566 = vor.u32 %v2564, %v2562
        %v2568 = vshll.u32 %v2383, 16
        %v2570 = vrot.slane %v2568, 1
        %v2571 = vsel %vm826, %v2566, %v2570
        %v2572 = vshrl.u32 %v2383, 16
        %v2574 = vor.u32 %v2572, %v2570
        %v2576 = vshll.u32 %v2384, 16
        %v2578 = vrot.slane %v2576, 1
        %v2579 = vsel %vm826, %v2574, %v2578
        %v2580 = vshrl.u32 %v2384, 16
        %v2582 = vor.u32 %v2580, %v2578
        %v2584 = vshll.u32 %v2385, 16
        %v2586 = vrot.slane %v2584, 1
        %v2587 = vsel %vm826, %v2582, %v2586
        %v2588 = vshrl.u32 %v2385, 16
        %v2590 = vor.u32 %v2588, %v2586
        %v2592 = vshll.u32 %v2386, 16
        %v2594 = vrot.slane %v2592, 1
        %v2595 = vsel %vm826, %v2590, %v2594
        %v2596 = vshrl.u32 %v2386, 16
        %v2598 = vor.u32 %v2596, %v2594
        %v2600 = vshll.u32 %v2387, 16
        %v2602 = vrot.slane %v2600, 1
        %v2603 = vsel %vm826, %v2598, %v2602
        %v2604 = vshrl.u32 %v2387, 16
        %v2606 = vor.u32 %v2604, %v2602
        %v2608 = vshll.u32 %v2388, 16
        %v2610 = vrot.slane %v2608, 1
        %v2611 = vsel %vm826, %v2606, %v2610
        %v2612 = vshrl.u32 %v2388, 16
        %v2614 = vor.u32 %v2612, %v2610
        %v2616 = vshll.u32 %v2389, 16
        %v2618 = vrot.slane %v2616, 1
        %v2619 = vsel %vm826, %v2614, %v2618
        %v2620 = vshrl.u32 %v2389, 16
        %v2622 = vor.u32 %v2620, %v2618
        %v2624 = vshll.u32 %v2390, 16
        %v2626 = vrot.slane %v2624, 1
        %v2627 = vsel %vm826, %v2622, %v2626
        %v2628 = vshrl.u32 %v2390, 16
        %v2630 = vor.u32 %v2628, %v2626
        %v2632 = vshll.u32 %v2391, 16
        %v2634 = vrot.slane %v2632, 1
        %v2635 = vsel %vm826, %v2630, %v2634
        %v2636 = vshrl.u32 %v2391, 16
        %v2638 = vor.u32 %v2636, %v2634
        %v2640 = vshll.u32 %v2392, 16
        %v2642 = vrot.slane %v2640, 1
        %v2643 = vsel %vm826, %v2638, %v2642
        %v2644 = vshrl.u32 %v2392, 16
        %v2646 = vor.u32 %v2644, %v2642
        %v2648 = vshll.u32 %v2393, 16
        %v2650 = vrot.slane %v2648, 1
        %v2651 = vsel %vm826, %v2646, %v2650
        %v2652 = vshrl.u32 %v2393, 16
        %v2654 = vor.u32 %v2652, %v2650
        %v2656 = vshll.u32 %v2394, 16
        %v2658 = vrot.slane %v2656, 1
        %v2659 = vsel %vm826, %v2654, %v2658
        %v2660 = vshrl.u32 %v2394, 16
        %v2662 = vor.u32 %v2660, %v2658
        %v2664 = vshll.u32 %v2395, 16
        %v2666 = vrot.slane %v2664, 1
        %v2667 = vsel %vm826, %v2662, %v2666
        %v2668 = vshrl.u32 %v2395, 16
        %v2670 = vor.u32 %v2668, %v2666
        %v2672 = vshll.u32 %v2396, 16
        %v2674 = vrot.slane %v2672, 1
        %v2675 = vsel %vm826, %v2670, %v2674
        %v2676 = vshrl.u32 %v2396, 16
        %v2678 = vor.u32 %v2676, %v2674
        %v2680 = vshll.u32 %v2414, 16
        %v2682 = vrot.slane %v2680, 1
        %v2683 = vsel %vm826, %v2678, %v2682
        %v2731 = vunpack.c.l.b16 %v2416
        %v2732 = vunpack.c.l.b16 %v2417
        %v2733 = vunpack.c.l.b16 %v2418
        %v2734 = vunpack.c.l.b16 %v2419
        %v2735 = vunpack.c.l.b16 %v2420
        %v2736 = vunpack.c.l.b16 %v2421
        %v2737 = vunpack.c.l.b16 %v2422
        %v2738 = vunpack.c.l.b16 %v2423
        %v2739 = vunpack.c.l.b16 %v2424
        %v2740 = vunpack.c.l.b16 %v2425
        %v2741 = vunpack.c.l.b16 %v2426
        %v2742 = vunpack.c.l.b16 %v2427
        %v2743 = vunpack.c.l.b16 %v2428
        %v2744 = vunpack.c.l.b16 %v2429
        %v2745 = vunpack.c.l.b16 %v2430
        %v2746 = vunpack.c.l.b16 %v2431
        %v2747 = vpack.c.b16 %v2732, %v2731
        %v2748 = vpack.c.b16 %v2734, %v2733
        %v2749 = vpack.c.b16 %v2736, %v2735
        %v2750 = vpack.c.b16 %v2738, %v2737
        %v2751 = vpack.c.b16 %v2740, %v2739
        %v2752 = vpack.c.b16 %v2742, %v2741
        %v2753 = vpack.c.b16 %v2744, %v2743
        %v2754 = vpack.c.b16 %v2746, %v2745
        %2763 = vmatprep.subr.bf16.mxu0 0
        %2764 = vmatpush1.bf16.msra.mxu0 %v2747
        %2765 = vmatprep.subr.bf16.mxu0 0
        %2766 = vmatpush1.bf16.msra.mxu0 %v2748
        %2767 = vmatprep.subr.bf16.mxu0 0
        %2768 = vmatpush1.bf16.msra.mxu0 %v2749
        %2769 = vmatprep.subr.bf16.mxu0 0
        %2770 = vmatpush1.bf16.msra.mxu0 %v2750
        %2771 = vmatprep.subr.bf16.mxu0 0
        %2772 = vmatpush1.bf16.msra.mxu0 %v2751
        %2773 = vmatprep.subr.bf16.mxu0 0
        %2774 = vmatpush1.bf16.msra.mxu0 %v2752
        %2775 = vmatprep.subr.bf16.mxu0 0
        %2776 = vmatpush1.bf16.msra.mxu0 %v2753
        %2777 = vmatprep.subr.bf16.mxu0 0
        %2778 = vmatpush1.bf16.msra.mxu0 %v2754
        %2779 = vmatprep.subr.bf16.mxu0 0
        %2780 = vmatpush1.bf16.msra.mxu0 0
        %2781 = vmatprep.subr.bf16.mxu0 0
        %2782 = vmatpush1.bf16.msra.mxu0 0
        %2783 = vmatprep.subr.bf16.mxu0 0
        %2784 = vmatpush1.bf16.msra.mxu0 0
        %2785 = vmatprep.subr.bf16.mxu0 0
        %2786 = vmatpush1.bf16.msra.mxu0 0
        %2787 = vmatprep.subr.bf16.mxu0 0
        %2788 = vmatpush1.bf16.msra.mxu0 0
        %2789 = vmatprep.subr.bf16.mxu0 0
        %2790 = vmatpush1.bf16.msra.mxu0 0
        %2791 = vmatprep.subr.bf16.mxu0 0
        %2792 = vmatpush1.bf16.msra.mxu0 0
        %2793 = vmatprep.subr.bf16.mxu0 0
        %2794 = vmatpush1.bf16.msra.mxu0 0
        %2795 = vmatprep.mubr.bf16.mxu0 0
        %2796 = vmatmul.mubr.bf16.gmra.mrb[0].mxu0 %v2443
        %v2797 = vpop.f32.mrb[0].mxu0
        %v2798 = vadd.f32 0.0, %v2797
        %v2799 = vpop.f32.mrb[0].mxu0
        %v2800 = vpop.f32.mrb[0].mxu0
        %v2801 = vadd.f32 0.0, %v2800
        %v2802 = vpop.f32.mrb[0].mxu0
        %2803 = vmatprep.mubr.bf16.mxu0 0
        %2804 = vmatmul.mubr.bf16.gmra.mrb[0].mxu0 %v2451
        %v2805 = vpop.f32.mrb[0].mxu0
        %v2806 = vadd.f32 0.0, %v2805
        %v2807 = vpop.f32.mrb[0].mxu0
        %v2808 = vpop.f32.mrb[0].mxu0
        %v2809 = vadd.f32 0.0, %v2808
        %v2810 = vpop.f32.mrb[0].mxu0
        %2811 = vmatprep.mubr.bf16.mxu0 0
        %2812 = vmatmul.mubr.bf16.gmra.mrb[0].mxu0 %v2459
        %v2813 = vpop.f32.mrb[0].mxu0
        %v2814 = vadd.f32 0.0, %v2813
        %v2815 = vpop.f32.mrb[0].mxu0
        %v2816 = vpop.f32.mrb[0].mxu0
        %v2817 = vadd.f32 0.0, %v2816
        %v2818 = vpop.f32.mrb[0].mxu0
        %2819 = vmatprep.mubr.bf16.mxu0 0
        %2820 = vmatmul.mubr.bf16.gmra.mrb[0].mxu0 %v2467
        %v2821 = vpop.f32.mrb[0].mxu0
        %v2822 = vadd.f32 0.0, %v2821
        %v2823 = vpop.f32.mrb[0].mxu0
        %v2824 = vpop.f32.mrb[0].mxu0
        %v2825 = vadd.f32 0.0, %v2824
        %v2826 = vpop.f32.mrb[0].mxu0
        %2827 = vmatprep.mubr.bf16.mxu0 0
        %2828 = vmatmul.mubr.bf16.gmra.mrb[0].mxu0 %v2475
        %v2829 = vpop.f32.mrb[0].mxu0
        %v2830 = vadd.f32 0.0, %v2829
        %v2831 = vpop.f32.mrb[0].mxu0
        %v2832 = vpop.f32.mrb[0].mxu0
        %v2833 = vadd.f32 0.0, %v2832
        %v2834 = vpop.f32.mrb[0].mxu0
        %2835 = vmatprep.mubr.bf16.mxu0 0
        %2836 = vmatmul.mubr.bf16.gmra.mrb[0].mxu0 %v2483
        %v2837 = vpop.f32.mrb[0].mxu0
        %v2838 = vadd.f32 0.0, %v2837
        %v2839 = vpop.f32.mrb[0].mxu0
        %v2840 = vpop.f32.mrb[0].mxu0
        %v2841 = vadd.f32 0.0, %v2840
        %v2842 = vpop.f32.mrb[0].mxu0
        %2843 = vmatprep.mubr.bf16.mxu0 0
        %2844 = vmatmul.mubr.bf16.gmra.mrb[0].mxu0 %v2491
        %v2845 = vpop.f32.mrb[0].mxu0
        %v2846 = vadd.f32 0.0, %v2845
        %v2847 = vpop.f32.mrb[0].mxu0
        %v2848 = vpop.f32.mrb[0].mxu0
        %v2849 = vadd.f32 0.0, %v2848
        %v2850 = vpop.f32.mrb[0].mxu0
        %2851 = vmatprep.mubr.bf16.mxu0 0
        %2852 = vmatmul.mubr.bf16.gmra.mrb[0].mxu0 %v2499
        %v2853 = vpop.f32.mrb[0].mxu0
        %v2854 = vadd.f32 0.0, %v2853
        %v2855 = vpop.f32.mrb[0].mxu0
        %v2856 = vpop.f32.mrb[0].mxu0
        %v2857 = vadd.f32 0.0, %v2856
        %v2858 = vpop.f32.mrb[0].mxu0
        %2859 = vmatprep.mubr.bf16.mxu0 0
        %2860 = vmatmul.mubr.bf16.gmra.mrb[0].mxu0 %v2507
        %v2861 = vpop.f32.mrb[0].mxu0
        %v2862 = vadd.f32 0.0, %v2861
        %v2863 = vpop.f32.mrb[0].mxu0
        %v2864 = vpop.f32.mrb[0].mxu0
        %v2865 = vadd.f32 0.0, %v2864
        %v2866 = vpop.f32.mrb[0].mxu0
        %2867 = vmatprep.mubr.bf16.mxu0 0
        %2868 = vmatmul.mubr.bf16.gmra.mrb[0].mxu0 %v2515
        %v2869 = vpop.f32.mrb[0].mxu0
        %v2870 = vadd.f32 0.0, %v2869
        %v2871 = vpop.f32.mrb[0].mxu0
        %v2872 = vpop.f32.mrb[0].mxu0
        %v2873 = vadd.f32 0.0, %v2872
        %v2874 = vpop.f32.mrb[0].mxu0
        %2875 = vmatprep.mubr.bf16.mxu0 0
        %2876 = vmatmul.mubr.bf16.gmra.mrb[0].mxu0 %v2523
        %v2877 = vpop.f32.mrb[0].mxu0
        %v2878 = vadd.f32 0.0, %v2877
        %v2879 = vpop.f32.mrb[0].mxu0
        %v2880 = vpop.f32.mrb[0].mxu0
        %v2881 = vadd.f32 0.0, %v2880
        %v2882 = vpop.f32.mrb[0].mxu0
        %2883 = vmatprep.mubr.bf16.mxu0 0
        %2884 = vmatmul.mubr.bf16.gmra.mrb[0].mxu0 %v2531
        %v2885 = vpop.f32.mrb[0].mxu0
        %v2886 = vadd.f32 0.0, %v2885
        %v2887 = vpop.f32.mrb[0].mxu0
        %v2888 = vpop.f32.mrb[0].mxu0
        %v2889 = vadd.f32 0.0, %v2888
        %v2890 = vpop.f32.mrb[0].mxu0
        %2891 = vmatprep.mubr.bf16.mxu0 0
        %2892 = vmatmul.mubr.bf16.gmra.mrb[0].mxu0 %v2539
        %v2893 = vpop.f32.mrb[0].mxu0
        %v2894 = vadd.f32 0.0, %v2893
        %v2895 = vpop.f32.mrb[0].mxu0
        %v2896 = vpop.f32.mrb[0].mxu0
        %v2897 = vadd.f32 0.0, %v2896
        %v2898 = vpop.f32.mrb[0].mxu0
        %2899 = vmatprep.mubr.bf16.mxu0 0
        %2900 = vmatmul.mubr.bf16.gmra.mrb[0].mxu0 %v2547
        %v2901 = vpop.f32.mrb[0].mxu0
        %v2902 = vadd.f32 0.0, %v2901
        %v2903 = vpop.f32.mrb[0].mxu0
        %v2904 = vpop.f32.mrb[0].mxu0
        %v2905 = vadd.f32 0.0, %v2904
        %v2906 = vpop.f32.mrb[0].mxu0
        %2907 = vmatprep.mubr.bf16.mxu0 0
        %2908 = vmatmul.mubr.bf16.gmra.mrb[0].mxu0 %v2555
        %v2909 = vpop.f32.mrb[0].mxu0
        %v2910 = vadd.f32 0.0, %v2909
        %v2911 = vpop.f32.mrb[0].mxu0
        %v2912 = vpop.f32.mrb[0].mxu0
        %v2913 = vadd.f32 0.0, %v2912
        %v2914 = vpop.f32.mrb[0].mxu0
        %2915 = vmatprep.mubr.bf16.mxu0 0
        %2916 = vmatmul.mubr.bf16.gmra.mrb[0].mxu0 %v2563
        %v2917 = vpop.f32.mrb[0].mxu0
        %v2918 = vadd.f32 0.0, %v2917
        %v2919 = vpop.f32.mrb[0].mxu0
        %v2920 = vpop.f32.mrb[0].mxu0
        %v2921 = vadd.f32 0.0, %v2920
        %v2922 = vpop.f32.mrb[0].mxu0
        %2923 = vmatprep.mubr.bf16.mxu0 0
        %2924 = vmatmul.mubr.bf16.gmra.mrb[0].mxu0 %v2571
        %v2925 = vpop.f32.mrb[0].mxu0
        %v2926 = vadd.f32 0.0, %v2925
        %v2927 = vpop.f32.mrb[0].mxu0
        %v2928 = vpop.f32.mrb[0].mxu0
        %v2929 = vadd.f32 0.0, %v2928
        %v2930 = vpop.f32.mrb[0].mxu0
        %2931 = vmatprep.mubr.bf16.mxu0 0
        %2932 = vmatmul.mubr.bf16.gmra.mrb[0].mxu0 %v2579
        %v2933 = vpop.f32.mrb[0].mxu0
        %v2934 = vadd.f32 0.0, %v2933
        %v2935 = vpop.f32.mrb[0].mxu0
        %v2936 = vpop.f32.mrb[0].mxu0
        %v2937 = vadd.f32 0.0, %v2936
        %v2938 = vpop.f32.mrb[0].mxu0
        %2939 = vmatprep.mubr.bf16.mxu0 0
        %2940 = vmatmul.mubr.bf16.gmra.mrb[0].mxu0 %v2587
        %v2941 = vpop.f32.mrb[0].mxu0
        %v2942 = vadd.f32 0.0, %v2941
        %v2943 = vpop.f32.mrb[0].mxu0
        %v2944 = vpop.f32.mrb[0].mxu0
        %v2945 = vadd.f32 0.0, %v2944
        %v2946 = vpop.f32.mrb[0].mxu0
        %2947 = vmatprep.mubr.bf16.mxu0 0
        %2948 = vmatmul.mubr.bf16.gmra.mrb[0].mxu0 %v2595
        %v2949 = vpop.f32.mrb[0].mxu0
        %v2950 = vadd.f32 0.0, %v2949
        %v2951 = vpop.f32.mrb[0].mxu0
        %v2952 = vpop.f32.mrb[0].mxu0
        %v2953 = vadd.f32 0.0, %v2952
        %v2954 = vpop.f32.mrb[0].mxu0
        %2955 = vmatprep.mubr.bf16.mxu0 0
        %2956 = vmatmul.mubr.bf16.gmra.mrb[0].mxu0 %v2603
        %v2957 = vpop.f32.mrb[0].mxu0
        %v2958 = vadd.f32 0.0, %v2957
        %v2959 = vpop.f32.mrb[0].mxu0
        %v2960 = vpop.f32.mrb[0].mxu0
        %v2961 = vadd.f32 0.0, %v2960
        %v2962 = vpop.f32.mrb[0].mxu0
        %2963 = vmatprep.mubr.bf16.mxu0 0
        %2964 = vmatmul.mubr.bf16.gmra.mrb[0].mxu0 %v2611
        %v2965 = vpop.f32.mrb[0].mxu0
        %v2966 = vadd.f32 0.0, %v2965
        %v2967 = vpop.f32.mrb[0].mxu0
        %v2968 = vpop.f32.mrb[0].mxu0
        %v2969 = vadd.f32 0.0, %v2968
        %v2970 = vpop.f32.mrb[0].mxu0
        %2971 = vmatprep.mubr.bf16.mxu0 0
        %2972 = vmatmul.mubr.bf16.gmra.mrb[0].mxu0 %v2619
        %v2973 = vpop.f32.mrb[0].mxu0
        %v2974 = vadd.f32 0.0, %v2973
        %v2975 = vpop.f32.mrb[0].mxu0
        %v2976 = vpop.f32.mrb[0].mxu0
        %v2977 = vadd.f32 0.0, %v2976
        %v2978 = vpop.f32.mrb[0].mxu0
        %2979 = vmatprep.mubr.bf16.mxu0 0
        %2980 = vmatmul.mubr.bf16.gmra.mrb[0].mxu0 %v2627
        %v2981 = vpop.f32.mrb[0].mxu0
        %v2982 = vadd.f32 0.0, %v2981
        %v2983 = vpop.f32.mrb[0].mxu0
        %v2984 = vpop.f32.mrb[0].mxu0
        %v2985 = vadd.f32 0.0, %v2984
        %v2986 = vpop.f32.mrb[0].mxu0
        %2987 = vmatprep.mubr.bf16.mxu0 0
        %2988 = vmatmul.mubr.bf16.gmra.mrb[0].mxu0 %v2635
        %v2989 = vpop.f32.mrb[0].mxu0
        %v2990 = vadd.f32 0.0, %v2989
        %v2991 = vpop.f32.mrb[0].mxu0
        %v2992 = vpop.f32.mrb[0].mxu0
        %v2993 = vadd.f32 0.0, %v2992
        %v2994 = vpop.f32.mrb[0].mxu0
        %2995 = vmatprep.mubr.bf16.mxu0 0
        %2996 = vmatmul.mubr.bf16.gmra.mrb[0].mxu0 %v2643
        %v2997 = vpop.f32.mrb[0].mxu0
        %v2998 = vadd.f32 0.0, %v2997
        %v2999 = vpop.f32.mrb[0].mxu0
        %v3000 = vpop.f32.mrb[0].mxu0
        %v3001 = vadd.f32 0.0, %v3000
        %v3002 = vpop.f32.mrb[0].mxu0
        %3003 = vmatprep.mubr.bf16.mxu0 0
        %3004 = vmatmul.mubr.bf16.gmra.mrb[0].mxu0 %v2651
        %v3005 = vpop.f32.mrb[0].mxu0
        %v3006 = vadd.f32 0.0, %v3005
        %v3007 = vpop.f32.mrb[0].mxu0
        %v3008 = vpop.f32.mrb[0].mxu0
        %v3009 = vadd.f32 0.0, %v3008
        %v3010 = vpop.f32.mrb[0].mxu0
        %3011 = vmatprep.mubr.bf16.mxu0 0
        %3012 = vmatmul.mubr.bf16.gmra.mrb[0].mxu0 %v2659
        %v3013 = vpop.f32.mrb[0].mxu0
        %v3014 = vadd.f32 0.0, %v3013
        %v3015 = vpop.f32.mrb[0].mxu0
        %v3016 = vpop.f32.mrb[0].mxu0
        %v3017 = vadd.f32 0.0, %v3016
        %v3018 = vpop.f32.mrb[0].mxu0
        %3019 = vmatprep.mubr.bf16.mxu0 0
        %3020 = vmatmul.mubr.bf16.gmra.mrb[0].mxu0 %v2667
        %v3021 = vpop.f32.mrb[0].mxu0
        %v3022 = vadd.f32 0.0, %v3021
        %v3023 = vpop.f32.mrb[0].mxu0
        %v3024 = vpop.f32.mrb[0].mxu0
        %v3025 = vadd.f32 0.0, %v3024
        %v3026 = vpop.f32.mrb[0].mxu0
        %3027 = vmatprep.mubr.bf16.mxu0 0
        %3028 = vmatmul.mubr.bf16.gmra.mrb[0].mxu0 %v2675
        %v3029 = vpop.f32.mrb[0].mxu0
        %v3030 = vadd.f32 0.0, %v3029
        %v3031 = vpop.f32.mrb[0].mxu0
        %v3032 = vpop.f32.mrb[0].mxu0
        %v3033 = vadd.f32 0.0, %v3032
        %v3034 = vpop.f32.mrb[0].mxu0
        %3035 = vmatprep.mubr.bf16.mxu0 0
        %3036 = vmatmul.mubr.bf16.gmra.mrb[0].mxu0 %v2683
        %v3037 = vpop.f32.mrb[0].mxu0
        %v3038 = vadd.f32 0.0, %v3037
        %v3039 = vpop.f32.mrb[0].mxu0
        %v3040 = vpop.f32.mrb[0].mxu0
        %v3041 = vadd.f32 0.0, %v3040
        %v3042 = vpop.f32.mrb[0].mxu0
        %3043 = vdwg.mxu0
        %v3060 = vunpack.c.l.b16 %v2398
        %v3061 = vunpack.c.l.b16 %v2399
        %v3062 = vunpack.c.l.b16 %v2400
        %v3063 = vunpack.c.l.b16 %v2401
        %v3064 = vunpack.c.l.b16 %v2402
        %v3065 = vunpack.c.l.b16 %v2403
        %v3066 = vunpack.c.l.b16 %v2404
        %v3067 = vunpack.c.l.b16 %v2405
        %v3068 = vunpack.c.l.b16 %v2406
        %v3069 = vunpack.c.l.b16 %v2407
        %v3070 = vunpack.c.l.b16 %v2408
        %v3071 = vunpack.c.l.b16 %v2409
        %v3072 = vunpack.c.l.b16 %v2410
        %v3073 = vunpack.c.l.b16 %v2411
        %v3074 = vunpack.c.l.b16 %v2412
        %v3075 = vunpack.c.l.b16 %v2413
        %v3076 = vpack.c.b16 %v3061, %v3060
        %v3077 = vpack.c.b16 %v3063, %v3062
        %v3078 = vpack.c.b16 %v3065, %v3064
        %v3079 = vpack.c.b16 %v3067, %v3066
        %v3080 = vpack.c.b16 %v3069, %v3068
        %v3081 = vpack.c.b16 %v3071, %v3070
        %v3082 = vpack.c.b16 %v3073, %v3072
        %v3083 = vpack.c.b16 %v3075, %v3074
        %3092 = vmatprep.subr.bf16.mxu0 0
        %3093 = vmatpush1.bf16.msra.mxu0 %v3076
        %3094 = vmatprep.subr.bf16.mxu0 0
        %3095 = vmatpush1.bf16.msra.mxu0 %v3077
        %3096 = vmatprep.subr.bf16.mxu0 0
        %3097 = vmatpush1.bf16.msra.mxu0 %v3078
        %3098 = vmatprep.subr.bf16.mxu0 0
        %3099 = vmatpush1.bf16.msra.mxu0 %v3079
        %3100 = vmatprep.subr.bf16.mxu0 0
        %3101 = vmatpush1.bf16.msra.mxu0 %v3080
        %3102 = vmatprep.subr.bf16.mxu0 0
        %3103 = vmatpush1.bf16.msra.mxu0 %v3081
        %3104 = vmatprep.subr.bf16.mxu0 0
        %3105 = vmatpush1.bf16.msra.mxu0 %v3082
        %3106 = vmatprep.subr.bf16.mxu0 0
        %3107 = vmatpush1.bf16.msra.mxu0 %v3083
        %3108 = vmatprep.subr.bf16.mxu0 0
        %3109 = vmatpush1.bf16.msra.mxu0 0
        %3110 = vmatprep.subr.bf16.mxu0 0
        %3111 = vmatpush1.bf16.msra.mxu0 0
        %3112 = vmatprep.subr.bf16.mxu0 0
        %3113 = vmatpush1.bf16.msra.mxu0 0
        %3114 = vmatprep.subr.bf16.mxu0 0
        %3115 = vmatpush1.bf16.msra.mxu0 0
        %3116 = vmatprep.subr.bf16.mxu0 0
        %3117 = vmatpush1.bf16.msra.mxu0 0
        %3118 = vmatprep.subr.bf16.mxu0 0
        %3119 = vmatpush1.bf16.msra.mxu0 0
        %3120 = vmatprep.subr.bf16.mxu0 0
        %3121 = vmatpush1.bf16.msra.mxu0 0
        %3122 = vmatprep.subr.bf16.mxu0 0
        %3123 = vmatpush1.bf16.msra.mxu0 0
        %3124 = vmatprep.mubr.bf16.mxu0 0
        %3125 = vmatmul.mubr.bf16.gmra.mrb[0].mxu0 %v2366
        %v3126 = vpop.f32.mrb[0].mxu0
        %v3127 = vadd.f32 %v2798, %v3126
        %v3128 = vpop.f32.mrb[0].mxu0
        %v3129 = vpop.f32.mrb[0].mxu0
        %v3130 = vadd.f32 %v2801, %v3129
        %v3131 = vpop.f32.mrb[0].mxu0
        %3132 = vmatprep.mubr.bf16.mxu0 0
        %3133 = vmatmul.mubr.bf16.gmra.mrb[0].mxu0 %v2367
        %v3134 = vpop.f32.mrb[0].mxu0
        %v3135 = vadd.f32 %v2806, %v3134
        %v3136 = vpop.f32.mrb[0].mxu0
        %v3137 = vpop.f32.mrb[0].mxu0
        %v3138 = vadd.f32 %v2809, %v3137
        %v3139 = vpop.f32.mrb[0].mxu0
        %3140 = vmatprep.mubr.bf16.mxu0 0
        %3141 = vmatmul.mubr.bf16.gmra.mrb[0].mxu0 %v2368
        %v3142 = vpop.f32.mrb[0].mxu0
        %v3143 = vadd.f32 %v2814, %v3142
        %v3144 = vpop.f32.mrb[0].mxu0
        %v3145 = vpop.f32.mrb[0].mxu0
        %v3146 = vadd.f32 %v2817, %v3145
        %v3147 = vpop.f32.mrb[0].mxu0
        %3148 = vmatprep.mubr.bf16.mxu0 0
        %3149 = vmatmul.mubr.bf16.gmra.mrb[0].mxu0 %v2369
        %v3150 = vpop.f32.mrb[0].mxu0
        %v3151 = vadd.f32 %v2822, %v3150
        %v3152 = vpop.f32.mrb[0].mxu0
        %v3153 = vpop.f32.mrb[0].mxu0
        %v3154 = vadd.f32 %v2825, %v3153
        %v3155 = vpop.f32.mrb[0].mxu0
        %3156 = vmatprep.mubr.bf16.mxu0 0
        %3157 = vmatmul.mubr.bf16.gmra.mrb[0].mxu0 %v2370
        %v3158 = vpop.f32.mrb[0].mxu0
        %v3159 = vadd.f32 %v2830, %v3158
        %v3160 = vpop.f32.mrb[0].mxu0
        %v3161 = vpop.f32.mrb[0].mxu0
        %v3162 = vadd.f32 %v2833, %v3161
        %v3163 = vpop.f32.mrb[0].mxu0
        %3164 = vmatprep.mubr.bf16.mxu0 0
        %3165 = vmatmul.mubr.bf16.gmra.mrb[0].mxu0 %v2371
        %v3166 = vpop.f32.mrb[0].mxu0
        %v3167 = vadd.f32 %v2838, %v3166
        %v3168 = vpop.f32.mrb[0].mxu0
        %v3169 = vpop.f32.mrb[0].mxu0
        %v3170 = vadd.f32 %v2841, %v3169
        %v3171 = vpop.f32.mrb[0].mxu0
        %3172 = vmatprep.mubr.bf16.mxu0 0
        %3173 = vmatmul.mubr.bf16.gmra.mrb[0].mxu0 %v2372
        %v3174 = vpop.f32.mrb[0].mxu0
        %v3175 = vadd.f32 %v2846, %v3174
        %v3176 = vpop.f32.mrb[0].mxu0
        %v3177 = vpop.f32.mrb[0].mxu0
        %v3178 = vadd.f32 %v2849, %v3177
        %v3179 = vpop.f32.mrb[0].mxu0
        %3180 = vmatprep.mubr.bf16.mxu0 0
        %3181 = vmatmul.mubr.bf16.gmra.mrb[0].mxu0 %v2373
        %v3182 = vpop.f32.mrb[0].mxu0
        %v3183 = vadd.f32 %v2854, %v3182
        %v3184 = vpop.f32.mrb[0].mxu0
        %v3185 = vpop.f32.mrb[0].mxu0
        %v3186 = vadd.f32 %v2857, %v3185
        %v3187 = vpop.f32.mrb[0].mxu0
        %3188 = vmatprep.mubr.bf16.mxu0 0
        %3189 = vmatmul.mubr.bf16.gmra.mrb[0].mxu0 %v2374
        %v3190 = vpop.f32.mrb[0].mxu0
        %v3191 = vadd.f32 %v2862, %v3190
        %v3192 = vpop.f32.mrb[0].mxu0
        %v3193 = vpop.f32.mrb[0].mxu0
        %v3194 = vadd.f32 %v2865, %v3193
        %v3195 = vpop.f32.mrb[0].mxu0
        %3196 = vmatprep.mubr.bf16.mxu0 0
        %3197 = vmatmul.mubr.bf16.gmra.mrb[0].mxu0 %v2375
        %v3198 = vpop.f32.mrb[0].mxu0
        %v3199 = vadd.f32 %v2870, %v3198
        %v3200 = vpop.f32.mrb[0].mxu0
        %v3201 = vpop.f32.mrb[0].mxu0
        %v3202 = vadd.f32 %v2873, %v3201
        %v3203 = vpop.f32.mrb[0].mxu0
        %3204 = vmatprep.mubr.bf16.mxu0 0
        %3205 = vmatmul.mubr.bf16.gmra.mrb[0].mxu0 %v2376
        %v3206 = vpop.f32.mrb[0].mxu0
        %v3207 = vadd.f32 %v2878, %v3206
        %v3208 = vpop.f32.mrb[0].mxu0
        %v3209 = vpop.f32.mrb[0].mxu0
        %v3210 = vadd.f32 %v2881, %v3209
        %v3211 = vpop.f32.mrb[0].mxu0
        %3212 = vmatprep.mubr.bf16.mxu0 0
        %3213 = vmatmul.mubr.bf16.gmra.mrb[0].mxu0 %v2377
        %v3214 = vpop.f32.mrb[0].mxu0
        %v3215 = vadd.f32 %v2886, %v3214
        %v3216 = vpop.f32.mrb[0].mxu0
        %v3217 = vpop.f32.mrb[0].mxu0
        %v3218 = vadd.f32 %v2889, %v3217
        %v3219 = vpop.f32.mrb[0].mxu0
        %3220 = vmatprep.mubr.bf16.mxu0 0
        %3221 = vmatmul.mubr.bf16.gmra.mrb[0].mxu0 %v2378
        %v3222 = vpop.f32.mrb[0].mxu0
        %v3223 = vadd.f32 %v2894, %v3222
        %v3224 = vpop.f32.mrb[0].mxu0
        %v3225 = vpop.f32.mrb[0].mxu0
        %v3226 = vadd.f32 %v2897, %v3225
        %v3227 = vpop.f32.mrb[0].mxu0
        %3228 = vmatprep.mubr.bf16.mxu0 0
        %3229 = vmatmul.mubr.bf16.gmra.mrb[0].mxu0 %v2379
        %v3230 = vpop.f32.mrb[0].mxu0
        %v3231 = vadd.f32 %v2902, %v3230
        %v3232 = vpop.f32.mrb[0].mxu0
        %v3233 = vpop.f32.mrb[0].mxu0
        %v3234 = vadd.f32 %v2905, %v3233
        %v3235 = vpop.f32.mrb[0].mxu0
        %3236 = vmatprep.mubr.bf16.mxu0 0
        %3237 = vmatmul.mubr.bf16.gmra.mrb[0].mxu0 %v2380
        %v3238 = vpop.f32.mrb[0].mxu0
        %v3239 = vadd.f32 %v2910, %v3238
        %v3240 = vpop.f32.mrb[0].mxu0
        %v3241 = vpop.f32.mrb[0].mxu0
        %v3242 = vadd.f32 %v2913, %v3241
        %v3243 = vpop.f32.mrb[0].mxu0
        %3244 = vmatprep.mubr.bf16.mxu0 0
        %3245 = vmatmul.mubr.bf16.gmra.mrb[0].mxu0 %v2381
        %v3246 = vpop.f32.mrb[0].mxu0
        %v3247 = vadd.f32 %v2918, %v3246
        %v3248 = vpop.f32.mrb[0].mxu0
        %v3249 = vpop.f32.mrb[0].mxu0
        %v3250 = vadd.f32 %v2921, %v3249
        %v3251 = vpop.f32.mrb[0].mxu0
        %3252 = vmatprep.mubr.bf16.mxu0 0
        %3253 = vmatmul.mubr.bf16.gmra.mrb[0].mxu0 %v2382
        %v3254 = vpop.f32.mrb[0].mxu0
        %v3255 = vadd.f32 %v2926, %v3254
        %v3256 = vpop.f32.mrb[0].mxu0
        %v3257 = vpop.f32.mrb[0].mxu0
        %v3258 = vadd.f32 %v2929, %v3257
        %v3259 = vpop.f32.mrb[0].mxu0
        %3260 = vmatprep.mubr.bf16.mxu0 0
        %3261 = vmatmul.mubr.bf16.gmra.mrb[0].mxu0 %v2383
        %v3262 = vpop.f32.mrb[0].mxu0
        %v3263 = vadd.f32 %v2934, %v3262
        %v3264 = vpop.f32.mrb[0].mxu0
        %v3265 = vpop.f32.mrb[0].mxu0
        %v3266 = vadd.f32 %v2937, %v3265
        %v3267 = vpop.f32.mrb[0].mxu0
        %3268 = vmatprep.mubr.bf16.mxu0 0
        %3269 = vmatmul.mubr.bf16.gmra.mrb[0].mxu0 %v2384
        %v3270 = vpop.f32.mrb[0].mxu0
        %v3271 = vadd.f32 %v2942, %v3270
        %v3272 = vpop.f32.mrb[0].mxu0
        %v3273 = vpop.f32.mrb[0].mxu0
        %v3274 = vadd.f32 %v2945, %v3273
        %v3275 = vpop.f32.mrb[0].mxu0
        %3276 = vmatprep.mubr.bf16.mxu0 0
        %3277 = vmatmul.mubr.bf16.gmra.mrb[0].mxu0 %v2385
        %v3278 = vpop.f32.mrb[0].mxu0
        %v3279 = vadd.f32 %v2950, %v3278
        %v3280 = vpop.f32.mrb[0].mxu0
        %v3281 = vpop.f32.mrb[0].mxu0
        %v3282 = vadd.f32 %v2953, %v3281
        %v3283 = vpop.f32.mrb[0].mxu0
        %3284 = vmatprep.mubr.bf16.mxu0 0
        %3285 = vmatmul.mubr.bf16.gmra.mrb[0].mxu0 %v2386
        %v3286 = vpop.f32.mrb[0].mxu0
        %v3287 = vadd.f32 %v2958, %v3286
        %v3288 = vpop.f32.mrb[0].mxu0
        %v3289 = vpop.f32.mrb[0].mxu0
        %v3290 = vadd.f32 %v2961, %v3289
        %v3291 = vpop.f32.mrb[0].mxu0
        %3292 = vmatprep.mubr.bf16.mxu0 0
        %3293 = vmatmul.mubr.bf16.gmra.mrb[0].mxu0 %v2387
        %v3294 = vpop.f32.mrb[0].mxu0
        %v3295 = vadd.f32 %v2966, %v3294
        %v3296 = vpop.f32.mrb[0].mxu0
        %v3297 = vpop.f32.mrb[0].mxu0
        %v3298 = vadd.f32 %v2969, %v3297
        %v3299 = vpop.f32.mrb[0].mxu0
        %3300 = vmatprep.mubr.bf16.mxu0 0
        %3301 = vmatmul.mubr.bf16.gmra.mrb[0].mxu0 %v2388
        %v3302 = vpop.f32.mrb[0].mxu0
        %v3303 = vadd.f32 %v2974, %v3302
        %v3304 = vpop.f32.mrb[0].mxu0
        %v3305 = vpop.f32.mrb[0].mxu0
        %v3306 = vadd.f32 %v2977, %v3305
        %v3307 = vpop.f32.mrb[0].mxu0
        %3308 = vmatprep.mubr.bf16.mxu0 0
        %3309 = vmatmul.mubr.bf16.gmra.mrb[0].mxu0 %v2389
        %v3310 = vpop.f32.mrb[0].mxu0
        %v3311 = vadd.f32 %v2982, %v3310
        %v3312 = vpop.f32.mrb[0].mxu0
        %v3313 = vpop.f32.mrb[0].mxu0
        %v3314 = vadd.f32 %v2985, %v3313
        %v3315 = vpop.f32.mrb[0].mxu0
        %3316 = vmatprep.mubr.bf16.mxu0 0
        %3317 = vmatmul.mubr.bf16.gmra.mrb[0].mxu0 %v2390
        %v3318 = vpop.f32.mrb[0].mxu0
        %v3319 = vadd.f32 %v2990, %v3318
        %v3320 = vpop.f32.mrb[0].mxu0
        %v3321 = vpop.f32.mrb[0].mxu0
        %v3322 = vadd.f32 %v2993, %v3321
        %v3323 = vpop.f32.mrb[0].mxu0
        %3324 = vmatprep.mubr.bf16.mxu0 0
        %3325 = vmatmul.mubr.bf16.gmra.mrb[0].mxu0 %v2391
        %v3326 = vpop.f32.mrb[0].mxu0
        %v3327 = vadd.f32 %v2998, %v3326
        %v3328 = vpop.f32.mrb[0].mxu0
        %v3329 = vpop.f32.mrb[0].mxu0
        %v3330 = vadd.f32 %v3001, %v3329
        %v3331 = vpop.f32.mrb[0].mxu0
        %3332 = vmatprep.mubr.bf16.mxu0 0
        %3333 = vmatmul.mubr.bf16.gmra.mrb[0].mxu0 %v2392
        %v3334 = vpop.f32.mrb[0].mxu0
        %v3335 = vadd.f32 %v3006, %v3334
        %v3336 = vpop.f32.mrb[0].mxu0
        %v3337 = vpop.f32.mrb[0].mxu0
        %v3338 = vadd.f32 %v3009, %v3337
        %v3339 = vpop.f32.mrb[0].mxu0
        %3340 = vmatprep.mubr.bf16.mxu0 0
        %3341 = vmatmul.mubr.bf16.gmra.mrb[0].mxu0 %v2393
        %v3342 = vpop.f32.mrb[0].mxu0
        %v3343 = vadd.f32 %v3014, %v3342
        %v3344 = vpop.f32.mrb[0].mxu0
        %v3345 = vpop.f32.mrb[0].mxu0
        %v3346 = vadd.f32 %v3017, %v3345
        %v3347 = vpop.f32.mrb[0].mxu0
        %3348 = vmatprep.mubr.bf16.mxu0 0
        %3349 = vmatmul.mubr.bf16.gmra.mrb[0].mxu0 %v2394
        %v3350 = vpop.f32.mrb[0].mxu0
        %v3351 = vadd.f32 %v3022, %v3350
        %v3352 = vpop.f32.mrb[0].mxu0
        %v3353 = vpop.f32.mrb[0].mxu0
        %v3354 = vadd.f32 %v3025, %v3353
        %v3355 = vpop.f32.mrb[0].mxu0
        %3356 = vmatprep.mubr.bf16.mxu0 0
        %3357 = vmatmul.mubr.bf16.gmra.mrb[0].mxu0 %v2395
        %v3358 = vpop.f32.mrb[0].mxu0
        %v3359 = vadd.f32 %v3030, %v3358
        %v3360 = vpop.f32.mrb[0].mxu0
        %v3361 = vpop.f32.mrb[0].mxu0
        %v3362 = vadd.f32 %v3033, %v3361
        %v3363 = vpop.f32.mrb[0].mxu0
        %3364 = vmatprep.mubr.bf16.mxu0 0
        %3365 = vmatmul.mubr.bf16.gmra.mrb[0].mxu0 %v2396
        %v3366 = vpop.f32.mrb[0].mxu0
        %v3367 = vadd.f32 %v3038, %v3366
        %v3368 = vpop.f32.mrb[0].mxu0
        %v3369 = vpop.f32.mrb[0].mxu0
        %v3370 = vadd.f32 %v3041, %v3369
        %v3371 = vpop.f32.mrb[0].mxu0
        %3372 = vdwg.mxu0
        %v3373 = vld [vmem:[#allocation2 + $0x10] sm:$0xfe]
        %s3374 = scalar_lea.vmem [#allocation7], 320
        %v3375 = vld [vmem:[%s3374] sm:$0xf]
        %v3376 = vld [vmem:[%s3374 + $0x4] sm:$0xf]
        %v3377 = vld [vmem:[%s3374 + $0x8] sm:$0xf]
        %v3378 = vld [vmem:[%s3374 + $0xc] sm:$0xf]
        %v3379 = vld [vmem:[%s3374 + $0x10] sm:$0xf]
        %v3380 = vld [vmem:[%s3374 + $0x14] sm:$0xf]
        %v3381 = vld [vmem:[%s3374 + $0x18] sm:$0xf]
        %v3382 = vld [vmem:[%s3374 + $0x1c] sm:$0xf]
        %v3383 = vld [vmem:[%s3374 + $0x20] sm:$0xf]
        %v3384 = vld [vmem:[%s3374 + $0x24] sm:$0xf]
        %v3385 = vld [vmem:[%s3374 + $0x28] sm:$0xf]
        %v3386 = vld [vmem:[%s3374 + $0x2c] sm:$0xf]
        %v3387 = vld [vmem:[%s3374 + $0x30] sm:$0xf]
        %v3388 = vld [vmem:[%s3374 + $0x34] sm:$0xf]
        %v3389 = vld [vmem:[%s3374 + $0x38] sm:$0xf]
        %v3390 = vld [vmem:[%s3374 + $0x3c] sm:$0xf]
        %v3423 = vrot.slane %v3373, 1
        %v3424 = vrot.slane %v2367, 1
        %v3425 = vsel %vm1818, %v3423, %v3424
        %v3426 = vrot.slane %v2368, 1
        %v3427 = vsel %vm1818, %v3424, %v3426
        %v3428 = vrot.slane %v2369, 1
        %v3429 = vsel %vm1818, %v3426, %v3428
        %v3430 = vrot.slane %v2370, 1
        %v3431 = vsel %vm1818, %v3428, %v3430
        %v3432 = vrot.slane %v2371, 1
        %v3433 = vsel %vm1818, %v3430, %v3432
        %v3434 = vrot.slane %v2372, 1
        %v3435 = vsel %vm1818, %v3432, %v3434
        %v3436 = vrot.slane %v2373, 1
        %v3437 = vsel %vm1818, %v3434, %v3436
        %v3438 = vrot.slane %v2374, 1
        %v3439 = vsel %vm1818, %v3436, %v3438
        %v3440 = vrot.slane %v2375, 1
        %v3441 = vsel %vm1818, %v3438, %v3440
        %v3442 = vrot.slane %v2376, 1
        %v3443 = vsel %vm1818, %v3440, %v3442
        %v3444 = vrot.slane %v2377, 1
        %v3445 = vsel %vm1818, %v3442, %v3444
        %v3446 = vrot.slane %v2378, 1
        %v3447 = vsel %vm1818, %v3444, %v3446
        %v3448 = vrot.slane %v2379, 1
        %v3449 = vsel %vm1818, %v3446, %v3448
        %v3450 = vrot.slane %v2380, 1
        %v3451 = vsel %vm1818, %v3448, %v3450
        %v3452 = vrot.slane %v2381, 1
        %v3453 = vsel %vm1818, %v3450, %v3452
        %v3454 = vrot.slane %v2382, 1
        %v3455 = vsel %vm1818, %v3452, %v3454
        %v3456 = vrot.slane %v2383, 1
        %v3457 = vsel %vm1818, %v3454, %v3456
        %v3458 = vrot.slane %v2384, 1
        %v3459 = vsel %vm1818, %v3456, %v3458
        %v3460 = vrot.slane %v2385, 1
        %v3461 = vsel %vm1818, %v3458, %v3460
        %v3462 = vrot.slane %v2386, 1
        %v3463 = vsel %vm1818, %v3460, %v3462
        %v3464 = vrot.slane %v2387, 1
        %v3465 = vsel %vm1818, %v3462, %v3464
        %v3466 = vrot.slane %v2388, 1
        %v3467 = vsel %vm1818, %v3464, %v3466
        %v3468 = vrot.slane %v2389, 1
        %v3469 = vsel %vm1818, %v3466, %v3468
        %v3470 = vrot.slane %v2390, 1
        %v3471 = vsel %vm1818, %v3468, %v3470
        %v3472 = vrot.slane %v2391, 1
        %v3473 = vsel %vm1818, %v3470, %v3472
        %v3474 = vrot.slane %v2392, 1
        %v3475 = vsel %vm1818, %v3472, %v3474
        %v3476 = vrot.slane %v2393, 1
        %v3477 = vsel %vm1818, %v3474, %v3476
        %v3478 = vrot.slane %v2394, 1
        %v3479 = vsel %vm1818, %v3476, %v3478
        %v3480 = vrot.slane %v2395, 1
        %v3481 = vsel %vm1818, %v3478, %v3480
        %v3482 = vrot.slane %v2396, 1
        %v3483 = vsel %vm1818, %v3480, %v3482
        %v3484 = vrot.slane %v2414, 1
        %v3485 = vsel %vm1818, %v3482, %v3484
        %v3533 = vunpack.c.l.b16 %v3375
        %v3534 = vunpack.c.l.b16 %v3376
        %v3535 = vunpack.c.l.b16 %v3377
        %v3536 = vunpack.c.l.b16 %v3378
        %v3537 = vunpack.c.l.b16 %v3379
        %v3538 = vunpack.c.l.b16 %v3380
        %v3539 = vunpack.c.l.b16 %v3381
        %v3540 = vunpack.c.l.b16 %v3382
        %v3541 = vunpack.c.l.b16 %v3383
        %v3542 = vunpack.c.l.b16 %v3384
        %v3543 = vunpack.c.l.b16 %v3385
        %v3544 = vunpack.c.l.b16 %v3386
        %v3545 = vunpack.c.l.b16 %v3387
        %v3546 = vunpack.c.l.b16 %v3388
        %v3547 = vunpack.c.l.b16 %v3389
        %v3548 = vunpack.c.l.b16 %v3390
        %v3549 = vpack.c.b16 %v3534, %v3533
        %v3550 = vpack.c.b16 %v3536, %v3535
        %v3551 = vpack.c.b16 %v3538, %v3537
        %v3552 = vpack.c.b16 %v3540, %v3539
        %v3553 = vpack.c.b16 %v3542, %v3541
        %v3554 = vpack.c.b16 %v3544, %v3543
        %v3555 = vpack.c.b16 %v3546, %v3545
        %v3556 = vpack.c.b16 %v3548, %v3547
        %3565 = vmatprep.subr.bf16.mxu0 0
        %3566 = vmatpush1.bf16.msra.mxu0 %v3549
        %3567 = vmatprep.subr.bf16.mxu0 0
        %3568 = vmatpush1.bf16.msra.mxu0 %v3550
        %3569 = vmatprep.subr.bf16.mxu0 0
        %3570 = vmatpush1.bf16.msra.mxu0 %v3551
        %3571 = vmatprep.subr.bf16.mxu0 0
        %3572 = vmatpush1.bf16.msra.mxu0 %v3552
        %3573 = vmatprep.subr.bf16.mxu0 0
        %3574 = vmatpush1.bf16.msra.mxu0 %v3553
        %3575 = vmatprep.subr.bf16.mxu0 0
        %3576 = vmatpush1.bf16.msra.mxu0 %v3554
        %3577 = vmatprep.subr.bf16.mxu0 0
        %3578 = vmatpush1.bf16.msra.mxu0 %v3555
        %3579 = vmatprep.subr.bf16.mxu0 0
        %3580 = vmatpush1.bf16.msra.mxu0 %v3556
        %3581 = vmatprep.subr.bf16.mxu0 0
        %3582 = vmatpush1.bf16.msra.mxu0 0
        %3583 = vmatprep.subr.bf16.mxu0 0
        %3584 = vmatpush1.bf16.msra.mxu0 0
        %3585 = vmatprep.subr.bf16.mxu0 0
        %3586 = vmatpush1.bf16.msra.mxu0 0
        %3587 = vmatprep.subr.bf16.mxu0 0
        %3588 = vmatpush1.bf16.msra.mxu0 0
        %3589 = vmatprep.subr.bf16.mxu0 0
        %3590 = vmatpush1.bf16.msra.mxu0 0
        %3591 = vmatprep.subr.bf16.mxu0 0
        %3592 = vmatpush1.bf16.msra.mxu0 0
        %3593 = vmatprep.subr.bf16.mxu0 0
        %3594 = vmatpush1.bf16.msra.mxu0 0
        %3595 = vmatprep.subr.bf16.mxu0 0
        %3596 = vmatpush1.bf16.msra.mxu0 0
        %3597 = vmatprep.mubr.bf16.mxu0 0
        %3598 = vmatmul.mubr.bf16.gmra.mrb[0].mxu0 %v3425
        %v3599 = vpop.f32.mrb[0].mxu0
        %v3600 = vadd.f32 0.0, %v3599
        %v3601 = vpop.f32.mrb[0].mxu0
        %v3602 = vpop.f32.mrb[0].mxu0
        %v3603 = vadd.f32 0.0, %v3602
        %v3604 = vpop.f32.mrb[0].mxu0
        %3605 = vmatprep.mubr.bf16.mxu0 0
        %3606 = vmatmul.mubr.bf16.gmra.mrb[0].mxu0 %v3427
        %v3607 = vpop.f32.mrb[0].mxu0
        %v3608 = vadd.f32 0.0, %v3607
        %v3609 = vpop.f32.mrb[0].mxu0
        %v3610 = vpop.f32.mrb[0].mxu0
        %v3611 = vadd.f32 0.0, %v3610
        %v3612 = vpop.f32.mrb[0].mxu0
        %3613 = vmatprep.mubr.bf16.mxu0 0
        %3614 = vmatmul.mubr.bf16.gmra.mrb[0].mxu0 %v3429
        %v3615 = vpop.f32.mrb[0].mxu0
        %v3616 = vadd.f32 0.0, %v3615
        %v3617 = vpop.f32.mrb[0].mxu0
        %v3618 = vpop.f32.mrb[0].mxu0
        %v3619 = vadd.f32 0.0, %v3618
        %v3620 = vpop.f32.mrb[0].mxu0
        %3621 = vmatprep.mubr.bf16.mxu0 0
        %3622 = vmatmul.mubr.bf16.gmra.mrb[0].mxu0 %v3431
        %v3623 = vpop.f32.mrb[0].mxu0
        %v3624 = vadd.f32 0.0, %v3623
        %v3625 = vpop.f32.mrb[0].mxu0
        %v3626 = vpop.f32.mrb[0].mxu0
        %v3627 = vadd.f32 0.0, %v3626
        %v3628 = vpop.f32.mrb[0].mxu0
        %3629 = vmatprep.mubr.bf16.mxu0 0
        %3630 = vmatmul.mubr.bf16.gmra.mrb[0].mxu0 %v3433
        %v3631 = vpop.f32.mrb[0].mxu0
        %v3632 = vadd.f32 0.0, %v3631
        %v3633 = vpop.f32.mrb[0].mxu0
        %v3634 = vpop.f32.mrb[0].mxu0
        %v3635 = vadd.f32 0.0, %v3634
        %v3636 = vpop.f32.mrb[0].mxu0
        %3637 = vmatprep.mubr.bf16.mxu0 0
        %3638 = vmatmul.mubr.bf16.gmra.mrb[0].mxu0 %v3435
        %v3639 = vpop.f32.mrb[0].mxu0
        %v3640 = vadd.f32 0.0, %v3639
        %v3641 = vpop.f32.mrb[0].mxu0
        %v3642 = vpop.f32.mrb[0].mxu0
        %v3643 = vadd.f32 0.0, %v3642
        %v3644 = vpop.f32.mrb[0].mxu0
        %3645 = vmatprep.mubr.bf16.mxu0 0
        %3646 = vmatmul.mubr.bf16.gmra.mrb[0].mxu0 %v3437
        %v3647 = vpop.f32.mrb[0].mxu0
        %v3648 = vadd.f32 0.0, %v3647
        %v3649 = vpop.f32.mrb[0].mxu0
        %v3650 = vpop.f32.mrb[0].mxu0
        %v3651 = vadd.f32 0.0, %v3650
        %v3652 = vpop.f32.mrb[0].mxu0
        %3653 = vmatprep.mubr.bf16.mxu0 0
        %3654 = vmatmul.mubr.bf16.gmra.mrb[0].mxu0 %v3439
        %v3655 = vpop.f32.mrb[0].mxu0
        %v3656 = vadd.f32 0.0, %v3655
        %v3657 = vpop.f32.mrb[0].mxu0
        %v3658 = vpop.f32.mrb[0].mxu0
        %v3659 = vadd.f32 0.0, %v3658
        %v3660 = vpop.f32.mrb[0].mxu0
        %3661 = vmatprep.mubr.bf16.mxu0 0
        %3662 = vmatmul.mubr.bf16.gmra.mrb[0].mxu0 %v3441
        %v3663 = vpop.f32.mrb[0].mxu0
        %v3664 = vadd.f32 0.0, %v3663
        %v3665 = vpop.f32.mrb[0].mxu0
        %v3666 = vpop.f32.mrb[0].mxu0
        %v3667 = vadd.f32 0.0, %v3666
        %v3668 = vpop.f32.mrb[0].mxu0
        %3669 = vmatprep.mubr.bf16.mxu0 0
        %3670 = vmatmul.mubr.bf16.gmra.mrb[0].mxu0 %v3443
        %v3671 = vpop.f32.mrb[0].mxu0
        %v3672 = vadd.f32 0.0, %v3671
        %v3673 = vpop.f32.mrb[0].mxu0
        %v3674 = vpop.f32.mrb[0].mxu0
        %v3675 = vadd.f32 0.0, %v3674
        %v3676 = vpop.f32.mrb[0].mxu0
        %3677 = vmatprep.mubr.bf16.mxu0 0
        %3678 = vmatmul.mubr.bf16.gmra.mrb[0].mxu0 %v3445
        %v3679 = vpop.f32.mrb[0].mxu0
        %v3680 = vadd.f32 0.0, %v3679
        %v3681 = vpop.f32.mrb[0].mxu0
        %v3682 = vpop.f32.mrb[0].mxu0
        %v3683 = vadd.f32 0.0, %v3682
        %v3684 = vpop.f32.mrb[0].mxu0
        %3685 = vmatprep.mubr.bf16.mxu0 0
        %3686 = vmatmul.mubr.bf16.gmra.mrb[0].mxu0 %v3447
        %v3687 = vpop.f32.mrb[0].mxu0
        %v3688 = vadd.f32 0.0, %v3687
        %v3689 = vpop.f32.mrb[0].mxu0
        %v3690 = vpop.f32.mrb[0].mxu0
        %v3691 = vadd.f32 0.0, %v3690
        %v3692 = vpop.f32.mrb[0].mxu0
        %3693 = vmatprep.mubr.bf16.mxu0 0
        %3694 = vmatmul.mubr.bf16.gmra.mrb[0].mxu0 %v3449
        %v3695 = vpop.f32.mrb[0].mxu0
        %v3696 = vadd.f32 0.0, %v3695
        %v3697 = vpop.f32.mrb[0].mxu0
        %v3698 = vpop.f32.mrb[0].mxu0
        %v3699 = vadd.f32 0.0, %v3698
        %v3700 = vpop.f32.mrb[0].mxu0
        %3701 = vmatprep.mubr.bf16.mxu0 0
        %3702 = vmatmul.mubr.bf16.gmra.mrb[0].mxu0 %v3451
        %v3703 = vpop.f32.mrb[0].mxu0
        %v3704 = vadd.f32 0.0, %v3703
        %v3705 = vpop.f32.mrb[0].mxu0
        %v3706 = vpop.f32.mrb[0].mxu0
        %v3707 = vadd.f32 0.0, %v3706
        %v3708 = vpop.f32.mrb[0].mxu0
        %3709 = vmatprep.mubr.bf16.mxu0 0
        %3710 = vmatmul.mubr.bf16.gmra.mrb[0].mxu0 %v3453
        %v3711 = vpop.f32.mrb[0].mxu0
        %v3712 = vadd.f32 0.0, %v3711
        %v3713 = vpop.f32.mrb[0].mxu0
        %v3714 = vpop.f32.mrb[0].mxu0
        %v3715 = vadd.f32 0.0, %v3714
        %v3716 = vpop.f32.mrb[0].mxu0
        %3717 = vmatprep.mubr.bf16.mxu0 0
        %3718 = vmatmul.mubr.bf16.gmra.mrb[0].mxu0 %v3455
        %v3719 = vpop.f32.mrb[0].mxu0
        %v3720 = vadd.f32 0.0, %v3719
        %v3721 = vpop.f32.mrb[0].mxu0
        %v3722 = vpop.f32.mrb[0].mxu0
        %v3723 = vadd.f32 0.0, %v3722
        %v3724 = vpop.f32.mrb[0].mxu0
        %3725 = vmatprep.mubr.bf16.mxu0 0
        %3726 = vmatmul.mubr.bf16.gmra.mrb[0].mxu0 %v3457
        %v3727 = vpop.f32.mrb[0].mxu0
        %v3728 = vadd.f32 0.0, %v3727
        %v3729 = vpop.f32.mrb[0].mxu0
        %v3730 = vpop.f32.mrb[0].mxu0
        %v3731 = vadd.f32 0.0, %v3730
        %v3732 = vpop.f32.mrb[0].mxu0
        %3733 = vmatprep.mubr.bf16.mxu0 0
        %3734 = vmatmul.mubr.bf16.gmra.mrb[0].mxu0 %v3459
        %v3735 = vpop.f32.mrb[0].mxu0
        %v3736 = vadd.f32 0.0, %v3735
        %v3737 = vpop.f32.mrb[0].mxu0
        %v3738 = vpop.f32.mrb[0].mxu0
        %v3739 = vadd.f32 0.0, %v3738
        %v3740 = vpop.f32.mrb[0].mxu0
        %3741 = vmatprep.mubr.bf16.mxu0 0
        %3742 = vmatmul.mubr.bf16.gmra.mrb[0].mxu0 %v3461
        %v3743 = vpop.f32.mrb[0].mxu0
        %v3744 = vadd.f32 0.0, %v3743
        %v3745 = vpop.f32.mrb[0].mxu0
        %v3746 = vpop.f32.mrb[0].mxu0
        %v3747 = vadd.f32 0.0, %v3746
        %v3748 = vpop.f32.mrb[0].mxu0
        %3749 = vmatprep.mubr.bf16.mxu0 0
        %3750 = vmatmul.mubr.bf16.gmra.mrb[0].mxu0 %v3463
        %v3751 = vpop.f32.mrb[0].mxu0
        %v3752 = vadd.f32 0.0, %v3751
        %v3753 = vpop.f32.mrb[0].mxu0
        %v3754 = vpop.f32.mrb[0].mxu0
        %v3755 = vadd.f32 0.0, %v3754
        %v3756 = vpop.f32.mrb[0].mxu0
        %3757 = vmatprep.mubr.bf16.mxu0 0
        %3758 = vmatmul.mubr.bf16.gmra.mrb[0].mxu0 %v3465
        %v3759 = vpop.f32.mrb[0].mxu0
        %v3760 = vadd.f32 0.0, %v3759
        %v3761 = vpop.f32.mrb[0].mxu0
        %v3762 = vpop.f32.mrb[0].mxu0
        %v3763 = vadd.f32 0.0, %v3762
        %v3764 = vpop.f32.mrb[0].mxu0
        %3765 = vmatprep.mubr.bf16.mxu0 0
        %3766 = vmatmul.mubr.bf16.gmra.mrb[0].mxu0 %v3467
        %v3767 = vpop.f32.mrb[0].mxu0
        %v3768 = vadd.f32 0.0, %v3767
        %v3769 = vpop.f32.mrb[0].mxu0
        %v3770 = vpop.f32.mrb[0].mxu0
        %v3771 = vadd.f32 0.0, %v3770
        %v3772 = vpop.f32.mrb[0].mxu0
        %3773 = vmatprep.mubr.bf16.mxu0 0
        %3774 = vmatmul.mubr.bf16.gmra.mrb[0].mxu0 %v3469
        %v3775 = vpop.f32.mrb[0].mxu0
        %v3776 = vadd.f32 0.0, %v3775
        %v3777 = vpop.f32.mrb[0].mxu0
        %v3778 = vpop.f32.mrb[0].mxu0
        %v3779 = vadd.f32 0.0, %v3778
        %v3780 = vpop.f32.mrb[0].mxu0
        %3781 = vmatprep.mubr.bf16.mxu0 0
        %3782 = vmatmul.mubr.bf16.gmra.mrb[0].mxu0 %v3471
        %v3783 = vpop.f32.mrb[0].mxu0
        %v3784 = vadd.f32 0.0, %v3783
        %v3785 = vpop.f32.mrb[0].mxu0
        %v3786 = vpop.f32.mrb[0].mxu0
        %v3787 = vadd.f32 0.0, %v3786
        %v3788 = vpop.f32.mrb[0].mxu0
        %3789 = vmatprep.mubr.bf16.mxu0 0
        %3790 = vmatmul.mubr.bf16.gmra.mrb[0].mxu0 %v3473
        %v3791 = vpop.f32.mrb[0].mxu0
        %v3792 = vadd.f32 0.0, %v3791
        %v3793 = vpop.f32.mrb[0].mxu0
        %v3794 = vpop.f32.mrb[0].mxu0
        %v3795 = vadd.f32 0.0, %v3794
        %v3796 = vpop.f32.mrb[0].mxu0
        %3797 = vmatprep.mubr.bf16.mxu0 0
        %3798 = vmatmul.mubr.bf16.gmra.mrb[0].mxu0 %v3475
        %v3799 = vpop.f32.mrb[0].mxu0
        %v3800 = vadd.f32 0.0, %v3799
        %v3801 = vpop.f32.mrb[0].mxu0
        %v3802 = vpop.f32.mrb[0].mxu0
        %v3803 = vadd.f32 0.0, %v3802
        %v3804 = vpop.f32.mrb[0].mxu0
        %3805 = vmatprep.mubr.bf16.mxu0 0
        %3806 = vmatmul.mubr.bf16.gmra.mrb[0].mxu0 %v3477
        %v3807 = vpop.f32.mrb[0].mxu0
        %v3808 = vadd.f32 0.0, %v3807
        %v3809 = vpop.f32.mrb[0].mxu0
        %v3810 = vpop.f32.mrb[0].mxu0
        %v3811 = vadd.f32 0.0, %v3810
        %v3812 = vpop.f32.mrb[0].mxu0
        %3813 = vmatprep.mubr.bf16.mxu0 0
        %3814 = vmatmul.mubr.bf16.gmra.mrb[0].mxu0 %v3479
        %v3815 = vpop.f32.mrb[0].mxu0
        %v3816 = vadd.f32 0.0, %v3815
        %v3817 = vpop.f32.mrb[0].mxu0
        %v3818 = vpop.f32.mrb[0].mxu0
        %v3819 = vadd.f32 0.0, %v3818
        %v3820 = vpop.f32.mrb[0].mxu0
        %3821 = vmatprep.mubr.bf16.mxu0 0
        %3822 = vmatmul.mubr.bf16.gmra.mrb[0].mxu0 %v3481
        %v3823 = vpop.f32.mrb[0].mxu0
        %v3824 = vadd.f32 0.0, %v3823
        %v3825 = vpop.f32.mrb[0].mxu0
        %v3826 = vpop.f32.mrb[0].mxu0
        %v3827 = vadd.f32 0.0, %v3826
        %v3828 = vpop.f32.mrb[0].mxu0
        %3829 = vmatprep.mubr.bf16.mxu0 0
        %3830 = vmatmul.mubr.bf16.gmra.mrb[0].mxu0 %v3483
        %v3831 = vpop.f32.mrb[0].mxu0
        %v3832 = vadd.f32 0.0, %v3831
        %v3833 = vpop.f32.mrb[0].mxu0
        %v3834 = vpop.f32.mrb[0].mxu0
        %v3835 = vadd.f32 0.0, %v3834
        %v3836 = vpop.f32.mrb[0].mxu0
        %3837 = vmatprep.mubr.bf16.mxu0 0
        %3838 = vmatmul.mubr.bf16.gmra.mrb[0].mxu0 %v3485
        %v3839 = vpop.f32.mrb[0].mxu0
        %v3840 = vadd.f32 0.0, %v3839
        %v3841 = vpop.f32.mrb[0].mxu0
        %v3842 = vpop.f32.mrb[0].mxu0
        %v3843 = vadd.f32 0.0, %v3842
        %v3844 = vpop.f32.mrb[0].mxu0
        %3845 = vdwg.mxu0
        %v3846 = vadd.f32 %v3127, %v3600
        %v3847 = vadd.f32 %v3130, %v3603
        %v3848 = vadd.f32 %v3135, %v3608
        %v3849 = vadd.f32 %v3138, %v3611
        %v3850 = vadd.f32 %v3143, %v3616
        %v3851 = vadd.f32 %v3146, %v3619
        %v3852 = vadd.f32 %v3151, %v3624
        %v3853 = vadd.f32 %v3154, %v3627
        %v3854 = vadd.f32 %v3159, %v3632
        %v3855 = vadd.f32 %v3162, %v3635
        %v3856 = vadd.f32 %v3167, %v3640
        %v3857 = vadd.f32 %v3170, %v3643
        %v3858 = vadd.f32 %v3175, %v3648
        %v3859 = vadd.f32 %v3178, %v3651
        %v3860 = vadd.f32 %v3183, %v3656
        %v3861 = vadd.f32 %v3186, %v3659
        %v3862 = vadd.f32 %v3191, %v3664
        %v3863 = vadd.f32 %v3194, %v3667
        %v3864 = vadd.f32 %v3199, %v3672
        %v3865 = vadd.f32 %v3202, %v3675
        %v3866 = vadd.f32 %v3207, %v3680
        %v3867 = vadd.f32 %v3210, %v3683
        %v3868 = vadd.f32 %v3215, %v3688
        %v3869 = vadd.f32 %v3218, %v3691
        %v3870 = vadd.f32 %v3223, %v3696
        %v3871 = vadd.f32 %v3226, %v3699
        %v3872 = vadd.f32 %v3231, %v3704
        %v3873 = vadd.f32 %v3234, %v3707
        %v3874 = vadd.f32 %v3239, %v3712
        %v3875 = vadd.f32 %v3242, %v3715
        %v3876 = vadd.f32 %v3247, %v3720
        %v3877 = vadd.f32 %v3250, %v3723
        %v3878 = vadd.f32 %v3255, %v3728
        %v3879 = vadd.f32 %v3258, %v3731
        %v3880 = vadd.f32 %v3263, %v3736
        %v3881 = vadd.f32 %v3266, %v3739
        %v3882 = vadd.f32 %v3271, %v3744
        %v3883 = vadd.f32 %v3274, %v3747
        %v3884 = vadd.f32 %v3279, %v3752
        %v3885 = vadd.f32 %v3282, %v3755
        %v3886 = vadd.f32 %v3287, %v3760
        %v3887 = vadd.f32 %v3290, %v3763
        %v3888 = vadd.f32 %v3295, %v3768
        %v3889 = vadd.f32 %v3298, %v3771
        %v3890 = vadd.f32 %v3303, %v3776
        %v3891 = vadd.f32 %v3306, %v3779
        %v3892 = vadd.f32 %v3311, %v3784
        %v3893 = vadd.f32 %v3314, %v3787
        %v3894 = vadd.f32 %v3319, %v3792
        %v3895 = vadd.f32 %v3322, %v3795
        %v3896 = vadd.f32 %v3327, %v3800
        %v3897 = vadd.f32 %v3330, %v3803
        %v3898 = vadd.f32 %v3335, %v3808
        %v3899 = vadd.f32 %v3338, %v3811
        %v3900 = vadd.f32 %v3343, %v3816
        %v3901 = vadd.f32 %v3346, %v3819
        %v3902 = vadd.f32 %v3351, %v3824
        %v3903 = vadd.f32 %v3354, %v3827
        %v3904 = vadd.f32 %v3359, %v3832
        %v3905 = vadd.f32 %v3362, %v3835
        %v3906 = vadd.f32 %v3367, %v3840
        %v3907 = vadd.f32 %v3370, %v3843
        %v3908 = vld [vmem:[#allocation3] sm:$0xff]
        %v3909 = vld [vmem:[#allocation3 + $0x8] sm:$0xff]
        %v3910 = vld [vmem:[#allocation3 + $0x10] sm:$0xff]
        %v3911 = vld [vmem:[#allocation3 + $0x18] sm:$0xff]
        %v3912 = vld [vmem:[#allocation3 + $0x20] sm:$0xff]
        %v3913 = vld [vmem:[#allocation3 + $0x28] sm:$0xff]
        %v3914 = vld [vmem:[#allocation3 + $0x30] sm:$0xff]
        %v3915 = vld [vmem:[#allocation3 + $0x38] sm:$0xff]
        %v3916 = vld [vmem:[#allocation3 + $0x40] sm:$0xff]
        %v3917 = vld [vmem:[#allocation3 + $0x48] sm:$0xff]
        %v3918 = vld [vmem:[#allocation3 + $0x50] sm:$0xff]
        %v3919 = vld [vmem:[#allocation3 + $0x58] sm:$0xff]
        %v3920 = vld [vmem:[#allocation3 + $0x60] sm:$0xff]
        %v3921 = vld [vmem:[#allocation3 + $0x68] sm:$0xff]
        %v3922 = vld [vmem:[#allocation3 + $0x70] sm:$0xff]
        %v3923 = vld [vmem:[#allocation3 + $0x78] sm:$0xff]
        %v3924 = vld [vmem:[#allocation3 + $0x80] sm:$0xff]
        %v3925 = vld [vmem:[#allocation3 + $0x88] sm:$0xff]
        %v3926 = vld [vmem:[#allocation3 + $0x90] sm:$0xff]
        %v3927 = vld [vmem:[#allocation3 + $0x98] sm:$0xff]
        %v3928 = vld [vmem:[#allocation3 + $0xa0] sm:$0xff]
        %v3929 = vld [vmem:[#allocation3 + $0xa8] sm:$0xff]
        %v3930 = vld [vmem:[#allocation3 + $0xb0] sm:$0xff]
        %v3931 = vld [vmem:[#allocation3 + $0xb8] sm:$0xff]
        %v3932 = vld [vmem:[#allocation3 + $0xc0] sm:$0xff]
        %v3933 = vld [vmem:[#allocation3 + $0xc8] sm:$0xff]
        %v3934 = vld [vmem:[#allocation3 + $0xd0] sm:$0xff]
        %v3935 = vld [vmem:[#allocation3 + $0xd8] sm:$0xff]
        %v3936 = vld [vmem:[#allocation3 + $0xe0] sm:$0xff]
        %v3937 = vld [vmem:[#allocation3 + $0xe8] sm:$0xff]
        %v3938 = vld [vmem:[#allocation3 + $0xf0] sm:$0xff]
        %v3939 = vld [vmem:[#allocation3 + $0xf8] sm:$0xff]
        %v3940 = vld [vmem:[#allocation3 + $0x100] sm:$0xff]
        %v3941 = vld [vmem:[#allocation3 + $0x108] sm:$0xff]
        %v3942 = vld [vmem:[#allocation3 + $0x110] sm:$0xff]
        %v3943 = vld [vmem:[#allocation3 + $0x118] sm:$0xff]
        %v3944 = vld [vmem:[#allocation3 + $0x120] sm:$0xff]
        %v3945 = vld [vmem:[#allocation3 + $0x128] sm:$0xff]
        %v3946 = vld [vmem:[#allocation3 + $0x130] sm:$0xff]
        %v3947 = vld [vmem:[#allocation3 + $0x138] sm:$0xff]
        %v3948 = vld [vmem:[#allocation3 + $0x140] sm:$0xff]
        %v3949 = vld [vmem:[#allocation3 + $0x148] sm:$0xff]
        %v3950 = vld [vmem:[#allocation3 + $0x150] sm:$0xff]
        %v3951 = vld [vmem:[#allocation3 + $0x158] sm:$0xff]
        %v3952 = vld [vmem:[#allocation3 + $0x160] sm:$0xff]
        %v3953 = vld [vmem:[#allocation3 + $0x168] sm:$0xff]
        %v3954 = vld [vmem:[#allocation3 + $0x170] sm:$0xff]
        %v3955 = vld [vmem:[#allocation3 + $0x178] sm:$0xff]
        %v3956 = vld [vmem:[#allocation3 + $0x180] sm:$0xff]
        %v3957 = vld [vmem:[#allocation3 + $0x188] sm:$0xff]
        %v3958 = vld [vmem:[#allocation3 + $0x190] sm:$0xff]
        %v3959 = vld [vmem:[#allocation3 + $0x198] sm:$0xff]
        %v3960 = vld [vmem:[#allocation3 + $0x1a0] sm:$0xff]
        %v3961 = vld [vmem:[#allocation3 + $0x1a8] sm:$0xff]
        %v3962 = vld [vmem:[#allocation3 + $0x1b0] sm:$0xff]
        %v3963 = vld [vmem:[#allocation3 + $0x1b8] sm:$0xff]
        %v3964 = vld [vmem:[#allocation3 + $0x1c0] sm:$0xff]
        %v3965 = vld [vmem:[#allocation3 + $0x1c8] sm:$0xff]
        %v3966 = vld [vmem:[#allocation3 + $0x1d0] sm:$0xff]
        %v3967 = vld [vmem:[#allocation3 + $0x1d8] sm:$0xff]
        %v3968 = vld [vmem:[#allocation3 + $0x1e0] sm:$0xff]
        %v3969 = vld [vmem:[#allocation3 + $0x1e8] sm:$0xff]
        %v3970 = vadd.f32 %v3908, %v3846
        %v3971 = vadd.f32 %v3909, %v3847
        %v3972 = vadd.f32 %v3910, %v3848
        %v3973 = vadd.f32 %v3911, %v3849
        %v3974 = vadd.f32 %v3912, %v3850
        %v3975 = vadd.f32 %v3913, %v3851
        %v3976 = vadd.f32 %v3914, %v3852
        %v3977 = vadd.f32 %v3915, %v3853
        %v3978 = vadd.f32 %v3916, %v3854
        %v3979 = vadd.f32 %v3917, %v3855
        %v3980 = vadd.f32 %v3918, %v3856
        %v3981 = vadd.f32 %v3919, %v3857
        %v3982 = vadd.f32 %v3920, %v3858
        %v3983 = vadd.f32 %v3921, %v3859
        %v3984 = vadd.f32 %v3922, %v3860
        %v3985 = vadd.f32 %v3923, %v3861
        %v3986 = vadd.f32 %v3924, %v3862
        %v3987 = vadd.f32 %v3925, %v3863
        %v3988 = vadd.f32 %v3926, %v3864
        %v3989 = vadd.f32 %v3927, %v3865
        %v3990 = vadd.f32 %v3928, %v3866
        %v3991 = vadd.f32 %v3929, %v3867
        %v3992 = vadd.f32 %v3930, %v3868
        %v3993 = vadd.f32 %v3931, %v3869
        %v3994 = vadd.f32 %v3932, %v3870
        %v3995 = vadd.f32 %v3933, %v3871
        %v3996 = vadd.f32 %v3934, %v3872
        %v3997 = vadd.f32 %v3935, %v3873
        %v3998 = vadd.f32 %v3936, %v3874
        %v3999 = vadd.f32 %v3937, %v3875
        %v4000 = vadd.f32 %v3938, %v3876
        %v4001 = vadd.f32 %v3939, %v3877
        %v4002 = vadd.f32 %v3940, %v3878
        %v4003 = vadd.f32 %v3941, %v3879
        %v4004 = vadd.f32 %v3942, %v3880
        %v4005 = vadd.f32 %v3943, %v3881
        %v4006 = vadd.f32 %v3944, %v3882
        %v4007 = vadd.f32 %v3945, %v3883
        %v4008 = vadd.f32 %v3946, %v3884
        %v4009 = vadd.f32 %v3947, %v3885
        %v4010 = vadd.f32 %v3948, %v3886
        %v4011 = vadd.f32 %v3949, %v3887
        %v4012 = vadd.f32 %v3950, %v3888
        %v4013 = vadd.f32 %v3951, %v3889
        %v4014 = vadd.f32 %v3952, %v3890
        %v4015 = vadd.f32 %v3953, %v3891
        %v4016 = vadd.f32 %v3954, %v3892
        %v4017 = vadd.f32 %v3955, %v3893
        %v4018 = vadd.f32 %v3956, %v3894
        %v4019 = vadd.f32 %v3957, %v3895
        %v4020 = vadd.f32 %v3958, %v3896
        %v4021 = vadd.f32 %v3959, %v3897
        %v4022 = vadd.f32 %v3960, %v3898
        %v4023 = vadd.f32 %v3961, %v3899
        %v4024 = vadd.f32 %v3962, %v3900
        %v4025 = vadd.f32 %v3963, %v3901
        %v4026 = vadd.f32 %v3964, %v3902
        %v4027 = vadd.f32 %v3965, %v3903
        %v4028 = vadd.f32 %v3966, %v3904
        %v4029 = vadd.f32 %v3967, %v3905
        %v4030 = vadd.f32 %v3968, %v3906
        %v4031 = vadd.f32 %v3969, %v3907
        %4032 = vst [vmem:[#allocation3] sm:$0xff] %v3970
        %4033 = vst [vmem:[#allocation3 + $0x8] sm:$0xff] %v3971
        %4034 = vst [vmem:[#allocation3 + $0x10] sm:$0xff] %v3972
        %4035 = vst [vmem:[#allocation3 + $0x18] sm:$0xff] %v3973
        %4036 = vst [vmem:[#allocation3 + $0x20] sm:$0xff] %v3974
        %4037 = vst [vmem:[#allocation3 + $0x28] sm:$0xff] %v3975
        %4038 = vst [vmem:[#allocation3 + $0x30] sm:$0xff] %v3976
        %4039 = vst [vmem:[#allocation3 + $0x38] sm:$0xff] %v3977
        %4040 = vst [vmem:[#allocation3 + $0x40] sm:$0xff] %v3978
        %4041 = vst [vmem:[#allocation3 + $0x48] sm:$0xff] %v3979
        %4042 = vst [vmem:[#allocation3 + $0x50] sm:$0xff] %v3980
        %4043 = vst [vmem:[#allocation3 + $0x58] sm:$0xff] %v3981
        %4044 = vst [vmem:[#allocation3 + $0x60] sm:$0xff] %v3982
        %4045 = vst [vmem:[#allocation3 + $0x68] sm:$0xff] %v3983
        %4046 = vst [vmem:[#allocation3 + $0x70] sm:$0xff] %v3984
        %4047 = vst [vmem:[#allocation3 + $0x78] sm:$0xff] %v3985
        %4048 = vst [vmem:[#allocation3 + $0x80] sm:$0xff] %v3986
        %4049 = vst [vmem:[#allocation3 + $0x88] sm:$0xff] %v3987
        %4050 = vst [vmem:[#allocation3 + $0x90] sm:$0xff] %v3988
        %4051 = vst [vmem:[#allocation3 + $0x98] sm:$0xff] %v3989
        %4052 = vst [vmem:[#allocation3 + $0xa0] sm:$0xff] %v3990
        %4053 = vst [vmem:[#allocation3 + $0xa8] sm:$0xff] %v3991
        %4054 = vst [vmem:[#allocation3 + $0xb0] sm:$0xff] %v3992
        %4055 = vst [vmem:[#allocation3 + $0xb8] sm:$0xff] %v3993
        %4056 = vst [vmem:[#allocation3 + $0xc0] sm:$0xff] %v3994
        %4057 = vst [vmem:[#allocation3 + $0xc8] sm:$0xff] %v3995
        %4058 = vst [vmem:[#allocation3 + $0xd0] sm:$0xff] %v3996
        %4059 = vst [vmem:[#allocation3 + $0xd8] sm:$0xff] %v3997
        %4060 = vst [vmem:[#allocation3 + $0xe0] sm:$0xff] %v3998
        %4061 = vst [vmem:[#allocation3 + $0xe8] sm:$0xff] %v3999
        %4062 = vst [vmem:[#allocation3 + $0xf0] sm:$0xff] %v4000
        %4063 = vst [vmem:[#allocation3 + $0xf8] sm:$0xff] %v4001
        %4064 = vst [vmem:[#allocation3 + $0x100] sm:$0xff] %v4002
        %4065 = vst [vmem:[#allocation3 + $0x108] sm:$0xff] %v4003
        %4066 = vst [vmem:[#allocation3 + $0x110] sm:$0xff] %v4004
        %4067 = vst [vmem:[#allocation3 + $0x118] sm:$0xff] %v4005
        %4068 = vst [vmem:[#allocation3 + $0x120] sm:$0xff] %v4006
        %4069 = vst [vmem:[#allocation3 + $0x128] sm:$0xff] %v4007
        %4070 = vst [vmem:[#allocation3 + $0x130] sm:$0xff] %v4008
        %4071 = vst [vmem:[#allocation3 + $0x138] sm:$0xff] %v4009
        %4072 = vst [vmem:[#allocation3 + $0x140] sm:$0xff] %v4010
        %4073 = vst [vmem:[#allocation3 + $0x148] sm:$0xff] %v4011
        %4074 = vst [vmem:[#allocation3 + $0x150] sm:$0xff] %v4012
        %4075 = vst [vmem:[#allocation3 + $0x158] sm:$0xff] %v4013
        %4076 = vst [vmem:[#allocation3 + $0x160] sm:$0xff] %v4014
        %4077 = vst [vmem:[#allocation3 + $0x168] sm:$0xff] %v4015
        %4078 = vst [vmem:[#allocation3 + $0x170] sm:$0xff] %v4016
        %4079 = vst [vmem:[#allocation3 + $0x178] sm:$0xff] %v4017
        %4080 = vst [vmem:[#allocation3 + $0x180] sm:$0xff] %v4018
        %4081 = vst [vmem:[#allocation3 + $0x188] sm:$0xff] %v4019
        %4082 = vst [vmem:[#allocation3 + $0x190] sm:$0xff] %v4020
        %4083 = vst [vmem:[#allocation3 + $0x198] sm:$0xff] %v4021
        %4084 = vst [vmem:[#allocation3 + $0x1a0] sm:$0xff] %v4022
        %4085 = vst [vmem:[#allocation3 + $0x1a8] sm:$0xff] %v4023
        %4086 = vst [vmem:[#allocation3 + $0x1b0] sm:$0xff] %v4024
        %4087 = vst [vmem:[#allocation3 + $0x1b8] sm:$0xff] %v4025
        %4088 = vst [vmem:[#allocation3 + $0x1c0] sm:$0xff] %v4026
        %4089 = vst [vmem:[#allocation3 + $0x1c8] sm:$0xff] %v4027
        %4090 = vst [vmem:[#allocation3 + $0x1d0] sm:$0xff] %v4028
        %4091 = vst [vmem:[#allocation3 + $0x1d8] sm:$0xff] %v4029
        %4092 = vst [vmem:[#allocation3 + $0x1e0] sm:$0xff] %v4030
        %4093 = vst [vmem:[#allocation3 + $0x1e8] sm:$0xff] %v4031
        %v4094 = vld [vmem:[#allocation2 + $0x20] sm:$0xff]
        %v4095 = vld [vmem:[#allocation2 + $0x28] sm:$0xff]
        %v4096 = vld [vmem:[#allocation2 + $0x30] sm:$0xff]
        %v4097 = vld [vmem:[#allocation2 + $0x38] sm:$0xff]
        %v4098 = vld [vmem:[#allocation2 + $0x40] sm:$0xff]
        %v4099 = vld [vmem:[#allocation2 + $0x48] sm:$0xff]
        %v4100 = vld [vmem:[#allocation2 + $0x50] sm:$0xff]
        %v4101 = vld [vmem:[#allocation2 + $0x58] sm:$0xff]
        %v4102 = vld [vmem:[#allocation2 + $0x60] sm:$0xff]
        %v4103 = vld [vmem:[#allocation2 + $0x68] sm:$0xff]
        %v4104 = vld [vmem:[#allocation2 + $0x70] sm:$0xff]
        %v4105 = vld [vmem:[#allocation2 + $0x78] sm:$0xff]
        %v4106 = vld [vmem:[#allocation2 + $0x80] sm:$0xff]
        %v4107 = vld [vmem:[#allocation2 + $0x88] sm:$0xff]
        %v4108 = vld [vmem:[#allocation2 + $0x90] sm:$0xff]
        %v4109 = vld [vmem:[#allocation2 + $0x98] sm:$0xff]
        %v4110 = vld [vmem:[#allocation2 + $0xa0] sm:$0xff]
        %v4111 = vld [vmem:[#allocation2 + $0xa8] sm:$0xff]
        %v4112 = vld [vmem:[#allocation2 + $0xb0] sm:$0xff]
        %v4113 = vld [vmem:[#allocation2 + $0xb8] sm:$0xff]
        %v4114 = vld [vmem:[#allocation2 + $0xc0] sm:$0xff]
        %v4115 = vld [vmem:[#allocation2 + $0xc8] sm:$0xff]
        %v4116 = vld [vmem:[#allocation2 + $0xd0] sm:$0xff]
        %v4117 = vld [vmem:[#allocation2 + $0xd8] sm:$0xff]
        %v4118 = vld [vmem:[#allocation2 + $0xe0] sm:$0xff]
        %v4119 = vld [vmem:[#allocation2 + $0xe8] sm:$0xff]
        %v4120 = vld [vmem:[#allocation2 + $0xf0] sm:$0xff]
        %v4121 = vld [vmem:[#allocation2 + $0xf8] sm:$0xff]
        %v4122 = vld [vmem:[#allocation2 + $0x100] sm:$0xff]
        %v4123 = vld [vmem:[#allocation2 + $0x108] sm:$0xff]
        %v4124 = vld [vmem:[#allocation2 + $0x110] sm:$0xff]
        %s4125 = scalar_lea.vmem [#allocation7], 384
        %v4126 = vld [vmem:[%s4125] sm:$0xf]
        %v4127 = vld [vmem:[%s4125 + $0x4] sm:$0xf]
        %v4128 = vld [vmem:[%s4125 + $0x8] sm:$0xf]
        %v4129 = vld [vmem:[%s4125 + $0xc] sm:$0xf]
        %v4130 = vld [vmem:[%s4125 + $0x10] sm:$0xf]
        %v4131 = vld [vmem:[%s4125 + $0x14] sm:$0xf]
        %v4132 = vld [vmem:[%s4125 + $0x18] sm:$0xf]
        %v4133 = vld [vmem:[%s4125 + $0x1c] sm:$0xf]
        %v4134 = vld [vmem:[%s4125 + $0x20] sm:$0xf]
        %v4135 = vld [vmem:[%s4125 + $0x24] sm:$0xf]
        %v4136 = vld [vmem:[%s4125 + $0x28] sm:$0xf]
        %v4137 = vld [vmem:[%s4125 + $0x2c] sm:$0xf]
        %v4138 = vld [vmem:[%s4125 + $0x30] sm:$0xf]
        %v4139 = vld [vmem:[%s4125 + $0x34] sm:$0xf]
        %v4140 = vld [vmem:[%s4125 + $0x38] sm:$0xf]
        %v4141 = vld [vmem:[%s4125 + $0x3c] sm:$0xf]
        %v4142 = vld [vmem:[#allocation2 + $0x20] sm:$0xff]
        %v4143 = vld [vmem:[#allocation2 + $0x28] sm:$0xff]
        %v4144 = vld [vmem:[#allocation2 + $0x30] sm:$0xff]
        %v4145 = vld [vmem:[#allocation2 + $0x38] sm:$0xff]
        %v4146 = vld [vmem:[#allocation2 + $0x40] sm:$0xff]
        %v4147 = vld [vmem:[#allocation2 + $0x48] sm:$0xff]
        %v4148 = vld [vmem:[#allocation2 + $0x50] sm:$0xff]
        %v4149 = vld [vmem:[#allocation2 + $0x58] sm:$0xff]
        %v4150 = vld [vmem:[#allocation2 + $0x60] sm:$0xff]
        %v4151 = vld [vmem:[#allocation2 + $0x68] sm:$0xff]
        %v4152 = vld [vmem:[#allocation2 + $0x70] sm:$0xff]
        %v4153 = vld [vmem:[#allocation2 + $0x78] sm:$0xff]
        %v4154 = vld [vmem:[#allocation2 + $0x80] sm:$0xff]
        %v4155 = vld [vmem:[#allocation2 + $0x88] sm:$0xff]
        %v4156 = vld [vmem:[#allocation2 + $0x90] sm:$0xff]
        %v4157 = vld [vmem:[#allocation2 + $0x98] sm:$0xff]
        %v4158 = vld [vmem:[#allocation2 + $0xa0] sm:$0xff]
        %v4159 = vld [vmem:[#allocation2 + $0xa8] sm:$0xff]
        %v4160 = vld [vmem:[#allocation2 + $0xb0] sm:$0xff]
        %v4161 = vld [vmem:[#allocation2 + $0xb8] sm:$0xff]
        %v4162 = vld [vmem:[#allocation2 + $0xc0] sm:$0xff]
        %v4163 = vld [vmem:[#allocation2 + $0xc8] sm:$0xff]
        %v4164 = vld [vmem:[#allocation2 + $0xd0] sm:$0xff]
        %v4165 = vld [vmem:[#allocation2 + $0xd8] sm:$0xff]
        %v4166 = vld [vmem:[#allocation2 + $0xe0] sm:$0xff]
        %v4167 = vld [vmem:[#allocation2 + $0xe8] sm:$0xff]
        %v4168 = vld [vmem:[#allocation2 + $0xf0] sm:$0xff]
        %v4169 = vld [vmem:[#allocation2 + $0xf8] sm:$0xff]
        %v4170 = vld [vmem:[#allocation2 + $0x100] sm:$0xff]
        %v4171 = vld [vmem:[#allocation2 + $0x108] sm:$0xff]
        %v4172 = vld [vmem:[#allocation2 + $0x110] sm:$0xff]
        %v4173 = vld [vmem:[#allocation2 + $0x118] sm:$0x1]
        %s4174 = scalar_lea.vmem [#allocation7], 448
        %v4175 = vld [vmem:[%s4174] sm:$0xf]
        %v4176 = vld [vmem:[%s4174 + $0x4] sm:$0xf]
        %v4177 = vld [vmem:[%s4174 + $0x8] sm:$0xf]
        %v4178 = vld [vmem:[%s4174 + $0xc] sm:$0xf]
        %v4179 = vld [vmem:[%s4174 + $0x10] sm:$0xf]
        %v4180 = vld [vmem:[%s4174 + $0x14] sm:$0xf]
        %v4181 = vld [vmem:[%s4174 + $0x18] sm:$0xf]
        %v4182 = vld [vmem:[%s4174 + $0x1c] sm:$0xf]
        %v4183 = vld [vmem:[%s4174 + $0x20] sm:$0xf]
        %v4184 = vld [vmem:[%s4174 + $0x24] sm:$0xf]
        %v4185 = vld [vmem:[%s4174 + $0x28] sm:$0xf]
        %v4186 = vld [vmem:[%s4174 + $0x2c] sm:$0xf]
        %v4187 = vld [vmem:[%s4174 + $0x30] sm:$0xf]
        %v4188 = vld [vmem:[%s4174 + $0x34] sm:$0xf]
        %v4189 = vld [vmem:[%s4174 + $0x38] sm:$0xf]
        %v4190 = vld [vmem:[%s4174 + $0x3c] sm:$0xf]
        %v4192 = vshrl.u32 %v4142, 16
        %v4194 = vshll.u32 %v4142, 16
        %v4196 = vrot.slane %v4194, 1
        %v4197 = vor.u32 %v4192, %v4196
        %v4199 = vshll.u32 %v4143, 16
        %v4201 = vrot.slane %v4199, 1
        %v4202 = vsel %vm826, %v4197, %v4201
        %v4203 = vshrl.u32 %v4143, 16
        %v4205 = vor.u32 %v4203, %v4201
        %v4207 = vshll.u32 %v4144, 16
        %v4209 = vrot.slane %v4207, 1
        %v4210 = vsel %vm826, %v4205, %v4209
        %v4211 = vshrl.u32 %v4144, 16
        %v4213 = vor.u32 %v4211, %v4209
        %v4215 = vshll.u32 %v4145, 16
        %v4217 = vrot.slane %v4215, 1
        %v4218 = vsel %vm826, %v4213, %v4217
        %v4219 = vshrl.u32 %v4145, 16
        %v4221 = vor.u32 %v4219, %v4217
        %v4223 = vshll.u32 %v4146, 16
        %v4225 = vrot.slane %v4223, 1
        %v4226 = vsel %vm826, %v4221, %v4225
        %v4227 = vshrl.u32 %v4146, 16
        %v4229 = vor.u32 %v4227, %v4225
        %v4231 = vshll.u32 %v4147, 16
        %v4233 = vrot.slane %v4231, 1
        %v4234 = vsel %vm826, %v4229, %v4233
        %v4235 = vshrl.u32 %v4147, 16
        %v4237 = vor.u32 %v4235, %v4233
        %v4239 = vshll.u32 %v4148, 16
        %v4241 = vrot.slane %v4239, 1
        %v4242 = vsel %vm826, %v4237, %v4241
        %v4243 = vshrl.u32 %v4148, 16
        %v4245 = vor.u32 %v4243, %v4241
        %v4247 = vshll.u32 %v4149, 16
        %v4249 = vrot.slane %v4247, 1
        %v4250 = vsel %vm826, %v4245, %v4249
        %v4251 = vshrl.u32 %v4149, 16
        %v4253 = vor.u32 %v4251, %v4249
        %v4255 = vshll.u32 %v4150, 16
        %v4257 = vrot.slane %v4255, 1
        %v4258 = vsel %vm826, %v4253, %v4257
        %v4259 = vshrl.u32 %v4150, 16
        %v4261 = vor.u32 %v4259, %v4257
        %v4263 = vshll.u32 %v4151, 16
        %v4265 = vrot.slane %v4263, 1
        %v4266 = vsel %vm826, %v4261, %v4265
        %v4267 = vshrl.u32 %v4151, 16
        %v4269 = vor.u32 %v4267, %v4265
        %v4271 = vshll.u32 %v4152, 16
        %v4273 = vrot.slane %v4271, 1
        %v4274 = vsel %vm826, %v4269, %v4273
        %v4275 = vshrl.u32 %v4152, 16
        %v4277 = vor.u32 %v4275, %v4273
        %v4279 = vshll.u32 %v4153, 16
        %v4281 = vrot.slane %v4279, 1
        %v4282 = vsel %vm826, %v4277, %v4281
        %v4283 = vshrl.u32 %v4153, 16
        %v4285 = vor.u32 %v4283, %v4281
        %v4287 = vshll.u32 %v4154, 16
        %v4289 = vrot.slane %v4287, 1
        %v4290 = vsel %vm826, %v4285, %v4289
        %v4291 = vshrl.u32 %v4154, 16
        %v4293 = vor.u32 %v4291, %v4289
        %v4295 = vshll.u32 %v4155, 16
        %v4297 = vrot.slane %v4295, 1
        %v4298 = vsel %vm826, %v4293, %v4297
        %v4299 = vshrl.u32 %v4155, 16
        %v4301 = vor.u32 %v4299, %v4297
        %v4303 = vshll.u32 %v4156, 16
        %v4305 = vrot.slane %v4303, 1
        %v4306 = vsel %vm826, %v4301, %v4305
        %v4307 = vshrl.u32 %v4156, 16
        %v4309 = vor.u32 %v4307, %v4305
        %v4311 = vshll.u32 %v4157, 16
        %v4313 = vrot.slane %v4311, 1
        %v4314 = vsel %vm826, %v4309, %v4313
        %v4315 = vshrl.u32 %v4157, 16
        %v4317 = vor.u32 %v4315, %v4313
        %v4319 = vshll.u32 %v4158, 16
        %v4321 = vrot.slane %v4319, 1
        %v4322 = vsel %vm826, %v4317, %v4321
        %v4323 = vshrl.u32 %v4158, 16
        %v4325 = vor.u32 %v4323, %v4321
        %v4327 = vshll.u32 %v4159, 16
        %v4329 = vrot.slane %v4327, 1
        %v4330 = vsel %vm826, %v4325, %v4329
        %v4331 = vshrl.u32 %v4159, 16
        %v4333 = vor.u32 %v4331, %v4329
        %v4335 = vshll.u32 %v4160, 16
        %v4337 = vrot.slane %v4335, 1
        %v4338 = vsel %vm826, %v4333, %v4337
        %v4339 = vshrl.u32 %v4160, 16
        %v4341 = vor.u32 %v4339, %v4337
        %v4343 = vshll.u32 %v4161, 16
        %v4345 = vrot.slane %v4343, 1
        %v4346 = vsel %vm826, %v4341, %v4345
        %v4347 = vshrl.u32 %v4161, 16
        %v4349 = vor.u32 %v4347, %v4345
        %v4351 = vshll.u32 %v4162, 16
        %v4353 = vrot.slane %v4351, 1
        %v4354 = vsel %vm826, %v4349, %v4353
        %v4355 = vshrl.u32 %v4162, 16
        %v4357 = vor.u32 %v4355, %v4353
        %v4359 = vshll.u32 %v4163, 16
        %v4361 = vrot.slane %v4359, 1
        %v4362 = vsel %vm826, %v4357, %v4361
        %v4363 = vshrl.u32 %v4163, 16
        %v4365 = vor.u32 %v4363, %v4361
        %v4367 = vshll.u32 %v4164, 16
        %v4369 = vrot.slane %v4367, 1
        %v4370 = vsel %vm826, %v4365, %v4369
        %v4371 = vshrl.u32 %v4164, 16
        %v4373 = vor.u32 %v4371, %v4369
        %v4375 = vshll.u32 %v4165, 16
        %v4377 = vrot.slane %v4375, 1
        %v4378 = vsel %vm826, %v4373, %v4377
        %v4379 = vshrl.u32 %v4165, 16
        %v4381 = vor.u32 %v4379, %v4377
        %v4383 = vshll.u32 %v4166, 16
        %v4385 = vrot.slane %v4383, 1
        %v4386 = vsel %vm826, %v4381, %v4385
        %v4387 = vshrl.u32 %v4166, 16
        %v4389 = vor.u32 %v4387, %v4385
        %v4391 = vshll.u32 %v4167, 16
        %v4393 = vrot.slane %v4391, 1
        %v4394 = vsel %vm826, %v4389, %v4393
        %v4395 = vshrl.u32 %v4167, 16
        %v4397 = vor.u32 %v4395, %v4393
        %v4399 = vshll.u32 %v4168, 16
        %v4401 = vrot.slane %v4399, 1
        %v4402 = vsel %vm826, %v4397, %v4401
        %v4403 = vshrl.u32 %v4168, 16
        %v4405 = vor.u32 %v4403, %v4401
        %v4407 = vshll.u32 %v4169, 16
        %v4409 = vrot.slane %v4407, 1
        %v4410 = vsel %vm826, %v4405, %v4409
        %v4411 = vshrl.u32 %v4169, 16
        %v4413 = vor.u32 %v4411, %v4409
        %v4415 = vshll.u32 %v4170, 16
        %v4417 = vrot.slane %v4415, 1
        %v4418 = vsel %vm826, %v4413, %v4417
        %v4419 = vshrl.u32 %v4170, 16
        %v4421 = vor.u32 %v4419, %v4417
        %v4423 = vshll.u32 %v4171, 16
        %v4425 = vrot.slane %v4423, 1
        %v4426 = vsel %vm826, %v4421, %v4425
        %v4427 = vshrl.u32 %v4171, 16
        %v4429 = vor.u32 %v4427, %v4425
        %v4431 = vshll.u32 %v4172, 16
        %v4433 = vrot.slane %v4431, 1
        %v4434 = vsel %vm826, %v4429, %v4433
        %v4435 = vshrl.u32 %v4172, 16
        %v4437 = vor.u32 %v4435, %v4433
        %v4439 = vshll.u32 %v4173, 16
        %v4441 = vrot.slane %v4439, 1
        %v4442 = vsel %vm826, %v4437, %v4441
        %v4490 = vunpack.c.l.b16 %v4175
        %v4491 = vunpack.c.l.b16 %v4176
        %v4492 = vunpack.c.l.b16 %v4177
        %v4493 = vunpack.c.l.b16 %v4178
        %v4494 = vunpack.c.l.b16 %v4179
        %v4495 = vunpack.c.l.b16 %v4180
        %v4496 = vunpack.c.l.b16 %v4181
        %v4497 = vunpack.c.l.b16 %v4182
        %v4498 = vunpack.c.l.b16 %v4183
        %v4499 = vunpack.c.l.b16 %v4184
        %v4500 = vunpack.c.l.b16 %v4185
        %v4501 = vunpack.c.l.b16 %v4186
        %v4502 = vunpack.c.l.b16 %v4187
        %v4503 = vunpack.c.l.b16 %v4188
        %v4504 = vunpack.c.l.b16 %v4189
        %v4505 = vunpack.c.l.b16 %v4190
        %v4506 = vpack.c.b16 %v4491, %v4490
        %v4507 = vpack.c.b16 %v4493, %v4492
        %v4508 = vpack.c.b16 %v4495, %v4494
        %v4509 = vpack.c.b16 %v4497, %v4496
        %v4510 = vpack.c.b16 %v4499, %v4498
        %v4511 = vpack.c.b16 %v4501, %v4500
        %v4512 = vpack.c.b16 %v4503, %v4502
        %v4513 = vpack.c.b16 %v4505, %v4504
        %4522 = vmatprep.subr.bf16.mxu0 0
        %4523 = vmatpush1.bf16.msra.mxu0 %v4506
        %4524 = vmatprep.subr.bf16.mxu0 0
        %4525 = vmatpush1.bf16.msra.mxu0 %v4507
        %4526 = vmatprep.subr.bf16.mxu0 0
        %4527 = vmatpush1.bf16.msra.mxu0 %v4508
        %4528 = vmatprep.subr.bf16.mxu0 0
        %4529 = vmatpush1.bf16.msra.mxu0 %v4509
        %4530 = vmatprep.subr.bf16.mxu0 0
        %4531 = vmatpush1.bf16.msra.mxu0 %v4510
        %4532 = vmatprep.subr.bf16.mxu0 0
        %4533 = vmatpush1.bf16.msra.mxu0 %v4511
        %4534 = vmatprep.subr.bf16.mxu0 0
        %4535 = vmatpush1.bf16.msra.mxu0 %v4512
        %4536 = vmatprep.subr.bf16.mxu0 0
        %4537 = vmatpush1.bf16.msra.mxu0 %v4513
        %4538 = vmatprep.subr.bf16.mxu0 0
        %4539 = vmatpush1.bf16.msra.mxu0 0
        %4540 = vmatprep.subr.bf16.mxu0 0
        %4541 = vmatpush1.bf16.msra.mxu0 0
        %4542 = vmatprep.subr.bf16.mxu0 0
        %4543 = vmatpush1.bf16.msra.mxu0 0
        %4544 = vmatprep.subr.bf16.mxu0 0
        %4545 = vmatpush1.bf16.msra.mxu0 0
        %4546 = vmatprep.subr.bf16.mxu0 0
        %4547 = vmatpush1.bf16.msra.mxu0 0
        %4548 = vmatprep.subr.bf16.mxu0 0
        %4549 = vmatpush1.bf16.msra.mxu0 0
        %4550 = vmatprep.subr.bf16.mxu0 0
        %4551 = vmatpush1.bf16.msra.mxu0 0
        %4552 = vmatprep.subr.bf16.mxu0 0
        %4553 = vmatpush1.bf16.msra.mxu0 0
        %4554 = vmatprep.mubr.bf16.mxu0 0
        %4555 = vmatmul.mubr.bf16.gmra.mrb[0].mxu0 %v4202
        %v4556 = vpop.f32.mrb[0].mxu0
        %v4557 = vadd.f32 0.0, %v4556
        %v4558 = vpop.f32.mrb[0].mxu0
        %v4559 = vpop.f32.mrb[0].mxu0
        %v4560 = vadd.f32 0.0, %v4559
        %v4561 = vpop.f32.mrb[0].mxu0
        %4562 = vmatprep.mubr.bf16.mxu0 0
        %4563 = vmatmul.mubr.bf16.gmra.mrb[0].mxu0 %v4210
        %v4564 = vpop.f32.mrb[0].mxu0
        %v4565 = vadd.f32 0.0, %v4564
        %v4566 = vpop.f32.mrb[0].mxu0
        %v4567 = vpop.f32.mrb[0].mxu0
        %v4568 = vadd.f32 0.0, %v4567
        %v4569 = vpop.f32.mrb[0].mxu0
        %4570 = vmatprep.mubr.bf16.mxu0 0
        %4571 = vmatmul.mubr.bf16.gmra.mrb[0].mxu0 %v4218
        %v4572 = vpop.f32.mrb[0].mxu0
        %v4573 = vadd.f32 0.0, %v4572
        %v4574 = vpop.f32.mrb[0].mxu0
        %v4575 = vpop.f32.mrb[0].mxu0
        %v4576 = vadd.f32 0.0, %v4575
        %v4577 = vpop.f32.mrb[0].mxu0
        %4578 = vmatprep.mubr.bf16.mxu0 0
        %4579 = vmatmul.mubr.bf16.gmra.mrb[0].mxu0 %v4226
        %v4580 = vpop.f32.mrb[0].mxu0
        %v4581 = vadd.f32 0.0, %v4580
        %v4582 = vpop.f32.mrb[0].mxu0
        %v4583 = vpop.f32.mrb[0].mxu0
        %v4584 = vadd.f32 0.0, %v4583
        %v4585 = vpop.f32.mrb[0].mxu0
        %4586 = vmatprep.mubr.bf16.mxu0 0
        %4587 = vmatmul.mubr.bf16.gmra.mrb[0].mxu0 %v4234
        %v4588 = vpop.f32.mrb[0].mxu0
        %v4589 = vadd.f32 0.0, %v4588
        %v4590 = vpop.f32.mrb[0].mxu0
        %v4591 = vpop.f32.mrb[0].mxu0
        %v4592 = vadd.f32 0.0, %v4591
        %v4593 = vpop.f32.mrb[0].mxu0
        %4594 = vmatprep.mubr.bf16.mxu0 0
        %4595 = vmatmul.mubr.bf16.gmra.mrb[0].mxu0 %v4242
        %v4596 = vpop.f32.mrb[0].mxu0
        %v4597 = vadd.f32 0.0, %v4596
        %v4598 = vpop.f32.mrb[0].mxu0
        %v4599 = vpop.f32.mrb[0].mxu0
        %v4600 = vadd.f32 0.0, %v4599
        %v4601 = vpop.f32.mrb[0].mxu0
        %4602 = vmatprep.mubr.bf16.mxu0 0
        %4603 = vmatmul.mubr.bf16.gmra.mrb[0].mxu0 %v4250
        %v4604 = vpop.f32.mrb[0].mxu0
        %v4605 = vadd.f32 0.0, %v4604
        %v4606 = vpop.f32.mrb[0].mxu0
        %v4607 = vpop.f32.mrb[0].mxu0
        %v4608 = vadd.f32 0.0, %v4607
        %v4609 = vpop.f32.mrb[0].mxu0
        %4610 = vmatprep.mubr.bf16.mxu0 0
        %4611 = vmatmul.mubr.bf16.gmra.mrb[0].mxu0 %v4258
        %v4612 = vpop.f32.mrb[0].mxu0
        %v4613 = vadd.f32 0.0, %v4612
        %v4614 = vpop.f32.mrb[0].mxu0
        %v4615 = vpop.f32.mrb[0].mxu0
        %v4616 = vadd.f32 0.0, %v4615
        %v4617 = vpop.f32.mrb[0].mxu0
        %4618 = vmatprep.mubr.bf16.mxu0 0
        %4619 = vmatmul.mubr.bf16.gmra.mrb[0].mxu0 %v4266
        %v4620 = vpop.f32.mrb[0].mxu0
        %v4621 = vadd.f32 0.0, %v4620
        %v4622 = vpop.f32.mrb[0].mxu0
        %v4623 = vpop.f32.mrb[0].mxu0
        %v4624 = vadd.f32 0.0, %v4623
        %v4625 = vpop.f32.mrb[0].mxu0
        %4626 = vmatprep.mubr.bf16.mxu0 0
        %4627 = vmatmul.mubr.bf16.gmra.mrb[0].mxu0 %v4274
        %v4628 = vpop.f32.mrb[0].mxu0
        %v4629 = vadd.f32 0.0, %v4628
        %v4630 = vpop.f32.mrb[0].mxu0
        %v4631 = vpop.f32.mrb[0].mxu0
        %v4632 = vadd.f32 0.0, %v4631
        %v4633 = vpop.f32.mrb[0].mxu0
        %4634 = vmatprep.mubr.bf16.mxu0 0
        %4635 = vmatmul.mubr.bf16.gmra.mrb[0].mxu0 %v4282
        %v4636 = vpop.f32.mrb[0].mxu0
        %v4637 = vadd.f32 0.0, %v4636
        %v4638 = vpop.f32.mrb[0].mxu0
        %v4639 = vpop.f32.mrb[0].mxu0
        %v4640 = vadd.f32 0.0, %v4639
        %v4641 = vpop.f32.mrb[0].mxu0
        %4642 = vmatprep.mubr.bf16.mxu0 0
        %4643 = vmatmul.mubr.bf16.gmra.mrb[0].mxu0 %v4290
        %v4644 = vpop.f32.mrb[0].mxu0
        %v4645 = vadd.f32 0.0, %v4644
        %v4646 = vpop.f32.mrb[0].mxu0
        %v4647 = vpop.f32.mrb[0].mxu0
        %v4648 = vadd.f32 0.0, %v4647
        %v4649 = vpop.f32.mrb[0].mxu0
        %4650 = vmatprep.mubr.bf16.mxu0 0
        %4651 = vmatmul.mubr.bf16.gmra.mrb[0].mxu0 %v4298
        %v4652 = vpop.f32.mrb[0].mxu0
        %v4653 = vadd.f32 0.0, %v4652
        %v4654 = vpop.f32.mrb[0].mxu0
        %v4655 = vpop.f32.mrb[0].mxu0
        %v4656 = vadd.f32 0.0, %v4655
        %v4657 = vpop.f32.mrb[0].mxu0
        %4658 = vmatprep.mubr.bf16.mxu0 0
        %4659 = vmatmul.mubr.bf16.gmra.mrb[0].mxu0 %v4306
        %v4660 = vpop.f32.mrb[0].mxu0
        %v4661 = vadd.f32 0.0, %v4660
        %v4662 = vpop.f32.mrb[0].mxu0
        %v4663 = vpop.f32.mrb[0].mxu0
        %v4664 = vadd.f32 0.0, %v4663
        %v4665 = vpop.f32.mrb[0].mxu0
        %4666 = vmatprep.mubr.bf16.mxu0 0
        %4667 = vmatmul.mubr.bf16.gmra.mrb[0].mxu0 %v4314
        %v4668 = vpop.f32.mrb[0].mxu0
        %v4669 = vadd.f32 0.0, %v4668
        %v4670 = vpop.f32.mrb[0].mxu0
        %v4671 = vpop.f32.mrb[0].mxu0
        %v4672 = vadd.f32 0.0, %v4671
        %v4673 = vpop.f32.mrb[0].mxu0
        %4674 = vmatprep.mubr.bf16.mxu0 0
        %4675 = vmatmul.mubr.bf16.gmra.mrb[0].mxu0 %v4322
        %v4676 = vpop.f32.mrb[0].mxu0
        %v4677 = vadd.f32 0.0, %v4676
        %v4678 = vpop.f32.mrb[0].mxu0
        %v4679 = vpop.f32.mrb[0].mxu0
        %v4680 = vadd.f32 0.0, %v4679
        %v4681 = vpop.f32.mrb[0].mxu0
        %4682 = vmatprep.mubr.bf16.mxu0 0
        %4683 = vmatmul.mubr.bf16.gmra.mrb[0].mxu0 %v4330
        %v4684 = vpop.f32.mrb[0].mxu0
        %v4685 = vadd.f32 0.0, %v4684
        %v4686 = vpop.f32.mrb[0].mxu0
        %v4687 = vpop.f32.mrb[0].mxu0
        %v4688 = vadd.f32 0.0, %v4687
        %v4689 = vpop.f32.mrb[0].mxu0
        %4690 = vmatprep.mubr.bf16.mxu0 0
        %4691 = vmatmul.mubr.bf16.gmra.mrb[0].mxu0 %v4338
        %v4692 = vpop.f32.mrb[0].mxu0
        %v4693 = vadd.f32 0.0, %v4692
        %v4694 = vpop.f32.mrb[0].mxu0
        %v4695 = vpop.f32.mrb[0].mxu0
        %v4696 = vadd.f32 0.0, %v4695
        %v4697 = vpop.f32.mrb[0].mxu0
        %4698 = vmatprep.mubr.bf16.mxu0 0
        %4699 = vmatmul.mubr.bf16.gmra.mrb[0].mxu0 %v4346
        %v4700 = vpop.f32.mrb[0].mxu0
        %v4701 = vadd.f32 0.0, %v4700
        %v4702 = vpop.f32.mrb[0].mxu0
        %v4703 = vpop.f32.mrb[0].mxu0
        %v4704 = vadd.f32 0.0, %v4703
        %v4705 = vpop.f32.mrb[0].mxu0
        %4706 = vmatprep.mubr.bf16.mxu0 0
        %4707 = vmatmul.mubr.bf16.gmra.mrb[0].mxu0 %v4354
        %v4708 = vpop.f32.mrb[0].mxu0
        %v4709 = vadd.f32 0.0, %v4708
        %v4710 = vpop.f32.mrb[0].mxu0
        %v4711 = vpop.f32.mrb[0].mxu0
        %v4712 = vadd.f32 0.0, %v4711
        %v4713 = vpop.f32.mrb[0].mxu0
        %4714 = vmatprep.mubr.bf16.mxu0 0
        %4715 = vmatmul.mubr.bf16.gmra.mrb[0].mxu0 %v4362
        %v4716 = vpop.f32.mrb[0].mxu0
        %v4717 = vadd.f32 0.0, %v4716
        %v4718 = vpop.f32.mrb[0].mxu0
        %v4719 = vpop.f32.mrb[0].mxu0
        %v4720 = vadd.f32 0.0, %v4719
        %v4721 = vpop.f32.mrb[0].mxu0
        %4722 = vmatprep.mubr.bf16.mxu0 0
        %4723 = vmatmul.mubr.bf16.gmra.mrb[0].mxu0 %v4370
        %v4724 = vpop.f32.mrb[0].mxu0
        %v4725 = vadd.f32 0.0, %v4724
        %v4726 = vpop.f32.mrb[0].mxu0
        %v4727 = vpop.f32.mrb[0].mxu0
        %v4728 = vadd.f32 0.0, %v4727
        %v4729 = vpop.f32.mrb[0].mxu0
        %4730 = vmatprep.mubr.bf16.mxu0 0
        %4731 = vmatmul.mubr.bf16.gmra.mrb[0].mxu0 %v4378
        %v4732 = vpop.f32.mrb[0].mxu0
        %v4733 = vadd.f32 0.0, %v4732
        %v4734 = vpop.f32.mrb[0].mxu0
        %v4735 = vpop.f32.mrb[0].mxu0
        %v4736 = vadd.f32 0.0, %v4735
        %v4737 = vpop.f32.mrb[0].mxu0
        %4738 = vmatprep.mubr.bf16.mxu0 0
        %4739 = vmatmul.mubr.bf16.gmra.mrb[0].mxu0 %v4386
        %v4740 = vpop.f32.mrb[0].mxu0
        %v4741 = vadd.f32 0.0, %v4740
        %v4742 = vpop.f32.mrb[0].mxu0
        %v4743 = vpop.f32.mrb[0].mxu0
        %v4744 = vadd.f32 0.0, %v4743
        %v4745 = vpop.f32.mrb[0].mxu0
        %4746 = vmatprep.mubr.bf16.mxu0 0
        %4747 = vmatmul.mubr.bf16.gmra.mrb[0].mxu0 %v4394
        %v4748 = vpop.f32.mrb[0].mxu0
        %v4749 = vadd.f32 0.0, %v4748
        %v4750 = vpop.f32.mrb[0].mxu0
        %v4751 = vpop.f32.mrb[0].mxu0
        %v4752 = vadd.f32 0.0, %v4751
        %v4753 = vpop.f32.mrb[0].mxu0
        %4754 = vmatprep.mubr.bf16.mxu0 0
        %4755 = vmatmul.mubr.bf16.gmra.mrb[0].mxu0 %v4402
        %v4756 = vpop.f32.mrb[0].mxu0
        %v4757 = vadd.f32 0.0, %v4756
        %v4758 = vpop.f32.mrb[0].mxu0
        %v4759 = vpop.f32.mrb[0].mxu0
        %v4760 = vadd.f32 0.0, %v4759
        %v4761 = vpop.f32.mrb[0].mxu0
        %4762 = vmatprep.mubr.bf16.mxu0 0
        %4763 = vmatmul.mubr.bf16.gmra.mrb[0].mxu0 %v4410
        %v4764 = vpop.f32.mrb[0].mxu0
        %v4765 = vadd.f32 0.0, %v4764
        %v4766 = vpop.f32.mrb[0].mxu0
        %v4767 = vpop.f32.mrb[0].mxu0
        %v4768 = vadd.f32 0.0, %v4767
        %v4769 = vpop.f32.mrb[0].mxu0
        %4770 = vmatprep.mubr.bf16.mxu0 0
        %4771 = vmatmul.mubr.bf16.gmra.mrb[0].mxu0 %v4418
        %v4772 = vpop.f32.mrb[0].mxu0
        %v4773 = vadd.f32 0.0, %v4772
        %v4774 = vpop.f32.mrb[0].mxu0
        %v4775 = vpop.f32.mrb[0].mxu0
        %v4776 = vadd.f32 0.0, %v4775
        %v4777 = vpop.f32.mrb[0].mxu0
        %4778 = vmatprep.mubr.bf16.mxu0 0
        %4779 = vmatmul.mubr.bf16.gmra.mrb[0].mxu0 %v4426
        %v4780 = vpop.f32.mrb[0].mxu0
        %v4781 = vadd.f32 0.0, %v4780
        %v4782 = vpop.f32.mrb[0].mxu0
        %v4783 = vpop.f32.mrb[0].mxu0
        %v4784 = vadd.f32 0.0, %v4783
        %v4785 = vpop.f32.mrb[0].mxu0
        %4786 = vmatprep.mubr.bf16.mxu0 0
        %4787 = vmatmul.mubr.bf16.gmra.mrb[0].mxu0 %v4434
        %v4788 = vpop.f32.mrb[0].mxu0
        %v4789 = vadd.f32 0.0, %v4788
        %v4790 = vpop.f32.mrb[0].mxu0
        %v4791 = vpop.f32.mrb[0].mxu0
        %v4792 = vadd.f32 0.0, %v4791
        %v4793 = vpop.f32.mrb[0].mxu0
        %4794 = vmatprep.mubr.bf16.mxu0 0
        %4795 = vmatmul.mubr.bf16.gmra.mrb[0].mxu0 %v4442
        %v4796 = vpop.f32.mrb[0].mxu0
        %v4797 = vadd.f32 0.0, %v4796
        %v4798 = vpop.f32.mrb[0].mxu0
        %v4799 = vpop.f32.mrb[0].mxu0
        %v4800 = vadd.f32 0.0, %v4799
        %v4801 = vpop.f32.mrb[0].mxu0
        %4802 = vdwg.mxu0
        %v4819 = vunpack.c.l.b16 %v4126
        %v4820 = vunpack.c.l.b16 %v4127
        %v4821 = vunpack.c.l.b16 %v4128
        %v4822 = vunpack.c.l.b16 %v4129
        %v4823 = vunpack.c.l.b16 %v4130
        %v4824 = vunpack.c.l.b16 %v4131
        %v4825 = vunpack.c.l.b16 %v4132
        %v4826 = vunpack.c.l.b16 %v4133
        %v4827 = vunpack.c.l.b16 %v4134
        %v4828 = vunpack.c.l.b16 %v4135
        %v4829 = vunpack.c.l.b16 %v4136
        %v4830 = vunpack.c.l.b16 %v4137
        %v4831 = vunpack.c.l.b16 %v4138
        %v4832 = vunpack.c.l.b16 %v4139
        %v4833 = vunpack.c.l.b16 %v4140
        %v4834 = vunpack.c.l.b16 %v4141
        %v4835 = vpack.c.b16 %v4820, %v4819
        %v4836 = vpack.c.b16 %v4822, %v4821
        %v4837 = vpack.c.b16 %v4824, %v4823
        %v4838 = vpack.c.b16 %v4826, %v4825
        %v4839 = vpack.c.b16 %v4828, %v4827
        %v4840 = vpack.c.b16 %v4830, %v4829
        %v4841 = vpack.c.b16 %v4832, %v4831
        %v4842 = vpack.c.b16 %v4834, %v4833
        %4851 = vmatprep.subr.bf16.mxu0 0
        %4852 = vmatpush1.bf16.msra.mxu0 %v4835
        %4853 = vmatprep.subr.bf16.mxu0 0
        %4854 = vmatpush1.bf16.msra.mxu0 %v4836
        %4855 = vmatprep.subr.bf16.mxu0 0
        %4856 = vmatpush1.bf16.msra.mxu0 %v4837
        %4857 = vmatprep.subr.bf16.mxu0 0
        %4858 = vmatpush1.bf16.msra.mxu0 %v4838
        %4859 = vmatprep.subr.bf16.mxu0 0
        %4860 = vmatpush1.bf16.msra.mxu0 %v4839
        %4861 = vmatprep.subr.bf16.mxu0 0
        %4862 = vmatpush1.bf16.msra.mxu0 %v4840
        %4863 = vmatprep.subr.bf16.mxu0 0
        %4864 = vmatpush1.bf16.msra.mxu0 %v4841
        %4865 = vmatprep.subr.bf16.mxu0 0
        %4866 = vmatpush1.bf16.msra.mxu0 %v4842
        %4867 = vmatprep.subr.bf16.mxu0 0
        %4868 = vmatpush1.bf16.msra.mxu0 0
        %4869 = vmatprep.subr.bf16.mxu0 0
        %4870 = vmatpush1.bf16.msra.mxu0 0
        %4871 = vmatprep.subr.bf16.mxu0 0
        %4872 = vmatpush1.bf16.msra.mxu0 0
        %4873 = vmatprep.subr.bf16.mxu0 0
        %4874 = vmatpush1.bf16.msra.mxu0 0
        %4875 = vmatprep.subr.bf16.mxu0 0
        %4876 = vmatpush1.bf16.msra.mxu0 0
        %4877 = vmatprep.subr.bf16.mxu0 0
        %4878 = vmatpush1.bf16.msra.mxu0 0
        %4879 = vmatprep.subr.bf16.mxu0 0
        %4880 = vmatpush1.bf16.msra.mxu0 0
        %4881 = vmatprep.subr.bf16.mxu0 0
        %4882 = vmatpush1.bf16.msra.mxu0 0
        %4883 = vmatprep.mubr.bf16.mxu0 0
        %4884 = vmatmul.mubr.bf16.gmra.mrb[0].mxu0 %v4094
        %v4885 = vpop.f32.mrb[0].mxu0
        %v4886 = vadd.f32 %v4557, %v4885
        %v4887 = vpop.f32.mrb[0].mxu0
        %v4888 = vpop.f32.mrb[0].mxu0
        %v4889 = vadd.f32 %v4560, %v4888
        %v4890 = vpop.f32.mrb[0].mxu0
        %4891 = vmatprep.mubr.bf16.mxu0 0
        %4892 = vmatmul.mubr.bf16.gmra.mrb[0].mxu0 %v4095
        %v4893 = vpop.f32.mrb[0].mxu0
        %v4894 = vadd.f32 %v4565, %v4893
        %v4895 = vpop.f32.mrb[0].mxu0
        %v4896 = vpop.f32.mrb[0].mxu0
        %v4897 = vadd.f32 %v4568, %v4896
        %v4898 = vpop.f32.mrb[0].mxu0
        %4899 = vmatprep.mubr.bf16.mxu0 0
        %4900 = vmatmul.mubr.bf16.gmra.mrb[0].mxu0 %v4096
        %v4901 = vpop.f32.mrb[0].mxu0
        %v4902 = vadd.f32 %v4573, %v4901
        %v4903 = vpop.f32.mrb[0].mxu0
        %v4904 = vpop.f32.mrb[0].mxu0
        %v4905 = vadd.f32 %v4576, %v4904
        %v4906 = vpop.f32.mrb[0].mxu0
        %4907 = vmatprep.mubr.bf16.mxu0 0
        %4908 = vmatmul.mubr.bf16.gmra.mrb[0].mxu0 %v4097
        %v4909 = vpop.f32.mrb[0].mxu0
        %v4910 = vadd.f32 %v4581, %v4909
        %v4911 = vpop.f32.mrb[0].mxu0
        %v4912 = vpop.f32.mrb[0].mxu0
        %v4913 = vadd.f32 %v4584, %v4912
        %v4914 = vpop.f32.mrb[0].mxu0
        %4915 = vmatprep.mubr.bf16.mxu0 0
        %4916 = vmatmul.mubr.bf16.gmra.mrb[0].mxu0 %v4098
        %v4917 = vpop.f32.mrb[0].mxu0
        %v4918 = vadd.f32 %v4589, %v4917
        %v4919 = vpop.f32.mrb[0].mxu0
        %v4920 = vpop.f32.mrb[0].mxu0
        %v4921 = vadd.f32 %v4592, %v4920
        %v4922 = vpop.f32.mrb[0].mxu0
        %4923 = vmatprep.mubr.bf16.mxu0 0
        %4924 = vmatmul.mubr.bf16.gmra.mrb[0].mxu0 %v4099
        %v4925 = vpop.f32.mrb[0].mxu0
        %v4926 = vadd.f32 %v4597, %v4925
        %v4927 = vpop.f32.mrb[0].mxu0
        %v4928 = vpop.f32.mrb[0].mxu0
        %v4929 = vadd.f32 %v4600, %v4928
        %v4930 = vpop.f32.mrb[0].mxu0
        %4931 = vmatprep.mubr.bf16.mxu0 0
        %4932 = vmatmul.mubr.bf16.gmra.mrb[0].mxu0 %v4100
        %v4933 = vpop.f32.mrb[0].mxu0
        %v4934 = vadd.f32 %v4605, %v4933
        %v4935 = vpop.f32.mrb[0].mxu0
        %v4936 = vpop.f32.mrb[0].mxu0
        %v4937 = vadd.f32 %v4608, %v4936
        %v4938 = vpop.f32.mrb[0].mxu0
        %4939 = vmatprep.mubr.bf16.mxu0 0
        %4940 = vmatmul.mubr.bf16.gmra.mrb[0].mxu0 %v4101
        %v4941 = vpop.f32.mrb[0].mxu0
        %v4942 = vadd.f32 %v4613, %v4941
        %v4943 = vpop.f32.mrb[0].mxu0
        %v4944 = vpop.f32.mrb[0].mxu0
        %v4945 = vadd.f32 %v4616, %v4944
        %v4946 = vpop.f32.mrb[0].mxu0
        %4947 = vmatprep.mubr.bf16.mxu0 0
        %4948 = vmatmul.mubr.bf16.gmra.mrb[0].mxu0 %v4102
        %v4949 = vpop.f32.mrb[0].mxu0
        %v4950 = vadd.f32 %v4621, %v4949
        %v4951 = vpop.f32.mrb[0].mxu0
        %v4952 = vpop.f32.mrb[0].mxu0
        %v4953 = vadd.f32 %v4624, %v4952
        %v4954 = vpop.f32.mrb[0].mxu0
        %4955 = vmatprep.mubr.bf16.mxu0 0
        %4956 = vmatmul.mubr.bf16.gmra.mrb[0].mxu0 %v4103
        %v4957 = vpop.f32.mrb[0].mxu0
        %v4958 = vadd.f32 %v4629, %v4957
        %v4959 = vpop.f32.mrb[0].mxu0
        %v4960 = vpop.f32.mrb[0].mxu0
        %v4961 = vadd.f32 %v4632, %v4960
        %v4962 = vpop.f32.mrb[0].mxu0
        %4963 = vmatprep.mubr.bf16.mxu0 0
        %4964 = vmatmul.mubr.bf16.gmra.mrb[0].mxu0 %v4104
        %v4965 = vpop.f32.mrb[0].mxu0
        %v4966 = vadd.f32 %v4637, %v4965
        %v4967 = vpop.f32.mrb[0].mxu0
        %v4968 = vpop.f32.mrb[0].mxu0
        %v4969 = vadd.f32 %v4640, %v4968
        %v4970 = vpop.f32.mrb[0].mxu0
        %4971 = vmatprep.mubr.bf16.mxu0 0
        %4972 = vmatmul.mubr.bf16.gmra.mrb[0].mxu0 %v4105
        %v4973 = vpop.f32.mrb[0].mxu0
        %v4974 = vadd.f32 %v4645, %v4973
        %v4975 = vpop.f32.mrb[0].mxu0
        %v4976 = vpop.f32.mrb[0].mxu0
        %v4977 = vadd.f32 %v4648, %v4976
        %v4978 = vpop.f32.mrb[0].mxu0
        %4979 = vmatprep.mubr.bf16.mxu0 0
        %4980 = vmatmul.mubr.bf16.gmra.mrb[0].mxu0 %v4106
        %v4981 = vpop.f32.mrb[0].mxu0
        %v4982 = vadd.f32 %v4653, %v4981
        %v4983 = vpop.f32.mrb[0].mxu0
        %v4984 = vpop.f32.mrb[0].mxu0
        %v4985 = vadd.f32 %v4656, %v4984
        %v4986 = vpop.f32.mrb[0].mxu0
        %4987 = vmatprep.mubr.bf16.mxu0 0
        %4988 = vmatmul.mubr.bf16.gmra.mrb[0].mxu0 %v4107
        %v4989 = vpop.f32.mrb[0].mxu0
        %v4990 = vadd.f32 %v4661, %v4989
        %v4991 = vpop.f32.mrb[0].mxu0
        %v4992 = vpop.f32.mrb[0].mxu0
        %v4993 = vadd.f32 %v4664, %v4992
        %v4994 = vpop.f32.mrb[0].mxu0
        %4995 = vmatprep.mubr.bf16.mxu0 0
        %4996 = vmatmul.mubr.bf16.gmra.mrb[0].mxu0 %v4108
        %v4997 = vpop.f32.mrb[0].mxu0
        %v4998 = vadd.f32 %v4669, %v4997
        %v4999 = vpop.f32.mrb[0].mxu0
        %v5000 = vpop.f32.mrb[0].mxu0
        %v5001 = vadd.f32 %v4672, %v5000
        %v5002 = vpop.f32.mrb[0].mxu0
        %5003 = vmatprep.mubr.bf16.mxu0 0
        %5004 = vmatmul.mubr.bf16.gmra.mrb[0].mxu0 %v4109
        %v5005 = vpop.f32.mrb[0].mxu0
        %v5006 = vadd.f32 %v4677, %v5005
        %v5007 = vpop.f32.mrb[0].mxu0
        %v5008 = vpop.f32.mrb[0].mxu0
        %v5009 = vadd.f32 %v4680, %v5008
        %v5010 = vpop.f32.mrb[0].mxu0
        %5011 = vmatprep.mubr.bf16.mxu0 0
        %5012 = vmatmul.mubr.bf16.gmra.mrb[0].mxu0 %v4110
        %v5013 = vpop.f32.mrb[0].mxu0
        %v5014 = vadd.f32 %v4685, %v5013
        %v5015 = vpop.f32.mrb[0].mxu0
        %v5016 = vpop.f32.mrb[0].mxu0
        %v5017 = vadd.f32 %v4688, %v5016
        %v5018 = vpop.f32.mrb[0].mxu0
        %5019 = vmatprep.mubr.bf16.mxu0 0
        %5020 = vmatmul.mubr.bf16.gmra.mrb[0].mxu0 %v4111
        %v5021 = vpop.f32.mrb[0].mxu0
        %v5022 = vadd.f32 %v4693, %v5021
        %v5023 = vpop.f32.mrb[0].mxu0
        %v5024 = vpop.f32.mrb[0].mxu0
        %v5025 = vadd.f32 %v4696, %v5024
        %v5026 = vpop.f32.mrb[0].mxu0
        %5027 = vmatprep.mubr.bf16.mxu0 0
        %5028 = vmatmul.mubr.bf16.gmra.mrb[0].mxu0 %v4112
        %v5029 = vpop.f32.mrb[0].mxu0
        %v5030 = vadd.f32 %v4701, %v5029
        %v5031 = vpop.f32.mrb[0].mxu0
        %v5032 = vpop.f32.mrb[0].mxu0
        %v5033 = vadd.f32 %v4704, %v5032
        %v5034 = vpop.f32.mrb[0].mxu0
        %5035 = vmatprep.mubr.bf16.mxu0 0
        %5036 = vmatmul.mubr.bf16.gmra.mrb[0].mxu0 %v4113
        %v5037 = vpop.f32.mrb[0].mxu0
        %v5038 = vadd.f32 %v4709, %v5037
        %v5039 = vpop.f32.mrb[0].mxu0
        %v5040 = vpop.f32.mrb[0].mxu0
        %v5041 = vadd.f32 %v4712, %v5040
        %v5042 = vpop.f32.mrb[0].mxu0
        %5043 = vmatprep.mubr.bf16.mxu0 0
        %5044 = vmatmul.mubr.bf16.gmra.mrb[0].mxu0 %v4114
        %v5045 = vpop.f32.mrb[0].mxu0
        %v5046 = vadd.f32 %v4717, %v5045
        %v5047 = vpop.f32.mrb[0].mxu0
        %v5048 = vpop.f32.mrb[0].mxu0
        %v5049 = vadd.f32 %v4720, %v5048
        %v5050 = vpop.f32.mrb[0].mxu0
        %5051 = vmatprep.mubr.bf16.mxu0 0
        %5052 = vmatmul.mubr.bf16.gmra.mrb[0].mxu0 %v4115
        %v5053 = vpop.f32.mrb[0].mxu0
        %v5054 = vadd.f32 %v4725, %v5053
        %v5055 = vpop.f32.mrb[0].mxu0
        %v5056 = vpop.f32.mrb[0].mxu0
        %v5057 = vadd.f32 %v4728, %v5056
        %v5058 = vpop.f32.mrb[0].mxu0
        %5059 = vmatprep.mubr.bf16.mxu0 0
        %5060 = vmatmul.mubr.bf16.gmra.mrb[0].mxu0 %v4116
        %v5061 = vpop.f32.mrb[0].mxu0
        %v5062 = vadd.f32 %v4733, %v5061
        %v5063 = vpop.f32.mrb[0].mxu0
        %v5064 = vpop.f32.mrb[0].mxu0
        %v5065 = vadd.f32 %v4736, %v5064
        %v5066 = vpop.f32.mrb[0].mxu0
        %5067 = vmatprep.mubr.bf16.mxu0 0
        %5068 = vmatmul.mubr.bf16.gmra.mrb[0].mxu0 %v4117
        %v5069 = vpop.f32.mrb[0].mxu0
        %v5070 = vadd.f32 %v4741, %v5069
        %v5071 = vpop.f32.mrb[0].mxu0
        %v5072 = vpop.f32.mrb[0].mxu0
        %v5073 = vadd.f32 %v4744, %v5072
        %v5074 = vpop.f32.mrb[0].mxu0
        %5075 = vmatprep.mubr.bf16.mxu0 0
        %5076 = vmatmul.mubr.bf16.gmra.mrb[0].mxu0 %v4118
        %v5077 = vpop.f32.mrb[0].mxu0
        %v5078 = vadd.f32 %v4749, %v5077
        %v5079 = vpop.f32.mrb[0].mxu0
        %v5080 = vpop.f32.mrb[0].mxu0
        %v5081 = vadd.f32 %v4752, %v5080
        %v5082 = vpop.f32.mrb[0].mxu0
        %5083 = vmatprep.mubr.bf16.mxu0 0
        %5084 = vmatmul.mubr.bf16.gmra.mrb[0].mxu0 %v4119
        %v5085 = vpop.f32.mrb[0].mxu0
        %v5086 = vadd.f32 %v4757, %v5085
        %v5087 = vpop.f32.mrb[0].mxu0
        %v5088 = vpop.f32.mrb[0].mxu0
        %v5089 = vadd.f32 %v4760, %v5088
        %v5090 = vpop.f32.mrb[0].mxu0
        %5091 = vmatprep.mubr.bf16.mxu0 0
        %5092 = vmatmul.mubr.bf16.gmra.mrb[0].mxu0 %v4120
        %v5093 = vpop.f32.mrb[0].mxu0
        %v5094 = vadd.f32 %v4765, %v5093
        %v5095 = vpop.f32.mrb[0].mxu0
        %v5096 = vpop.f32.mrb[0].mxu0
        %v5097 = vadd.f32 %v4768, %v5096
        %v5098 = vpop.f32.mrb[0].mxu0
        %5099 = vmatprep.mubr.bf16.mxu0 0
        %5100 = vmatmul.mubr.bf16.gmra.mrb[0].mxu0 %v4121
        %v5101 = vpop.f32.mrb[0].mxu0
        %v5102 = vadd.f32 %v4773, %v5101
        %v5103 = vpop.f32.mrb[0].mxu0
        %v5104 = vpop.f32.mrb[0].mxu0
        %v5105 = vadd.f32 %v4776, %v5104
        %v5106 = vpop.f32.mrb[0].mxu0
        %5107 = vmatprep.mubr.bf16.mxu0 0
        %5108 = vmatmul.mubr.bf16.gmra.mrb[0].mxu0 %v4122
        %v5109 = vpop.f32.mrb[0].mxu0
        %v5110 = vadd.f32 %v4781, %v5109
        %v5111 = vpop.f32.mrb[0].mxu0
        %v5112 = vpop.f32.mrb[0].mxu0
        %v5113 = vadd.f32 %v4784, %v5112
        %v5114 = vpop.f32.mrb[0].mxu0
        %5115 = vmatprep.mubr.bf16.mxu0 0
        %5116 = vmatmul.mubr.bf16.gmra.mrb[0].mxu0 %v4123
        %v5117 = vpop.f32.mrb[0].mxu0
        %v5118 = vadd.f32 %v4789, %v5117
        %v5119 = vpop.f32.mrb[0].mxu0
        %v5120 = vpop.f32.mrb[0].mxu0
        %v5121 = vadd.f32 %v4792, %v5120
        %v5122 = vpop.f32.mrb[0].mxu0
        %5123 = vmatprep.mubr.bf16.mxu0 0
        %5124 = vmatmul.mubr.bf16.gmra.mrb[0].mxu0 %v4124
        %v5125 = vpop.f32.mrb[0].mxu0
        %v5126 = vadd.f32 %v4797, %v5125
        %v5127 = vpop.f32.mrb[0].mxu0
        %v5128 = vpop.f32.mrb[0].mxu0
        %v5129 = vadd.f32 %v4800, %v5128
        %v5130 = vpop.f32.mrb[0].mxu0
        %5131 = vdwg.mxu0
        %v5132 = vld [vmem:[#allocation2 + $0x20] sm:$0xfe]
        %s5133 = scalar_lea.vmem [#allocation7], 512
        %v5134 = vld [vmem:[%s5133] sm:$0xf]
        %v5135 = vld [vmem:[%s5133 + $0x4] sm:$0xf]
        %v5136 = vld [vmem:[%s5133 + $0x8] sm:$0xf]
        %v5137 = vld [vmem:[%s5133 + $0xc] sm:$0xf]
        %v5138 = vld [vmem:[%s5133 + $0x10] sm:$0xf]
        %v5139 = vld [vmem:[%s5133 + $0x14] sm:$0xf]
        %v5140 = vld [vmem:[%s5133 + $0x18] sm:$0xf]
        %v5141 = vld [vmem:[%s5133 + $0x1c] sm:$0xf]
        %v5142 = vld [vmem:[%s5133 + $0x20] sm:$0xf]
        %v5143 = vld [vmem:[%s5133 + $0x24] sm:$0xf]
        %v5144 = vld [vmem:[%s5133 + $0x28] sm:$0xf]
        %v5145 = vld [vmem:[%s5133 + $0x2c] sm:$0xf]
        %v5146 = vld [vmem:[%s5133 + $0x30] sm:$0xf]
        %v5147 = vld [vmem:[%s5133 + $0x34] sm:$0xf]
        %v5148 = vld [vmem:[%s5133 + $0x38] sm:$0xf]
        %v5149 = vld [vmem:[%s5133 + $0x3c] sm:$0xf]
        %v5182 = vrot.slane %v5132, 1
        %v5183 = vrot.slane %v4143, 1
        %v5184 = vsel %vm1818, %v5182, %v5183
        %v5185 = vrot.slane %v4144, 1
        %v5186 = vsel %vm1818, %v5183, %v5185
        %v5187 = vrot.slane %v4145, 1
        %v5188 = vsel %vm1818, %v5185, %v5187
        %v5189 = vrot.slane %v4146, 1
        %v5190 = vsel %vm1818, %v5187, %v5189
        %v5191 = vrot.slane %v4147, 1
        %v5192 = vsel %vm1818, %v5189, %v5191
        %v5193 = vrot.slane %v4148, 1
        %v5194 = vsel %vm1818, %v5191, %v5193
        %v5195 = vrot.slane %v4149, 1
        %v5196 = vsel %vm1818, %v5193, %v5195
        %v5197 = vrot.slane %v4150, 1
        %v5198 = vsel %vm1818, %v5195, %v5197
        %v5199 = vrot.slane %v4151, 1
        %v5200 = vsel %vm1818, %v5197, %v5199
        %v5201 = vrot.slane %v4152, 1
        %v5202 = vsel %vm1818, %v5199, %v5201
        %v5203 = vrot.slane %v4153, 1
        %v5204 = vsel %vm1818, %v5201, %v5203
        %v5205 = vrot.slane %v4154, 1
        %v5206 = vsel %vm1818, %v5203, %v5205
        %v5207 = vrot.slane %v4155, 1
        %v5208 = vsel %vm1818, %v5205, %v5207
        %v5209 = vrot.slane %v4156, 1
        %v5210 = vsel %vm1818, %v5207, %v5209
        %v5211 = vrot.slane %v4157, 1
        %v5212 = vsel %vm1818, %v5209, %v5211
        %v5213 = vrot.slane %v4158, 1
        %v5214 = vsel %vm1818, %v5211, %v5213
        %v5215 = vrot.slane %v4159, 1
        %v5216 = vsel %vm1818, %v5213, %v5215
        %v5217 = vrot.slane %v4160, 1
        %v5218 = vsel %vm1818, %v5215, %v5217
        %v5219 = vrot.slane %v4161, 1
        %v5220 = vsel %vm1818, %v5217, %v5219
        %v5221 = vrot.slane %v4162, 1
        %v5222 = vsel %vm1818, %v5219, %v5221
        %v5223 = vrot.slane %v4163, 1
        %v5224 = vsel %vm1818, %v5221, %v5223
        %v5225 = vrot.slane %v4164, 1
        %v5226 = vsel %vm1818, %v5223, %v5225
        %v5227 = vrot.slane %v4165, 1
        %v5228 = vsel %vm1818, %v5225, %v5227
        %v5229 = vrot.slane %v4166, 1
        %v5230 = vsel %vm1818, %v5227, %v5229
        %v5231 = vrot.slane %v4167, 1
        %v5232 = vsel %vm1818, %v5229, %v5231
        %v5233 = vrot.slane %v4168, 1
        %v5234 = vsel %vm1818, %v5231, %v5233
        %v5235 = vrot.slane %v4169, 1
        %v5236 = vsel %vm1818, %v5233, %v5235
        %v5237 = vrot.slane %v4170, 1
        %v5238 = vsel %vm1818, %v5235, %v5237
        %v5239 = vrot.slane %v4171, 1
        %v5240 = vsel %vm1818, %v5237, %v5239
        %v5241 = vrot.slane %v4172, 1
        %v5242 = vsel %vm1818, %v5239, %v5241
        %v5243 = vrot.slane %v4173, 1
        %v5244 = vsel %vm1818, %v5241, %v5243
        %v5292 = vunpack.c.l.b16 %v5134
        %v5293 = vunpack.c.l.b16 %v5135
        %v5294 = vunpack.c.l.b16 %v5136
        %v5295 = vunpack.c.l.b16 %v5137
        %v5296 = vunpack.c.l.b16 %v5138
        %v5297 = vunpack.c.l.b16 %v5139
        %v5298 = vunpack.c.l.b16 %v5140
        %v5299 = vunpack.c.l.b16 %v5141
        %v5300 = vunpack.c.l.b16 %v5142
        %v5301 = vunpack.c.l.b16 %v5143
        %v5302 = vunpack.c.l.b16 %v5144
        %v5303 = vunpack.c.l.b16 %v5145
        %v5304 = vunpack.c.l.b16 %v5146
        %v5305 = vunpack.c.l.b16 %v5147
        %v5306 = vunpack.c.l.b16 %v5148
        %v5307 = vunpack.c.l.b16 %v5149
        %v5308 = vpack.c.b16 %v5293, %v5292
        %v5309 = vpack.c.b16 %v5295, %v5294
        %v5310 = vpack.c.b16 %v5297, %v5296
        %v5311 = vpack.c.b16 %v5299, %v5298
        %v5312 = vpack.c.b16 %v5301, %v5300
        %v5313 = vpack.c.b16 %v5303, %v5302
        %v5314 = vpack.c.b16 %v5305, %v5304
        %v5315 = vpack.c.b16 %v5307, %v5306
        %5324 = vmatprep.subr.bf16.mxu0 0
        %5325 = vmatpush1.bf16.msra.mxu0 %v5308
        %5326 = vmatprep.subr.bf16.mxu0 0
        %5327 = vmatpush1.bf16.msra.mxu0 %v5309
        %5328 = vmatprep.subr.bf16.mxu0 0
        %5329 = vmatpush1.bf16.msra.mxu0 %v5310
        %5330 = vmatprep.subr.bf16.mxu0 0
        %5331 = vmatpush1.bf16.msra.mxu0 %v5311
        %5332 = vmatprep.subr.bf16.mxu0 0
        %5333 = vmatpush1.bf16.msra.mxu0 %v5312
        %5334 = vmatprep.subr.bf16.mxu0 0
        %5335 = vmatpush1.bf16.msra.mxu0 %v5313
        %5336 = vmatprep.subr.bf16.mxu0 0
        %5337 = vmatpush1.bf16.msra.mxu0 %v5314
        %5338 = vmatprep.subr.bf16.mxu0 0
        %5339 = vmatpush1.bf16.msra.mxu0 %v5315
        %5340 = vmatprep.subr.bf16.mxu0 0
        %5341 = vmatpush1.bf16.msra.mxu0 0
        %5342 = vmatprep.subr.bf16.mxu0 0
        %5343 = vmatpush1.bf16.msra.mxu0 0
        %5344 = vmatprep.subr.bf16.mxu0 0
        %5345 = vmatpush1.bf16.msra.mxu0 0
        %5346 = vmatprep.subr.bf16.mxu0 0
        %5347 = vmatpush1.bf16.msra.mxu0 0
        %5348 = vmatprep.subr.bf16.mxu0 0
        %5349 = vmatpush1.bf16.msra.mxu0 0
        %5350 = vmatprep.subr.bf16.mxu0 0
        %5351 = vmatpush1.bf16.msra.mxu0 0
        %5352 = vmatprep.subr.bf16.mxu0 0
        %5353 = vmatpush1.bf16.msra.mxu0 0
        %5354 = vmatprep.subr.bf16.mxu0 0
        %5355 = vmatpush1.bf16.msra.mxu0 0
        %5356 = vmatprep.mubr.bf16.mxu0 0
        %5357 = vmatmul.mubr.bf16.gmra.mrb[0].mxu0 %v5184
        %v5358 = vpop.f32.mrb[0].mxu0
        %v5359 = vadd.f32 0.0, %v5358
        %v5360 = vpop.f32.mrb[0].mxu0
        %v5361 = vpop.f32.mrb[0].mxu0
        %v5362 = vadd.f32 0.0, %v5361
        %v5363 = vpop.f32.mrb[0].mxu0
        %5364 = vmatprep.mubr.bf16.mxu0 0
        %5365 = vmatmul.mubr.bf16.gmra.mrb[0].mxu0 %v5186
        %v5366 = vpop.f32.mrb[0].mxu0
        %v5367 = vadd.f32 0.0, %v5366
        %v5368 = vpop.f32.mrb[0].mxu0
        %v5369 = vpop.f32.mrb[0].mxu0
        %v5370 = vadd.f32 0.0, %v5369
        %v5371 = vpop.f32.mrb[0].mxu0
        %5372 = vmatprep.mubr.bf16.mxu0 0
        %5373 = vmatmul.mubr.bf16.gmra.mrb[0].mxu0 %v5188
        %v5374 = vpop.f32.mrb[0].mxu0
        %v5375 = vadd.f32 0.0, %v5374
        %v5376 = vpop.f32.mrb[0].mxu0
        %v5377 = vpop.f32.mrb[0].mxu0
        %v5378 = vadd.f32 0.0, %v5377
        %v5379 = vpop.f32.mrb[0].mxu0
        %5380 = vmatprep.mubr.bf16.mxu0 0
        %5381 = vmatmul.mubr.bf16.gmra.mrb[0].mxu0 %v5190
        %v5382 = vpop.f32.mrb[0].mxu0
        %v5383 = vadd.f32 0.0, %v5382
        %v5384 = vpop.f32.mrb[0].mxu0
        %v5385 = vpop.f32.mrb[0].mxu0
        %v5386 = vadd.f32 0.0, %v5385
        %v5387 = vpop.f32.mrb[0].mxu0
        %5388 = vmatprep.mubr.bf16.mxu0 0
        %5389 = vmatmul.mubr.bf16.gmra.mrb[0].mxu0 %v5192
        %v5390 = vpop.f32.mrb[0].mxu0
        %v5391 = vadd.f32 0.0, %v5390
        %v5392 = vpop.f32.mrb[0].mxu0
        %v5393 = vpop.f32.mrb[0].mxu0
        %v5394 = vadd.f32 0.0, %v5393
        %v5395 = vpop.f32.mrb[0].mxu0
        %5396 = vmatprep.mubr.bf16.mxu0 0
        %5397 = vmatmul.mubr.bf16.gmra.mrb[0].mxu0 %v5194
        %v5398 = vpop.f32.mrb[0].mxu0
        %v5399 = vadd.f32 0.0, %v5398
        %v5400 = vpop.f32.mrb[0].mxu0
        %v5401 = vpop.f32.mrb[0].mxu0
        %v5402 = vadd.f32 0.0, %v5401
        %v5403 = vpop.f32.mrb[0].mxu0
        %5404 = vmatprep.mubr.bf16.mxu0 0
        %5405 = vmatmul.mubr.bf16.gmra.mrb[0].mxu0 %v5196
        %v5406 = vpop.f32.mrb[0].mxu0
        %v5407 = vadd.f32 0.0, %v5406
        %v5408 = vpop.f32.mrb[0].mxu0
        %v5409 = vpop.f32.mrb[0].mxu0
        %v5410 = vadd.f32 0.0, %v5409
        %v5411 = vpop.f32.mrb[0].mxu0
        %5412 = vmatprep.mubr.bf16.mxu0 0
        %5413 = vmatmul.mubr.bf16.gmra.mrb[0].mxu0 %v5198
        %v5414 = vpop.f32.mrb[0].mxu0
        %v5415 = vadd.f32 0.0, %v5414
        %v5416 = vpop.f32.mrb[0].mxu0
        %v5417 = vpop.f32.mrb[0].mxu0
        %v5418 = vadd.f32 0.0, %v5417
        %v5419 = vpop.f32.mrb[0].mxu0
        %5420 = vmatprep.mubr.bf16.mxu0 0
        %5421 = vmatmul.mubr.bf16.gmra.mrb[0].mxu0 %v5200
        %v5422 = vpop.f32.mrb[0].mxu0
        %v5423 = vadd.f32 0.0, %v5422
        %v5424 = vpop.f32.mrb[0].mxu0
        %v5425 = vpop.f32.mrb[0].mxu0
        %v5426 = vadd.f32 0.0, %v5425
        %v5427 = vpop.f32.mrb[0].mxu0
        %5428 = vmatprep.mubr.bf16.mxu0 0
        %5429 = vmatmul.mubr.bf16.gmra.mrb[0].mxu0 %v5202
        %v5430 = vpop.f32.mrb[0].mxu0
        %v5431 = vadd.f32 0.0, %v5430
        %v5432 = vpop.f32.mrb[0].mxu0
        %v5433 = vpop.f32.mrb[0].mxu0
        %v5434 = vadd.f32 0.0, %v5433
        %v5435 = vpop.f32.mrb[0].mxu0
        %5436 = vmatprep.mubr.bf16.mxu0 0
        %5437 = vmatmul.mubr.bf16.gmra.mrb[0].mxu0 %v5204
        %v5438 = vpop.f32.mrb[0].mxu0
        %v5439 = vadd.f32 0.0, %v5438
        %v5440 = vpop.f32.mrb[0].mxu0
        %v5441 = vpop.f32.mrb[0].mxu0
        %v5442 = vadd.f32 0.0, %v5441
        %v5443 = vpop.f32.mrb[0].mxu0
        %5444 = vmatprep.mubr.bf16.mxu0 0
        %5445 = vmatmul.mubr.bf16.gmra.mrb[0].mxu0 %v5206
        %v5446 = vpop.f32.mrb[0].mxu0
        %v5447 = vadd.f32 0.0, %v5446
        %v5448 = vpop.f32.mrb[0].mxu0
        %v5449 = vpop.f32.mrb[0].mxu0
        %v5450 = vadd.f32 0.0, %v5449
        %v5451 = vpop.f32.mrb[0].mxu0
        %5452 = vmatprep.mubr.bf16.mxu0 0
        %5453 = vmatmul.mubr.bf16.gmra.mrb[0].mxu0 %v5208
        %v5454 = vpop.f32.mrb[0].mxu0
        %v5455 = vadd.f32 0.0, %v5454
        %v5456 = vpop.f32.mrb[0].mxu0
        %v5457 = vpop.f32.mrb[0].mxu0
        %v5458 = vadd.f32 0.0, %v5457
        %v5459 = vpop.f32.mrb[0].mxu0
        %5460 = vmatprep.mubr.bf16.mxu0 0
        %5461 = vmatmul.mubr.bf16.gmra.mrb[0].mxu0 %v5210
        %v5462 = vpop.f32.mrb[0].mxu0
        %v5463 = vadd.f32 0.0, %v5462
        %v5464 = vpop.f32.mrb[0].mxu0
        %v5465 = vpop.f32.mrb[0].mxu0
        %v5466 = vadd.f32 0.0, %v5465
        %v5467 = vpop.f32.mrb[0].mxu0
        %5468 = vmatprep.mubr.bf16.mxu0 0
        %5469 = vmatmul.mubr.bf16.gmra.mrb[0].mxu0 %v5212
        %v5470 = vpop.f32.mrb[0].mxu0
        %v5471 = vadd.f32 0.0, %v5470
        %v5472 = vpop.f32.mrb[0].mxu0
        %v5473 = vpop.f32.mrb[0].mxu0
        %v5474 = vadd.f32 0.0, %v5473
        %v5475 = vpop.f32.mrb[0].mxu0
        %5476 = vmatprep.mubr.bf16.mxu0 0
        %5477 = vmatmul.mubr.bf16.gmra.mrb[0].mxu0 %v5214
        %v5478 = vpop.f32.mrb[0].mxu0
        %v5479 = vadd.f32 0.0, %v5478
        %v5480 = vpop.f32.mrb[0].mxu0
        %v5481 = vpop.f32.mrb[0].mxu0
        %v5482 = vadd.f32 0.0, %v5481
        %v5483 = vpop.f32.mrb[0].mxu0
        %5484 = vmatprep.mubr.bf16.mxu0 0
        %5485 = vmatmul.mubr.bf16.gmra.mrb[0].mxu0 %v5216
        %v5486 = vpop.f32.mrb[0].mxu0
        %v5487 = vadd.f32 0.0, %v5486
        %v5488 = vpop.f32.mrb[0].mxu0
        %v5489 = vpop.f32.mrb[0].mxu0
        %v5490 = vadd.f32 0.0, %v5489
        %v5491 = vpop.f32.mrb[0].mxu0
        %5492 = vmatprep.mubr.bf16.mxu0 0
        %5493 = vmatmul.mubr.bf16.gmra.mrb[0].mxu0 %v5218
        %v5494 = vpop.f32.mrb[0].mxu0
        %v5495 = vadd.f32 0.0, %v5494
        %v5496 = vpop.f32.mrb[0].mxu0
        %v5497 = vpop.f32.mrb[0].mxu0
        %v5498 = vadd.f32 0.0, %v5497
        %v5499 = vpop.f32.mrb[0].mxu0
        %5500 = vmatprep.mubr.bf16.mxu0 0
        %5501 = vmatmul.mubr.bf16.gmra.mrb[0].mxu0 %v5220
        %v5502 = vpop.f32.mrb[0].mxu0
        %v5503 = vadd.f32 0.0, %v5502
        %v5504 = vpop.f32.mrb[0].mxu0
        %v5505 = vpop.f32.mrb[0].mxu0
        %v5506 = vadd.f32 0.0, %v5505
        %v5507 = vpop.f32.mrb[0].mxu0
        %5508 = vmatprep.mubr.bf16.mxu0 0
        %5509 = vmatmul.mubr.bf16.gmra.mrb[0].mxu0 %v5222
        %v5510 = vpop.f32.mrb[0].mxu0
        %v5511 = vadd.f32 0.0, %v5510
        %v5512 = vpop.f32.mrb[0].mxu0
        %v5513 = vpop.f32.mrb[0].mxu0
        %v5514 = vadd.f32 0.0, %v5513
        %v5515 = vpop.f32.mrb[0].mxu0
        %5516 = vmatprep.mubr.bf16.mxu0 0
        %5517 = vmatmul.mubr.bf16.gmra.mrb[0].mxu0 %v5224
        %v5518 = vpop.f32.mrb[0].mxu0
        %v5519 = vadd.f32 0.0, %v5518
        %v5520 = vpop.f32.mrb[0].mxu0
        %v5521 = vpop.f32.mrb[0].mxu0
        %v5522 = vadd.f32 0.0, %v5521
        %v5523 = vpop.f32.mrb[0].mxu0
        %5524 = vmatprep.mubr.bf16.mxu0 0
        %5525 = vmatmul.mubr.bf16.gmra.mrb[0].mxu0 %v5226
        %v5526 = vpop.f32.mrb[0].mxu0
        %v5527 = vadd.f32 0.0, %v5526
        %v5528 = vpop.f32.mrb[0].mxu0
        %v5529 = vpop.f32.mrb[0].mxu0
        %v5530 = vadd.f32 0.0, %v5529
        %v5531 = vpop.f32.mrb[0].mxu0
        %5532 = vmatprep.mubr.bf16.mxu0 0
        %5533 = vmatmul.mubr.bf16.gmra.mrb[0].mxu0 %v5228
        %v5534 = vpop.f32.mrb[0].mxu0
        %v5535 = vadd.f32 0.0, %v5534
        %v5536 = vpop.f32.mrb[0].mxu0
        %v5537 = vpop.f32.mrb[0].mxu0
        %v5538 = vadd.f32 0.0, %v5537
        %v5539 = vpop.f32.mrb[0].mxu0
        %5540 = vmatprep.mubr.bf16.mxu0 0
        %5541 = vmatmul.mubr.bf16.gmra.mrb[0].mxu0 %v5230
        %v5542 = vpop.f32.mrb[0].mxu0
        %v5543 = vadd.f32 0.0, %v5542
        %v5544 = vpop.f32.mrb[0].mxu0
        %v5545 = vpop.f32.mrb[0].mxu0
        %v5546 = vadd.f32 0.0, %v5545
        %v5547 = vpop.f32.mrb[0].mxu0
        %5548 = vmatprep.mubr.bf16.mxu0 0
        %5549 = vmatmul.mubr.bf16.gmra.mrb[0].mxu0 %v5232
        %v5550 = vpop.f32.mrb[0].mxu0
        %v5551 = vadd.f32 0.0, %v5550
        %v5552 = vpop.f32.mrb[0].mxu0
        %v5553 = vpop.f32.mrb[0].mxu0
        %v5554 = vadd.f32 0.0, %v5553
        %v5555 = vpop.f32.mrb[0].mxu0
        %5556 = vmatprep.mubr.bf16.mxu0 0
        %5557 = vmatmul.mubr.bf16.gmra.mrb[0].mxu0 %v5234
        %v5558 = vpop.f32.mrb[0].mxu0
        %v5559 = vadd.f32 0.0, %v5558
        %v5560 = vpop.f32.mrb[0].mxu0
        %v5561 = vpop.f32.mrb[0].mxu0
        %v5562 = vadd.f32 0.0, %v5561
        %v5563 = vpop.f32.mrb[0].mxu0
        %5564 = vmatprep.mubr.bf16.mxu0 0
        %5565 = vmatmul.mubr.bf16.gmra.mrb[0].mxu0 %v5236
        %v5566 = vpop.f32.mrb[0].mxu0
        %v5567 = vadd.f32 0.0, %v5566
        %v5568 = vpop.f32.mrb[0].mxu0
        %v5569 = vpop.f32.mrb[0].mxu0
        %v5570 = vadd.f32 0.0, %v5569
        %v5571 = vpop.f32.mrb[0].mxu0
        %5572 = vmatprep.mubr.bf16.mxu0 0
        %5573 = vmatmul.mubr.bf16.gmra.mrb[0].mxu0 %v5238
        %v5574 = vpop.f32.mrb[0].mxu0
        %v5575 = vadd.f32 0.0, %v5574
        %v5576 = vpop.f32.mrb[0].mxu0
        %v5577 = vpop.f32.mrb[0].mxu0
        %v5578 = vadd.f32 0.0, %v5577
        %v5579 = vpop.f32.mrb[0].mxu0
        %5580 = vmatprep.mubr.bf16.mxu0 0
        %5581 = vmatmul.mubr.bf16.gmra.mrb[0].mxu0 %v5240
        %v5582 = vpop.f32.mrb[0].mxu0
        %v5583 = vadd.f32 0.0, %v5582
        %v5584 = vpop.f32.mrb[0].mxu0
        %v5585 = vpop.f32.mrb[0].mxu0
        %v5586 = vadd.f32 0.0, %v5585
        %v5587 = vpop.f32.mrb[0].mxu0
        %5588 = vmatprep.mubr.bf16.mxu0 0
        %5589 = vmatmul.mubr.bf16.gmra.mrb[0].mxu0 %v5242
        %v5590 = vpop.f32.mrb[0].mxu0
        %v5591 = vadd.f32 0.0, %v5590
        %v5592 = vpop.f32.mrb[0].mxu0
        %v5593 = vpop.f32.mrb[0].mxu0
        %v5594 = vadd.f32 0.0, %v5593
        %v5595 = vpop.f32.mrb[0].mxu0
        %5596 = vmatprep.mubr.bf16.mxu0 0
        %5597 = vmatmul.mubr.bf16.gmra.mrb[0].mxu0 %v5244
        %v5598 = vpop.f32.mrb[0].mxu0
        %v5599 = vadd.f32 0.0, %v5598
        %v5600 = vpop.f32.mrb[0].mxu0
        %v5601 = vpop.f32.mrb[0].mxu0
        %v5602 = vadd.f32 0.0, %v5601
        %v5603 = vpop.f32.mrb[0].mxu0
        %5604 = vdwg.mxu0
        %v5605 = vadd.f32 %v4886, %v5359
        %v5606 = vadd.f32 %v4889, %v5362
        %v5607 = vadd.f32 %v4894, %v5367
        %v5608 = vadd.f32 %v4897, %v5370
        %v5609 = vadd.f32 %v4902, %v5375
        %v5610 = vadd.f32 %v4905, %v5378
        %v5611 = vadd.f32 %v4910, %v5383
        %v5612 = vadd.f32 %v4913, %v5386
        %v5613 = vadd.f32 %v4918, %v5391
        %v5614 = vadd.f32 %v4921, %v5394
        %v5615 = vadd.f32 %v4926, %v5399
        %v5616 = vadd.f32 %v4929, %v5402
        %v5617 = vadd.f32 %v4934, %v5407
        %v5618 = vadd.f32 %v4937, %v5410
        %v5619 = vadd.f32 %v4942, %v5415
        %v5620 = vadd.f32 %v4945, %v5418
        %v5621 = vadd.f32 %v4950, %v5423
        %v5622 = vadd.f32 %v4953, %v5426
        %v5623 = vadd.f32 %v4958, %v5431
        %v5624 = vadd.f32 %v4961, %v5434
        %v5625 = vadd.f32 %v4966, %v5439
        %v5626 = vadd.f32 %v4969, %v5442
        %v5627 = vadd.f32 %v4974, %v5447
        %v5628 = vadd.f32 %v4977, %v5450
        %v5629 = vadd.f32 %v4982, %v5455
        %v5630 = vadd.f32 %v4985, %v5458
        %v5631 = vadd.f32 %v4990, %v5463
        %v5632 = vadd.f32 %v4993, %v5466
        %v5633 = vadd.f32 %v4998, %v5471
        %v5634 = vadd.f32 %v5001, %v5474
        %v5635 = vadd.f32 %v5006, %v5479
        %v5636 = vadd.f32 %v5009, %v5482
        %v5637 = vadd.f32 %v5014, %v5487
        %v5638 = vadd.f32 %v5017, %v5490
        %v5639 = vadd.f32 %v5022, %v5495
        %v5640 = vadd.f32 %v5025, %v5498
        %v5641 = vadd.f32 %v5030, %v5503
        %v5642 = vadd.f32 %v5033, %v5506
        %v5643 = vadd.f32 %v5038, %v5511
        %v5644 = vadd.f32 %v5041, %v5514
        %v5645 = vadd.f32 %v5046, %v5519
        %v5646 = vadd.f32 %v5049, %v5522
        %v5647 = vadd.f32 %v5054, %v5527
        %v5648 = vadd.f32 %v5057, %v5530
        %v5649 = vadd.f32 %v5062, %v5535
        %v5650 = vadd.f32 %v5065, %v5538
        %v5651 = vadd.f32 %v5070, %v5543
        %v5652 = vadd.f32 %v5073, %v5546
        %v5653 = vadd.f32 %v5078, %v5551
        %v5654 = vadd.f32 %v5081, %v5554
        %v5655 = vadd.f32 %v5086, %v5559
        %v5656 = vadd.f32 %v5089, %v5562
        %v5657 = vadd.f32 %v5094, %v5567
        %v5658 = vadd.f32 %v5097, %v5570
        %v5659 = vadd.f32 %v5102, %v5575
        %v5660 = vadd.f32 %v5105, %v5578
        %v5661 = vadd.f32 %v5110, %v5583
        %v5662 = vadd.f32 %v5113, %v5586
        %v5663 = vadd.f32 %v5118, %v5591
        %v5664 = vadd.f32 %v5121, %v5594
        %v5665 = vadd.f32 %v5126, %v5599
        %v5666 = vadd.f32 %v5129, %v5602
        %v5667 = vld [vmem:[#allocation3] sm:$0xff]
        %v5668 = vld [vmem:[#allocation3 + $0x8] sm:$0xff]
        %v5669 = vld [vmem:[#allocation3 + $0x10] sm:$0xff]
        %v5670 = vld [vmem:[#allocation3 + $0x18] sm:$0xff]
        %v5671 = vld [vmem:[#allocation3 + $0x20] sm:$0xff]
        %v5672 = vld [vmem:[#allocation3 + $0x28] sm:$0xff]
        %v5673 = vld [vmem:[#allocation3 + $0x30] sm:$0xff]
        %v5674 = vld [vmem:[#allocation3 + $0x38] sm:$0xff]
        %v5675 = vld [vmem:[#allocation3 + $0x40] sm:$0xff]
        %v5676 = vld [vmem:[#allocation3 + $0x48] sm:$0xff]
        %v5677 = vld [vmem:[#allocation3 + $0x50] sm:$0xff]
        %v5678 = vld [vmem:[#allocation3 + $0x58] sm:$0xff]
        %v5679 = vld [vmem:[#allocation3 + $0x60] sm:$0xff]
        %v5680 = vld [vmem:[#allocation3 + $0x68] sm:$0xff]
        %v5681 = vld [vmem:[#allocation3 + $0x70] sm:$0xff]
        %v5682 = vld [vmem:[#allocation3 + $0x78] sm:$0xff]
        %v5683 = vld [vmem:[#allocation3 + $0x80] sm:$0xff]
        %v5684 = vld [vmem:[#allocation3 + $0x88] sm:$0xff]
        %v5685 = vld [vmem:[#allocation3 + $0x90] sm:$0xff]
        %v5686 = vld [vmem:[#allocation3 + $0x98] sm:$0xff]
        %v5687 = vld [vmem:[#allocation3 + $0xa0] sm:$0xff]
        %v5688 = vld [vmem:[#allocation3 + $0xa8] sm:$0xff]
        %v5689 = vld [vmem:[#allocation3 + $0xb0] sm:$0xff]
        %v5690 = vld [vmem:[#allocation3 + $0xb8] sm:$0xff]
        %v5691 = vld [vmem:[#allocation3 + $0xc0] sm:$0xff]
        %v5692 = vld [vmem:[#allocation3 + $0xc8] sm:$0xff]
        %v5693 = vld [vmem:[#allocation3 + $0xd0] sm:$0xff]
        %v5694 = vld [vmem:[#allocation3 + $0xd8] sm:$0xff]
        %v5695 = vld [vmem:[#allocation3 + $0xe0] sm:$0xff]
        %v5696 = vld [vmem:[#allocation3 + $0xe8] sm:$0xff]
        %v5697 = vld [vmem:[#allocation3 + $0xf0] sm:$0xff]
        %v5698 = vld [vmem:[#allocation3 + $0xf8] sm:$0xff]
        %v5699 = vld [vmem:[#allocation3 + $0x100] sm:$0xff]
        %v5700 = vld [vmem:[#allocation3 + $0x108] sm:$0xff]
        %v5701 = vld [vmem:[#allocation3 + $0x110] sm:$0xff]
        %v5702 = vld [vmem:[#allocation3 + $0x118] sm:$0xff]
        %v5703 = vld [vmem:[#allocation3 + $0x120] sm:$0xff]
        %v5704 = vld [vmem:[#allocation3 + $0x128] sm:$0xff]
        %v5705 = vld [vmem:[#allocation3 + $0x130] sm:$0xff]
        %v5706 = vld [vmem:[#allocation3 + $0x138] sm:$0xff]
        %v5707 = vld [vmem:[#allocation3 + $0x140] sm:$0xff]
        %v5708 = vld [vmem:[#allocation3 + $0x148] sm:$0xff]
        %v5709 = vld [vmem:[#allocation3 + $0x150] sm:$0xff]
        %v5710 = vld [vmem:[#allocation3 + $0x158] sm:$0xff]
        %v5711 = vld [vmem:[#allocation3 + $0x160] sm:$0xff]
        %v5712 = vld [vmem:[#allocation3 + $0x168] sm:$0xff]
        %v5713 = vld [vmem:[#allocation3 + $0x170] sm:$0xff]
        %v5714 = vld [vmem:[#allocation3 + $0x178] sm:$0xff]
        %v5715 = vld [vmem:[#allocation3 + $0x180] sm:$0xff]
        %v5716 = vld [vmem:[#allocation3 + $0x188] sm:$0xff]
        %v5717 = vld [vmem:[#allocation3 + $0x190] sm:$0xff]
        %v5718 = vld [vmem:[#allocation3 + $0x198] sm:$0xff]
        %v5719 = vld [vmem:[#allocation3 + $0x1a0] sm:$0xff]
        %v5720 = vld [vmem:[#allocation3 + $0x1a8] sm:$0xff]
        %v5721 = vld [vmem:[#allocation3 + $0x1b0] sm:$0xff]
        %v5722 = vld [vmem:[#allocation3 + $0x1b8] sm:$0xff]
        %v5723 = vld [vmem:[#allocation3 + $0x1c0] sm:$0xff]
        %v5724 = vld [vmem:[#allocation3 + $0x1c8] sm:$0xff]
        %v5725 = vld [vmem:[#allocation3 + $0x1d0] sm:$0xff]
        %v5726 = vld [vmem:[#allocation3 + $0x1d8] sm:$0xff]
        %v5727 = vld [vmem:[#allocation3 + $0x1e0] sm:$0xff]
        %v5728 = vld [vmem:[#allocation3 + $0x1e8] sm:$0xff]
        %v5729 = vadd.f32 %v5667, %v5605
        %v5730 = vadd.f32 %v5668, %v5606
        %v5731 = vadd.f32 %v5669, %v5607
        %v5732 = vadd.f32 %v5670, %v5608
        %v5733 = vadd.f32 %v5671, %v5609
        %v5734 = vadd.f32 %v5672, %v5610
        %v5735 = vadd.f32 %v5673, %v5611
        %v5736 = vadd.f32 %v5674, %v5612
        %v5737 = vadd.f32 %v5675, %v5613
        %v5738 = vadd.f32 %v5676, %v5614
        %v5739 = vadd.f32 %v5677, %v5615
        %v5740 = vadd.f32 %v5678, %v5616
        %v5741 = vadd.f32 %v5679, %v5617
        %v5742 = vadd.f32 %v5680, %v5618
        %v5743 = vadd.f32 %v5681, %v5619
        %v5744 = vadd.f32 %v5682, %v5620
        %v5745 = vadd.f32 %v5683, %v5621
        %v5746 = vadd.f32 %v5684, %v5622
        %v5747 = vadd.f32 %v5685, %v5623
        %v5748 = vadd.f32 %v5686, %v5624
        %v5749 = vadd.f32 %v5687, %v5625
        %v5750 = vadd.f32 %v5688, %v5626
        %v5751 = vadd.f32 %v5689, %v5627
        %v5752 = vadd.f32 %v5690, %v5628
        %v5753 = vadd.f32 %v5691, %v5629
        %v5754 = vadd.f32 %v5692, %v5630
        %v5755 = vadd.f32 %v5693, %v5631
        %v5756 = vadd.f32 %v5694, %v5632
        %v5757 = vadd.f32 %v5695, %v5633
        %v5758 = vadd.f32 %v5696, %v5634
        %v5759 = vadd.f32 %v5697, %v5635
        %v5760 = vadd.f32 %v5698, %v5636
        %v5761 = vadd.f32 %v5699, %v5637
        %v5762 = vadd.f32 %v5700, %v5638
        %v5763 = vadd.f32 %v5701, %v5639
        %v5764 = vadd.f32 %v5702, %v5640
        %v5765 = vadd.f32 %v5703, %v5641
        %v5766 = vadd.f32 %v5704, %v5642
        %v5767 = vadd.f32 %v5705, %v5643
        %v5768 = vadd.f32 %v5706, %v5644
        %v5769 = vadd.f32 %v5707, %v5645
        %v5770 = vadd.f32 %v5708, %v5646
        %v5771 = vadd.f32 %v5709, %v5647
        %v5772 = vadd.f32 %v5710, %v5648
        %v5773 = vadd.f32 %v5711, %v5649
        %v5774 = vadd.f32 %v5712, %v5650
        %v5775 = vadd.f32 %v5713, %v5651
        %v5776 = vadd.f32 %v5714, %v5652
        %v5777 = vadd.f32 %v5715, %v5653
        %v5778 = vadd.f32 %v5716, %v5654
        %v5779 = vadd.f32 %v5717, %v5655
        %v5780 = vadd.f32 %v5718, %v5656
        %v5781 = vadd.f32 %v5719, %v5657
        %v5782 = vadd.f32 %v5720, %v5658
        %v5783 = vadd.f32 %v5721, %v5659
        %v5784 = vadd.f32 %v5722, %v5660
        %v5785 = vadd.f32 %v5723, %v5661
        %v5786 = vadd.f32 %v5724, %v5662
        %v5787 = vadd.f32 %v5725, %v5663
        %v5788 = vadd.f32 %v5726, %v5664
        %v5789 = vadd.f32 %v5727, %v5665
        %v5790 = vadd.f32 %v5728, %v5666
        %5791 = vst [vmem:[#allocation3] sm:$0xff] %v5729
        %5792 = vst [vmem:[#allocation3 + $0x8] sm:$0xff] %v5730
        %5793 = vst [vmem:[#allocation3 + $0x10] sm:$0xff] %v5731
        %5794 = vst [vmem:[#allocation3 + $0x18] sm:$0xff] %v5732
        %5795 = vst [vmem:[#allocation3 + $0x20] sm:$0xff] %v5733
        %5796 = vst [vmem:[#allocation3 + $0x28] sm:$0xff] %v5734
        %5797 = vst [vmem:[#allocation3 + $0x30] sm:$0xff] %v5735
        %5798 = vst [vmem:[#allocation3 + $0x38] sm:$0xff] %v5736
        %5799 = vst [vmem:[#allocation3 + $0x40] sm:$0xff] %v5737
        %5800 = vst [vmem:[#allocation3 + $0x48] sm:$0xff] %v5738
        %5801 = vst [vmem:[#allocation3 + $0x50] sm:$0xff] %v5739
        %5802 = vst [vmem:[#allocation3 + $0x58] sm:$0xff] %v5740
        %5803 = vst [vmem:[#allocation3 + $0x60] sm:$0xff] %v5741
        %5804 = vst [vmem:[#allocation3 + $0x68] sm:$0xff] %v5742
        %5805 = vst [vmem:[#allocation3 + $0x70] sm:$0xff] %v5743
        %5806 = vst [vmem:[#allocation3 + $0x78] sm:$0xff] %v5744
        %5807 = vst [vmem:[#allocation3 + $0x80] sm:$0xff] %v5745
        %5808 = vst [vmem:[#allocation3 + $0x88] sm:$0xff] %v5746
        %5809 = vst [vmem:[#allocation3 + $0x90] sm:$0xff] %v5747
        %5810 = vst [vmem:[#allocation3 + $0x98] sm:$0xff] %v5748
        %5811 = vst [vmem:[#allocation3 + $0xa0] sm:$0xff] %v5749
        %5812 = vst [vmem:[#allocation3 + $0xa8] sm:$0xff] %v5750
        %5813 = vst [vmem:[#allocation3 + $0xb0] sm:$0xff] %v5751
        %5814 = vst [vmem:[#allocation3 + $0xb8] sm:$0xff] %v5752
        %5815 = vst [vmem:[#allocation3 + $0xc0] sm:$0xff] %v5753
        %5816 = vst [vmem:[#allocation3 + $0xc8] sm:$0xff] %v5754
        %5817 = vst [vmem:[#allocation3 + $0xd0] sm:$0xff] %v5755
        %5818 = vst [vmem:[#allocation3 + $0xd8] sm:$0xff] %v5756
        %5819 = vst [vmem:[#allocation3 + $0xe0] sm:$0xff] %v5757
        %5820 = vst [vmem:[#allocation3 + $0xe8] sm:$0xff] %v5758
        %5821 = vst [vmem:[#allocation3 + $0xf0] sm:$0xff] %v5759
        %5822 = vst [vmem:[#allocation3 + $0xf8] sm:$0xff] %v5760
        %5823 = vst [vmem:[#allocation3 + $0x100] sm:$0xff] %v5761
        %5824 = vst [vmem:[#allocation3 + $0x108] sm:$0xff] %v5762
        %5825 = vst [vmem:[#allocation3 + $0x110] sm:$0xff] %v5763
        %5826 = vst [vmem:[#allocation3 + $0x118] sm:$0xff] %v5764
        %5827 = vst [vmem:[#allocation3 + $0x120] sm:$0xff] %v5765
        %5828 = vst [vmem:[#allocation3 + $0x128] sm:$0xff] %v5766
        %5829 = vst [vmem:[#allocation3 + $0x130] sm:$0xff] %v5767
        %5830 = vst [vmem:[#allocation3 + $0x138] sm:$0xff] %v5768
        %5831 = vst [vmem:[#allocation3 + $0x140] sm:$0xff] %v5769
        %5832 = vst [vmem:[#allocation3 + $0x148] sm:$0xff] %v5770
        %5833 = vst [vmem:[#allocation3 + $0x150] sm:$0xff] %v5771
        %5834 = vst [vmem:[#allocation3 + $0x158] sm:$0xff] %v5772
        %5835 = vst [vmem:[#allocation3 + $0x160] sm:$0xff] %v5773
        %5836 = vst [vmem:[#allocation3 + $0x168] sm:$0xff] %v5774
        %5837 = vst [vmem:[#allocation3 + $0x170] sm:$0xff] %v5775
        %5838 = vst [vmem:[#allocation3 + $0x178] sm:$0xff] %v5776
        %5839 = vst [vmem:[#allocation3 + $0x180] sm:$0xff] %v5777
        %5840 = vst [vmem:[#allocation3 + $0x188] sm:$0xff] %v5778
        %5841 = vst [vmem:[#allocation3 + $0x190] sm:$0xff] %v5779
        %5842 = vst [vmem:[#allocation3 + $0x198] sm:$0xff] %v5780
        %5843 = vst [vmem:[#allocation3 + $0x1a0] sm:$0xff] %v5781
        %5844 = vst [vmem:[#allocation3 + $0x1a8] sm:$0xff] %v5782
        %5845 = vst [vmem:[#allocation3 + $0x1b0] sm:$0xff] %v5783
        %5846 = vst [vmem:[#allocation3 + $0x1b8] sm:$0xff] %v5784
        %5847 = vst [vmem:[#allocation3 + $0x1c0] sm:$0xff] %v5785
        %5848 = vst [vmem:[#allocation3 + $0x1c8] sm:$0xff] %v5786
        %5849 = vst [vmem:[#allocation3 + $0x1d0] sm:$0xff] %v5787
        %5850 = vst [vmem:[#allocation3 + $0x1d8] sm:$0xff] %v5788
        %5851 = vst [vmem:[#allocation3 + $0x1e0] sm:$0xff] %v5789
        %5852 = vst [vmem:[#allocation3 + $0x1e8] sm:$0xff] %v5790
        %v5853 = vld [vmem:[#allocation3] sm:$0xff]
        %v5854 = vld [vmem:[#allocation3 + $0x8] sm:$0xff]
        %v5855 = vpack.c.bf16 %v5854, %v5853
        %v5857 = vunpack.c.l.b16 %v5855
        %v5858 = vunpack.c.h.b16 %v5855
        %v5859 = vpack.c.b16 %v5857, %v5857
        %v5860 = vpack.c.b16 %v5858, %v5858
        %5863 = vst [vmem:[%s251] sm:$0xf] %v5859
        %5864 = vst [vmem:[%s251 + $0x4] sm:$0xf] %v5860
        %v5865 = vld [vmem:[#allocation3 + $0x20] sm:$0xff]
        %v5866 = vld [vmem:[#allocation3 + $0x28] sm:$0xff]
        %v5867 = vpack.c.bf16 %v5866, %v5865
        %v5869 = vunpack.c.l.b16 %v5867
        %v5870 = vunpack.c.h.b16 %v5867
        %v5871 = vpack.c.b16 %v5869, %v5869
        %v5872 = vpack.c.b16 %v5870, %v5870
        %s5875 = scalar_lea.vmem %s251, 8 [#allocation9]
        %5876 = vst [vmem:[%s5875] sm:$0xf] %v5871
        %5877 = vst [vmem:[%s5875 + $0x4] sm:$0xf] %v5872
        %v5878 = vld [vmem:[#allocation3 + $0x40] sm:$0xff]
        %v5879 = vld [vmem:[#allocation3 + $0x48] sm:$0xff]
        %v5880 = vpack.c.bf16 %v5879, %v5878
        %v5882 = vunpack.c.l.b16 %v5880
        %v5883 = vunpack.c.h.b16 %v5880
        %v5884 = vpack.c.b16 %v5882, %v5882
        %v5885 = vpack.c.b16 %v5883, %v5883
        %s5888 = scalar_lea.vmem %s251, 16 [#allocation9]
        %5889 = vst [vmem:[%s5888] sm:$0xf] %v5884
        %5890 = vst [vmem:[%s5888 + $0x4] sm:$0xf] %v5885
        %v5891 = vld [vmem:[#allocation3 + $0x60] sm:$0xff]
        %v5892 = vld [vmem:[#allocation3 + $0x68] sm:$0xff]
        %v5893 = vpack.c.bf16 %v5892, %v5891
        %v5895 = vunpack.c.l.b16 %v5893
        %v5896 = vunpack.c.h.b16 %v5893
        %v5897 = vpack.c.b16 %v5895, %v5895
        %v5898 = vpack.c.b16 %v5896, %v5896
        %s5901 = scalar_lea.vmem %s251, 24 [#allocation9]
        %5902 = vst [vmem:[%s5901] sm:$0xf] %v5897
        %5903 = vst [vmem:[%s5901 + $0x4] sm:$0xf] %v5898
        %v5904 = vld [vmem:[#allocation3 + $0x80] sm:$0xff]
        %v5905 = vld [vmem:[#allocation3 + $0x88] sm:$0xff]
        %v5906 = vpack.c.bf16 %v5905, %v5904
        %v5908 = vunpack.c.l.b16 %v5906
        %v5909 = vunpack.c.h.b16 %v5906
        %v5910 = vpack.c.b16 %v5908, %v5908
        %v5911 = vpack.c.b16 %v5909, %v5909
        %s5914 = scalar_lea.vmem %s251, 32 [#allocation9]
        %5915 = vst [vmem:[%s5914] sm:$0xf] %v5910
        %5916 = vst [vmem:[%s5914 + $0x4] sm:$0xf] %v5911
        %v5917 = vld [vmem:[#allocation3 + $0xa0] sm:$0xff]
        %v5918 = vld [vmem:[#allocation3 + $0xa8] sm:$0xff]
        %v5919 = vpack.c.bf16 %v5918, %v5917
        %v5921 = vunpack.c.l.b16 %v5919
        %v5922 = vunpack.c.h.b16 %v5919
        %v5923 = vpack.c.b16 %v5921, %v5921
        %v5924 = vpack.c.b16 %v5922, %v5922
        %s5927 = scalar_lea.vmem %s251, 40 [#allocation9]
        %5928 = vst [vmem:[%s5927] sm:$0xf] %v5923
        %5929 = vst [vmem:[%s5927 + $0x4] sm:$0xf] %v5924
        %v5930 = vld [vmem:[#allocation3 + $0xc0] sm:$0xff]
        %v5931 = vld [vmem:[#allocation3 + $0xc8] sm:$0xff]
        %v5932 = vpack.c.bf16 %v5931, %v5930
        %v5934 = vunpack.c.l.b16 %v5932
        %v5935 = vunpack.c.h.b16 %v5932
        %v5936 = vpack.c.b16 %v5934, %v5934
        %v5937 = vpack.c.b16 %v5935, %v5935
        %s5940 = scalar_lea.vmem %s251, 48 [#allocation9]
        %5941 = vst [vmem:[%s5940] sm:$0xf] %v5936
        %5942 = vst [vmem:[%s5940 + $0x4] sm:$0xf] %v5937
        %v5943 = vld [vmem:[#allocation3 + $0xe0] sm:$0xff]
        %v5944 = vld [vmem:[#allocation3 + $0xe8] sm:$0xff]
        %v5945 = vpack.c.bf16 %v5944, %v5943
        %v5947 = vunpack.c.l.b16 %v5945
        %v5948 = vunpack.c.h.b16 %v5945
        %v5949 = vpack.c.b16 %v5947, %v5947
        %v5950 = vpack.c.b16 %v5948, %v5948
        %s5953 = scalar_lea.vmem %s251, 56 [#allocation9]
        %5954 = vst [vmem:[%s5953] sm:$0xf] %v5949
        %5955 = vst [vmem:[%s5953 + $0x4] sm:$0xf] %v5950
        %v5956 = vld [vmem:[#allocation3 + $0x100] sm:$0xff]
        %v5957 = vld [vmem:[#allocation3 + $0x108] sm:$0xff]
        %v5958 = vpack.c.bf16 %v5957, %v5956
        %v5960 = vunpack.c.l.b16 %v5958
        %v5961 = vunpack.c.h.b16 %v5958
        %v5962 = vpack.c.b16 %v5960, %v5960
        %v5963 = vpack.c.b16 %v5961, %v5961
        %s5966 = scalar_lea.vmem %s251, 64 [#allocation9]
        %5967 = vst [vmem:[%s5966] sm:$0xf] %v5962
        %5968 = vst [vmem:[%s5966 + $0x4] sm:$0xf] %v5963
        %v5969 = vld [vmem:[#allocation3 + $0x120] sm:$0xff]
        %v5970 = vld [vmem:[#allocation3 + $0x128] sm:$0xff]
        %v5971 = vpack.c.bf16 %v5970, %v5969
        %v5973 = vunpack.c.l.b16 %v5971
        %v5974 = vunpack.c.h.b16 %v5971
        %v5975 = vpack.c.b16 %v5973, %v5973
        %v5976 = vpack.c.b16 %v5974, %v5974
        %s5979 = scalar_lea.vmem %s251, 72 [#allocation9]
        %5980 = vst [vmem:[%s5979] sm:$0xf] %v5975
        %5981 = vst [vmem:[%s5979 + $0x4] sm:$0xf] %v5976
        %v5982 = vld [vmem:[#allocation3 + $0x140] sm:$0xff]
        %v5983 = vld [vmem:[#allocation3 + $0x148] sm:$0xff]
        %v5984 = vpack.c.bf16 %v5983, %v5982
        %v5986 = vunpack.c.l.b16 %v5984
        %v5987 = vunpack.c.h.b16 %v5984
        %v5988 = vpack.c.b16 %v5986, %v5986
        %v5989 = vpack.c.b16 %v5987, %v5987
        %s5992 = scalar_lea.vmem %s251, 80 [#allocation9]
        %5993 = vst [vmem:[%s5992] sm:$0xf] %v5988
        %5994 = vst [vmem:[%s5992 + $0x4] sm:$0xf] %v5989
        %v5995 = vld [vmem:[#allocation3 + $0x160] sm:$0xff]
        %v5996 = vld [vmem:[#allocation3 + $0x168] sm:$0xff]
        %v5997 = vpack.c.bf16 %v5996, %v5995
        %v5999 = vunpack.c.l.b16 %v5997
        %v6000 = vunpack.c.h.b16 %v5997
        %v6001 = vpack.c.b16 %v5999, %v5999
        %v6002 = vpack.c.b16 %v6000, %v6000
        %s6005 = scalar_lea.vmem %s251, 88 [#allocation9]
        %6006 = vst [vmem:[%s6005] sm:$0xf] %v6001
        %6007 = vst [vmem:[%s6005 + $0x4] sm:$0xf] %v6002
        %v6008 = vld [vmem:[#allocation3 + $0x180] sm:$0xff]
        %v6009 = vld [vmem:[#allocation3 + $0x188] sm:$0xff]
        %v6010 = vpack.c.bf16 %v6009, %v6008
        %v6012 = vunpack.c.l.b16 %v6010
        %v6013 = vunpack.c.h.b16 %v6010
        %v6014 = vpack.c.b16 %v6012, %v6012
        %v6015 = vpack.c.b16 %v6013, %v6013
        %s6018 = scalar_lea.vmem %s251, 96 [#allocation9]
        %6019 = vst [vmem:[%s6018] sm:$0xf] %v6014
        %6020 = vst [vmem:[%s6018 + $0x4] sm:$0xf] %v6015
        %v6021 = vld [vmem:[#allocation3 + $0x1a0] sm:$0xff]
        %v6022 = vld [vmem:[#allocation3 + $0x1a8] sm:$0xff]
        %v6023 = vpack.c.bf16 %v6022, %v6021
        %v6025 = vunpack.c.l.b16 %v6023
        %v6026 = vunpack.c.h.b16 %v6023
        %v6027 = vpack.c.b16 %v6025, %v6025
        %v6028 = vpack.c.b16 %v6026, %v6026
        %s6031 = scalar_lea.vmem %s251, 104 [#allocation9]
        %6032 = vst [vmem:[%s6031] sm:$0xf] %v6027
        %6033 = vst [vmem:[%s6031 + $0x4] sm:$0xf] %v6028
        %v6034 = vld [vmem:[#allocation3 + $0x1c0] sm:$0xff]
        %v6035 = vld [vmem:[#allocation3 + $0x1c8] sm:$0xff]
        %v6036 = vpack.c.bf16 %v6035, %v6034
        %v6038 = vunpack.c.l.b16 %v6036
        %v6039 = vunpack.c.h.b16 %v6036
        %v6040 = vpack.c.b16 %v6038, %v6038
        %v6041 = vpack.c.b16 %v6039, %v6039
        %s6044 = scalar_lea.vmem %s251, 112 [#allocation9]
        %6045 = vst [vmem:[%s6044] sm:$0xf] %v6040
        %6046 = vst [vmem:[%s6044 + $0x4] sm:$0xf] %v6041
        %v6047 = vld [vmem:[#allocation3 + $0x1e0] sm:$0xff]
        %v6048 = vld [vmem:[#allocation3 + $0x1e8] sm:$0xff]
        %v6049 = vpack.c.bf16 %v6048, %v6047
        %v6051 = vunpack.c.l.b16 %v6049
        %v6052 = vunpack.c.h.b16 %v6049
        %v6053 = vpack.c.b16 %v6051, %v6051
        %v6054 = vpack.c.b16 %v6052, %v6052
        %s6057 = scalar_lea.vmem %s251, 120 [#allocation9]
        %6058 = vst [vmem:[%s6057] sm:$0xf] %v6053
        %6059 = vst [vmem:[%s6057 + $0x4] sm:$0xf] %v6054
        %s6060 = sand.u32 %s138, 1
        %s6061 = scalar_lea.sflag [#allocation6], %s6060
        %s6062 = sand.u32 %s138, 1
        %s6063 = smul.addr %s6062, 128
        %s6064 = scalar_lea.vmem [#allocation9], %s6063
        // Predicated region
        $region49: #{tpu_custom_call.1} parent=35 // pred_check
          %p6065 = pneg %p148
        $region50: #{tpu_custom_call.1} parent=35 // pred_check_branch
          %6067 = sbr.rel (%p6065) target = $region52
        $region51: #{tpu_custom_call.1} parent=35 // pred_region
          %s6069 = ssub.s32 2048, 2048
          %6070 = vsyncadd %s6061, %s6069
          %s6071 = smul.addr %s26, 32
          %s6072 = sadd.s32 %s27, %s6071
          %s6073 = smul.addr %s6072, 64
          %s6074 = scalar_lea.hbm %s4, %s6073
          %s6075 = sshll.u32 %s6064, 4
          %s6076 = int_to_ptr.vmem [resolvable:$true] %s6075
          %6081 = dma.vmem_to_hbm [thread:$0]  %s6076, 2048, %s6074, %s6061, 64, 64, 4
        $region52: #{tpu_custom_call.1} parent=35 // pred_fallthru
          _
      $region36: #{tpu_custom_call.1} parent=5 // pred_fallthru
        _
      %p6082 = scmp.le.s32.totalorder 2, %s17
      // Predicated region
      $region53: #{tpu_custom_call.1} parent=5 // pred_check
        %p6083 = pneg %p6082
      $region54: #{tpu_custom_call.1} parent=5 // pred_check_branch
        %6085 = sbr.rel (%p6083) target = $region56
      $region55: #{tpu_custom_call.1} parent=5 // pred_region
        %s6086 = ssub.s32 %s17, 2
        // Predicated region
        $region57: #{tpu_custom_call.1} parent=55 // pred_check
          %p6087 = pneg %p154
        $region58: #{tpu_custom_call.1} parent=55 // pred_check_branch
          %6089 = sbr.rel (%p6087) target = $region60
        $region59: #{tpu_custom_call.1} parent=55 // pred_region
          %s6090 = sand.u32 %s139, 1
          %s6091 = scalar_lea.sflag [#allocation6], %s6090
          %s6092 = sand.u32 %s139, 1
          %s6093 = smul.addr %s6092, 128
          %s6094 = scalar_lea.vmem [#allocation9], %s6093
          %6095 = dma.done %s6091, 2048
        $region60: #{tpu_custom_call.1} parent=55 // pred_fallthru
          _
      $region56: #{tpu_custom_call.1} parent=5 // pred_fallthru
        _
    $region6: #{tpu_custom_call.1} parent=1 // loop_footer
      %s21 = sadd.s32 1, %s17
    $region7: #{tpu_custom_call.1} parent=1 // loop_footer_branch
      %16 = sbr.rel target = $region3
    $region8: #{tpu_custom_call.1} parent=1 // loop_exit
      _
    %6096 = vsyncpa [#allocation5], 1
    %s6097 = scalar_lea.sflag [#allocation5], 1
    %6098 = vsyncpa %s6097, 1
    %6099 = vsyncpa [#allocation8], 1
    %6100 = vsyncpa [#allocation6], 1
    %s6101 = scalar_lea.sflag [#allocation6], 1
    %6102 = vsyncpa %s6101, 1

</llo_original>
